<compile_context>
chip_gen: v7x
topology: tpu7x:2x2x1
jax: 0.10.0
libtpu: 0.0.40
codegen_flags: <defaults>
</compile_context>

<pallas_src>
import functools

import jax
import jax.numpy as jnp
from jax.experimental import pallas as pl
from jax.experimental.pallas import tpu as pltpu

NEG_SLOPE = 0.01   # F.leaky_relu default negative_slope
HIDDEN = 1024      # fixed by the module definition
LANE = 128
TM_MAX = 512       # row-tile ceiling (fits comfortably in 32 MiB VMEM budget)
ALIGN = 16         # batch/tile alignment (bf16 packs 16 sublanes per vreg)


def _round_up(x, m):
    return (x + m - 1) // m * m


def _leaky_relu(x):
    return jnp.where(x > 0, x, NEG_SLOPE * x)


def _choose_tiling(batch, tm_max=TM_MAX, align=ALIGN):
    """Pick (TM, grid_steps, padded_batch).

    Keeps TM <= tm_max, avoids ~2x padding for batches just above a tile
    boundary, and (when the batch is big enough) uses an even number of >= 2
    grid steps so v7x's two TensorCores can each take tiles.
    """
    b = _round_up(max(batch, 1), align)
    steps = pl.cdiv(b, tm_max)
    if b >= 2 * align:
        steps = max(steps, 2)          # give the second TC (v7x) a tile
        if steps % 2:
            steps += 1                 # even split across the 2 TensorCores
    tm = _round_up(pl.cdiv(b, steps), align)
    steps = pl.cdiv(b, tm)             # TM round-up may absorb a step
    return tm, steps, tm * steps


def othello_mlp_kernel(x_ref,
                       w1_ref, b1_ref,
                       w2_ref, b2_ref,
                       w3_ref, b3_ref,
                       wh_ref, bh_ref,
                       out_ref,
                       *, action_size):
    """One batch tile through fc1..fc3 + fused (pi | v) head.

    x_ref  : (TM, K_pad)  bf16       w*_ref : bf16, (in, out) layout
    b*_ref : (1, out)     f32
    out_ref: (TM, H_pad)  f32  -- cols [0, A) = log_pi, col A = tanh(v),
                                   remaining cols are padding.
    """
    # fc1 / fc2 / fc3 + leaky_relu  (dropout = identity at inference).
    # All matmuls accumulate in f32; activations carried as bf16.
    h = jnp.dot(x_ref[...], w1_ref[...],
                preferred_element_type=jnp.float32) + b1_ref[...]
    h = _leaky_relu(h).astype(jnp.bfloat16)
    h = jnp.dot(h, w2_ref[...],
                preferred_element_type=jnp.float32) + b2_ref[...]
    h = _leaky_relu(h).astype(jnp.bfloat16)
    h = jnp.dot(h, w3_ref[...],
                preferred_element_type=jnp.float32) + b3_ref[...]
    h = _leaky_relu(h).astype(jnp.bfloat16)

    # Fused heads: one 128-lane matmul.  Columns [0, A) = pi logits,
    # column A = value logit, rest are zero-padded (weights & bias zero).
    head = jnp.dot(h, wh_ref[...],
                   preferred_element_type=jnp.float32) + bh_ref[...]

    col = jax.lax.broadcasted_iota(jnp.int32, head.shape, 1)
    pi_mask = col < action_size

    # masked, max-stabilized log_softmax over the real action columns only
    pi_logits = jnp.where(pi_mask, head, jnp.float32(-1e30))
    m = jnp.max(pi_logits, axis=1, keepdims=True)
    s = pi_logits - m
    lse = jnp.log(jnp.sum(jnp.where(pi_mask, jnp.exp(s), 0.0),
                          axis=1, keepdims=True))
    log_pi = s - lse

    v = jnp.tanh(head)   # only column `action_size` is the real value head

    out_ref[...] = jnp.where(pi_mask, log_pi, v)


def prepare_params(params, d_in):
    """Pad + pack the f32 (in, out) params into the kernel layout.

    Weights -> bf16 (w1 K-padded to 128, heads fused & lane-padded);
    biases stay f32."""
    (w1, b1, w2, b2, w3, b3, wpi, bpi, wv, bv) = params
    action_size = wpi.shape[1]

    k_pad = _round_up(d_in, LANE)
    w1p = jnp.zeros((k_pad, HIDDEN), jnp.float32).at[:d_in].set(w1)

    h_pad = _round_up(action_size + 1, LANE)
    wh = jnp.zeros((HIDDEN, h_pad), jnp.float32)
    wh = wh.at[:, :action_size].set(wpi).at[:, action_size:action_size + 1].set(wv)
    bh = jnp.zeros((1, h_pad), jnp.float32)
    bh = bh.at[:, :action_size].set(bpi).at[:, action_size:action_size + 1].set(bv)

    bf16 = lambda a: a.astype(jnp.bfloat16)
    return (bf16(w1p), b1, bf16(w2), b2, bf16(w3), b3,
            bf16(wh), bh, k_pad, h_pad, action_size)


def othello_nnet2_forward(x_nchw, params):
    """x_nchw: (B, 2, n, n) float32. Returns (log_pi (B, A), v (B, 1))."""
    B = x_nchw.shape[0]
    d_in = x_nchw.shape[1] * x_nchw.shape[2] * x_nchw.shape[3]
    x = x_nchw.reshape(B, d_in)                       # same as torch .view

    (w1, b1, w2, b2, w3, b3, wh, bh,
     k_pad, h_pad, action_size) = prepare_params(params, d_in)

    TM, grid_len, B_pad = _choose_tiling(B)
    # pad + pre-cast to bf16 (halves the x-tile DMA; cast fuses into the pad)
    x_pad = (jnp.zeros((B_pad, k_pad), jnp.float32)
             .at[:B, :d_in].set(x)
             .astype(jnp.bfloat16))

    row_tile = lambda i: (i, 0)
    resident = lambda i: (0, 0)      # same block every step: weights stay put
    single = pl.Buffered(1)          # constant index_map -> single-buffer

    grid_spec = pltpu.PrefetchScalarGridSpec(
        num_scalar_prefetch=0,
        grid=(grid_len,),
        in_specs=[
            pl.BlockSpec((TM, k_pad), row_tile),                              # x
            pl.BlockSpec((k_pad, HIDDEN), resident, pipeline_mode=single),    # w1
            pl.BlockSpec((1, HIDDEN), resident, pipeline_mode=single),        # b1
            pl.BlockSpec((HIDDEN, HIDDEN), resident, pipeline_mode=single),   # w2
            pl.BlockSpec((1, HIDDEN), resident, pipeline_mode=single),        # b2
            pl.BlockSpec((HIDDEN, HIDDEN), resident, pipeline_mode=single),   # w3
            pl.BlockSpec((1, HIDDEN), resident, pipeline_mode=single),        # b3
            pl.BlockSpec((HIDDEN, h_pad), resident, pipeline_mode=single),    # w_head
            pl.BlockSpec((1, h_pad), resident, pipeline_mode=single),         # b_head
        ],
        out_specs=pl.BlockSpec((TM, h_pad), row_tile),
    )

    flops = 2 * B_pad * (k_pad * HIDDEN + 2 * HIDDEN * HIDDEN + HIDDEN * h_pad)
    bytes_accessed = (x_pad.size * 2
                      + (w1.size + w2.size + w3.size + wh.size) * 2
                      + (b1.size + b2.size + b3.size + bh.size) * 4
                      + B_pad * h_pad * 4)
    cost = pl.CostEstimate(flops=flops,
                           transcendentals=2 * B_pad * h_pad,  # exp + tanh
                           bytes_accessed=bytes_accessed)

    out = pl.pallas_call(
        functools.partial(othello_mlp_kernel, action_size=action_size),
        out_shape=jax.ShapeDtypeStruct((B_pad, h_pad), jnp.float32),
        grid_spec=grid_spec,
        compiler_params=pltpu.CompilerParams(
            dimension_semantics=("parallel",),
            vmem_limit_bytes=32 * 1024 * 1024),
        cost_estimate=cost,
    )(x_pad, w1, b1, w2, b2, w3, b3, wh, bh)

    log_pi = out[:B, :action_size]
    v = out[:B, action_size:action_size + 1]
    return log_pi, v


def init_params(key, d_in, hidden, action_size):
    """nn.Linear-style U(-1/sqrt(fan_in), 1/sqrt(fan_in)); weights (in, out)."""
    def linear(k, fan_in, fan_out):
        kw, kb = jax.random.split(k)
        bound = 1.0 / jnp.sqrt(fan_in)
        w = jax.random.uniform(kw, (fan_in, fan_out), jnp.float32, -bound, bound)
        b = jax.random.uniform(kb, (1, fan_out), jnp.float32, -bound, bound)
        return w, b

    k1, k2, k3, k4, k5 = jax.random.split(key, 5)
    w1, b1 = linear(k1, d_in, hidden)
    w2, b2 = linear(k2, hidden, hidden)
    w3, b3 = linear(k3, hidden, hidden)
    wpi, bpi = linear(k4, hidden, action_size)
    wv, bv = linear(k5, hidden, 1)
    return (w1, b1, w2, b2, w3, b3, wpi, bpi, wv, bv)


def _reference_forward(x_nchw, params):
    """Pure-JAX reference at matched precision (bf16 weights/acts, f32 accum)."""
    B = x_nchw.shape[0]
    d_in = x_nchw.shape[1] * x_nchw.shape[2] * x_nchw.shape[3]
    (w1, b1, w2, b2, w3, b3, wh, bh,
     k_pad, h_pad, A) = prepare_params(params, d_in)
    x = jnp.zeros((B, k_pad), jnp.float32).at[:, :d_in].set(x_nchw.reshape(B, d_in))

    def dot(a, w):
        return jnp.dot(a.astype(jnp.bfloat16), w,
                       preferred_element_type=jnp.float32)

    h = _leaky_relu(dot(x, w1) + b1)
    h = _leaky_relu(dot(h, w2) + b2)
    h = _leaky_relu(dot(h, w3) + b3)
    head = dot(h, wh) + bh
    pi = head[:, :A]
    log_pi = pi - jax.scipy.special.logsumexp(pi, axis=1, keepdims=True)
    v = jnp.tanh(head[:, A:A + 1])
    return log_pi, v


if __name__ == "__main__":
    # Small Othello game: n = 6 -> board 6x6, action_size = n*n + 1 = 37.
    n = 6
    batch = 8
    d_in = 2 * n * n          # 72
    hidden = HIDDEN           # 1024, fixed by the module
    action_size = n * n + 1   # 37

    key = jax.random.PRNGKey(0)
    k_params, k_x = jax.random.split(key)

    params = init_params(k_params, d_in, hidden, action_size)
    x = jax.random.normal(k_x, (batch, 2, n, n), jnp.float32)  # NCHW input

    log_pi, v = othello_nnet2_forward(x, params)
    jax.block_until_ready((log_pi, v))

    # correctness check against a pure-JAX reference at matched precision
    ref_log_pi, ref_v = _reference_forward(x, params)
    assert log_pi.shape == (batch, action_size) and v.shape == (batch, 1)
    assert jnp.allclose(log_pi, ref_log_pi, atol=2e-3, rtol=2e-3)
    assert jnp.allclose(v, ref_v, atol=2e-3, rtol=2e-3)
    assert bool(jnp.all(jnp.isfinite(log_pi))) and bool(jnp.all(jnp.isfinite(v)))

    print("KERNEL_OK")
</pallas_src>

<mosaic_0001>
module attributes {stable_mosaic.version = 11 : i64} {
  func.func @othello_mlp_kernel(%arg0: i32, %arg1: memref<16x128xbf16, #tpu.memory_space<vmem>>, %arg2: memref<128x1024xbf16, #tpu.memory_space<vmem>>, %arg3: memref<1x1024xf32, #tpu.memory_space<vmem>>, %arg4: memref<1024x1024xbf16, #tpu.memory_space<vmem>>, %arg5: memref<1x1024xf32, #tpu.memory_space<vmem>>, %arg6: memref<1024x1024xbf16, #tpu.memory_space<vmem>>, %arg7: memref<1x1024xf32, #tpu.memory_space<vmem>>, %arg8: memref<1024x128xbf16, #tpu.memory_space<vmem>>, %arg9: memref<1x128xf32, #tpu.memory_space<vmem>>, %arg10: memref<16x128xf32, #tpu.memory_space<vmem>>) attributes {dimension_semantics = [#tpu.dimension_semantics<parallel>], iteration_bounds = array<i64: 1>, scalar_prefetch = 0 : i64, scratch_operands = 0 : i64, tpu.core_type = #tpu.core_type<tc>, window_params = [{transform_indices = @transform_0, window_bounds = array<i64: 16, 128>}, {pipeline_mode = #tpu.pipeline_mode<synchronous>, transform_indices = @transform_1, window_bounds = array<i64: 128, 1024>}, {pipeline_mode = #tpu.pipeline_mode<synchronous>, transform_indices = @transform_2, window_bounds = array<i64: 1, 1024>}, {pipeline_mode = #tpu.pipeline_mode<synchronous>, transform_indices = @transform_3, window_bounds = array<i64: 1024, 1024>}, {pipeline_mode = #tpu.pipeline_mode<synchronous>, transform_indices = @transform_4, window_bounds = array<i64: 1, 1024>}, {pipeline_mode = #tpu.pipeline_mode<synchronous>, transform_indices = @transform_5, window_bounds = array<i64: 1024, 1024>}, {pipeline_mode = #tpu.pipeline_mode<synchronous>, transform_indices = @transform_6, window_bounds = array<i64: 1, 1024>}, {pipeline_mode = #tpu.pipeline_mode<synchronous>, transform_indices = @transform_7, window_bounds = array<i64: 1024, 128>}, {pipeline_mode = #tpu.pipeline_mode<synchronous>, transform_indices = @transform_8, window_bounds = array<i64: 1, 128>}, {transform_indices = @transform_9, window_bounds = array<i64: 16, 128>}]} {
    %c0 = arith.constant 0 : index
    %c0_0 = arith.constant 0 : index
    %0 = vector.load %arg1[%c0, %c0_0] : memref<16x128xbf16, #tpu.memory_space<vmem>>, vector<16x128xbf16>
    %c0_1 = arith.constant 0 : index
    %c0_2 = arith.constant 0 : index
    %1 = vector.load %arg2[%c0_1, %c0_2] : memref<128x1024xbf16, #tpu.memory_space<vmem>>, vector<128x1024xbf16>
    %cst = arith.constant dense<0.000000e+00> : vector<16x1024xf32>
    %2 = tpu.matmul %0, %1, %cst {dimension_numbers = #tpu.dot_dimension_numbers<[1], [0], [0], [1], [0, 0, 1, 1], [], []>} : vector<16x128xbf16>, vector<128x1024xbf16>, vector<16x1024xf32> -> vector<16x1024xf32>
    %c0_3 = arith.constant 0 : index
    %c0_4 = arith.constant 0 : index
    %3 = vector.load %arg3[%c0_3, %c0_4] : memref<1x1024xf32, #tpu.memory_space<vmem>>, vector<1x1024xf32>
    %4 = vector.broadcast %3 : vector<1x1024xf32> to vector<16x1024xf32>
    %5 = arith.addf %2, %4 : vector<16x1024xf32>
    %cst_5 = arith.constant 0.000000e+00 : f32
    %6 = vector.broadcast %cst_5 : f32 to vector<16x1024xf32>
    %7 = arith.cmpf ogt, %5, %6 : vector<16x1024xf32>
    %cst_6 = arith.constant 0.00999999977 : f32
    %8 = vector.broadcast %cst_6 : f32 to vector<16x1024xf32>
    %9 = arith.mulf %8, %5 : vector<16x1024xf32>
    %10 = arith.select %7, %5, %9 : vector<16x1024xi1>, vector<16x1024xf32>
    %11 = arith.truncf %10 : vector<16x1024xf32> to vector<16x1024xbf16>
    %c0_7 = arith.constant 0 : index
    %c0_8 = arith.constant 0 : index
    %12 = vector.load %arg4[%c0_7, %c0_8] : memref<1024x1024xbf16, #tpu.memory_space<vmem>>, vector<1024x1024xbf16>
    %cst_9 = arith.constant dense<0.000000e+00> : vector<16x1024xf32>
    %13 = tpu.matmul %11, %12, %cst_9 {dimension_numbers = #tpu.dot_dimension_numbers<[1], [0], [0], [1], [0, 0, 1, 1], [], []>} : vector<16x1024xbf16>, vector<1024x1024xbf16>, vector<16x1024xf32> -> vector<16x1024xf32>
    %c0_10 = arith.constant 0 : index
    %c0_11 = arith.constant 0 : index
    %14 = vector.load %arg5[%c0_10, %c0_11] : memref<1x1024xf32, #tpu.memory_space<vmem>>, vector<1x1024xf32>
    %15 = vector.broadcast %14 : vector<1x1024xf32> to vector<16x1024xf32>
    %16 = arith.addf %13, %15 : vector<16x1024xf32>
    %cst_12 = arith.constant 0.000000e+00 : f32
    %17 = vector.broadcast %cst_12 : f32 to vector<16x1024xf32>
    %18 = arith.cmpf ogt, %16, %17 : vector<16x1024xf32>
    %cst_13 = arith.constant 0.00999999977 : f32
    %19 = vector.broadcast %cst_13 : f32 to vector<16x1024xf32>
    %20 = arith.mulf %19, %16 : vector<16x1024xf32>
    %21 = arith.select %18, %16, %20 : vector<16x1024xi1>, vector<16x1024xf32>
    %22 = arith.truncf %21 : vector<16x1024xf32> to vector<16x1024xbf16>
    %c0_14 = arith.constant 0 : index
    %c0_15 = arith.constant 0 : index
    %23 = vector.load %arg6[%c0_14, %c0_15] : memref<1024x1024xbf16, #tpu.memory_space<vmem>>, vector<1024x1024xbf16>
    %cst_16 = arith.constant dense<0.000000e+00> : vector<16x1024xf32>
    %24 = tpu.matmul %22, %23, %cst_16 {dimension_numbers = #tpu.dot_dimension_numbers<[1], [0], [0], [1], [0, 0, 1, 1], [], []>} : vector<16x1024xbf16>, vector<1024x1024xbf16>, vector<16x1024xf32> -> vector<16x1024xf32>
    %c0_17 = arith.constant 0 : index
    %c0_18 = arith.constant 0 : index
    %25 = vector.load %arg7[%c0_17, %c0_18] : memref<1x1024xf32, #tpu.memory_space<vmem>>, vector<1x1024xf32>
    %26 = vector.broadcast %25 : vector<1x1024xf32> to vector<16x1024xf32>
    %27 = arith.addf %24, %26 : vector<16x1024xf32>
    %cst_19 = arith.constant 0.000000e+00 : f32
    %28 = vector.broadcast %cst_19 : f32 to vector<16x1024xf32>
    %29 = arith.cmpf ogt, %27, %28 : vector<16x1024xf32>
    %cst_20 = arith.constant 0.00999999977 : f32
    %30 = vector.broadcast %cst_20 : f32 to vector<16x1024xf32>
    %31 = arith.mulf %30, %27 : vector<16x1024xf32>
    %32 = arith.select %29, %27, %31 : vector<16x1024xi1>, vector<16x1024xf32>
    %33 = arith.truncf %32 : vector<16x1024xf32> to vector<16x1024xbf16>
    %c0_21 = arith.constant 0 : index
    %c0_22 = arith.constant 0 : index
    %34 = vector.load %arg8[%c0_21, %c0_22] : memref<1024x128xbf16, #tpu.memory_space<vmem>>, vector<1024x128xbf16>
    %cst_23 = arith.constant dense<0.000000e+00> : vector<16x128xf32>
    %35 = tpu.matmul %33, %34, %cst_23 {dimension_numbers = #tpu.dot_dimension_numbers<[1], [0], [0], [1], [0, 0, 1, 1], [], []>} : vector<16x1024xbf16>, vector<1024x128xbf16>, vector<16x128xf32> -> vector<16x128xf32>
    %c0_24 = arith.constant 0 : index
    %c0_25 = arith.constant 0 : index
    %36 = vector.load %arg9[%c0_24, %c0_25] : memref<1x128xf32, #tpu.memory_space<vmem>>, vector<1x128xf32>
    %37 = vector.broadcast %36 : vector<1x128xf32> to vector<16x128xf32>
    %38 = arith.addf %35, %37 : vector<16x128xf32>
    %39 = tpu.iota {dimensions = array<i32: 1>} : vector<16x128xi32>
    %c37_i32 = arith.constant 37 : i32
    %40 = vector.broadcast %c37_i32 : i32 to vector<16x128xi32>
    %41 = arith.cmpi slt, %39, %40 : vector<16x128xi32>
    %cst_26 = arith.constant -1.000000e+30 : f32
    %42 = vector.broadcast %cst_26 : f32 to vector<16x128xf32>
    %43 = arith.select %41, %38, %42 : vector<16x128xi1>, vector<16x128xf32>
    %cst_27 = arith.constant dense<0xFF800000> : vector<16xf32>
    %44 = vector.multi_reduction <maximumf>, %43, %cst_27 [1] : vector<16x128xf32> to vector<16xf32>
    %45 = vector.shape_cast %44 : vector<16xf32> to vector<16x1xf32>
    %46 = vector.broadcast %45 : vector<16x1xf32> to vector<16x128xf32>
    %47 = arith.subf %43, %46 : vector<16x128xf32>
    %48 = math.exp %47 : vector<16x128xf32>
    %cst_28 = arith.constant 0.000000e+00 : f32
    %49 = vector.broadcast %cst_28 : f32 to vector<16x128xf32>
    %50 = arith.select %41, %48, %49 : vector<16x128xi1>, vector<16x128xf32>
    %cst_29 = arith.constant dense<0.000000e+00> : vector<16xf32>
    %51 = vector.multi_reduction <add>, %50, %cst_29 [1] : vector<16x128xf32> to vector<16xf32>
    %52 = vector.shape_cast %51 : vector<16xf32> to vector<16x1xf32>
    %53 = math.log %52 : vector<16x1xf32>
    %54 = vector.broadcast %53 : vector<16x1xf32> to vector<16x128xf32>
    %55 = arith.subf %47, %54 : vector<16x128xf32>
    %56 = math.tanh %38 : vector<16x128xf32>
    %57 = arith.select %41, %55, %56 : vector<16x128xi1>, vector<16x128xf32>
    %c0_30 = arith.constant 0 : index
    %c0_31 = arith.constant 0 : index
    %58 = vector.load %arg10[%c0_30, %c0_31] : memref<16x128xf32, #tpu.memory_space<vmem>>, vector<16x128xf32>
    tpu.vector_store %arg10[%c0_30, %c0_31], %57 {strides = array<i32>} : memref<16x128xf32, #tpu.memory_space<vmem>>, vector<16x128xf32>,
    return
  }
  func.func @transform_0(%arg0: i32) -> (i32, i32) {
    %c0_i32 = arith.constant 0 : i32
    %c0_i32_0 = arith.constant 0 : i32
    return %arg0, %c0_i32 : i32, i32
  }
  func.func @transform_1(%arg0: i32) -> (i32, i32) {
    %c0_i32 = arith.constant 0 : i32
    %c0_i32_0 = arith.constant 0 : i32
    %c0_i32_1 = arith.constant 0 : i32
    return %c0_i32, %c0_i32_0 : i32, i32
  }
  func.func @transform_2(%arg0: i32) -> (i32, i32) {
    %c0_i32 = arith.constant 0 : i32
    %c0_i32_0 = arith.constant 0 : i32
    %c0_i32_1 = arith.constant 0 : i32
    return %c0_i32, %c0_i32_0 : i32, i32
  }
  func.func @transform_3(%arg0: i32) -> (i32, i32) {
    %c0_i32 = arith.constant 0 : i32
    %c0_i32_0 = arith.constant 0 : i32
    %c0_i32_1 = arith.constant 0 : i32
    return %c0_i32, %c0_i32_0 : i32, i32
  }
  func.func @transform_4(%arg0: i32) -> (i32, i32) {
    %c0_i32 = arith.constant 0 : i32
    %c0_i32_0 = arith.constant 0 : i32
    %c0_i32_1 = arith.constant 0 : i32
    return %c0_i32, %c0_i32_0 : i32, i32
  }
  func.func @transform_5(%arg0: i32) -> (i32, i32) {
    %c0_i32 = arith.constant 0 : i32
    %c0_i32_0 = arith.constant 0 : i32
    %c0_i32_1 = arith.constant 0 : i32
    return %c0_i32, %c0_i32_0 : i32, i32
  }
  func.func @transform_6(%arg0: i32) -> (i32, i32) {
    %c0_i32 = arith.constant 0 : i32
    %c0_i32_0 = arith.constant 0 : i32
    %c0_i32_1 = arith.constant 0 : i32
    return %c0_i32, %c0_i32_0 : i32, i32
  }
  func.func @transform_7(%arg0: i32) -> (i32, i32) {
    %c0_i32 = arith.constant 0 : i32
    %c0_i32_0 = arith.constant 0 : i32
    %c0_i32_1 = arith.constant 0 : i32
    return %c0_i32, %c0_i32_0 : i32, i32
  }
  func.func @transform_8(%arg0: i32) -> (i32, i32) {
    %c0_i32 = arith.constant 0 : i32
    %c0_i32_0 = arith.constant 0 : i32
    %c0_i32_1 = arith.constant 0 : i32
    return %c0_i32, %c0_i32_0 : i32, i32
  }
  func.func @transform_9(%arg0: i32) -> (i32, i32) {
    %c0_i32 = arith.constant 0 : i32
    %c0_i32_0 = arith.constant 0 : i32
    return %arg0, %c0_i32 : i32, i32
  }
}

</mosaic_0001>

<llo_original>
// kernel: tpu_custom_call.1
$region0: #{tpu_custom_call.1}
  #allocation0 [shape = 'u32[]', space=smem, size = 0x4, offset = 0x4, fixed_abs, tag = 'smem constant byte address 0x4 - core index']
  #allocation1 [shape = 'u32[144,128]{1,0:T(1,128)}', space=vmem, size = 0x12000, scoped, tag = 'internal scratch']
  %s0 = inlined_call_operand.hbm [shape: bf16[16,128], index: 0, kind: input, shape index: {}]
  %s1 = inlined_call_operand.hbm [shape: bf16[128,1024], index: 1, kind: input, shape index: {}]
  %s2 = inlined_call_operand.hbm [shape: f32[1,1024], index: 2, kind: input, shape index: {}]
  %s3 = inlined_call_operand.hbm [shape: bf16[1024,1024], index: 3, kind: input, shape index: {}]
  %s4 = inlined_call_operand.hbm [shape: f32[1,1024], index: 4, kind: input, shape index: {}]
  %s5 = inlined_call_operand.hbm [shape: bf16[1024,1024], index: 5, kind: input, shape index: {}]
  %s6 = inlined_call_operand.hbm [shape: f32[1,1024], index: 6, kind: input, shape index: {}]
  %s7 = inlined_call_operand.hbm [shape: bf16[1024,128], index: 7, kind: input, shape index: {}]
  %s8 = inlined_call_operand.hbm [shape: f32[1,128], index: 8, kind: input, shape index: {}]
  %s9 = inlined_call_operand.hbm [shape: f32[16,128], index: 9, kind: output, shape index: {}]
  %s10 = sld [smem:[#allocation0]]
  $region82: #{tpu_custom_call.1} parent=0
    _
  %s12 = ssub.s32 1, %s10
  %s13 = scalar_select 0, %s12, %s10
  $region1: #{tpu_custom_call.1} parent=0
    #allocation2 [shape = 'u8[4096]{0}', space=vmem, size = 0x1000, scoped, tag = 'input window, operand 0, single buffered']
    #allocation3 [shape = 's32[1]{0}', space=sflag, size = 0x4, scoped, tag = 'scoped memory for tpu_custom_call.1']
    #allocation4 [shape = 's32[1]{0}', space=sflag, size = 0x4, scoped, tag = 'scoped memory for tpu_custom_call.1']
    #allocation5 [shape = 'u8[262144]{0}', space=vmem, size = 0x40000, scoped, tag = 'input window, operand 1, single buffered']
    #allocation6 [shape = 's32[1]{0}', space=sflag, size = 0x4, scoped, tag = 'scoped memory for tpu_custom_call.1']
    #allocation7 [shape = 'u8[4096]{0}', space=vmem, size = 0x1000, scoped, tag = 'input window, operand 2, single buffered']
    #allocation8 [shape = 'u8[2097152]{0}', space=vmem, size = 0x200000, scoped, tag = 'input window, operand 3, single buffered']
    #allocation9 [shape = 's32[1]{0}', space=sflag, size = 0x4, scoped, tag = 'scoped memory for tpu_custom_call.1']
    #allocation10 [shape = 'u8[4096]{0}', space=vmem, size = 0x1000, scoped, tag = 'input window, operand 4, single buffered']
    #allocation11 [shape = 'u8[2097152]{0}', space=vmem, size = 0x200000, scoped, tag = 'input window, operand 5, single buffered']
    #allocation12 [shape = 's32[1]{0}', space=sflag, size = 0x4, scoped, tag = 'scoped memory for tpu_custom_call.1']
    #allocation13 [shape = 'u8[4096]{0}', space=vmem, size = 0x1000, scoped, tag = 'input window, operand 6, single buffered']
    #allocation14 [shape = 'u8[262144]{0}', space=vmem, size = 0x40000, scoped, tag = 'input window, operand 7, single buffered']
    #allocation15 [shape = 's32[1]{0}', space=sflag, size = 0x4, scoped, tag = 'scoped memory for tpu_custom_call.1']
    #allocation16 [shape = 'u8[512]{0}', space=vmem, size = 0x400, scoped, tag = 'input window, operand 8, single buffered']
    #allocation17 [shape = 'u8[8192]{0}', space=vmem, size = 0x2000, scoped, tag = 'output window, operand 0, single buffered']
    %14 = vsyncpa [#allocation3], 0
    %15 = vsyncpa [#allocation6], 0
    %16 = vsyncpa [#allocation9], 0
    %17 = vsyncpa [#allocation12], 0
    %18 = vsyncpa [#allocation15], 0
    %19 = vsyncpa [#allocation4], 0
    // Predicated region
    $region2: #{tpu_custom_call.1} parent=1 // pred_check
      _
    $region3: #{tpu_custom_call.1} parent=1 // pred_check_branch
      %21 = sbr.rel (0) target = $region5
    $region4: #{tpu_custom_call.1} parent=1 // pred_region
      %s23 = ssub.s32 128, 128
      %24 = vsyncadd [#allocation3], %s23
      %s25 = sshll.u32 [#allocation2], 4
      %s26 = int_to_ptr.vmem [resolvable:$true] %s25
      %31 = dma.hbm_to_vmem [thread:$0]  %s0, 128, %s26, [#allocation3], 64, 64, 4
    $region5: #{tpu_custom_call.1} parent=1 // pred_fallthru
      _
    // Predicated region
    $region6: #{tpu_custom_call.1} parent=1 // pred_check
      _
    $region7: #{tpu_custom_call.1} parent=1 // pred_check_branch
      %33 = sbr.rel (0) target = $region9
    $region8: #{tpu_custom_call.1} parent=1 // pred_region
      %s35 = ssub.s32 8192, 8192
      %36 = vsyncadd [#allocation6], %s35
      %s37 = sshll.u32 [#allocation5], 4
      %s38 = int_to_ptr.vmem [resolvable:$true] %s37
      %43 = dma.hbm_to_vmem [thread:$0]  %s1, 8192, %s38, [#allocation6], 512, 512, 32
    $region9: #{tpu_custom_call.1} parent=1 // pred_fallthru
      _
    // Predicated region
    $region10: #{tpu_custom_call.1} parent=1 // pred_check
      _
    $region11: #{tpu_custom_call.1} parent=1 // pred_check_branch
      %45 = sbr.rel (0) target = $region13
    $region12: #{tpu_custom_call.1} parent=1 // pred_region
      %s47 = ssub.s32 128, 128
      %48 = vsyncadd [#allocation6], %s47
      %s50 = sshll.u32 [#allocation7], 4
      %s51 = int_to_ptr.vmem [resolvable:$true] %s50
      %53 = dma.hbm_to_vmem [thread:$0]  %s2, 128, %s51, [#allocation6]
    $region13: #{tpu_custom_call.1} parent=1 // pred_fallthru
      _
    // Predicated region
    $region14: #{tpu_custom_call.1} parent=1 // pred_check
      _
    $region15: #{tpu_custom_call.1} parent=1 // pred_check_branch
      %55 = sbr.rel (0) target = $region17
    $region16: #{tpu_custom_call.1} parent=1 // pred_region
      %s57 = ssub.s32 65536, 65536
      %58 = vsyncadd [#allocation9], %s57
      %s59 = sshll.u32 [#allocation8], 4
      %s60 = int_to_ptr.vmem [resolvable:$true] %s59
      %65 = dma.hbm_to_vmem [thread:$0]  %s3, 65536, %s60, [#allocation9], 512, 512, 32
    $region17: #{tpu_custom_call.1} parent=1 // pred_fallthru
      _
    // Predicated region
    $region18: #{tpu_custom_call.1} parent=1 // pred_check
      _
    $region19: #{tpu_custom_call.1} parent=1 // pred_check_branch
      %67 = sbr.rel (0) target = $region21
    $region20: #{tpu_custom_call.1} parent=1 // pred_region
      %s69 = ssub.s32 128, 128
      %70 = vsyncadd [#allocation9], %s69
      %s72 = sshll.u32 [#allocation10], 4
      %s73 = int_to_ptr.vmem [resolvable:$true] %s72
      %75 = dma.hbm_to_vmem [thread:$0]  %s4, 128, %s73, [#allocation9]
    $region21: #{tpu_custom_call.1} parent=1 // pred_fallthru
      _
    // Predicated region
    $region22: #{tpu_custom_call.1} parent=1 // pred_check
      _
    $region23: #{tpu_custom_call.1} parent=1 // pred_check_branch
      %77 = sbr.rel (0) target = $region25
    $region24: #{tpu_custom_call.1} parent=1 // pred_region
      %s79 = ssub.s32 65536, 65536
      %80 = vsyncadd [#allocation12], %s79
      %s81 = sshll.u32 [#allocation11], 4
      %s82 = int_to_ptr.vmem [resolvable:$true] %s81
      %87 = dma.hbm_to_vmem [thread:$0]  %s5, 65536, %s82, [#allocation12], 512, 512, 32
    $region25: #{tpu_custom_call.1} parent=1 // pred_fallthru
      _
    // Predicated region
    $region26: #{tpu_custom_call.1} parent=1 // pred_check
      _
    $region27: #{tpu_custom_call.1} parent=1 // pred_check_branch
      %89 = sbr.rel (0) target = $region29
    $region28: #{tpu_custom_call.1} parent=1 // pred_region
      %s91 = ssub.s32 128, 128
      %92 = vsyncadd [#allocation12], %s91
      %s94 = sshll.u32 [#allocation13], 4
      %s95 = int_to_ptr.vmem [resolvable:$true] %s94
      %97 = dma.hbm_to_vmem [thread:$0]  %s6, 128, %s95, [#allocation12]
    $region29: #{tpu_custom_call.1} parent=1 // pred_fallthru
      _
    // Predicated region
    $region30: #{tpu_custom_call.1} parent=1 // pred_check
      _
    $region31: #{tpu_custom_call.1} parent=1 // pred_check_branch
      %99 = sbr.rel (0) target = $region33
    $region32: #{tpu_custom_call.1} parent=1 // pred_region
      %s101 = ssub.s32 8192, 8192
      %102 = vsyncadd [#allocation15], %s101
      %s103 = sshll.u32 [#allocation14], 4
      %s104 = int_to_ptr.vmem [resolvable:$true] %s103
      %109 = dma.hbm_to_vmem [thread:$0]  %s7, 8192, %s104, [#allocation15], 64, 64, 4
    $region33: #{tpu_custom_call.1} parent=1 // pred_fallthru
      _
    // Predicated region
    $region34: #{tpu_custom_call.1} parent=1 // pred_check
      _
    $region35: #{tpu_custom_call.1} parent=1 // pred_check_branch
      %111 = sbr.rel (0) target = $region37
    $region36: #{tpu_custom_call.1} parent=1 // pred_region
      %s113 = ssub.s32 16, 16
      %114 = vsyncadd [#allocation15], %s113
      %s116 = sshll.u32 [#allocation16], 4
      %s117 = int_to_ptr.vmem [resolvable:$true] %s116
      %119 = dma.hbm_to_vmem [thread:$0]  %s8, 16, %s117, [#allocation15]
    $region37: #{tpu_custom_call.1} parent=1 // pred_fallthru
      _
    // Predicated region
    $region38: #{tpu_custom_call.1} parent=1 // pred_check
      _
    $region39: #{tpu_custom_call.1} parent=1 // pred_check_branch
      %121 = sbr.rel (0) target = $region41
    $region40: #{tpu_custom_call.1} parent=1 // pred_region
      %122 = dma.done [#allocation3], 128
    $region41: #{tpu_custom_call.1} parent=1 // pred_fallthru
      _
    // Predicated region
    $region42: #{tpu_custom_call.1} parent=1 // pred_check
      _
    $region43: #{tpu_custom_call.1} parent=1 // pred_check_branch
      %124 = sbr.rel (0) target = $region45
    $region44: #{tpu_custom_call.1} parent=1 // pred_region
      %125 = dma.done [#allocation6], 8192
    $region45: #{tpu_custom_call.1} parent=1 // pred_fallthru
      _
    // Predicated region
    $region46: #{tpu_custom_call.1} parent=1 // pred_check
      _
    $region47: #{tpu_custom_call.1} parent=1 // pred_check_branch
      %127 = sbr.rel (0) target = $region49
    $region48: #{tpu_custom_call.1} parent=1 // pred_region
      %128 = dma.done [#allocation6], 128
    $region49: #{tpu_custom_call.1} parent=1 // pred_fallthru
      _
    // Predicated region
    $region50: #{tpu_custom_call.1} parent=1 // pred_check
      _
    $region51: #{tpu_custom_call.1} parent=1 // pred_check_branch
      %130 = sbr.rel (0) target = $region53
    $region52: #{tpu_custom_call.1} parent=1 // pred_region
      %131 = dma.done [#allocation9], 65536
    $region53: #{tpu_custom_call.1} parent=1 // pred_fallthru
      _
    // Predicated region
    $region54: #{tpu_custom_call.1} parent=1 // pred_check
      _
    $region55: #{tpu_custom_call.1} parent=1 // pred_check_branch
      %133 = sbr.rel (0) target = $region57
    $region56: #{tpu_custom_call.1} parent=1 // pred_region
      %134 = dma.done [#allocation9], 128
    $region57: #{tpu_custom_call.1} parent=1 // pred_fallthru
      _
    // Predicated region
    $region58: #{tpu_custom_call.1} parent=1 // pred_check
      _
    $region59: #{tpu_custom_call.1} parent=1 // pred_check_branch
      %136 = sbr.rel (0) target = $region61
    $region60: #{tpu_custom_call.1} parent=1 // pred_region
      %137 = dma.done [#allocation12], 65536
    $region61: #{tpu_custom_call.1} parent=1 // pred_fallthru
      _
    // Predicated region
    $region62: #{tpu_custom_call.1} parent=1 // pred_check
      _
    $region63: #{tpu_custom_call.1} parent=1 // pred_check_branch
      %139 = sbr.rel (0) target = $region65
    $region64: #{tpu_custom_call.1} parent=1 // pred_region
      %140 = dma.done [#allocation12], 128
    $region65: #{tpu_custom_call.1} parent=1 // pred_fallthru
      _
    // Predicated region
    $region66: #{tpu_custom_call.1} parent=1 // pred_check
      _
    $region67: #{tpu_custom_call.1} parent=1 // pred_check_branch
      %142 = sbr.rel (0) target = $region69
    $region68: #{tpu_custom_call.1} parent=1 // pred_region
      %143 = dma.done [#allocation15], 8192
    $region69: #{tpu_custom_call.1} parent=1 // pred_fallthru
      _
    // Predicated region
    $region70: #{tpu_custom_call.1} parent=1 // pred_check
      _
    $region71: #{tpu_custom_call.1} parent=1 // pred_check_branch
      %145 = sbr.rel (0) target = $region73
    $region72: #{tpu_custom_call.1} parent=1 // pred_region
      %146 = dma.done [#allocation15], 16
    $region73: #{tpu_custom_call.1} parent=1 // pred_fallthru
      _
    %v148 = vld [vmem:[#allocation2] sm:$0xf]
    %v149 = vld [vmem:[#allocation2 + $0x4] sm:$0xf]
    %v150 = vld [vmem:[#allocation5] sm:$0xff]
    %v151 = vld [vmem:[#allocation5 + $0x8] sm:$0xff]
    %v152 = vld [vmem:[#allocation5 + $0x10] sm:$0xff]
    %v153 = vld [vmem:[#allocation5 + $0x18] sm:$0xff]
    %v154 = vld [vmem:[#allocation5 + $0x20] sm:$0xff]
    %v155 = vld [vmem:[#allocation5 + $0x28] sm:$0xff]
    %v156 = vld [vmem:[#allocation5 + $0x30] sm:$0xff]
    %v157 = vld [vmem:[#allocation5 + $0x38] sm:$0xff]
    %v158 = vld [vmem:[#allocation5 + $0x40] sm:$0xff]
    %v159 = vld [vmem:[#allocation5 + $0x48] sm:$0xff]
    %v160 = vld [vmem:[#allocation5 + $0x50] sm:$0xff]
    %v161 = vld [vmem:[#allocation5 + $0x58] sm:$0xff]
    %v162 = vld [vmem:[#allocation5 + $0x60] sm:$0xff]
    %v163 = vld [vmem:[#allocation5 + $0x68] sm:$0xff]
    %v164 = vld [vmem:[#allocation5 + $0x70] sm:$0xff]
    %v165 = vld [vmem:[#allocation5 + $0x78] sm:$0xff]
    %v166 = vld [vmem:[#allocation5 + $0x80] sm:$0xff]
    %v167 = vld [vmem:[#allocation5 + $0x88] sm:$0xff]
    %v168 = vld [vmem:[#allocation5 + $0x90] sm:$0xff]
    %v169 = vld [vmem:[#allocation5 + $0x98] sm:$0xff]
    %v170 = vld [vmem:[#allocation5 + $0xa0] sm:$0xff]
    %v171 = vld [vmem:[#allocation5 + $0xa8] sm:$0xff]
    %v172 = vld [vmem:[#allocation5 + $0xb0] sm:$0xff]
    %v173 = vld [vmem:[#allocation5 + $0xb8] sm:$0xff]
    %v174 = vld [vmem:[#allocation5 + $0xc0] sm:$0xff]
    %v175 = vld [vmem:[#allocation5 + $0xc8] sm:$0xff]
    %v176 = vld [vmem:[#allocation5 + $0xd0] sm:$0xff]
    %v177 = vld [vmem:[#allocation5 + $0xd8] sm:$0xff]
    %v178 = vld [vmem:[#allocation5 + $0xe0] sm:$0xff]
    %v179 = vld [vmem:[#allocation5 + $0xe8] sm:$0xff]
    %v180 = vld [vmem:[#allocation5 + $0xf0] sm:$0xff]
    %v181 = vld [vmem:[#allocation5 + $0xf8] sm:$0xff]
    %v182 = vld [vmem:[#allocation5 + $0x100] sm:$0xff]
    %v183 = vld [vmem:[#allocation5 + $0x108] sm:$0xff]
    %v184 = vld [vmem:[#allocation5 + $0x110] sm:$0xff]
    %v185 = vld [vmem:[#allocation5 + $0x118] sm:$0xff]
    %v186 = vld [vmem:[#allocation5 + $0x120] sm:$0xff]
    %v187 = vld [vmem:[#allocation5 + $0x128] sm:$0xff]
    %v188 = vld [vmem:[#allocation5 + $0x130] sm:$0xff]
    %v189 = vld [vmem:[#allocation5 + $0x138] sm:$0xff]
    %v190 = vld [vmem:[#allocation5 + $0x140] sm:$0xff]
    %v191 = vld [vmem:[#allocation5 + $0x148] sm:$0xff]
    %v192 = vld [vmem:[#allocation5 + $0x150] sm:$0xff]
    %v193 = vld [vmem:[#allocation5 + $0x158] sm:$0xff]
    %v194 = vld [vmem:[#allocation5 + $0x160] sm:$0xff]
    %v195 = vld [vmem:[#allocation5 + $0x168] sm:$0xff]
    %v196 = vld [vmem:[#allocation5 + $0x170] sm:$0xff]
    %v197 = vld [vmem:[#allocation5 + $0x178] sm:$0xff]
    %v198 = vld [vmem:[#allocation5 + $0x180] sm:$0xff]
    %v199 = vld [vmem:[#allocation5 + $0x188] sm:$0xff]
    %v200 = vld [vmem:[#allocation5 + $0x190] sm:$0xff]
    %v201 = vld [vmem:[#allocation5 + $0x198] sm:$0xff]
    %v202 = vld [vmem:[#allocation5 + $0x1a0] sm:$0xff]
    %v203 = vld [vmem:[#allocation5 + $0x1a8] sm:$0xff]
    %v204 = vld [vmem:[#allocation5 + $0x1b0] sm:$0xff]
    %v205 = vld [vmem:[#allocation5 + $0x1b8] sm:$0xff]
    %v206 = vld [vmem:[#allocation5 + $0x1c0] sm:$0xff]
    %v207 = vld [vmem:[#allocation5 + $0x1c8] sm:$0xff]
    %v208 = vld [vmem:[#allocation5 + $0x1d0] sm:$0xff]
    %v209 = vld [vmem:[#allocation5 + $0x1d8] sm:$0xff]
    %v210 = vld [vmem:[#allocation5 + $0x1e0] sm:$0xff]
    %v211 = vld [vmem:[#allocation5 + $0x1e8] sm:$0xff]
    %v212 = vld [vmem:[#allocation5 + $0x1f0] sm:$0xff]
    %v213 = vld [vmem:[#allocation5 + $0x1f8] sm:$0xff]
    %v214 = vld [vmem:[#allocation7] sm:$0xff]
    %v216 = vlaneseq
    %v217 = vshrl.u32 %v216, 7
    %v218 = vsub.s32 0, %v217
    %v219 = vrot.slane %v214, %v218
    %v220 = vlaneseq
    %v221 = vshrl.u32 %v220, 7
    %v222 = vsub.s32 1, %v221
    %v223 = vrot.slane %v214, %v222
    %v224 = vlaneseq
    %v225 = vshrl.u32 %v224, 7
    %v226 = vsub.s32 2, %v225
    %v227 = vrot.slane %v214, %v226
    %v228 = vlaneseq
    %v229 = vshrl.u32 %v228, 7
    %v230 = vsub.s32 3, %v229
    %v231 = vrot.slane %v214, %v230
    %v232 = vlaneseq
    %v233 = vshrl.u32 %v232, 7
    %v234 = vsub.s32 4, %v233
    %v235 = vrot.slane %v214, %v234
    %v236 = vlaneseq
    %v237 = vshrl.u32 %v236, 7
    %v238 = vsub.s32 5, %v237
    %v239 = vrot.slane %v214, %v238
    %v240 = vlaneseq
    %v241 = vshrl.u32 %v240, 7
    %v242 = vsub.s32 6, %v241
    %v243 = vrot.slane %v214, %v242
    %v244 = vlaneseq
    %v245 = vshrl.u32 %v244, 7
    %v246 = vsub.s32 7, %v245
    %v247 = vrot.slane %v214, %v246
    %v258 = vunpack.c.l.b16 %v148
    %v259 = vunpack.c.l.b16 %v149
    %v260 = vpack.c.b16 %v259, %v258
    %v326 = vunpack.c.l.b16 %v150
    %v327 = vunpack.c.h.b16 %v150
    %v328 = vunpack.c.l.b16 %v151
    %v329 = vunpack.c.h.b16 %v151
    %v330 = vunpack.c.l.b16 %v152
    %v331 = vunpack.c.h.b16 %v152
    %v332 = vunpack.c.l.b16 %v153
    %v333 = vunpack.c.h.b16 %v153
    %v334 = vunpack.c.l.b16 %v154
    %v335 = vunpack.c.h.b16 %v154
    %v336 = vunpack.c.l.b16 %v155
    %v337 = vunpack.c.h.b16 %v155
    %v338 = vunpack.c.l.b16 %v156
    %v339 = vunpack.c.h.b16 %v156
    %v340 = vunpack.c.l.b16 %v157
    %v341 = vunpack.c.h.b16 %v157
    %v342 = vunpack.c.l.b16 %v158
    %v343 = vunpack.c.h.b16 %v158
    %v344 = vunpack.c.l.b16 %v159
    %v345 = vunpack.c.h.b16 %v159
    %v346 = vunpack.c.l.b16 %v160
    %v347 = vunpack.c.h.b16 %v160
    %v348 = vunpack.c.l.b16 %v161
    %v349 = vunpack.c.h.b16 %v161
    %v350 = vunpack.c.l.b16 %v162
    %v351 = vunpack.c.h.b16 %v162
    %v352 = vunpack.c.l.b16 %v163
    %v353 = vunpack.c.h.b16 %v163
    %v354 = vunpack.c.l.b16 %v164
    %v355 = vunpack.c.h.b16 %v164
    %v356 = vunpack.c.l.b16 %v165
    %v357 = vunpack.c.h.b16 %v165
    %v358 = vunpack.c.l.b16 %v166
    %v359 = vunpack.c.h.b16 %v166
    %v360 = vunpack.c.l.b16 %v167
    %v361 = vunpack.c.h.b16 %v167
    %v362 = vunpack.c.l.b16 %v168
    %v363 = vunpack.c.h.b16 %v168
    %v364 = vunpack.c.l.b16 %v169
    %v365 = vunpack.c.h.b16 %v169
    %v366 = vunpack.c.l.b16 %v170
    %v367 = vunpack.c.h.b16 %v170
    %v368 = vunpack.c.l.b16 %v171
    %v369 = vunpack.c.h.b16 %v171
    %v370 = vunpack.c.l.b16 %v172
    %v371 = vunpack.c.h.b16 %v172
    %v372 = vunpack.c.l.b16 %v173
    %v373 = vunpack.c.h.b16 %v173
    %v374 = vunpack.c.l.b16 %v174
    %v375 = vunpack.c.h.b16 %v174
    %v376 = vunpack.c.l.b16 %v175
    %v377 = vunpack.c.h.b16 %v175
    %v378 = vunpack.c.l.b16 %v176
    %v379 = vunpack.c.h.b16 %v176
    %v380 = vunpack.c.l.b16 %v177
    %v381 = vunpack.c.h.b16 %v177
    %v382 = vunpack.c.l.b16 %v178
    %v383 = vunpack.c.h.b16 %v178
    %v384 = vunpack.c.l.b16 %v179
    %v385 = vunpack.c.h.b16 %v179
    %v386 = vunpack.c.l.b16 %v180
    %v387 = vunpack.c.h.b16 %v180
    %v388 = vunpack.c.l.b16 %v181
    %v389 = vunpack.c.h.b16 %v181
    %v390 = vunpack.c.l.b16 %v182
    %v391 = vunpack.c.h.b16 %v182
    %v392 = vunpack.c.l.b16 %v183
    %v393 = vunpack.c.h.b16 %v183
    %v394 = vunpack.c.l.b16 %v184
    %v395 = vunpack.c.h.b16 %v184
    %v396 = vunpack.c.l.b16 %v185
    %v397 = vunpack.c.h.b16 %v185
    %v398 = vunpack.c.l.b16 %v186
    %v399 = vunpack.c.h.b16 %v186
    %v400 = vunpack.c.l.b16 %v187
    %v401 = vunpack.c.h.b16 %v187
    %v402 = vunpack.c.l.b16 %v188
    %v403 = vunpack.c.h.b16 %v188
    %v404 = vunpack.c.l.b16 %v189
    %v405 = vunpack.c.h.b16 %v189
    %v406 = vunpack.c.l.b16 %v190
    %v407 = vunpack.c.h.b16 %v190
    %v408 = vunpack.c.l.b16 %v191
    %v409 = vunpack.c.h.b16 %v191
    %v410 = vunpack.c.l.b16 %v192
    %v411 = vunpack.c.h.b16 %v192
    %v412 = vunpack.c.l.b16 %v193
    %v413 = vunpack.c.h.b16 %v193
    %v414 = vunpack.c.l.b16 %v194
    %v415 = vunpack.c.h.b16 %v194
    %v416 = vunpack.c.l.b16 %v195
    %v417 = vunpack.c.h.b16 %v195
    %v418 = vunpack.c.l.b16 %v196
    %v419 = vunpack.c.h.b16 %v196
    %v420 = vunpack.c.l.b16 %v197
    %v421 = vunpack.c.h.b16 %v197
    %v422 = vunpack.c.l.b16 %v198
    %v423 = vunpack.c.h.b16 %v198
    %v424 = vunpack.c.l.b16 %v199
    %v425 = vunpack.c.h.b16 %v199
    %v426 = vunpack.c.l.b16 %v200
    %v427 = vunpack.c.h.b16 %v200
    %v428 = vunpack.c.l.b16 %v201
    %v429 = vunpack.c.h.b16 %v201
    %v430 = vunpack.c.l.b16 %v202
    %v431 = vunpack.c.h.b16 %v202
    %v432 = vunpack.c.l.b16 %v203
    %v433 = vunpack.c.h.b16 %v203
    %v434 = vunpack.c.l.b16 %v204
    %v435 = vunpack.c.h.b16 %v204
    %v436 = vunpack.c.l.b16 %v205
    %v437 = vunpack.c.h.b16 %v205
    %v438 = vunpack.c.l.b16 %v206
    %v439 = vunpack.c.h.b16 %v206
    %v440 = vunpack.c.l.b16 %v207
    %v441 = vunpack.c.h.b16 %v207
    %v442 = vunpack.c.l.b16 %v208
    %v443 = vunpack.c.h.b16 %v208
    %v444 = vunpack.c.l.b16 %v209
    %v445 = vunpack.c.h.b16 %v209
    %v446 = vunpack.c.l.b16 %v210
    %v447 = vunpack.c.h.b16 %v210
    %v448 = vunpack.c.l.b16 %v211
    %v449 = vunpack.c.h.b16 %v211
    %v450 = vunpack.c.l.b16 %v212
    %v451 = vunpack.c.h.b16 %v212
    %v452 = vunpack.c.l.b16 %v213
    %v453 = vunpack.c.h.b16 %v213
    %v454 = vpack.c.b16 %v334, %v326
    %v455 = vpack.c.b16 %v335, %v327
    %v456 = vpack.c.b16 %v336, %v328
    %v457 = vpack.c.b16 %v337, %v329
    %v458 = vpack.c.b16 %v338, %v330
    %v459 = vpack.c.b16 %v339, %v331
    %v460 = vpack.c.b16 %v340, %v332
    %v461 = vpack.c.b16 %v341, %v333
    %v462 = vpack.c.b16 %v350, %v342
    %v463 = vpack.c.b16 %v351, %v343
    %v464 = vpack.c.b16 %v352, %v344
    %v465 = vpack.c.b16 %v353, %v345
    %v466 = vpack.c.b16 %v354, %v346
    %v467 = vpack.c.b16 %v355, %v347
    %v468 = vpack.c.b16 %v356, %v348
    %v469 = vpack.c.b16 %v357, %v349
    %v470 = vpack.c.b16 %v366, %v358
    %v471 = vpack.c.b16 %v367, %v359
    %v472 = vpack.c.b16 %v368, %v360
    %v473 = vpack.c.b16 %v369, %v361
    %v474 = vpack.c.b16 %v370, %v362
    %v475 = vpack.c.b16 %v371, %v363
    %v476 = vpack.c.b16 %v372, %v364
    %v477 = vpack.c.b16 %v373, %v365
    %v478 = vpack.c.b16 %v382, %v374
    %v479 = vpack.c.b16 %v383, %v375
    %v480 = vpack.c.b16 %v384, %v376
    %v481 = vpack.c.b16 %v385, %v377
    %v482 = vpack.c.b16 %v386, %v378
    %v483 = vpack.c.b16 %v387, %v379
    %v484 = vpack.c.b16 %v388, %v380
    %v485 = vpack.c.b16 %v389, %v381
    %v486 = vpack.c.b16 %v398, %v390
    %v487 = vpack.c.b16 %v399, %v391
    %v488 = vpack.c.b16 %v400, %v392
    %v489 = vpack.c.b16 %v401, %v393
    %v490 = vpack.c.b16 %v402, %v394
    %v491 = vpack.c.b16 %v403, %v395
    %v492 = vpack.c.b16 %v404, %v396
    %v493 = vpack.c.b16 %v405, %v397
    %v494 = vpack.c.b16 %v414, %v406
    %v495 = vpack.c.b16 %v415, %v407
    %v496 = vpack.c.b16 %v416, %v408
    %v497 = vpack.c.b16 %v417, %v409
    %v498 = vpack.c.b16 %v418, %v410
    %v499 = vpack.c.b16 %v419, %v411
    %v500 = vpack.c.b16 %v420, %v412
    %v501 = vpack.c.b16 %v421, %v413
    %v502 = vpack.c.b16 %v430, %v422
    %v503 = vpack.c.b16 %v431, %v423
    %v504 = vpack.c.b16 %v432, %v424
    %v505 = vpack.c.b16 %v433, %v425
    %v506 = vpack.c.b16 %v434, %v426
    %v507 = vpack.c.b16 %v435, %v427
    %v508 = vpack.c.b16 %v436, %v428
    %v509 = vpack.c.b16 %v437, %v429
    %v510 = vpack.c.b16 %v446, %v438
    %v511 = vpack.c.b16 %v447, %v439
    %v512 = vpack.c.b16 %v448, %v440
    %v513 = vpack.c.b16 %v449, %v441
    %v514 = vpack.c.b16 %v450, %v442
    %v515 = vpack.c.b16 %v451, %v443
    %v516 = vpack.c.b16 %v452, %v444
    %v517 = vpack.c.b16 %v453, %v445
    %582 = vmatprep.subr.bf16.mxu0 %v455
    %583 = vmatpush1.bf16.msra.mxu0 %v454
    %584 = vmatprep.subr.bf16.mxu0 %v463
    %585 = vmatpush1.bf16.msra.mxu0 %v462
    %586 = vmatprep.subr.bf16.mxu0 %v471
    %587 = vmatpush1.bf16.msra.mxu0 %v470
    %588 = vmatprep.subr.bf16.mxu0 %v479
    %589 = vmatpush1.bf16.msra.mxu0 %v478
    %590 = vmatprep.subr.bf16.mxu0 %v487
    %591 = vmatpush1.bf16.msra.mxu0 %v486
    %592 = vmatprep.subr.bf16.mxu0 %v495
    %593 = vmatpush1.bf16.msra.mxu0 %v494
    %594 = vmatprep.subr.bf16.mxu0 %v503
    %595 = vmatpush1.bf16.msra.mxu0 %v502
    %596 = vmatprep.subr.bf16.mxu0 %v511
    %597 = vmatpush1.bf16.msra.mxu0 %v510
    %598 = vmatprep.subr.bf16.mxu0 0
    %599 = vmatpush1.bf16.msra.mxu0 0
    %600 = vmatprep.subr.bf16.mxu0 0
    %601 = vmatpush1.bf16.msra.mxu0 0
    %602 = vmatprep.subr.bf16.mxu0 0
    %603 = vmatpush1.bf16.msra.mxu0 0
    %604 = vmatprep.subr.bf16.mxu0 0
    %605 = vmatpush1.bf16.msra.mxu0 0
    %606 = vmatprep.subr.bf16.mxu0 0
    %607 = vmatpush1.bf16.msra.mxu0 0
    %608 = vmatprep.subr.bf16.mxu0 0
    %609 = vmatpush1.bf16.msra.mxu0 0
    %610 = vmatprep.subr.bf16.mxu0 0
    %611 = vmatpush1.bf16.msra.mxu0 0
    %612 = vmatprep.subr.bf16.mxu0 0
    %613 = vmatpush1.bf16.msra.mxu0 0
    %614 = vmatprep.mubr.bf16.mxu0 0
    %615 = vmatmul.mubr.bf16.gmra.mrb[0].mxu0 %v260
    %v616 = vpop.f32.mrb[0].mxu0
    %v617 = vadd.f32 %v219, %v616
    %v618 = vpop.f32.mrb[0].mxu0
    %v619 = vadd.f32 %v223, %v618
    %v620 = vpop.f32.mrb[0].mxu0
    %v621 = vadd.f32 %v219, %v620
    %v622 = vpop.f32.mrb[0].mxu0
    %v623 = vadd.f32 %v223, %v622
    %624 = vdwg.mxu0
    %625 = vmatprep.subr.bf16.mxu0 %v457
    %626 = vmatpush1.bf16.msra.mxu0 %v456
    %627 = vmatprep.subr.bf16.mxu0 %v465
    %628 = vmatpush1.bf16.msra.mxu0 %v464
    %629 = vmatprep.subr.bf16.mxu0 %v473
    %630 = vmatpush1.bf16.msra.mxu0 %v472
    %631 = vmatprep.subr.bf16.mxu0 %v481
    %632 = vmatpush1.bf16.msra.mxu0 %v480
    %633 = vmatprep.subr.bf16.mxu0 %v489
    %634 = vmatpush1.bf16.msra.mxu0 %v488
    %635 = vmatprep.subr.bf16.mxu0 %v497
    %636 = vmatpush1.bf16.msra.mxu0 %v496
    %637 = vmatprep.subr.bf16.mxu0 %v505
    %638 = vmatpush1.bf16.msra.mxu0 %v504
    %639 = vmatprep.subr.bf16.mxu0 %v513
    %640 = vmatpush1.bf16.msra.mxu0 %v512
    %641 = vmatprep.subr.bf16.mxu0 0
    %642 = vmatpush1.bf16.msra.mxu0 0
    %643 = vmatprep.subr.bf16.mxu0 0
    %644 = vmatpush1.bf16.msra.mxu0 0
    %645 = vmatprep.subr.bf16.mxu0 0
    %646 = vmatpush1.bf16.msra.mxu0 0
    %647 = vmatprep.subr.bf16.mxu0 0
    %648 = vmatpush1.bf16.msra.mxu0 0
    %649 = vmatprep.subr.bf16.mxu0 0
    %650 = vmatpush1.bf16.msra.mxu0 0
    %651 = vmatprep.subr.bf16.mxu0 0
    %652 = vmatpush1.bf16.msra.mxu0 0
    %653 = vmatprep.subr.bf16.mxu0 0
    %654 = vmatpush1.bf16.msra.mxu0 0
    %655 = vmatprep.subr.bf16.mxu0 0
    %656 = vmatpush1.bf16.msra.mxu0 0
    %657 = vmatprep.mubr.bf16.mxu0 0
    %658 = vmatmul.mubr.bf16.gmra.mrb[0].mxu0 %v260
    %v659 = vpop.f32.mrb[0].mxu0
    %v660 = vadd.f32 %v227, %v659
    %v661 = vpop.f32.mrb[0].mxu0
    %v662 = vadd.f32 %v231, %v661
    %v663 = vpop.f32.mrb[0].mxu0
    %v664 = vadd.f32 %v227, %v663
    %v665 = vpop.f32.mrb[0].mxu0
    %v666 = vadd.f32 %v231, %v665
    %667 = vdwg.mxu0
    %668 = vmatprep.subr.bf16.mxu0 %v459
    %669 = vmatpush1.bf16.msra.mxu0 %v458
    %670 = vmatprep.subr.bf16.mxu0 %v467
    %671 = vmatpush1.bf16.msra.mxu0 %v466
    %672 = vmatprep.subr.bf16.mxu0 %v475
    %673 = vmatpush1.bf16.msra.mxu0 %v474
    %674 = vmatprep.subr.bf16.mxu0 %v483
    %675 = vmatpush1.bf16.msra.mxu0 %v482
    %676 = vmatprep.subr.bf16.mxu0 %v491
    %677 = vmatpush1.bf16.msra.mxu0 %v490
    %678 = vmatprep.subr.bf16.mxu0 %v499
    %679 = vmatpush1.bf16.msra.mxu0 %v498
    %680 = vmatprep.subr.bf16.mxu0 %v507
    %681 = vmatpush1.bf16.msra.mxu0 %v506
    %682 = vmatprep.subr.bf16.mxu0 %v515
    %683 = vmatpush1.bf16.msra.mxu0 %v514
    %684 = vmatprep.subr.bf16.mxu0 0
    %685 = vmatpush1.bf16.msra.mxu0 0
    %686 = vmatprep.subr.bf16.mxu0 0
    %687 = vmatpush1.bf16.msra.mxu0 0
    %688 = vmatprep.subr.bf16.mxu0 0
    %689 = vmatpush1.bf16.msra.mxu0 0
    %690 = vmatprep.subr.bf16.mxu0 0
    %691 = vmatpush1.bf16.msra.mxu0 0
    %692 = vmatprep.subr.bf16.mxu0 0
    %693 = vmatpush1.bf16.msra.mxu0 0
    %694 = vmatprep.subr.bf16.mxu0 0
    %695 = vmatpush1.bf16.msra.mxu0 0
    %696 = vmatprep.subr.bf16.mxu0 0
    %697 = vmatpush1.bf16.msra.mxu0 0
    %698 = vmatprep.subr.bf16.mxu0 0
    %699 = vmatpush1.bf16.msra.mxu0 0
    %700 = vmatprep.mubr.bf16.mxu0 0
    %701 = vmatmul.mubr.bf16.gmra.mrb[0].mxu0 %v260
    %v702 = vpop.f32.mrb[0].mxu0
    %v703 = vadd.f32 %v235, %v702
    %v704 = vpop.f32.mrb[0].mxu0
    %v705 = vadd.f32 %v239, %v704
    %v706 = vpop.f32.mrb[0].mxu0
    %v707 = vadd.f32 %v235, %v706
    %v708 = vpop.f32.mrb[0].mxu0
    %v709 = vadd.f32 %v239, %v708
    %710 = vdwg.mxu0
    %711 = vmatprep.subr.bf16.mxu0 %v461
    %712 = vmatpush1.bf16.msra.mxu0 %v460
    %713 = vmatprep.subr.bf16.mxu0 %v469
    %714 = vmatpush1.bf16.msra.mxu0 %v468
    %715 = vmatprep.subr.bf16.mxu0 %v477
    %716 = vmatpush1.bf16.msra.mxu0 %v476
    %717 = vmatprep.subr.bf16.mxu0 %v485
    %718 = vmatpush1.bf16.msra.mxu0 %v484
    %719 = vmatprep.subr.bf16.mxu0 %v493
    %720 = vmatpush1.bf16.msra.mxu0 %v492
    %721 = vmatprep.subr.bf16.mxu0 %v501
    %722 = vmatpush1.bf16.msra.mxu0 %v500
    %723 = vmatprep.subr.bf16.mxu0 %v509
    %724 = vmatpush1.bf16.msra.mxu0 %v508
    %725 = vmatprep.subr.bf16.mxu0 %v517
    %726 = vmatpush1.bf16.msra.mxu0 %v516
    %727 = vmatprep.subr.bf16.mxu0 0
    %728 = vmatpush1.bf16.msra.mxu0 0
    %729 = vmatprep.subr.bf16.mxu0 0
    %730 = vmatpush1.bf16.msra.mxu0 0
    %731 = vmatprep.subr.bf16.mxu0 0
    %732 = vmatpush1.bf16.msra.mxu0 0
    %733 = vmatprep.subr.bf16.mxu0 0
    %734 = vmatpush1.bf16.msra.mxu0 0
    %735 = vmatprep.subr.bf16.mxu0 0
    %736 = vmatpush1.bf16.msra.mxu0 0
    %737 = vmatprep.subr.bf16.mxu0 0
    %738 = vmatpush1.bf16.msra.mxu0 0
    %739 = vmatprep.subr.bf16.mxu0 0
    %740 = vmatpush1.bf16.msra.mxu0 0
    %741 = vmatprep.subr.bf16.mxu0 0
    %742 = vmatpush1.bf16.msra.mxu0 0
    %743 = vmatprep.mubr.bf16.mxu0 0
    %744 = vmatmul.mubr.bf16.gmra.mrb[0].mxu0 %v260
    %v745 = vpop.f32.mrb[0].mxu0
    %v746 = vadd.f32 %v243, %v745
    %v747 = vpop.f32.mrb[0].mxu0
    %v748 = vadd.f32 %v247, %v747
    %v749 = vpop.f32.mrb[0].mxu0
    %v750 = vadd.f32 %v243, %v749
    %v751 = vpop.f32.mrb[0].mxu0
    %v752 = vadd.f32 %v247, %v751
    %753 = vdwg.mxu0
    %vm754 = vcmp.gt.f32.partialorder %v617, 0.0
    %vm755 = vcmp.gt.f32.partialorder %v619, 0.0
    %vm756 = vcmp.gt.f32.partialorder %v660, 0.0
    %vm757 = vcmp.gt.f32.partialorder %v662, 0.0
    %vm758 = vcmp.gt.f32.partialorder %v703, 0.0
    %vm759 = vcmp.gt.f32.partialorder %v705, 0.0
    %vm760 = vcmp.gt.f32.partialorder %v746, 0.0
    %vm761 = vcmp.gt.f32.partialorder %v748, 0.0
    %vm762 = vcmp.gt.f32.partialorder %v621, 0.0
    %vm763 = vcmp.gt.f32.partialorder %v623, 0.0
    %vm764 = vcmp.gt.f32.partialorder %v664, 0.0
    %vm765 = vcmp.gt.f32.partialorder %v666, 0.0
    %vm766 = vcmp.gt.f32.partialorder %v707, 0.0
    %vm767 = vcmp.gt.f32.partialorder %v709, 0.0
    %vm768 = vcmp.gt.f32.partialorder %v750, 0.0
    %vm769 = vcmp.gt.f32.partialorder %v752, 0.0
    %v770 = vmul.f32 %v617, 0.01
    %v771 = vmul.f32 %v619, 0.01
    %v772 = vmul.f32 %v660, 0.01
    %v773 = vmul.f32 %v662, 0.01
    %v774 = vmul.f32 %v703, 0.01
    %v775 = vmul.f32 %v705, 0.01
    %v776 = vmul.f32 %v746, 0.01
    %v777 = vmul.f32 %v748, 0.01
    %v778 = vmul.f32 %v621, 0.01
    %v779 = vmul.f32 %v623, 0.01
    %v780 = vmul.f32 %v664, 0.01
    %v781 = vmul.f32 %v666, 0.01
    %v782 = vmul.f32 %v707, 0.01
    %v783 = vmul.f32 %v709, 0.01
    %v784 = vmul.f32 %v750, 0.01
    %v785 = vmul.f32 %v752, 0.01
    %v786 = vsel %vm754, %v617, %v770
    %v787 = vsel %vm755, %v619, %v771
    %v788 = vsel %vm756, %v660, %v772
    %v789 = vsel %vm757, %v662, %v773
    %v790 = vsel %vm758, %v703, %v774
    %v791 = vsel %vm759, %v705, %v775
    %v792 = vsel %vm760, %v746, %v776
    %v793 = vsel %vm761, %v748, %v777
    %v794 = vsel %vm762, %v621, %v778
    %v795 = vsel %vm763, %v623, %v779
    %v796 = vsel %vm764, %v664, %v780
    %v797 = vsel %vm765, %v666, %v781
    %v798 = vsel %vm766, %v707, %v782
    %v799 = vsel %vm767, %v709, %v783
    %v800 = vsel %vm768, %v750, %v784
    %v801 = vsel %vm769, %v752, %v785
    %v802 = vpack.c.bf16 %v794, %v786
    %v803 = vpack.c.bf16 %v795, %v787
    %v804 = vpack.c.bf16 %v796, %v788
    %v805 = vpack.c.bf16 %v797, %v789
    %v806 = vpack.c.bf16 %v798, %v790
    %v807 = vpack.c.bf16 %v799, %v791
    %v808 = vpack.c.bf16 %v800, %v792
    %v809 = vpack.c.bf16 %v801, %v793
    %v810 = vld [vmem:[#allocation8] sm:$0xff]
    %v811 = vld [vmem:[#allocation8 + $0x8] sm:$0xff]
    %v812 = vld [vmem:[#allocation8 + $0x10] sm:$0xff]
    %v813 = vld [vmem:[#allocation8 + $0x18] sm:$0xff]
    %v814 = vld [vmem:[#allocation8 + $0x20] sm:$0xff]
    %v815 = vld [vmem:[#allocation8 + $0x28] sm:$0xff]
    %v816 = vld [vmem:[#allocation8 + $0x30] sm:$0xff]
    %v817 = vld [vmem:[#allocation8 + $0x38] sm:$0xff]
    %v818 = vld [vmem:[#allocation8 + $0x40] sm:$0xff]
    %v819 = vld [vmem:[#allocation8 + $0x48] sm:$0xff]
    %v820 = vld [vmem:[#allocation8 + $0x50] sm:$0xff]
    %v821 = vld [vmem:[#allocation8 + $0x58] sm:$0xff]
    %v822 = vld [vmem:[#allocation8 + $0x60] sm:$0xff]
    %v823 = vld [vmem:[#allocation8 + $0x68] sm:$0xff]
    %v824 = vld [vmem:[#allocation8 + $0x70] sm:$0xff]
    %v825 = vld [vmem:[#allocation8 + $0x78] sm:$0xff]
    %v826 = vld [vmem:[#allocation8 + $0x80] sm:$0xff]
    %v827 = vld [vmem:[#allocation8 + $0x88] sm:$0xff]
    %v828 = vld [vmem:[#allocation8 + $0x90] sm:$0xff]
    %v829 = vld [vmem:[#allocation8 + $0x98] sm:$0xff]
    %v830 = vld [vmem:[#allocation8 + $0xa0] sm:$0xff]
    %v831 = vld [vmem:[#allocation8 + $0xa8] sm:$0xff]
    %v832 = vld [vmem:[#allocation8 + $0xb0] sm:$0xff]
    %v833 = vld [vmem:[#allocation8 + $0xb8] sm:$0xff]
    %v834 = vld [vmem:[#allocation8 + $0xc0] sm:$0xff]
    %v835 = vld [vmem:[#allocation8 + $0xc8] sm:$0xff]
    %v836 = vld [vmem:[#allocation8 + $0xd0] sm:$0xff]
    %v837 = vld [vmem:[#allocation8 + $0xd8] sm:$0xff]
    %v838 = vld [vmem:[#allocation8 + $0xe0] sm:$0xff]
    %v839 = vld [vmem:[#allocation8 + $0xe8] sm:$0xff]
    %v840 = vld [vmem:[#allocation8 + $0xf0] sm:$0xff]
    %v841 = vld [vmem:[#allocation8 + $0xf8] sm:$0xff]
    %v842 = vld [vmem:[#allocation8 + $0x100] sm:$0xff]
    %v843 = vld [vmem:[#allocation8 + $0x108] sm:$0xff]
    %v844 = vld [vmem:[#allocation8 + $0x110] sm:$0xff]
    %v845 = vld [vmem:[#allocation8 + $0x118] sm:$0xff]
    %v846 = vld [vmem:[#allocation8 + $0x120] sm:$0xff]
    %v847 = vld [vmem:[#allocation8 + $0x128] sm:$0xff]
    %v848 = vld [vmem:[#allocation8 + $0x130] sm:$0xff]
    %v849 = vld [vmem:[#allocation8 + $0x138] sm:$0xff]
    %v850 = vld [vmem:[#allocation8 + $0x140] sm:$0xff]
    %v851 = vld [vmem:[#allocation8 + $0x148] sm:$0xff]
    %v852 = vld [vmem:[#allocation8 + $0x150] sm:$0xff]
    %v853 = vld [vmem:[#allocation8 + $0x158] sm:$0xff]
    %v854 = vld [vmem:[#allocation8 + $0x160] sm:$0xff]
    %v855 = vld [vmem:[#allocation8 + $0x168] sm:$0xff]
    %v856 = vld [vmem:[#allocation8 + $0x170] sm:$0xff]
    %v857 = vld [vmem:[#allocation8 + $0x178] sm:$0xff]
    %v858 = vld [vmem:[#allocation8 + $0x180] sm:$0xff]
    %v859 = vld [vmem:[#allocation8 + $0x188] sm:$0xff]
    %v860 = vld [vmem:[#allocation8 + $0x190] sm:$0xff]
    %v861 = vld [vmem:[#allocation8 + $0x198] sm:$0xff]
    %v862 = vld [vmem:[#allocation8 + $0x1a0] sm:$0xff]
    %v863 = vld [vmem:[#allocation8 + $0x1a8] sm:$0xff]
    %v864 = vld [vmem:[#allocation8 + $0x1b0] sm:$0xff]
    %v865 = vld [vmem:[#allocation8 + $0x1b8] sm:$0xff]
    %v866 = vld [vmem:[#allocation8 + $0x1c0] sm:$0xff]
    %v867 = vld [vmem:[#allocation8 + $0x1c8] sm:$0xff]
    %v868 = vld [vmem:[#allocation8 + $0x1d0] sm:$0xff]
    %v869 = vld [vmem:[#allocation8 + $0x1d8] sm:$0xff]
    %v870 = vld [vmem:[#allocation8 + $0x1e0] sm:$0xff]
    %v871 = vld [vmem:[#allocation8 + $0x1e8] sm:$0xff]
    %v872 = vld [vmem:[#allocation8 + $0x1f0] sm:$0xff]
    %v873 = vld [vmem:[#allocation8 + $0x1f8] sm:$0xff]
    %v874 = vld [vmem:[#allocation8 + $0x200] sm:$0xff]
    %v875 = vld [vmem:[#allocation8 + $0x208] sm:$0xff]
    %v876 = vld [vmem:[#allocation8 + $0x210] sm:$0xff]
    %v877 = vld [vmem:[#allocation8 + $0x218] sm:$0xff]
    %v878 = vld [vmem:[#allocation8 + $0x220] sm:$0xff]
    %v879 = vld [vmem:[#allocation8 + $0x228] sm:$0xff]
    %v880 = vld [vmem:[#allocation8 + $0x230] sm:$0xff]
    %v881 = vld [vmem:[#allocation8 + $0x238] sm:$0xff]
    %v882 = vld [vmem:[#allocation8 + $0x240] sm:$0xff]
    %v883 = vld [vmem:[#allocation8 + $0x248] sm:$0xff]
    %v884 = vld [vmem:[#allocation8 + $0x250] sm:$0xff]
    %v885 = vld [vmem:[#allocation8 + $0x258] sm:$0xff]
    %v886 = vld [vmem:[#allocation8 + $0x260] sm:$0xff]
    %v887 = vld [vmem:[#allocation8 + $0x268] sm:$0xff]
    %v888 = vld [vmem:[#allocation8 + $0x270] sm:$0xff]
    %v889 = vld [vmem:[#allocation8 + $0x278] sm:$0xff]
    %v890 = vld [vmem:[#allocation8 + $0x280] sm:$0xff]
    %v891 = vld [vmem:[#allocation8 + $0x288] sm:$0xff]
    %v892 = vld [vmem:[#allocation8 + $0x290] sm:$0xff]
    %v893 = vld [vmem:[#allocation8 + $0x298] sm:$0xff]
    %v894 = vld [vmem:[#allocation8 + $0x2a0] sm:$0xff]
    %v895 = vld [vmem:[#allocation8 + $0x2a8] sm:$0xff]
    %v896 = vld [vmem:[#allocation8 + $0x2b0] sm:$0xff]
    %v897 = vld [vmem:[#allocation8 + $0x2b8] sm:$0xff]
    %v898 = vld [vmem:[#allocation8 + $0x2c0] sm:$0xff]
    %v899 = vld [vmem:[#allocation8 + $0x2c8] sm:$0xff]
    %v900 = vld [vmem:[#allocation8 + $0x2d0] sm:$0xff]
    %v901 = vld [vmem:[#allocation8 + $0x2d8] sm:$0xff]
    %v902 = vld [vmem:[#allocation8 + $0x2e0] sm:$0xff]
    %v903 = vld [vmem:[#allocation8 + $0x2e8] sm:$0xff]
    %v904 = vld [vmem:[#allocation8 + $0x2f0] sm:$0xff]
    %v905 = vld [vmem:[#allocation8 + $0x2f8] sm:$0xff]
    %v906 = vld [vmem:[#allocation8 + $0x300] sm:$0xff]
    %v907 = vld [vmem:[#allocation8 + $0x308] sm:$0xff]
    %v908 = vld [vmem:[#allocation8 + $0x310] sm:$0xff]
    %v909 = vld [vmem:[#allocation8 + $0x318] sm:$0xff]
    %v910 = vld [vmem:[#allocation8 + $0x320] sm:$0xff]
    %v911 = vld [vmem:[#allocation8 + $0x328] sm:$0xff]
    %v912 = vld [vmem:[#allocation8 + $0x330] sm:$0xff]
    %v913 = vld [vmem:[#allocation8 + $0x338] sm:$0xff]
    %v914 = vld [vmem:[#allocation8 + $0x340] sm:$0xff]
    %v915 = vld [vmem:[#allocation8 + $0x348] sm:$0xff]
    %v916 = vld [vmem:[#allocation8 + $0x350] sm:$0xff]
    %v917 = vld [vmem:[#allocation8 + $0x358] sm:$0xff]
    %v918 = vld [vmem:[#allocation8 + $0x360] sm:$0xff]
    %v919 = vld [vmem:[#allocation8 + $0x368] sm:$0xff]
    %v920 = vld [vmem:[#allocation8 + $0x370] sm:$0xff]
    %v921 = vld [vmem:[#allocation8 + $0x378] sm:$0xff]
    %v922 = vld [vmem:[#allocation8 + $0x380] sm:$0xff]
    %v923 = vld [vmem:[#allocation8 + $0x388] sm:$0xff]
    %v924 = vld [vmem:[#allocation8 + $0x390] sm:$0xff]
    %v925 = vld [vmem:[#allocation8 + $0x398] sm:$0xff]
    %v926 = vld [vmem:[#allocation8 + $0x3a0] sm:$0xff]
    %v927 = vld [vmem:[#allocation8 + $0x3a8] sm:$0xff]
    %v928 = vld [vmem:[#allocation8 + $0x3b0] sm:$0xff]
    %v929 = vld [vmem:[#allocation8 + $0x3b8] sm:$0xff]
    %v930 = vld [vmem:[#allocation8 + $0x3c0] sm:$0xff]
    %v931 = vld [vmem:[#allocation8 + $0x3c8] sm:$0xff]
    %v932 = vld [vmem:[#allocation8 + $0x3d0] sm:$0xff]
    %v933 = vld [vmem:[#allocation8 + $0x3d8] sm:$0xff]
    %v934 = vld [vmem:[#allocation8 + $0x3e0] sm:$0xff]
    %v935 = vld [vmem:[#allocation8 + $0x3e8] sm:$0xff]
    %v936 = vld [vmem:[#allocation8 + $0x3f0] sm:$0xff]
    %v937 = vld [vmem:[#allocation8 + $0x3f8] sm:$0xff]
    %v938 = vld [vmem:[#allocation8 + $0x400] sm:$0xff]
    %v939 = vld [vmem:[#allocation8 + $0x408] sm:$0xff]
    %v940 = vld [vmem:[#allocation8 + $0x410] sm:$0xff]
    %v941 = vld [vmem:[#allocation8 + $0x418] sm:$0xff]
    %v942 = vld [vmem:[#allocation8 + $0x420] sm:$0xff]
    %v943 = vld [vmem:[#allocation8 + $0x428] sm:$0xff]
    %v944 = vld [vmem:[#allocation8 + $0x430] sm:$0xff]
    %v945 = vld [vmem:[#allocation8 + $0x438] sm:$0xff]
    %v946 = vld [vmem:[#allocation8 + $0x440] sm:$0xff]
    %v947 = vld [vmem:[#allocation8 + $0x448] sm:$0xff]
    %v948 = vld [vmem:[#allocation8 + $0x450] sm:$0xff]
    %v949 = vld [vmem:[#allocation8 + $0x458] sm:$0xff]
    %v950 = vld [vmem:[#allocation8 + $0x460] sm:$0xff]
    %v951 = vld [vmem:[#allocation8 + $0x468] sm:$0xff]
    %v952 = vld [vmem:[#allocation8 + $0x470] sm:$0xff]
    %v953 = vld [vmem:[#allocation8 + $0x478] sm:$0xff]
    %v954 = vld [vmem:[#allocation8 + $0x480] sm:$0xff]
    %v955 = vld [vmem:[#allocation8 + $0x488] sm:$0xff]
    %v956 = vld [vmem:[#allocation8 + $0x490] sm:$0xff]
    %v957 = vld [vmem:[#allocation8 + $0x498] sm:$0xff]
    %v958 = vld [vmem:[#allocation8 + $0x4a0] sm:$0xff]
    %v959 = vld [vmem:[#allocation8 + $0x4a8] sm:$0xff]
    %v960 = vld [vmem:[#allocation8 + $0x4b0] sm:$0xff]
    %v961 = vld [vmem:[#allocation8 + $0x4b8] sm:$0xff]
    %v962 = vld [vmem:[#allocation8 + $0x4c0] sm:$0xff]
    %v963 = vld [vmem:[#allocation8 + $0x4c8] sm:$0xff]
    %v964 = vld [vmem:[#allocation8 + $0x4d0] sm:$0xff]
    %v965 = vld [vmem:[#allocation8 + $0x4d8] sm:$0xff]
    %v966 = vld [vmem:[#allocation8 + $0x4e0] sm:$0xff]
    %v967 = vld [vmem:[#allocation8 + $0x4e8] sm:$0xff]
    %v968 = vld [vmem:[#allocation8 + $0x4f0] sm:$0xff]
    %v969 = vld [vmem:[#allocation8 + $0x4f8] sm:$0xff]
    %v970 = vld [vmem:[#allocation8 + $0x500] sm:$0xff]
    %v971 = vld [vmem:[#allocation8 + $0x508] sm:$0xff]
    %v972 = vld [vmem:[#allocation8 + $0x510] sm:$0xff]
    %v973 = vld [vmem:[#allocation8 + $0x518] sm:$0xff]
    %v974 = vld [vmem:[#allocation8 + $0x520] sm:$0xff]
    %v975 = vld [vmem:[#allocation8 + $0x528] sm:$0xff]
    %v976 = vld [vmem:[#allocation8 + $0x530] sm:$0xff]
    %v977 = vld [vmem:[#allocation8 + $0x538] sm:$0xff]
    %v978 = vld [vmem:[#allocation8 + $0x540] sm:$0xff]
    %v979 = vld [vmem:[#allocation8 + $0x548] sm:$0xff]
    %v980 = vld [vmem:[#allocation8 + $0x550] sm:$0xff]
    %v981 = vld [vmem:[#allocation8 + $0x558] sm:$0xff]
    %v982 = vld [vmem:[#allocation8 + $0x560] sm:$0xff]
    %v983 = vld [vmem:[#allocation8 + $0x568] sm:$0xff]
    %v984 = vld [vmem:[#allocation8 + $0x570] sm:$0xff]
    %v985 = vld [vmem:[#allocation8 + $0x578] sm:$0xff]
    %v986 = vld [vmem:[#allocation8 + $0x580] sm:$0xff]
    %v987 = vld [vmem:[#allocation8 + $0x588] sm:$0xff]
    %v988 = vld [vmem:[#allocation8 + $0x590] sm:$0xff]
    %v989 = vld [vmem:[#allocation8 + $0x598] sm:$0xff]
    %v990 = vld [vmem:[#allocation8 + $0x5a0] sm:$0xff]
    %v991 = vld [vmem:[#allocation8 + $0x5a8] sm:$0xff]
    %v992 = vld [vmem:[#allocation8 + $0x5b0] sm:$0xff]
    %v993 = vld [vmem:[#allocation8 + $0x5b8] sm:$0xff]
    %v994 = vld [vmem:[#allocation8 + $0x5c0] sm:$0xff]
    %v995 = vld [vmem:[#allocation8 + $0x5c8] sm:$0xff]
    %v996 = vld [vmem:[#allocation8 + $0x5d0] sm:$0xff]
    %v997 = vld [vmem:[#allocation8 + $0x5d8] sm:$0xff]
    %v998 = vld [vmem:[#allocation8 + $0x5e0] sm:$0xff]
    %v999 = vld [vmem:[#allocation8 + $0x5e8] sm:$0xff]
    %v1000 = vld [vmem:[#allocation8 + $0x5f0] sm:$0xff]
    %v1001 = vld [vmem:[#allocation8 + $0x5f8] sm:$0xff]
    %v1002 = vld [vmem:[#allocation8 + $0x600] sm:$0xff]
    %v1003 = vld [vmem:[#allocation8 + $0x608] sm:$0xff]
    %v1004 = vld [vmem:[#allocation8 + $0x610] sm:$0xff]
    %v1005 = vld [vmem:[#allocation8 + $0x618] sm:$0xff]
    %v1006 = vld [vmem:[#allocation8 + $0x620] sm:$0xff]
    %v1007 = vld [vmem:[#allocation8 + $0x628] sm:$0xff]
    %v1008 = vld [vmem:[#allocation8 + $0x630] sm:$0xff]
    %v1009 = vld [vmem:[#allocation8 + $0x638] sm:$0xff]
    %v1010 = vld [vmem:[#allocation8 + $0x640] sm:$0xff]
    %v1011 = vld [vmem:[#allocation8 + $0x648] sm:$0xff]
    %v1012 = vld [vmem:[#allocation8 + $0x650] sm:$0xff]
    %v1013 = vld [vmem:[#allocation8 + $0x658] sm:$0xff]
    %v1014 = vld [vmem:[#allocation8 + $0x660] sm:$0xff]
    %v1015 = vld [vmem:[#allocation8 + $0x668] sm:$0xff]
    %v1016 = vld [vmem:[#allocation8 + $0x670] sm:$0xff]
    %v1017 = vld [vmem:[#allocation8 + $0x678] sm:$0xff]
    %v1018 = vld [vmem:[#allocation8 + $0x680] sm:$0xff]
    %v1019 = vld [vmem:[#allocation8 + $0x688] sm:$0xff]
    %v1020 = vld [vmem:[#allocation8 + $0x690] sm:$0xff]
    %v1021 = vld [vmem:[#allocation8 + $0x698] sm:$0xff]
    %v1022 = vld [vmem:[#allocation8 + $0x6a0] sm:$0xff]
    %v1023 = vld [vmem:[#allocation8 + $0x6a8] sm:$0xff]
    %v1024 = vld [vmem:[#allocation8 + $0x6b0] sm:$0xff]
    %v1025 = vld [vmem:[#allocation8 + $0x6b8] sm:$0xff]
    %v1026 = vld [vmem:[#allocation8 + $0x6c0] sm:$0xff]
    %v1027 = vld [vmem:[#allocation8 + $0x6c8] sm:$0xff]
    %v1028 = vld [vmem:[#allocation8 + $0x6d0] sm:$0xff]
    %v1029 = vld [vmem:[#allocation8 + $0x6d8] sm:$0xff]
    %v1030 = vld [vmem:[#allocation8 + $0x6e0] sm:$0xff]
    %v1031 = vld [vmem:[#allocation8 + $0x6e8] sm:$0xff]
    %v1032 = vld [vmem:[#allocation8 + $0x6f0] sm:$0xff]
    %v1033 = vld [vmem:[#allocation8 + $0x6f8] sm:$0xff]
    %v1034 = vld [vmem:[#allocation8 + $0x700] sm:$0xff]
    %v1035 = vld [vmem:[#allocation8 + $0x708] sm:$0xff]
    %v1036 = vld [vmem:[#allocation8 + $0x710] sm:$0xff]
    %v1037 = vld [vmem:[#allocation8 + $0x718] sm:$0xff]
    %v1038 = vld [vmem:[#allocation8 + $0x720] sm:$0xff]
    %v1039 = vld [vmem:[#allocation8 + $0x728] sm:$0xff]
    %v1040 = vld [vmem:[#allocation8 + $0x730] sm:$0xff]
    %v1041 = vld [vmem:[#allocation8 + $0x738] sm:$0xff]
    %v1042 = vld [vmem:[#allocation8 + $0x740] sm:$0xff]
    %v1043 = vld [vmem:[#allocation8 + $0x748] sm:$0xff]
    %v1044 = vld [vmem:[#allocation8 + $0x750] sm:$0xff]
    %v1045 = vld [vmem:[#allocation8 + $0x758] sm:$0xff]
    %v1046 = vld [vmem:[#allocation8 + $0x760] sm:$0xff]
    %v1047 = vld [vmem:[#allocation8 + $0x768] sm:$0xff]
    %v1048 = vld [vmem:[#allocation8 + $0x770] sm:$0xff]
    %v1049 = vld [vmem:[#allocation8 + $0x778] sm:$0xff]
    %v1050 = vld [vmem:[#allocation8 + $0x780] sm:$0xff]
    %v1051 = vld [vmem:[#allocation8 + $0x788] sm:$0xff]
    %v1052 = vld [vmem:[#allocation8 + $0x790] sm:$0xff]
    %v1053 = vld [vmem:[#allocation8 + $0x798] sm:$0xff]
    %v1054 = vld [vmem:[#allocation8 + $0x7a0] sm:$0xff]
    %v1055 = vld [vmem:[#allocation8 + $0x7a8] sm:$0xff]
    %v1056 = vld [vmem:[#allocation8 + $0x7b0] sm:$0xff]
    %v1057 = vld [vmem:[#allocation8 + $0x7b8] sm:$0xff]
    %v1058 = vld [vmem:[#allocation8 + $0x7c0] sm:$0xff]
    %v1059 = vld [vmem:[#allocation8 + $0x7c8] sm:$0xff]
    %v1060 = vld [vmem:[#allocation8 + $0x7d0] sm:$0xff]
    %v1061 = vld [vmem:[#allocation8 + $0x7d8] sm:$0xff]
    %v1062 = vld [vmem:[#allocation8 + $0x7e0] sm:$0xff]
    %v1063 = vld [vmem:[#allocation8 + $0x7e8] sm:$0xff]
    %v1064 = vld [vmem:[#allocation8 + $0x7f0] sm:$0xff]
    %v1065 = vld [vmem:[#allocation8 + $0x7f8] sm:$0xff]
    %v1066 = vld [vmem:[#allocation8 + $0x800] sm:$0xff]
    %v1067 = vld [vmem:[#allocation8 + $0x808] sm:$0xff]
    %v1068 = vld [vmem:[#allocation8 + $0x810] sm:$0xff]
    %v1069 = vld [vmem:[#allocation8 + $0x818] sm:$0xff]
    %v1070 = vld [vmem:[#allocation8 + $0x820] sm:$0xff]
    %v1071 = vld [vmem:[#allocation8 + $0x828] sm:$0xff]
    %v1072 = vld [vmem:[#allocation8 + $0x830] sm:$0xff]
    %v1073 = vld [vmem:[#allocation8 + $0x838] sm:$0xff]
    %v1074 = vld [vmem:[#allocation8 + $0x840] sm:$0xff]
    %v1075 = vld [vmem:[#allocation8 + $0x848] sm:$0xff]
    %v1076 = vld [vmem:[#allocation8 + $0x850] sm:$0xff]
    %v1077 = vld [vmem:[#allocation8 + $0x858] sm:$0xff]
    %v1078 = vld [vmem:[#allocation8 + $0x860] sm:$0xff]
    %v1079 = vld [vmem:[#allocation8 + $0x868] sm:$0xff]
    %v1080 = vld [vmem:[#allocation8 + $0x870] sm:$0xff]
    %v1081 = vld [vmem:[#allocation8 + $0x878] sm:$0xff]
    %v1082 = vld [vmem:[#allocation8 + $0x880] sm:$0xff]
    %v1083 = vld [vmem:[#allocation8 + $0x888] sm:$0xff]
    %v1084 = vld [vmem:[#allocation8 + $0x890] sm:$0xff]
    %v1085 = vld [vmem:[#allocation8 + $0x898] sm:$0xff]
    %v1086 = vld [vmem:[#allocation8 + $0x8a0] sm:$0xff]
    %v1087 = vld [vmem:[#allocation8 + $0x8a8] sm:$0xff]
    %v1088 = vld [vmem:[#allocation8 + $0x8b0] sm:$0xff]
    %v1089 = vld [vmem:[#allocation8 + $0x8b8] sm:$0xff]
    %v1090 = vld [vmem:[#allocation8 + $0x8c0] sm:$0xff]
    %v1091 = vld [vmem:[#allocation8 + $0x8c8] sm:$0xff]
    %v1092 = vld [vmem:[#allocation8 + $0x8d0] sm:$0xff]
    %v1093 = vld [vmem:[#allocation8 + $0x8d8] sm:$0xff]
    %v1094 = vld [vmem:[#allocation8 + $0x8e0] sm:$0xff]
    %v1095 = vld [vmem:[#allocation8 + $0x8e8] sm:$0xff]
    %v1096 = vld [vmem:[#allocation8 + $0x8f0] sm:$0xff]
    %v1097 = vld [vmem:[#allocation8 + $0x8f8] sm:$0xff]
    %v1098 = vld [vmem:[#allocation8 + $0x900] sm:$0xff]
    %v1099 = vld [vmem:[#allocation8 + $0x908] sm:$0xff]
    %v1100 = vld [vmem:[#allocation8 + $0x910] sm:$0xff]
    %v1101 = vld [vmem:[#allocation8 + $0x918] sm:$0xff]
    %v1102 = vld [vmem:[#allocation8 + $0x920] sm:$0xff]
    %v1103 = vld [vmem:[#allocation8 + $0x928] sm:$0xff]
    %v1104 = vld [vmem:[#allocation8 + $0x930] sm:$0xff]
    %v1105 = vld [vmem:[#allocation8 + $0x938] sm:$0xff]
    %v1106 = vld [vmem:[#allocation8 + $0x940] sm:$0xff]
    %v1107 = vld [vmem:[#allocation8 + $0x948] sm:$0xff]
    %v1108 = vld [vmem:[#allocation8 + $0x950] sm:$0xff]
    %v1109 = vld [vmem:[#allocation8 + $0x958] sm:$0xff]
    %v1110 = vld [vmem:[#allocation8 + $0x960] sm:$0xff]
    %v1111 = vld [vmem:[#allocation8 + $0x968] sm:$0xff]
    %v1112 = vld [vmem:[#allocation8 + $0x970] sm:$0xff]
    %v1113 = vld [vmem:[#allocation8 + $0x978] sm:$0xff]
    %v1114 = vld [vmem:[#allocation8 + $0x980] sm:$0xff]
    %v1115 = vld [vmem:[#allocation8 + $0x988] sm:$0xff]
    %v1116 = vld [vmem:[#allocation8 + $0x990] sm:$0xff]
    %v1117 = vld [vmem:[#allocation8 + $0x998] sm:$0xff]
    %v1118 = vld [vmem:[#allocation8 + $0x9a0] sm:$0xff]
    %v1119 = vld [vmem:[#allocation8 + $0x9a8] sm:$0xff]
    %v1120 = vld [vmem:[#allocation8 + $0x9b0] sm:$0xff]
    %v1121 = vld [vmem:[#allocation8 + $0x9b8] sm:$0xff]
    %v1122 = vld [vmem:[#allocation8 + $0x9c0] sm:$0xff]
    %v1123 = vld [vmem:[#allocation8 + $0x9c8] sm:$0xff]
    %v1124 = vld [vmem:[#allocation8 + $0x9d0] sm:$0xff]
    %v1125 = vld [vmem:[#allocation8 + $0x9d8] sm:$0xff]
    %v1126 = vld [vmem:[#allocation8 + $0x9e0] sm:$0xff]
    %v1127 = vld [vmem:[#allocation8 + $0x9e8] sm:$0xff]
    %v1128 = vld [vmem:[#allocation8 + $0x9f0] sm:$0xff]
    %v1129 = vld [vmem:[#allocation8 + $0x9f8] sm:$0xff]
    %v1130 = vld [vmem:[#allocation8 + $0xa00] sm:$0xff]
    %v1131 = vld [vmem:[#allocation8 + $0xa08] sm:$0xff]
    %v1132 = vld [vmem:[#allocation8 + $0xa10] sm:$0xff]
    %v1133 = vld [vmem:[#allocation8 + $0xa18] sm:$0xff]
    %v1134 = vld [vmem:[#allocation8 + $0xa20] sm:$0xff]
    %v1135 = vld [vmem:[#allocation8 + $0xa28] sm:$0xff]
    %v1136 = vld [vmem:[#allocation8 + $0xa30] sm:$0xff]
    %v1137 = vld [vmem:[#allocation8 + $0xa38] sm:$0xff]
    %v1138 = vld [vmem:[#allocation8 + $0xa40] sm:$0xff]
    %v1139 = vld [vmem:[#allocation8 + $0xa48] sm:$0xff]
    %v1140 = vld [vmem:[#allocation8 + $0xa50] sm:$0xff]
    %v1141 = vld [vmem:[#allocation8 + $0xa58] sm:$0xff]
    %v1142 = vld [vmem:[#allocation8 + $0xa60] sm:$0xff]
    %v1143 = vld [vmem:[#allocation8 + $0xa68] sm:$0xff]
    %v1144 = vld [vmem:[#allocation8 + $0xa70] sm:$0xff]
    %v1145 = vld [vmem:[#allocation8 + $0xa78] sm:$0xff]
    %v1146 = vld [vmem:[#allocation8 + $0xa80] sm:$0xff]
    %v1147 = vld [vmem:[#allocation8 + $0xa88] sm:$0xff]
    %v1148 = vld [vmem:[#allocation8 + $0xa90] sm:$0xff]
    %v1149 = vld [vmem:[#allocation8 + $0xa98] sm:$0xff]
    %v1150 = vld [vmem:[#allocation8 + $0xaa0] sm:$0xff]
    %v1151 = vld [vmem:[#allocation8 + $0xaa8] sm:$0xff]
    %v1152 = vld [vmem:[#allocation8 + $0xab0] sm:$0xff]
    %v1153 = vld [vmem:[#allocation8 + $0xab8] sm:$0xff]
    %v1154 = vld [vmem:[#allocation8 + $0xac0] sm:$0xff]
    %v1155 = vld [vmem:[#allocation8 + $0xac8] sm:$0xff]
    %v1156 = vld [vmem:[#allocation8 + $0xad0] sm:$0xff]
    %v1157 = vld [vmem:[#allocation8 + $0xad8] sm:$0xff]
    %v1158 = vld [vmem:[#allocation8 + $0xae0] sm:$0xff]
    %v1159 = vld [vmem:[#allocation8 + $0xae8] sm:$0xff]
    %v1160 = vld [vmem:[#allocation8 + $0xaf0] sm:$0xff]
    %v1161 = vld [vmem:[#allocation8 + $0xaf8] sm:$0xff]
    %v1162 = vld [vmem:[#allocation8 + $0xb00] sm:$0xff]
    %v1163 = vld [vmem:[#allocation8 + $0xb08] sm:$0xff]
    %v1164 = vld [vmem:[#allocation8 + $0xb10] sm:$0xff]
    %v1165 = vld [vmem:[#allocation8 + $0xb18] sm:$0xff]
    %v1166 = vld [vmem:[#allocation8 + $0xb20] sm:$0xff]
    %v1167 = vld [vmem:[#allocation8 + $0xb28] sm:$0xff]
    %v1168 = vld [vmem:[#allocation8 + $0xb30] sm:$0xff]
    %v1169 = vld [vmem:[#allocation8 + $0xb38] sm:$0xff]
    %v1170 = vld [vmem:[#allocation8 + $0xb40] sm:$0xff]
    %v1171 = vld [vmem:[#allocation8 + $0xb48] sm:$0xff]
    %v1172 = vld [vmem:[#allocation8 + $0xb50] sm:$0xff]
    %v1173 = vld [vmem:[#allocation8 + $0xb58] sm:$0xff]
    %v1174 = vld [vmem:[#allocation8 + $0xb60] sm:$0xff]
    %v1175 = vld [vmem:[#allocation8 + $0xb68] sm:$0xff]
    %v1176 = vld [vmem:[#allocation8 + $0xb70] sm:$0xff]
    %v1177 = vld [vmem:[#allocation8 + $0xb78] sm:$0xff]
    %v1178 = vld [vmem:[#allocation8 + $0xb80] sm:$0xff]
    %v1179 = vld [vmem:[#allocation8 + $0xb88] sm:$0xff]
    %v1180 = vld [vmem:[#allocation8 + $0xb90] sm:$0xff]
    %v1181 = vld [vmem:[#allocation8 + $0xb98] sm:$0xff]
    %v1182 = vld [vmem:[#allocation8 + $0xba0] sm:$0xff]
    %v1183 = vld [vmem:[#allocation8 + $0xba8] sm:$0xff]
    %v1184 = vld [vmem:[#allocation8 + $0xbb0] sm:$0xff]
    %v1185 = vld [vmem:[#allocation8 + $0xbb8] sm:$0xff]
    %v1186 = vld [vmem:[#allocation8 + $0xbc0] sm:$0xff]
    %v1187 = vld [vmem:[#allocation8 + $0xbc8] sm:$0xff]
    %v1188 = vld [vmem:[#allocation8 + $0xbd0] sm:$0xff]
    %v1189 = vld [vmem:[#allocation8 + $0xbd8] sm:$0xff]
    %v1190 = vld [vmem:[#allocation8 + $0xbe0] sm:$0xff]
    %v1191 = vld [vmem:[#allocation8 + $0xbe8] sm:$0xff]
    %v1192 = vld [vmem:[#allocation8 + $0xbf0] sm:$0xff]
    %v1193 = vld [vmem:[#allocation8 + $0xbf8] sm:$0xff]
    %v1194 = vld [vmem:[#allocation8 + $0xc00] sm:$0xff]
    %v1195 = vld [vmem:[#allocation8 + $0xc08] sm:$0xff]
    %v1196 = vld [vmem:[#allocation8 + $0xc10] sm:$0xff]
    %v1197 = vld [vmem:[#allocation8 + $0xc18] sm:$0xff]
    %v1198 = vld [vmem:[#allocation8 + $0xc20] sm:$0xff]
    %v1199 = vld [vmem:[#allocation8 + $0xc28] sm:$0xff]
    %v1200 = vld [vmem:[#allocation8 + $0xc30] sm:$0xff]
    %v1201 = vld [vmem:[#allocation8 + $0xc38] sm:$0xff]
    %v1202 = vld [vmem:[#allocation8 + $0xc40] sm:$0xff]
    %v1203 = vld [vmem:[#allocation8 + $0xc48] sm:$0xff]
    %v1204 = vld [vmem:[#allocation8 + $0xc50] sm:$0xff]
    %v1205 = vld [vmem:[#allocation8 + $0xc58] sm:$0xff]
    %v1206 = vld [vmem:[#allocation8 + $0xc60] sm:$0xff]
    %v1207 = vld [vmem:[#allocation8 + $0xc68] sm:$0xff]
    %v1208 = vld [vmem:[#allocation8 + $0xc70] sm:$0xff]
    %v1209 = vld [vmem:[#allocation8 + $0xc78] sm:$0xff]
    %v1210 = vld [vmem:[#allocation8 + $0xc80] sm:$0xff]
    %v1211 = vld [vmem:[#allocation8 + $0xc88] sm:$0xff]
    %v1212 = vld [vmem:[#allocation8 + $0xc90] sm:$0xff]
    %v1213 = vld [vmem:[#allocation8 + $0xc98] sm:$0xff]
    %v1214 = vld [vmem:[#allocation8 + $0xca0] sm:$0xff]
    %v1215 = vld [vmem:[#allocation8 + $0xca8] sm:$0xff]
    %v1216 = vld [vmem:[#allocation8 + $0xcb0] sm:$0xff]
    %v1217 = vld [vmem:[#allocation8 + $0xcb8] sm:$0xff]
    %v1218 = vld [vmem:[#allocation8 + $0xcc0] sm:$0xff]
    %v1219 = vld [vmem:[#allocation8 + $0xcc8] sm:$0xff]
    %v1220 = vld [vmem:[#allocation8 + $0xcd0] sm:$0xff]
    %v1221 = vld [vmem:[#allocation8 + $0xcd8] sm:$0xff]
    %v1222 = vld [vmem:[#allocation8 + $0xce0] sm:$0xff]
    %v1223 = vld [vmem:[#allocation8 + $0xce8] sm:$0xff]
    %v1224 = vld [vmem:[#allocation8 + $0xcf0] sm:$0xff]
    %v1225 = vld [vmem:[#allocation8 + $0xcf8] sm:$0xff]
    %v1226 = vld [vmem:[#allocation8 + $0xd00] sm:$0xff]
    %v1227 = vld [vmem:[#allocation8 + $0xd08] sm:$0xff]
    %v1228 = vld [vmem:[#allocation8 + $0xd10] sm:$0xff]
    %v1229 = vld [vmem:[#allocation8 + $0xd18] sm:$0xff]
    %v1230 = vld [vmem:[#allocation8 + $0xd20] sm:$0xff]
    %v1231 = vld [vmem:[#allocation8 + $0xd28] sm:$0xff]
    %v1232 = vld [vmem:[#allocation8 + $0xd30] sm:$0xff]
    %v1233 = vld [vmem:[#allocation8 + $0xd38] sm:$0xff]
    %v1234 = vld [vmem:[#allocation8 + $0xd40] sm:$0xff]
    %v1235 = vld [vmem:[#allocation8 + $0xd48] sm:$0xff]
    %v1236 = vld [vmem:[#allocation8 + $0xd50] sm:$0xff]
    %v1237 = vld [vmem:[#allocation8 + $0xd58] sm:$0xff]
    %v1238 = vld [vmem:[#allocation8 + $0xd60] sm:$0xff]
    %v1239 = vld [vmem:[#allocation8 + $0xd68] sm:$0xff]
    %v1240 = vld [vmem:[#allocation8 + $0xd70] sm:$0xff]
    %v1241 = vld [vmem:[#allocation8 + $0xd78] sm:$0xff]
    %v1242 = vld [vmem:[#allocation8 + $0xd80] sm:$0xff]
    %v1243 = vld [vmem:[#allocation8 + $0xd88] sm:$0xff]
    %v1244 = vld [vmem:[#allocation8 + $0xd90] sm:$0xff]
    %v1245 = vld [vmem:[#allocation8 + $0xd98] sm:$0xff]
    %v1246 = vld [vmem:[#allocation8 + $0xda0] sm:$0xff]
    %v1247 = vld [vmem:[#allocation8 + $0xda8] sm:$0xff]
    %v1248 = vld [vmem:[#allocation8 + $0xdb0] sm:$0xff]
    %v1249 = vld [vmem:[#allocation8 + $0xdb8] sm:$0xff]
    %v1250 = vld [vmem:[#allocation8 + $0xdc0] sm:$0xff]
    %v1251 = vld [vmem:[#allocation8 + $0xdc8] sm:$0xff]
    %v1252 = vld [vmem:[#allocation8 + $0xdd0] sm:$0xff]
    %v1253 = vld [vmem:[#allocation8 + $0xdd8] sm:$0xff]
    %v1254 = vld [vmem:[#allocation8 + $0xde0] sm:$0xff]
    %v1255 = vld [vmem:[#allocation8 + $0xde8] sm:$0xff]
    %v1256 = vld [vmem:[#allocation8 + $0xdf0] sm:$0xff]
    %v1257 = vld [vmem:[#allocation8 + $0xdf8] sm:$0xff]
    %v1258 = vld [vmem:[#allocation8 + $0xe00] sm:$0xff]
    %v1259 = vld [vmem:[#allocation8 + $0xe08] sm:$0xff]
    %v1260 = vld [vmem:[#allocation8 + $0xe10] sm:$0xff]
    %v1261 = vld [vmem:[#allocation8 + $0xe18] sm:$0xff]
    %v1262 = vld [vmem:[#allocation8 + $0xe20] sm:$0xff]
    %v1263 = vld [vmem:[#allocation8 + $0xe28] sm:$0xff]
    %v1264 = vld [vmem:[#allocation8 + $0xe30] sm:$0xff]
    %v1265 = vld [vmem:[#allocation8 + $0xe38] sm:$0xff]
    %v1266 = vld [vmem:[#allocation8 + $0xe40] sm:$0xff]
    %v1267 = vld [vmem:[#allocation8 + $0xe48] sm:$0xff]
    %v1268 = vld [vmem:[#allocation8 + $0xe50] sm:$0xff]
    %v1269 = vld [vmem:[#allocation8 + $0xe58] sm:$0xff]
    %v1270 = vld [vmem:[#allocation8 + $0xe60] sm:$0xff]
    %v1271 = vld [vmem:[#allocation8 + $0xe68] sm:$0xff]
    %v1272 = vld [vmem:[#allocation8 + $0xe70] sm:$0xff]
    %v1273 = vld [vmem:[#allocation8 + $0xe78] sm:$0xff]
    %v1274 = vld [vmem:[#allocation8 + $0xe80] sm:$0xff]
    %v1275 = vld [vmem:[#allocation8 + $0xe88] sm:$0xff]
    %v1276 = vld [vmem:[#allocation8 + $0xe90] sm:$0xff]
    %v1277 = vld [vmem:[#allocation8 + $0xe98] sm:$0xff]
    %v1278 = vld [vmem:[#allocation8 + $0xea0] sm:$0xff]
    %v1279 = vld [vmem:[#allocation8 + $0xea8] sm:$0xff]
    %v1280 = vld [vmem:[#allocation8 + $0xeb0] sm:$0xff]
    %v1281 = vld [vmem:[#allocation8 + $0xeb8] sm:$0xff]
    %v1282 = vld [vmem:[#allocation8 + $0xec0] sm:$0xff]
    %v1283 = vld [vmem:[#allocation8 + $0xec8] sm:$0xff]
    %v1284 = vld [vmem:[#allocation8 + $0xed0] sm:$0xff]
    %v1285 = vld [vmem:[#allocation8 + $0xed8] sm:$0xff]
    %v1286 = vld [vmem:[#allocation8 + $0xee0] sm:$0xff]
    %v1287 = vld [vmem:[#allocation8 + $0xee8] sm:$0xff]
    %v1288 = vld [vmem:[#allocation8 + $0xef0] sm:$0xff]
    %v1289 = vld [vmem:[#allocation8 + $0xef8] sm:$0xff]
    %v1290 = vld [vmem:[#allocation8 + $0xf00] sm:$0xff]
    %v1291 = vld [vmem:[#allocation8 + $0xf08] sm:$0xff]
    %v1292 = vld [vmem:[#allocation8 + $0xf10] sm:$0xff]
    %v1293 = vld [vmem:[#allocation8 + $0xf18] sm:$0xff]
    %v1294 = vld [vmem:[#allocation8 + $0xf20] sm:$0xff]
    %v1295 = vld [vmem:[#allocation8 + $0xf28] sm:$0xff]
    %v1296 = vld [vmem:[#allocation8 + $0xf30] sm:$0xff]
    %v1297 = vld [vmem:[#allocation8 + $0xf38] sm:$0xff]
    %v1298 = vld [vmem:[#allocation8 + $0xf40] sm:$0xff]
    %v1299 = vld [vmem:[#allocation8 + $0xf48] sm:$0xff]
    %v1300 = vld [vmem:[#allocation8 + $0xf50] sm:$0xff]
    %v1301 = vld [vmem:[#allocation8 + $0xf58] sm:$0xff]
    %v1302 = vld [vmem:[#allocation8 + $0xf60] sm:$0xff]
    %v1303 = vld [vmem:[#allocation8 + $0xf68] sm:$0xff]
    %v1304 = vld [vmem:[#allocation8 + $0xf70] sm:$0xff]
    %v1305 = vld [vmem:[#allocation8 + $0xf78] sm:$0xff]
    %v1306 = vld [vmem:[#allocation8 + $0xf80] sm:$0xff]
    %v1307 = vld [vmem:[#allocation8 + $0xf88] sm:$0xff]
    %v1308 = vld [vmem:[#allocation8 + $0xf90] sm:$0xff]
    %v1309 = vld [vmem:[#allocation8 + $0xf98] sm:$0xff]
    %v1310 = vld [vmem:[#allocation8 + $0xfa0] sm:$0xff]
    %v1311 = vld [vmem:[#allocation8 + $0xfa8] sm:$0xff]
    %v1312 = vld [vmem:[#allocation8 + $0xfb0] sm:$0xff]
    %v1313 = vld [vmem:[#allocation8 + $0xfb8] sm:$0xff]
    %v1314 = vld [vmem:[#allocation8 + $0xfc0] sm:$0xff]
    %v1315 = vld [vmem:[#allocation8 + $0xfc8] sm:$0xff]
    %v1316 = vld [vmem:[#allocation8 + $0xfd0] sm:$0xff]
    %v1317 = vld [vmem:[#allocation8 + $0xfd8] sm:$0xff]
    %v1318 = vld [vmem:[#allocation8 + $0xfe0] sm:$0xff]
    %v1319 = vld [vmem:[#allocation8 + $0xfe8] sm:$0xff]
    %v1320 = vld [vmem:[#allocation8 + $0xff0] sm:$0xff]
    %v1321 = vld [vmem:[#allocation8 + $0xff8] sm:$0xff]
    %v1322 = vld [vmem:[#allocation10] sm:$0xff]
    %v1324 = vlaneseq
    %v1325 = vshrl.u32 %v1324, 7
    %v1326 = vsub.s32 0, %v1325
    %v1327 = vrot.slane %v1322, %v1326
    %v1328 = vlaneseq
    %v1329 = vshrl.u32 %v1328, 7
    %v1330 = vsub.s32 1, %v1329
    %v1331 = vrot.slane %v1322, %v1330
    %v1332 = vlaneseq
    %v1333 = vshrl.u32 %v1332, 7
    %v1334 = vsub.s32 2, %v1333
    %v1335 = vrot.slane %v1322, %v1334
    %v1336 = vlaneseq
    %v1337 = vshrl.u32 %v1336, 7
    %v1338 = vsub.s32 3, %v1337
    %v1339 = vrot.slane %v1322, %v1338
    %v1340 = vlaneseq
    %v1341 = vshrl.u32 %v1340, 7
    %v1342 = vsub.s32 4, %v1341
    %v1343 = vrot.slane %v1322, %v1342
    %v1344 = vlaneseq
    %v1345 = vshrl.u32 %v1344, 7
    %v1346 = vsub.s32 5, %v1345
    %v1347 = vrot.slane %v1322, %v1346
    %v1348 = vlaneseq
    %v1349 = vshrl.u32 %v1348, 7
    %v1350 = vsub.s32 6, %v1349
    %v1351 = vrot.slane %v1322, %v1350
    %v1352 = vlaneseq
    %v1353 = vshrl.u32 %v1352, 7
    %v1354 = vsub.s32 7, %v1353
    %v1355 = vrot.slane %v1322, %v1354
    %v1876 = vunpack.c.l.b16 %v810
    %v1877 = vunpack.c.h.b16 %v810
    %v1878 = vunpack.c.l.b16 %v811
    %v1879 = vunpack.c.h.b16 %v811
    %v1880 = vunpack.c.l.b16 %v812
    %v1881 = vunpack.c.h.b16 %v812
    %v1882 = vunpack.c.l.b16 %v813
    %v1883 = vunpack.c.h.b16 %v813
    %v1884 = vunpack.c.l.b16 %v814
    %v1885 = vunpack.c.h.b16 %v814
    %v1886 = vunpack.c.l.b16 %v815
    %v1887 = vunpack.c.h.b16 %v815
    %v1888 = vunpack.c.l.b16 %v816
    %v1889 = vunpack.c.h.b16 %v816
    %v1890 = vunpack.c.l.b16 %v817
    %v1891 = vunpack.c.h.b16 %v817
    %v1892 = vunpack.c.l.b16 %v818
    %v1893 = vunpack.c.h.b16 %v818
    %v1894 = vunpack.c.l.b16 %v819
    %v1895 = vunpack.c.h.b16 %v819
    %v1896 = vunpack.c.l.b16 %v820
    %v1897 = vunpack.c.h.b16 %v820
    %v1898 = vunpack.c.l.b16 %v821
    %v1899 = vunpack.c.h.b16 %v821
    %v1900 = vunpack.c.l.b16 %v822
    %v1901 = vunpack.c.h.b16 %v822
    %v1902 = vunpack.c.l.b16 %v823
    %v1903 = vunpack.c.h.b16 %v823
    %v1904 = vunpack.c.l.b16 %v824
    %v1905 = vunpack.c.h.b16 %v824
    %v1906 = vunpack.c.l.b16 %v825
    %v1907 = vunpack.c.h.b16 %v825
    %v1908 = vunpack.c.l.b16 %v826
    %v1909 = vunpack.c.h.b16 %v826
    %v1910 = vunpack.c.l.b16 %v827
    %v1911 = vunpack.c.h.b16 %v827
    %v1912 = vunpack.c.l.b16 %v828
    %v1913 = vunpack.c.h.b16 %v828
    %v1914 = vunpack.c.l.b16 %v829
    %v1915 = vunpack.c.h.b16 %v829
    %v1916 = vunpack.c.l.b16 %v830
    %v1917 = vunpack.c.h.b16 %v830
    %v1918 = vunpack.c.l.b16 %v831
    %v1919 = vunpack.c.h.b16 %v831
    %v1920 = vunpack.c.l.b16 %v832
    %v1921 = vunpack.c.h.b16 %v832
    %v1922 = vunpack.c.l.b16 %v833
    %v1923 = vunpack.c.h.b16 %v833
    %v1924 = vunpack.c.l.b16 %v834
    %v1925 = vunpack.c.h.b16 %v834
    %v1926 = vunpack.c.l.b16 %v835
    %v1927 = vunpack.c.h.b16 %v835
    %v1928 = vunpack.c.l.b16 %v836
    %v1929 = vunpack.c.h.b16 %v836
    %v1930 = vunpack.c.l.b16 %v837
    %v1931 = vunpack.c.h.b16 %v837
    %v1932 = vunpack.c.l.b16 %v838
    %v1933 = vunpack.c.h.b16 %v838
    %v1934 = vunpack.c.l.b16 %v839
    %v1935 = vunpack.c.h.b16 %v839
    %v1936 = vunpack.c.l.b16 %v840
    %v1937 = vunpack.c.h.b16 %v840
    %v1938 = vunpack.c.l.b16 %v841
    %v1939 = vunpack.c.h.b16 %v841
    %v1940 = vunpack.c.l.b16 %v842
    %v1941 = vunpack.c.h.b16 %v842
    %v1942 = vunpack.c.l.b16 %v843
    %v1943 = vunpack.c.h.b16 %v843
    %v1944 = vunpack.c.l.b16 %v844
    %v1945 = vunpack.c.h.b16 %v844
    %v1946 = vunpack.c.l.b16 %v845
    %v1947 = vunpack.c.h.b16 %v845
    %v1948 = vunpack.c.l.b16 %v846
    %v1949 = vunpack.c.h.b16 %v846
    %v1950 = vunpack.c.l.b16 %v847
    %v1951 = vunpack.c.h.b16 %v847
    %v1952 = vunpack.c.l.b16 %v848
    %v1953 = vunpack.c.h.b16 %v848
    %v1954 = vunpack.c.l.b16 %v849
    %v1955 = vunpack.c.h.b16 %v849
    %v1956 = vunpack.c.l.b16 %v850
    %v1957 = vunpack.c.h.b16 %v850
    %v1958 = vunpack.c.l.b16 %v851
    %v1959 = vunpack.c.h.b16 %v851
    %v1960 = vunpack.c.l.b16 %v852
    %v1961 = vunpack.c.h.b16 %v852
    %v1962 = vunpack.c.l.b16 %v853
    %v1963 = vunpack.c.h.b16 %v853
    %v1964 = vunpack.c.l.b16 %v854
    %v1965 = vunpack.c.h.b16 %v854
    %v1966 = vunpack.c.l.b16 %v855
    %v1967 = vunpack.c.h.b16 %v855
    %v1968 = vunpack.c.l.b16 %v856
    %v1969 = vunpack.c.h.b16 %v856
    %v1970 = vunpack.c.l.b16 %v857
    %v1971 = vunpack.c.h.b16 %v857
    %v1972 = vunpack.c.l.b16 %v858
    %v1973 = vunpack.c.h.b16 %v858
    %v1974 = vunpack.c.l.b16 %v859
    %v1975 = vunpack.c.h.b16 %v859
    %v1976 = vunpack.c.l.b16 %v860
    %v1977 = vunpack.c.h.b16 %v860
    %v1978 = vunpack.c.l.b16 %v861
    %v1979 = vunpack.c.h.b16 %v861
    %v1980 = vunpack.c.l.b16 %v862
    %v1981 = vunpack.c.h.b16 %v862
    %v1982 = vunpack.c.l.b16 %v863
    %v1983 = vunpack.c.h.b16 %v863
    %v1984 = vunpack.c.l.b16 %v864
    %v1985 = vunpack.c.h.b16 %v864
    %v1986 = vunpack.c.l.b16 %v865
    %v1987 = vunpack.c.h.b16 %v865
    %v1988 = vunpack.c.l.b16 %v866
    %v1989 = vunpack.c.h.b16 %v866
    %v1990 = vunpack.c.l.b16 %v867
    %v1991 = vunpack.c.h.b16 %v867
    %v1992 = vunpack.c.l.b16 %v868
    %v1993 = vunpack.c.h.b16 %v868
    %v1994 = vunpack.c.l.b16 %v869
    %v1995 = vunpack.c.h.b16 %v869
    %v1996 = vunpack.c.l.b16 %v870
    %v1997 = vunpack.c.h.b16 %v870
    %v1998 = vunpack.c.l.b16 %v871
    %v1999 = vunpack.c.h.b16 %v871
    %v2000 = vunpack.c.l.b16 %v872
    %v2001 = vunpack.c.h.b16 %v872
    %v2002 = vunpack.c.l.b16 %v873
    %v2003 = vunpack.c.h.b16 %v873
    %v2004 = vunpack.c.l.b16 %v874
    %v2005 = vunpack.c.h.b16 %v874
    %v2006 = vunpack.c.l.b16 %v875
    %v2007 = vunpack.c.h.b16 %v875
    %v2008 = vunpack.c.l.b16 %v876
    %v2009 = vunpack.c.h.b16 %v876
    %v2010 = vunpack.c.l.b16 %v877
    %v2011 = vunpack.c.h.b16 %v877
    %v2012 = vunpack.c.l.b16 %v878
    %v2013 = vunpack.c.h.b16 %v878
    %v2014 = vunpack.c.l.b16 %v879
    %v2015 = vunpack.c.h.b16 %v879
    %v2016 = vunpack.c.l.b16 %v880
    %v2017 = vunpack.c.h.b16 %v880
    %v2018 = vunpack.c.l.b16 %v881
    %v2019 = vunpack.c.h.b16 %v881
    %v2020 = vunpack.c.l.b16 %v882
    %v2021 = vunpack.c.h.b16 %v882
    %v2022 = vunpack.c.l.b16 %v883
    %v2023 = vunpack.c.h.b16 %v883
    %v2024 = vunpack.c.l.b16 %v884
    %v2025 = vunpack.c.h.b16 %v884
    %v2026 = vunpack.c.l.b16 %v885
    %v2027 = vunpack.c.h.b16 %v885
    %v2028 = vunpack.c.l.b16 %v886
    %v2029 = vunpack.c.h.b16 %v886
    %v2030 = vunpack.c.l.b16 %v887
    %v2031 = vunpack.c.h.b16 %v887
    %v2032 = vunpack.c.l.b16 %v888
    %v2033 = vunpack.c.h.b16 %v888
    %v2034 = vunpack.c.l.b16 %v889
    %v2035 = vunpack.c.h.b16 %v889
    %v2036 = vunpack.c.l.b16 %v890
    %v2037 = vunpack.c.h.b16 %v890
    %v2038 = vunpack.c.l.b16 %v891
    %v2039 = vunpack.c.h.b16 %v891
    %v2040 = vunpack.c.l.b16 %v892
    %v2041 = vunpack.c.h.b16 %v892
    %v2042 = vunpack.c.l.b16 %v893
    %v2043 = vunpack.c.h.b16 %v893
    %v2044 = vunpack.c.l.b16 %v894
    %v2045 = vunpack.c.h.b16 %v894
    %v2046 = vunpack.c.l.b16 %v895
    %v2047 = vunpack.c.h.b16 %v895
    %v2048 = vunpack.c.l.b16 %v896
    %v2049 = vunpack.c.h.b16 %v896
    %v2050 = vunpack.c.l.b16 %v897
    %v2051 = vunpack.c.h.b16 %v897
    %v2052 = vunpack.c.l.b16 %v898
    %v2053 = vunpack.c.h.b16 %v898
    %v2054 = vunpack.c.l.b16 %v899
    %v2055 = vunpack.c.h.b16 %v899
    %v2056 = vunpack.c.l.b16 %v900
    %v2057 = vunpack.c.h.b16 %v900
    %v2058 = vunpack.c.l.b16 %v901
    %v2059 = vunpack.c.h.b16 %v901
    %v2060 = vunpack.c.l.b16 %v902
    %v2061 = vunpack.c.h.b16 %v902
    %v2062 = vunpack.c.l.b16 %v903
    %v2063 = vunpack.c.h.b16 %v903
    %v2064 = vunpack.c.l.b16 %v904
    %v2065 = vunpack.c.h.b16 %v904
    %v2066 = vunpack.c.l.b16 %v905
    %v2067 = vunpack.c.h.b16 %v905
    %v2068 = vunpack.c.l.b16 %v906
    %v2069 = vunpack.c.h.b16 %v906
    %v2070 = vunpack.c.l.b16 %v907
    %v2071 = vunpack.c.h.b16 %v907
    %v2072 = vunpack.c.l.b16 %v908
    %v2073 = vunpack.c.h.b16 %v908
    %v2074 = vunpack.c.l.b16 %v909
    %v2075 = vunpack.c.h.b16 %v909
    %v2076 = vunpack.c.l.b16 %v910
    %v2077 = vunpack.c.h.b16 %v910
    %v2078 = vunpack.c.l.b16 %v911
    %v2079 = vunpack.c.h.b16 %v911
    %v2080 = vunpack.c.l.b16 %v912
    %v2081 = vunpack.c.h.b16 %v912
    %v2082 = vunpack.c.l.b16 %v913
    %v2083 = vunpack.c.h.b16 %v913
    %v2084 = vunpack.c.l.b16 %v914
    %v2085 = vunpack.c.h.b16 %v914
    %v2086 = vunpack.c.l.b16 %v915
    %v2087 = vunpack.c.h.b16 %v915
    %v2088 = vunpack.c.l.b16 %v916
    %v2089 = vunpack.c.h.b16 %v916
    %v2090 = vunpack.c.l.b16 %v917
    %v2091 = vunpack.c.h.b16 %v917
    %v2092 = vunpack.c.l.b16 %v918
    %v2093 = vunpack.c.h.b16 %v918
    %v2094 = vunpack.c.l.b16 %v919
    %v2095 = vunpack.c.h.b16 %v919
    %v2096 = vunpack.c.l.b16 %v920
    %v2097 = vunpack.c.h.b16 %v920
    %v2098 = vunpack.c.l.b16 %v921
    %v2099 = vunpack.c.h.b16 %v921
    %v2100 = vunpack.c.l.b16 %v922
    %v2101 = vunpack.c.h.b16 %v922
    %v2102 = vunpack.c.l.b16 %v923
    %v2103 = vunpack.c.h.b16 %v923
    %v2104 = vunpack.c.l.b16 %v924
    %v2105 = vunpack.c.h.b16 %v924
    %v2106 = vunpack.c.l.b16 %v925
    %v2107 = vunpack.c.h.b16 %v925
    %v2108 = vunpack.c.l.b16 %v926
    %v2109 = vunpack.c.h.b16 %v926
    %v2110 = vunpack.c.l.b16 %v927
    %v2111 = vunpack.c.h.b16 %v927
    %v2112 = vunpack.c.l.b16 %v928
    %v2113 = vunpack.c.h.b16 %v928
    %v2114 = vunpack.c.l.b16 %v929
    %v2115 = vunpack.c.h.b16 %v929
    %v2116 = vunpack.c.l.b16 %v930
    %v2117 = vunpack.c.h.b16 %v930
    %v2118 = vunpack.c.l.b16 %v931
    %v2119 = vunpack.c.h.b16 %v931
    %v2120 = vunpack.c.l.b16 %v932
    %v2121 = vunpack.c.h.b16 %v932
    %v2122 = vunpack.c.l.b16 %v933
    %v2123 = vunpack.c.h.b16 %v933
    %v2124 = vunpack.c.l.b16 %v934
    %v2125 = vunpack.c.h.b16 %v934
    %v2126 = vunpack.c.l.b16 %v935
    %v2127 = vunpack.c.h.b16 %v935
    %v2128 = vunpack.c.l.b16 %v936
    %v2129 = vunpack.c.h.b16 %v936
    %v2130 = vunpack.c.l.b16 %v937
    %v2131 = vunpack.c.h.b16 %v937
    %v2132 = vunpack.c.l.b16 %v938
    %v2133 = vunpack.c.h.b16 %v938
    %v2134 = vunpack.c.l.b16 %v939
    %v2135 = vunpack.c.h.b16 %v939
    %v2136 = vunpack.c.l.b16 %v940
    %v2137 = vunpack.c.h.b16 %v940
    %v2138 = vunpack.c.l.b16 %v941
    %v2139 = vunpack.c.h.b16 %v941
    %v2140 = vunpack.c.l.b16 %v942
    %v2141 = vunpack.c.h.b16 %v942
    %v2142 = vunpack.c.l.b16 %v943
    %v2143 = vunpack.c.h.b16 %v943
    %v2144 = vunpack.c.l.b16 %v944
    %v2145 = vunpack.c.h.b16 %v944
    %v2146 = vunpack.c.l.b16 %v945
    %v2147 = vunpack.c.h.b16 %v945
    %v2148 = vunpack.c.l.b16 %v946
    %v2149 = vunpack.c.h.b16 %v946
    %v2150 = vunpack.c.l.b16 %v947
    %v2151 = vunpack.c.h.b16 %v947
    %v2152 = vunpack.c.l.b16 %v948
    %v2153 = vunpack.c.h.b16 %v948
    %v2154 = vunpack.c.l.b16 %v949
    %v2155 = vunpack.c.h.b16 %v949
    %v2156 = vunpack.c.l.b16 %v950
    %v2157 = vunpack.c.h.b16 %v950
    %v2158 = vunpack.c.l.b16 %v951
    %v2159 = vunpack.c.h.b16 %v951
    %v2160 = vunpack.c.l.b16 %v952
    %v2161 = vunpack.c.h.b16 %v952
    %v2162 = vunpack.c.l.b16 %v953
    %v2163 = vunpack.c.h.b16 %v953
    %v2164 = vunpack.c.l.b16 %v954
    %v2165 = vunpack.c.h.b16 %v954
    %v2166 = vunpack.c.l.b16 %v955
    %v2167 = vunpack.c.h.b16 %v955
    %v2168 = vunpack.c.l.b16 %v956
    %v2169 = vunpack.c.h.b16 %v956
    %v2170 = vunpack.c.l.b16 %v957
    %v2171 = vunpack.c.h.b16 %v957
    %v2172 = vunpack.c.l.b16 %v958
    %v2173 = vunpack.c.h.b16 %v958
    %v2174 = vunpack.c.l.b16 %v959
    %v2175 = vunpack.c.h.b16 %v959
    %v2176 = vunpack.c.l.b16 %v960
    %v2177 = vunpack.c.h.b16 %v960
    %v2178 = vunpack.c.l.b16 %v961
    %v2179 = vunpack.c.h.b16 %v961
    %v2180 = vunpack.c.l.b16 %v962
    %v2181 = vunpack.c.h.b16 %v962
    %v2182 = vunpack.c.l.b16 %v963
    %v2183 = vunpack.c.h.b16 %v963
    %v2184 = vunpack.c.l.b16 %v964
    %v2185 = vunpack.c.h.b16 %v964
    %v2186 = vunpack.c.l.b16 %v965
    %v2187 = vunpack.c.h.b16 %v965
    %v2188 = vunpack.c.l.b16 %v966
    %v2189 = vunpack.c.h.b16 %v966
    %v2190 = vunpack.c.l.b16 %v967
    %v2191 = vunpack.c.h.b16 %v967
    %v2192 = vunpack.c.l.b16 %v968
    %v2193 = vunpack.c.h.b16 %v968
    %v2194 = vunpack.c.l.b16 %v969
    %v2195 = vunpack.c.h.b16 %v969
    %v2196 = vunpack.c.l.b16 %v970
    %v2197 = vunpack.c.h.b16 %v970
    %v2198 = vunpack.c.l.b16 %v971
    %v2199 = vunpack.c.h.b16 %v971
    %v2200 = vunpack.c.l.b16 %v972
    %v2201 = vunpack.c.h.b16 %v972
    %v2202 = vunpack.c.l.b16 %v973
    %v2203 = vunpack.c.h.b16 %v973
    %v2204 = vunpack.c.l.b16 %v974
    %v2205 = vunpack.c.h.b16 %v974
    %v2206 = vunpack.c.l.b16 %v975
    %v2207 = vunpack.c.h.b16 %v975
    %v2208 = vunpack.c.l.b16 %v976
    %v2209 = vunpack.c.h.b16 %v976
    %v2210 = vunpack.c.l.b16 %v977
    %v2211 = vunpack.c.h.b16 %v977
    %v2212 = vunpack.c.l.b16 %v978
    %v2213 = vunpack.c.h.b16 %v978
    %v2214 = vunpack.c.l.b16 %v979
    %v2215 = vunpack.c.h.b16 %v979
    %v2216 = vunpack.c.l.b16 %v980
    %v2217 = vunpack.c.h.b16 %v980
    %v2218 = vunpack.c.l.b16 %v981
    %v2219 = vunpack.c.h.b16 %v981
    %v2220 = vunpack.c.l.b16 %v982
    %v2221 = vunpack.c.h.b16 %v982
    %v2222 = vunpack.c.l.b16 %v983
    %v2223 = vunpack.c.h.b16 %v983
    %v2224 = vunpack.c.l.b16 %v984
    %v2225 = vunpack.c.h.b16 %v984
    %v2226 = vunpack.c.l.b16 %v985
    %v2227 = vunpack.c.h.b16 %v985
    %v2228 = vunpack.c.l.b16 %v986
    %v2229 = vunpack.c.h.b16 %v986
    %v2230 = vunpack.c.l.b16 %v987
    %v2231 = vunpack.c.h.b16 %v987
    %v2232 = vunpack.c.l.b16 %v988
    %v2233 = vunpack.c.h.b16 %v988
    %v2234 = vunpack.c.l.b16 %v989
    %v2235 = vunpack.c.h.b16 %v989
    %v2236 = vunpack.c.l.b16 %v990
    %v2237 = vunpack.c.h.b16 %v990
    %v2238 = vunpack.c.l.b16 %v991
    %v2239 = vunpack.c.h.b16 %v991
    %v2240 = vunpack.c.l.b16 %v992
    %v2241 = vunpack.c.h.b16 %v992
    %v2242 = vunpack.c.l.b16 %v993
    %v2243 = vunpack.c.h.b16 %v993
    %v2244 = vunpack.c.l.b16 %v994
    %v2245 = vunpack.c.h.b16 %v994
    %v2246 = vunpack.c.l.b16 %v995
    %v2247 = vunpack.c.h.b16 %v995
    %v2248 = vunpack.c.l.b16 %v996
    %v2249 = vunpack.c.h.b16 %v996
    %v2250 = vunpack.c.l.b16 %v997
    %v2251 = vunpack.c.h.b16 %v997
    %v2252 = vunpack.c.l.b16 %v998
    %v2253 = vunpack.c.h.b16 %v998
    %v2254 = vunpack.c.l.b16 %v999
    %v2255 = vunpack.c.h.b16 %v999
    %v2256 = vunpack.c.l.b16 %v1000
    %v2257 = vunpack.c.h.b16 %v1000
    %v2258 = vunpack.c.l.b16 %v1001
    %v2259 = vunpack.c.h.b16 %v1001
    %v2260 = vunpack.c.l.b16 %v1002
    %v2261 = vunpack.c.h.b16 %v1002
    %v2262 = vunpack.c.l.b16 %v1003
    %v2263 = vunpack.c.h.b16 %v1003
    %v2264 = vunpack.c.l.b16 %v1004
    %v2265 = vunpack.c.h.b16 %v1004
    %v2266 = vunpack.c.l.b16 %v1005
    %v2267 = vunpack.c.h.b16 %v1005
    %v2268 = vunpack.c.l.b16 %v1006
    %v2269 = vunpack.c.h.b16 %v1006
    %v2270 = vunpack.c.l.b16 %v1007
    %v2271 = vunpack.c.h.b16 %v1007
    %v2272 = vunpack.c.l.b16 %v1008
    %v2273 = vunpack.c.h.b16 %v1008
    %v2274 = vunpack.c.l.b16 %v1009
    %v2275 = vunpack.c.h.b16 %v1009
    %v2276 = vunpack.c.l.b16 %v1010
    %v2277 = vunpack.c.h.b16 %v1010
    %v2278 = vunpack.c.l.b16 %v1011
    %v2279 = vunpack.c.h.b16 %v1011
    %v2280 = vunpack.c.l.b16 %v1012
    %v2281 = vunpack.c.h.b16 %v1012
    %v2282 = vunpack.c.l.b16 %v1013
    %v2283 = vunpack.c.h.b16 %v1013
    %v2284 = vunpack.c.l.b16 %v1014
    %v2285 = vunpack.c.h.b16 %v1014
    %v2286 = vunpack.c.l.b16 %v1015
    %v2287 = vunpack.c.h.b16 %v1015
    %v2288 = vunpack.c.l.b16 %v1016
    %v2289 = vunpack.c.h.b16 %v1016
    %v2290 = vunpack.c.l.b16 %v1017
    %v2291 = vunpack.c.h.b16 %v1017
    %v2292 = vunpack.c.l.b16 %v1018
    %v2293 = vunpack.c.h.b16 %v1018
    %v2294 = vunpack.c.l.b16 %v1019
    %v2295 = vunpack.c.h.b16 %v1019
    %v2296 = vunpack.c.l.b16 %v1020
    %v2297 = vunpack.c.h.b16 %v1020
    %v2298 = vunpack.c.l.b16 %v1021
    %v2299 = vunpack.c.h.b16 %v1021
    %v2300 = vunpack.c.l.b16 %v1022
    %v2301 = vunpack.c.h.b16 %v1022
    %v2302 = vunpack.c.l.b16 %v1023
    %v2303 = vunpack.c.h.b16 %v1023
    %v2304 = vunpack.c.l.b16 %v1024
    %v2305 = vunpack.c.h.b16 %v1024
    %v2306 = vunpack.c.l.b16 %v1025
    %v2307 = vunpack.c.h.b16 %v1025
    %v2308 = vunpack.c.l.b16 %v1026
    %v2309 = vunpack.c.h.b16 %v1026
    %v2310 = vunpack.c.l.b16 %v1027
    %v2311 = vunpack.c.h.b16 %v1027
    %v2312 = vunpack.c.l.b16 %v1028
    %v2313 = vunpack.c.h.b16 %v1028
    %v2314 = vunpack.c.l.b16 %v1029
    %v2315 = vunpack.c.h.b16 %v1029
    %v2316 = vunpack.c.l.b16 %v1030
    %v2317 = vunpack.c.h.b16 %v1030
    %v2318 = vunpack.c.l.b16 %v1031
    %v2319 = vunpack.c.h.b16 %v1031
    %v2320 = vunpack.c.l.b16 %v1032
    %v2321 = vunpack.c.h.b16 %v1032
    %v2322 = vunpack.c.l.b16 %v1033
    %v2323 = vunpack.c.h.b16 %v1033
    %v2324 = vunpack.c.l.b16 %v1034
    %v2325 = vunpack.c.h.b16 %v1034
    %v2326 = vunpack.c.l.b16 %v1035
    %v2327 = vunpack.c.h.b16 %v1035
    %v2328 = vunpack.c.l.b16 %v1036
    %v2329 = vunpack.c.h.b16 %v1036
    %v2330 = vunpack.c.l.b16 %v1037
    %v2331 = vunpack.c.h.b16 %v1037
    %v2332 = vunpack.c.l.b16 %v1038
    %v2333 = vunpack.c.h.b16 %v1038
    %v2334 = vunpack.c.l.b16 %v1039
    %v2335 = vunpack.c.h.b16 %v1039
    %v2336 = vunpack.c.l.b16 %v1040
    %v2337 = vunpack.c.h.b16 %v1040
    %v2338 = vunpack.c.l.b16 %v1041
    %v2339 = vunpack.c.h.b16 %v1041
    %v2340 = vunpack.c.l.b16 %v1042
    %v2341 = vunpack.c.h.b16 %v1042
    %v2342 = vunpack.c.l.b16 %v1043
    %v2343 = vunpack.c.h.b16 %v1043
    %v2344 = vunpack.c.l.b16 %v1044
    %v2345 = vunpack.c.h.b16 %v1044
    %v2346 = vunpack.c.l.b16 %v1045
    %v2347 = vunpack.c.h.b16 %v1045
    %v2348 = vunpack.c.l.b16 %v1046
    %v2349 = vunpack.c.h.b16 %v1046
    %v2350 = vunpack.c.l.b16 %v1047
    %v2351 = vunpack.c.h.b16 %v1047
    %v2352 = vunpack.c.l.b16 %v1048
    %v2353 = vunpack.c.h.b16 %v1048
    %v2354 = vunpack.c.l.b16 %v1049
    %v2355 = vunpack.c.h.b16 %v1049
    %v2356 = vunpack.c.l.b16 %v1050
    %v2357 = vunpack.c.h.b16 %v1050
    %v2358 = vunpack.c.l.b16 %v1051
    %v2359 = vunpack.c.h.b16 %v1051
    %v2360 = vunpack.c.l.b16 %v1052
    %v2361 = vunpack.c.h.b16 %v1052
    %v2362 = vunpack.c.l.b16 %v1053
    %v2363 = vunpack.c.h.b16 %v1053
    %v2364 = vunpack.c.l.b16 %v1054
    %v2365 = vunpack.c.h.b16 %v1054
    %v2366 = vunpack.c.l.b16 %v1055
    %v2367 = vunpack.c.h.b16 %v1055
    %v2368 = vunpack.c.l.b16 %v1056
    %v2369 = vunpack.c.h.b16 %v1056
    %v2370 = vunpack.c.l.b16 %v1057
    %v2371 = vunpack.c.h.b16 %v1057
    %v2372 = vunpack.c.l.b16 %v1058
    %v2373 = vunpack.c.h.b16 %v1058
    %v2374 = vunpack.c.l.b16 %v1059
    %v2375 = vunpack.c.h.b16 %v1059
    %v2376 = vunpack.c.l.b16 %v1060
    %v2377 = vunpack.c.h.b16 %v1060
    %v2378 = vunpack.c.l.b16 %v1061
    %v2379 = vunpack.c.h.b16 %v1061
    %v2380 = vunpack.c.l.b16 %v1062
    %v2381 = vunpack.c.h.b16 %v1062
    %v2382 = vunpack.c.l.b16 %v1063
    %v2383 = vunpack.c.h.b16 %v1063
    %v2384 = vunpack.c.l.b16 %v1064
    %v2385 = vunpack.c.h.b16 %v1064
    %v2386 = vunpack.c.l.b16 %v1065
    %v2387 = vunpack.c.h.b16 %v1065
    %v2388 = vunpack.c.l.b16 %v1066
    %v2389 = vunpack.c.h.b16 %v1066
    %v2390 = vunpack.c.l.b16 %v1067
    %v2391 = vunpack.c.h.b16 %v1067
    %v2392 = vunpack.c.l.b16 %v1068
    %v2393 = vunpack.c.h.b16 %v1068
    %v2394 = vunpack.c.l.b16 %v1069
    %v2395 = vunpack.c.h.b16 %v1069
    %v2396 = vunpack.c.l.b16 %v1070
    %v2397 = vunpack.c.h.b16 %v1070
    %v2398 = vunpack.c.l.b16 %v1071
    %v2399 = vunpack.c.h.b16 %v1071
    %v2400 = vunpack.c.l.b16 %v1072
    %v2401 = vunpack.c.h.b16 %v1072
    %v2402 = vunpack.c.l.b16 %v1073
    %v2403 = vunpack.c.h.b16 %v1073
    %v2404 = vunpack.c.l.b16 %v1074
    %v2405 = vunpack.c.h.b16 %v1074
    %v2406 = vunpack.c.l.b16 %v1075
    %v2407 = vunpack.c.h.b16 %v1075
    %v2408 = vunpack.c.l.b16 %v1076
    %v2409 = vunpack.c.h.b16 %v1076
    %v2410 = vunpack.c.l.b16 %v1077
    %v2411 = vunpack.c.h.b16 %v1077
    %v2412 = vunpack.c.l.b16 %v1078
    %v2413 = vunpack.c.h.b16 %v1078
    %v2414 = vunpack.c.l.b16 %v1079
    %v2415 = vunpack.c.h.b16 %v1079
    %v2416 = vunpack.c.l.b16 %v1080
    %v2417 = vunpack.c.h.b16 %v1080
    %v2418 = vunpack.c.l.b16 %v1081
    %v2419 = vunpack.c.h.b16 %v1081
    %v2420 = vunpack.c.l.b16 %v1082
    %v2421 = vunpack.c.h.b16 %v1082
    %v2422 = vunpack.c.l.b16 %v1083
    %v2423 = vunpack.c.h.b16 %v1083
    %v2424 = vunpack.c.l.b16 %v1084
    %v2425 = vunpack.c.h.b16 %v1084
    %v2426 = vunpack.c.l.b16 %v1085
    %v2427 = vunpack.c.h.b16 %v1085
    %v2428 = vunpack.c.l.b16 %v1086
    %v2429 = vunpack.c.h.b16 %v1086
    %v2430 = vunpack.c.l.b16 %v1087
    %v2431 = vunpack.c.h.b16 %v1087
    %v2432 = vunpack.c.l.b16 %v1088
    %v2433 = vunpack.c.h.b16 %v1088
    %v2434 = vunpack.c.l.b16 %v1089
    %v2435 = vunpack.c.h.b16 %v1089
    %v2436 = vunpack.c.l.b16 %v1090
    %v2437 = vunpack.c.h.b16 %v1090
    %v2438 = vunpack.c.l.b16 %v1091
    %v2439 = vunpack.c.h.b16 %v1091
    %v2440 = vunpack.c.l.b16 %v1092
    %v2441 = vunpack.c.h.b16 %v1092
    %v2442 = vunpack.c.l.b16 %v1093
    %v2443 = vunpack.c.h.b16 %v1093
    %v2444 = vunpack.c.l.b16 %v1094
    %v2445 = vunpack.c.h.b16 %v1094
    %v2446 = vunpack.c.l.b16 %v1095
    %v2447 = vunpack.c.h.b16 %v1095
    %v2448 = vunpack.c.l.b16 %v1096
    %v2449 = vunpack.c.h.b16 %v1096
    %v2450 = vunpack.c.l.b16 %v1097
    %v2451 = vunpack.c.h.b16 %v1097
    %v2452 = vunpack.c.l.b16 %v1098
    %v2453 = vunpack.c.h.b16 %v1098
    %v2454 = vunpack.c.l.b16 %v1099
    %v2455 = vunpack.c.h.b16 %v1099
    %v2456 = vunpack.c.l.b16 %v1100
    %v2457 = vunpack.c.h.b16 %v1100
    %v2458 = vunpack.c.l.b16 %v1101
    %v2459 = vunpack.c.h.b16 %v1101
    %v2460 = vunpack.c.l.b16 %v1102
    %v2461 = vunpack.c.h.b16 %v1102
    %v2462 = vunpack.c.l.b16 %v1103
    %v2463 = vunpack.c.h.b16 %v1103
    %v2464 = vunpack.c.l.b16 %v1104
    %v2465 = vunpack.c.h.b16 %v1104
    %v2466 = vunpack.c.l.b16 %v1105
    %v2467 = vunpack.c.h.b16 %v1105
    %v2468 = vunpack.c.l.b16 %v1106
    %v2469 = vunpack.c.h.b16 %v1106
    %v2470 = vunpack.c.l.b16 %v1107
    %v2471 = vunpack.c.h.b16 %v1107
    %v2472 = vunpack.c.l.b16 %v1108
    %v2473 = vunpack.c.h.b16 %v1108
    %v2474 = vunpack.c.l.b16 %v1109
    %v2475 = vunpack.c.h.b16 %v1109
    %v2476 = vunpack.c.l.b16 %v1110
    %v2477 = vunpack.c.h.b16 %v1110
    %v2478 = vunpack.c.l.b16 %v1111
    %v2479 = vunpack.c.h.b16 %v1111
    %v2480 = vunpack.c.l.b16 %v1112
    %v2481 = vunpack.c.h.b16 %v1112
    %v2482 = vunpack.c.l.b16 %v1113
    %v2483 = vunpack.c.h.b16 %v1113
    %v2484 = vunpack.c.l.b16 %v1114
    %v2485 = vunpack.c.h.b16 %v1114
    %v2486 = vunpack.c.l.b16 %v1115
    %v2487 = vunpack.c.h.b16 %v1115
    %v2488 = vunpack.c.l.b16 %v1116
    %v2489 = vunpack.c.h.b16 %v1116
    %v2490 = vunpack.c.l.b16 %v1117
    %v2491 = vunpack.c.h.b16 %v1117
    %v2492 = vunpack.c.l.b16 %v1118
    %v2493 = vunpack.c.h.b16 %v1118
    %v2494 = vunpack.c.l.b16 %v1119
    %v2495 = vunpack.c.h.b16 %v1119
    %v2496 = vunpack.c.l.b16 %v1120
    %v2497 = vunpack.c.h.b16 %v1120
    %v2498 = vunpack.c.l.b16 %v1121
    %v2499 = vunpack.c.h.b16 %v1121
    %v2500 = vunpack.c.l.b16 %v1122
    %v2501 = vunpack.c.h.b16 %v1122
    %v2502 = vunpack.c.l.b16 %v1123
    %v2503 = vunpack.c.h.b16 %v1123
    %v2504 = vunpack.c.l.b16 %v1124
    %v2505 = vunpack.c.h.b16 %v1124
    %v2506 = vunpack.c.l.b16 %v1125
    %v2507 = vunpack.c.h.b16 %v1125
    %v2508 = vunpack.c.l.b16 %v1126
    %v2509 = vunpack.c.h.b16 %v1126
    %v2510 = vunpack.c.l.b16 %v1127
    %v2511 = vunpack.c.h.b16 %v1127
    %v2512 = vunpack.c.l.b16 %v1128
    %v2513 = vunpack.c.h.b16 %v1128
    %v2514 = vunpack.c.l.b16 %v1129
    %v2515 = vunpack.c.h.b16 %v1129
    %v2516 = vunpack.c.l.b16 %v1130
    %v2517 = vunpack.c.h.b16 %v1130
    %v2518 = vunpack.c.l.b16 %v1131
    %v2519 = vunpack.c.h.b16 %v1131
    %v2520 = vunpack.c.l.b16 %v1132
    %v2521 = vunpack.c.h.b16 %v1132
    %v2522 = vunpack.c.l.b16 %v1133
    %v2523 = vunpack.c.h.b16 %v1133
    %v2524 = vunpack.c.l.b16 %v1134
    %v2525 = vunpack.c.h.b16 %v1134
    %v2526 = vunpack.c.l.b16 %v1135
    %v2527 = vunpack.c.h.b16 %v1135
    %v2528 = vunpack.c.l.b16 %v1136
    %v2529 = vunpack.c.h.b16 %v1136
    %v2530 = vunpack.c.l.b16 %v1137
    %v2531 = vunpack.c.h.b16 %v1137
    %v2532 = vunpack.c.l.b16 %v1138
    %v2533 = vunpack.c.h.b16 %v1138
    %v2534 = vunpack.c.l.b16 %v1139
    %v2535 = vunpack.c.h.b16 %v1139
    %v2536 = vunpack.c.l.b16 %v1140
    %v2537 = vunpack.c.h.b16 %v1140
    %v2538 = vunpack.c.l.b16 %v1141
    %v2539 = vunpack.c.h.b16 %v1141
    %v2540 = vunpack.c.l.b16 %v1142
    %v2541 = vunpack.c.h.b16 %v1142
    %v2542 = vunpack.c.l.b16 %v1143
    %v2543 = vunpack.c.h.b16 %v1143
    %v2544 = vunpack.c.l.b16 %v1144
    %v2545 = vunpack.c.h.b16 %v1144
    %v2546 = vunpack.c.l.b16 %v1145
    %v2547 = vunpack.c.h.b16 %v1145
    %v2548 = vunpack.c.l.b16 %v1146
    %v2549 = vunpack.c.h.b16 %v1146
    %v2550 = vunpack.c.l.b16 %v1147
    %v2551 = vunpack.c.h.b16 %v1147
    %v2552 = vunpack.c.l.b16 %v1148
    %v2553 = vunpack.c.h.b16 %v1148
    %v2554 = vunpack.c.l.b16 %v1149
    %v2555 = vunpack.c.h.b16 %v1149
    %v2556 = vunpack.c.l.b16 %v1150
    %v2557 = vunpack.c.h.b16 %v1150
    %v2558 = vunpack.c.l.b16 %v1151
    %v2559 = vunpack.c.h.b16 %v1151
    %v2560 = vunpack.c.l.b16 %v1152
    %v2561 = vunpack.c.h.b16 %v1152
    %v2562 = vunpack.c.l.b16 %v1153
    %v2563 = vunpack.c.h.b16 %v1153
    %v2564 = vunpack.c.l.b16 %v1154
    %v2565 = vunpack.c.h.b16 %v1154
    %v2566 = vunpack.c.l.b16 %v1155
    %v2567 = vunpack.c.h.b16 %v1155
    %v2568 = vunpack.c.l.b16 %v1156
    %v2569 = vunpack.c.h.b16 %v1156
    %v2570 = vunpack.c.l.b16 %v1157
    %v2571 = vunpack.c.h.b16 %v1157
    %v2572 = vunpack.c.l.b16 %v1158
    %v2573 = vunpack.c.h.b16 %v1158
    %v2574 = vunpack.c.l.b16 %v1159
    %v2575 = vunpack.c.h.b16 %v1159
    %v2576 = vunpack.c.l.b16 %v1160
    %v2577 = vunpack.c.h.b16 %v1160
    %v2578 = vunpack.c.l.b16 %v1161
    %v2579 = vunpack.c.h.b16 %v1161
    %v2580 = vunpack.c.l.b16 %v1162
    %v2581 = vunpack.c.h.b16 %v1162
    %v2582 = vunpack.c.l.b16 %v1163
    %v2583 = vunpack.c.h.b16 %v1163
    %v2584 = vunpack.c.l.b16 %v1164
    %v2585 = vunpack.c.h.b16 %v1164
    %v2586 = vunpack.c.l.b16 %v1165
    %v2587 = vunpack.c.h.b16 %v1165
    %v2588 = vunpack.c.l.b16 %v1166
    %v2589 = vunpack.c.h.b16 %v1166
    %v2590 = vunpack.c.l.b16 %v1167
    %v2591 = vunpack.c.h.b16 %v1167
    %v2592 = vunpack.c.l.b16 %v1168
    %v2593 = vunpack.c.h.b16 %v1168
    %v2594 = vunpack.c.l.b16 %v1169
    %v2595 = vunpack.c.h.b16 %v1169
    %v2596 = vunpack.c.l.b16 %v1170
    %v2597 = vunpack.c.h.b16 %v1170
    %v2598 = vunpack.c.l.b16 %v1171
    %v2599 = vunpack.c.h.b16 %v1171
    %v2600 = vunpack.c.l.b16 %v1172
    %v2601 = vunpack.c.h.b16 %v1172
    %v2602 = vunpack.c.l.b16 %v1173
    %v2603 = vunpack.c.h.b16 %v1173
    %v2604 = vunpack.c.l.b16 %v1174
    %v2605 = vunpack.c.h.b16 %v1174
    %v2606 = vunpack.c.l.b16 %v1175
    %v2607 = vunpack.c.h.b16 %v1175
    %v2608 = vunpack.c.l.b16 %v1176
    %v2609 = vunpack.c.h.b16 %v1176
    %v2610 = vunpack.c.l.b16 %v1177
    %v2611 = vunpack.c.h.b16 %v1177
    %v2612 = vunpack.c.l.b16 %v1178
    %v2613 = vunpack.c.h.b16 %v1178
    %v2614 = vunpack.c.l.b16 %v1179
    %v2615 = vunpack.c.h.b16 %v1179
    %v2616 = vunpack.c.l.b16 %v1180
    %v2617 = vunpack.c.h.b16 %v1180
    %v2618 = vunpack.c.l.b16 %v1181
    %v2619 = vunpack.c.h.b16 %v1181
    %v2620 = vunpack.c.l.b16 %v1182
    %v2621 = vunpack.c.h.b16 %v1182
    %v2622 = vunpack.c.l.b16 %v1183
    %v2623 = vunpack.c.h.b16 %v1183
    %v2624 = vunpack.c.l.b16 %v1184
    %v2625 = vunpack.c.h.b16 %v1184
    %v2626 = vunpack.c.l.b16 %v1185
    %v2627 = vunpack.c.h.b16 %v1185
    %v2628 = vunpack.c.l.b16 %v1186
    %v2629 = vunpack.c.h.b16 %v1186
    %v2630 = vunpack.c.l.b16 %v1187
    %v2631 = vunpack.c.h.b16 %v1187
    %v2632 = vunpack.c.l.b16 %v1188
    %v2633 = vunpack.c.h.b16 %v1188
    %v2634 = vunpack.c.l.b16 %v1189
    %v2635 = vunpack.c.h.b16 %v1189
    %v2636 = vunpack.c.l.b16 %v1190
    %v2637 = vunpack.c.h.b16 %v1190
    %v2638 = vunpack.c.l.b16 %v1191
    %v2639 = vunpack.c.h.b16 %v1191
    %v2640 = vunpack.c.l.b16 %v1192
    %v2641 = vunpack.c.h.b16 %v1192
    %v2642 = vunpack.c.l.b16 %v1193
    %v2643 = vunpack.c.h.b16 %v1193
    %v2644 = vunpack.c.l.b16 %v1194
    %v2645 = vunpack.c.h.b16 %v1194
    %v2646 = vunpack.c.l.b16 %v1195
    %v2647 = vunpack.c.h.b16 %v1195
    %v2648 = vunpack.c.l.b16 %v1196
    %v2649 = vunpack.c.h.b16 %v1196
    %v2650 = vunpack.c.l.b16 %v1197
    %v2651 = vunpack.c.h.b16 %v1197
    %v2652 = vunpack.c.l.b16 %v1198
    %v2653 = vunpack.c.h.b16 %v1198
    %v2654 = vunpack.c.l.b16 %v1199
    %v2655 = vunpack.c.h.b16 %v1199
    %v2656 = vunpack.c.l.b16 %v1200
    %v2657 = vunpack.c.h.b16 %v1200
    %v2658 = vunpack.c.l.b16 %v1201
    %v2659 = vunpack.c.h.b16 %v1201
    %v2660 = vunpack.c.l.b16 %v1202
    %v2661 = vunpack.c.h.b16 %v1202
    %v2662 = vunpack.c.l.b16 %v1203
    %v2663 = vunpack.c.h.b16 %v1203
    %v2664 = vunpack.c.l.b16 %v1204
    %v2665 = vunpack.c.h.b16 %v1204
    %v2666 = vunpack.c.l.b16 %v1205
    %v2667 = vunpack.c.h.b16 %v1205
    %v2668 = vunpack.c.l.b16 %v1206
    %v2669 = vunpack.c.h.b16 %v1206
    %v2670 = vunpack.c.l.b16 %v1207
    %v2671 = vunpack.c.h.b16 %v1207
    %v2672 = vunpack.c.l.b16 %v1208
    %v2673 = vunpack.c.h.b16 %v1208
    %v2674 = vunpack.c.l.b16 %v1209
    %v2675 = vunpack.c.h.b16 %v1209
    %v2676 = vunpack.c.l.b16 %v1210
    %v2677 = vunpack.c.h.b16 %v1210
    %v2678 = vunpack.c.l.b16 %v1211
    %v2679 = vunpack.c.h.b16 %v1211
    %v2680 = vunpack.c.l.b16 %v1212
    %v2681 = vunpack.c.h.b16 %v1212
    %v2682 = vunpack.c.l.b16 %v1213
    %v2683 = vunpack.c.h.b16 %v1213
    %v2684 = vunpack.c.l.b16 %v1214
    %v2685 = vunpack.c.h.b16 %v1214
    %v2686 = vunpack.c.l.b16 %v1215
    %v2687 = vunpack.c.h.b16 %v1215
    %v2688 = vunpack.c.l.b16 %v1216
    %v2689 = vunpack.c.h.b16 %v1216
    %v2690 = vunpack.c.l.b16 %v1217
    %v2691 = vunpack.c.h.b16 %v1217
    %v2692 = vunpack.c.l.b16 %v1218
    %v2693 = vunpack.c.h.b16 %v1218
    %v2694 = vunpack.c.l.b16 %v1219
    %v2695 = vunpack.c.h.b16 %v1219
    %v2696 = vunpack.c.l.b16 %v1220
    %v2697 = vunpack.c.h.b16 %v1220
    %v2698 = vunpack.c.l.b16 %v1221
    %v2699 = vunpack.c.h.b16 %v1221
    %v2700 = vunpack.c.l.b16 %v1222
    %v2701 = vunpack.c.h.b16 %v1222
    %v2702 = vunpack.c.l.b16 %v1223
    %v2703 = vunpack.c.h.b16 %v1223
    %v2704 = vunpack.c.l.b16 %v1224
    %v2705 = vunpack.c.h.b16 %v1224
    %v2706 = vunpack.c.l.b16 %v1225
    %v2707 = vunpack.c.h.b16 %v1225
    %v2708 = vunpack.c.l.b16 %v1226
    %v2709 = vunpack.c.h.b16 %v1226
    %v2710 = vunpack.c.l.b16 %v1227
    %v2711 = vunpack.c.h.b16 %v1227
    %v2712 = vunpack.c.l.b16 %v1228
    %v2713 = vunpack.c.h.b16 %v1228
    %v2714 = vunpack.c.l.b16 %v1229
    %v2715 = vunpack.c.h.b16 %v1229
    %v2716 = vunpack.c.l.b16 %v1230
    %v2717 = vunpack.c.h.b16 %v1230
    %v2718 = vunpack.c.l.b16 %v1231
    %v2719 = vunpack.c.h.b16 %v1231
    %v2720 = vunpack.c.l.b16 %v1232
    %v2721 = vunpack.c.h.b16 %v1232
    %v2722 = vunpack.c.l.b16 %v1233
    %v2723 = vunpack.c.h.b16 %v1233
    %v2724 = vunpack.c.l.b16 %v1234
    %v2725 = vunpack.c.h.b16 %v1234
    %v2726 = vunpack.c.l.b16 %v1235
    %v2727 = vunpack.c.h.b16 %v1235
    %v2728 = vunpack.c.l.b16 %v1236
    %v2729 = vunpack.c.h.b16 %v1236
    %v2730 = vunpack.c.l.b16 %v1237
    %v2731 = vunpack.c.h.b16 %v1237
    %v2732 = vunpack.c.l.b16 %v1238
    %v2733 = vunpack.c.h.b16 %v1238
    %v2734 = vunpack.c.l.b16 %v1239
    %v2735 = vunpack.c.h.b16 %v1239
    %v2736 = vunpack.c.l.b16 %v1240
    %v2737 = vunpack.c.h.b16 %v1240
    %v2738 = vunpack.c.l.b16 %v1241
    %v2739 = vunpack.c.h.b16 %v1241
    %v2740 = vunpack.c.l.b16 %v1242
    %v2741 = vunpack.c.h.b16 %v1242
    %v2742 = vunpack.c.l.b16 %v1243
    %v2743 = vunpack.c.h.b16 %v1243
    %v2744 = vunpack.c.l.b16 %v1244
    %v2745 = vunpack.c.h.b16 %v1244
    %v2746 = vunpack.c.l.b16 %v1245
    %v2747 = vunpack.c.h.b16 %v1245
    %v2748 = vunpack.c.l.b16 %v1246
    %v2749 = vunpack.c.h.b16 %v1246
    %v2750 = vunpack.c.l.b16 %v1247
    %v2751 = vunpack.c.h.b16 %v1247
    %v2752 = vunpack.c.l.b16 %v1248
    %v2753 = vunpack.c.h.b16 %v1248
    %v2754 = vunpack.c.l.b16 %v1249
    %v2755 = vunpack.c.h.b16 %v1249
    %v2756 = vunpack.c.l.b16 %v1250
    %v2757 = vunpack.c.h.b16 %v1250
    %v2758 = vunpack.c.l.b16 %v1251
    %v2759 = vunpack.c.h.b16 %v1251
    %v2760 = vunpack.c.l.b16 %v1252
    %v2761 = vunpack.c.h.b16 %v1252
    %v2762 = vunpack.c.l.b16 %v1253
    %v2763 = vunpack.c.h.b16 %v1253
    %v2764 = vunpack.c.l.b16 %v1254
    %v2765 = vunpack.c.h.b16 %v1254
    %v2766 = vunpack.c.l.b16 %v1255
    %v2767 = vunpack.c.h.b16 %v1255
    %v2768 = vunpack.c.l.b16 %v1256
    %v2769 = vunpack.c.h.b16 %v1256
    %v2770 = vunpack.c.l.b16 %v1257
    %v2771 = vunpack.c.h.b16 %v1257
    %v2772 = vunpack.c.l.b16 %v1258
    %v2773 = vunpack.c.h.b16 %v1258
    %v2774 = vunpack.c.l.b16 %v1259
    %v2775 = vunpack.c.h.b16 %v1259
    %v2776 = vunpack.c.l.b16 %v1260
    %v2777 = vunpack.c.h.b16 %v1260
    %v2778 = vunpack.c.l.b16 %v1261
    %v2779 = vunpack.c.h.b16 %v1261
    %v2780 = vunpack.c.l.b16 %v1262
    %v2781 = vunpack.c.h.b16 %v1262
    %v2782 = vunpack.c.l.b16 %v1263
    %v2783 = vunpack.c.h.b16 %v1263
    %v2784 = vunpack.c.l.b16 %v1264
    %v2785 = vunpack.c.h.b16 %v1264
    %v2786 = vunpack.c.l.b16 %v1265
    %v2787 = vunpack.c.h.b16 %v1265
    %v2788 = vunpack.c.l.b16 %v1266
    %v2789 = vunpack.c.h.b16 %v1266
    %v2790 = vunpack.c.l.b16 %v1267
    %v2791 = vunpack.c.h.b16 %v1267
    %v2792 = vunpack.c.l.b16 %v1268
    %v2793 = vunpack.c.h.b16 %v1268
    %v2794 = vunpack.c.l.b16 %v1269
    %v2795 = vunpack.c.h.b16 %v1269
    %v2796 = vunpack.c.l.b16 %v1270
    %v2797 = vunpack.c.h.b16 %v1270
    %v2798 = vunpack.c.l.b16 %v1271
    %v2799 = vunpack.c.h.b16 %v1271
    %v2800 = vunpack.c.l.b16 %v1272
    %v2801 = vunpack.c.h.b16 %v1272
    %v2802 = vunpack.c.l.b16 %v1273
    %v2803 = vunpack.c.h.b16 %v1273
    %v2804 = vunpack.c.l.b16 %v1274
    %v2805 = vunpack.c.h.b16 %v1274
    %v2806 = vunpack.c.l.b16 %v1275
    %v2807 = vunpack.c.h.b16 %v1275
    %v2808 = vunpack.c.l.b16 %v1276
    %v2809 = vunpack.c.h.b16 %v1276
    %v2810 = vunpack.c.l.b16 %v1277
    %v2811 = vunpack.c.h.b16 %v1277
    %v2812 = vunpack.c.l.b16 %v1278
    %v2813 = vunpack.c.h.b16 %v1278
    %v2814 = vunpack.c.l.b16 %v1279
    %v2815 = vunpack.c.h.b16 %v1279
    %v2816 = vunpack.c.l.b16 %v1280
    %v2817 = vunpack.c.h.b16 %v1280
    %v2818 = vunpack.c.l.b16 %v1281
    %v2819 = vunpack.c.h.b16 %v1281
    %v2820 = vunpack.c.l.b16 %v1282
    %v2821 = vunpack.c.h.b16 %v1282
    %v2822 = vunpack.c.l.b16 %v1283
    %v2823 = vunpack.c.h.b16 %v1283
    %v2824 = vunpack.c.l.b16 %v1284
    %v2825 = vunpack.c.h.b16 %v1284
    %v2826 = vunpack.c.l.b16 %v1285
    %v2827 = vunpack.c.h.b16 %v1285
    %v2828 = vunpack.c.l.b16 %v1286
    %v2829 = vunpack.c.h.b16 %v1286
    %v2830 = vunpack.c.l.b16 %v1287
    %v2831 = vunpack.c.h.b16 %v1287
    %v2832 = vunpack.c.l.b16 %v1288
    %v2833 = vunpack.c.h.b16 %v1288
    %v2834 = vunpack.c.l.b16 %v1289
    %v2835 = vunpack.c.h.b16 %v1289
    %v2836 = vunpack.c.l.b16 %v1290
    %v2837 = vunpack.c.h.b16 %v1290
    %v2838 = vunpack.c.l.b16 %v1291
    %v2839 = vunpack.c.h.b16 %v1291
    %v2840 = vunpack.c.l.b16 %v1292
    %v2841 = vunpack.c.h.b16 %v1292
    %v2842 = vunpack.c.l.b16 %v1293
    %v2843 = vunpack.c.h.b16 %v1293
    %v2844 = vunpack.c.l.b16 %v1294
    %v2845 = vunpack.c.h.b16 %v1294
    %v2846 = vunpack.c.l.b16 %v1295
    %v2847 = vunpack.c.h.b16 %v1295
    %v2848 = vunpack.c.l.b16 %v1296
    %v2849 = vunpack.c.h.b16 %v1296
    %v2850 = vunpack.c.l.b16 %v1297
    %v2851 = vunpack.c.h.b16 %v1297
    %v2852 = vunpack.c.l.b16 %v1298
    %v2853 = vunpack.c.h.b16 %v1298
    %v2854 = vunpack.c.l.b16 %v1299
    %v2855 = vunpack.c.h.b16 %v1299
    %v2856 = vunpack.c.l.b16 %v1300
    %v2857 = vunpack.c.h.b16 %v1300
    %v2858 = vunpack.c.l.b16 %v1301
    %v2859 = vunpack.c.h.b16 %v1301
    %v2860 = vunpack.c.l.b16 %v1302
    %v2861 = vunpack.c.h.b16 %v1302
    %v2862 = vunpack.c.l.b16 %v1303
    %v2863 = vunpack.c.h.b16 %v1303
    %v2864 = vunpack.c.l.b16 %v1304
    %v2865 = vunpack.c.h.b16 %v1304
    %v2866 = vunpack.c.l.b16 %v1305
    %v2867 = vunpack.c.h.b16 %v1305
    %v2868 = vunpack.c.l.b16 %v1306
    %v2869 = vunpack.c.h.b16 %v1306
    %v2870 = vunpack.c.l.b16 %v1307
    %v2871 = vunpack.c.h.b16 %v1307
    %v2872 = vunpack.c.l.b16 %v1308
    %v2873 = vunpack.c.h.b16 %v1308
    %v2874 = vunpack.c.l.b16 %v1309
    %v2875 = vunpack.c.h.b16 %v1309
    %v2876 = vunpack.c.l.b16 %v1310
    %v2877 = vunpack.c.h.b16 %v1310
    %v2878 = vunpack.c.l.b16 %v1311
    %v2879 = vunpack.c.h.b16 %v1311
    %v2880 = vunpack.c.l.b16 %v1312
    %v2881 = vunpack.c.h.b16 %v1312
    %v2882 = vunpack.c.l.b16 %v1313
    %v2883 = vunpack.c.h.b16 %v1313
    %v2884 = vunpack.c.l.b16 %v1314
    %v2885 = vunpack.c.h.b16 %v1314
    %v2886 = vunpack.c.l.b16 %v1315
    %v2887 = vunpack.c.h.b16 %v1315
    %v2888 = vunpack.c.l.b16 %v1316
    %v2889 = vunpack.c.h.b16 %v1316
    %v2890 = vunpack.c.l.b16 %v1317
    %v2891 = vunpack.c.h.b16 %v1317
    %v2892 = vunpack.c.l.b16 %v1318
    %v2893 = vunpack.c.h.b16 %v1318
    %v2894 = vunpack.c.l.b16 %v1319
    %v2895 = vunpack.c.h.b16 %v1319
    %v2896 = vunpack.c.l.b16 %v1320
    %v2897 = vunpack.c.h.b16 %v1320
    %v2898 = vunpack.c.l.b16 %v1321
    %v2899 = vunpack.c.h.b16 %v1321
    %v2900 = vpack.c.b16 %v1884, %v1876
    %v2901 = vpack.c.b16 %v1885, %v1877
    %v2902 = vpack.c.b16 %v1886, %v1878
    %v2903 = vpack.c.b16 %v1887, %v1879
    %v2904 = vpack.c.b16 %v1888, %v1880
    %v2905 = vpack.c.b16 %v1889, %v1881
    %v2906 = vpack.c.b16 %v1890, %v1882
    %v2907 = vpack.c.b16 %v1891, %v1883
    %v2908 = vpack.c.b16 %v1900, %v1892
    %v2909 = vpack.c.b16 %v1901, %v1893
    %v2910 = vpack.c.b16 %v1902, %v1894
    %v2911 = vpack.c.b16 %v1903, %v1895
    %v2912 = vpack.c.b16 %v1904, %v1896
    %v2913 = vpack.c.b16 %v1905, %v1897
    %v2914 = vpack.c.b16 %v1906, %v1898
    %v2915 = vpack.c.b16 %v1907, %v1899
    %v2916 = vpack.c.b16 %v1916, %v1908
    %v2917 = vpack.c.b16 %v1917, %v1909
    %v2918 = vpack.c.b16 %v1918, %v1910
    %v2919 = vpack.c.b16 %v1919, %v1911
    %v2920 = vpack.c.b16 %v1920, %v1912
    %v2921 = vpack.c.b16 %v1921, %v1913
    %v2922 = vpack.c.b16 %v1922, %v1914
    %v2923 = vpack.c.b16 %v1923, %v1915
    %v2924 = vpack.c.b16 %v1932, %v1924
    %v2925 = vpack.c.b16 %v1933, %v1925
    %v2926 = vpack.c.b16 %v1934, %v1926
    %v2927 = vpack.c.b16 %v1935, %v1927
    %v2928 = vpack.c.b16 %v1936, %v1928
    %v2929 = vpack.c.b16 %v1937, %v1929
    %v2930 = vpack.c.b16 %v1938, %v1930
    %v2931 = vpack.c.b16 %v1939, %v1931
    %v2932 = vpack.c.b16 %v1948, %v1940
    %v2933 = vpack.c.b16 %v1949, %v1941
    %v2934 = vpack.c.b16 %v1950, %v1942
    %v2935 = vpack.c.b16 %v1951, %v1943
    %v2936 = vpack.c.b16 %v1952, %v1944
    %v2937 = vpack.c.b16 %v1953, %v1945
    %v2938 = vpack.c.b16 %v1954, %v1946
    %v2939 = vpack.c.b16 %v1955, %v1947
    %v2940 = vpack.c.b16 %v1964, %v1956
    %v2941 = vpack.c.b16 %v1965, %v1957
    %v2942 = vpack.c.b16 %v1966, %v1958
    %v2943 = vpack.c.b16 %v1967, %v1959
    %v2944 = vpack.c.b16 %v1968, %v1960
    %v2945 = vpack.c.b16 %v1969, %v1961
    %v2946 = vpack.c.b16 %v1970, %v1962
    %v2947 = vpack.c.b16 %v1971, %v1963
    %v2948 = vpack.c.b16 %v1980, %v1972
    %v2949 = vpack.c.b16 %v1981, %v1973
    %v2950 = vpack.c.b16 %v1982, %v1974
    %v2951 = vpack.c.b16 %v1983, %v1975
    %v2952 = vpack.c.b16 %v1984, %v1976
    %v2953 = vpack.c.b16 %v1985, %v1977
    %v2954 = vpack.c.b16 %v1986, %v1978
    %v2955 = vpack.c.b16 %v1987, %v1979
    %v2956 = vpack.c.b16 %v1996, %v1988
    %v2957 = vpack.c.b16 %v1997, %v1989
    %v2958 = vpack.c.b16 %v1998, %v1990
    %v2959 = vpack.c.b16 %v1999, %v1991
    %v2960 = vpack.c.b16 %v2000, %v1992
    %v2961 = vpack.c.b16 %v2001, %v1993
    %v2962 = vpack.c.b16 %v2002, %v1994
    %v2963 = vpack.c.b16 %v2003, %v1995
    %v2964 = vpack.c.b16 %v2012, %v2004
    %v2965 = vpack.c.b16 %v2013, %v2005
    %v2966 = vpack.c.b16 %v2014, %v2006
    %v2967 = vpack.c.b16 %v2015, %v2007
    %v2968 = vpack.c.b16 %v2016, %v2008
    %v2969 = vpack.c.b16 %v2017, %v2009
    %v2970 = vpack.c.b16 %v2018, %v2010
    %v2971 = vpack.c.b16 %v2019, %v2011
    %v2972 = vpack.c.b16 %v2028, %v2020
    %v2973 = vpack.c.b16 %v2029, %v2021
    %v2974 = vpack.c.b16 %v2030, %v2022
    %v2975 = vpack.c.b16 %v2031, %v2023
    %v2976 = vpack.c.b16 %v2032, %v2024
    %v2977 = vpack.c.b16 %v2033, %v2025
    %v2978 = vpack.c.b16 %v2034, %v2026
    %v2979 = vpack.c.b16 %v2035, %v2027
    %v2980 = vpack.c.b16 %v2044, %v2036
    %v2981 = vpack.c.b16 %v2045, %v2037
    %v2982 = vpack.c.b16 %v2046, %v2038
    %v2983 = vpack.c.b16 %v2047, %v2039
    %v2984 = vpack.c.b16 %v2048, %v2040
    %v2985 = vpack.c.b16 %v2049, %v2041
    %v2986 = vpack.c.b16 %v2050, %v2042
    %v2987 = vpack.c.b16 %v2051, %v2043
    %v2988 = vpack.c.b16 %v2060, %v2052
    %v2989 = vpack.c.b16 %v2061, %v2053
    %v2990 = vpack.c.b16 %v2062, %v2054
    %v2991 = vpack.c.b16 %v2063, %v2055
    %v2992 = vpack.c.b16 %v2064, %v2056
    %v2993 = vpack.c.b16 %v2065, %v2057
    %v2994 = vpack.c.b16 %v2066, %v2058
    %v2995 = vpack.c.b16 %v2067, %v2059
    %v2996 = vpack.c.b16 %v2076, %v2068
    %v2997 = vpack.c.b16 %v2077, %v2069
    %v2998 = vpack.c.b16 %v2078, %v2070
    %v2999 = vpack.c.b16 %v2079, %v2071
    %v3000 = vpack.c.b16 %v2080, %v2072
    %v3001 = vpack.c.b16 %v2081, %v2073
    %v3002 = vpack.c.b16 %v2082, %v2074
    %v3003 = vpack.c.b16 %v2083, %v2075
    %v3004 = vpack.c.b16 %v2092, %v2084
    %v3005 = vpack.c.b16 %v2093, %v2085
    %v3006 = vpack.c.b16 %v2094, %v2086
    %v3007 = vpack.c.b16 %v2095, %v2087
    %v3008 = vpack.c.b16 %v2096, %v2088
    %v3009 = vpack.c.b16 %v2097, %v2089
    %v3010 = vpack.c.b16 %v2098, %v2090
    %v3011 = vpack.c.b16 %v2099, %v2091
    %v3012 = vpack.c.b16 %v2108, %v2100
    %v3013 = vpack.c.b16 %v2109, %v2101
    %v3014 = vpack.c.b16 %v2110, %v2102
    %v3015 = vpack.c.b16 %v2111, %v2103
    %v3016 = vpack.c.b16 %v2112, %v2104
    %v3017 = vpack.c.b16 %v2113, %v2105
    %v3018 = vpack.c.b16 %v2114, %v2106
    %v3019 = vpack.c.b16 %v2115, %v2107
    %v3020 = vpack.c.b16 %v2124, %v2116
    %v3021 = vpack.c.b16 %v2125, %v2117
    %v3022 = vpack.c.b16 %v2126, %v2118
    %v3023 = vpack.c.b16 %v2127, %v2119
    %v3024 = vpack.c.b16 %v2128, %v2120
    %v3025 = vpack.c.b16 %v2129, %v2121
    %v3026 = vpack.c.b16 %v2130, %v2122
    %v3027 = vpack.c.b16 %v2131, %v2123
    %v3028 = vpack.c.b16 %v2140, %v2132
    %v3029 = vpack.c.b16 %v2141, %v2133
    %v3030 = vpack.c.b16 %v2142, %v2134
    %v3031 = vpack.c.b16 %v2143, %v2135
    %v3032 = vpack.c.b16 %v2144, %v2136
    %v3033 = vpack.c.b16 %v2145, %v2137
    %v3034 = vpack.c.b16 %v2146, %v2138
    %v3035 = vpack.c.b16 %v2147, %v2139
    %v3036 = vpack.c.b16 %v2156, %v2148
    %v3037 = vpack.c.b16 %v2157, %v2149
    %v3038 = vpack.c.b16 %v2158, %v2150
    %v3039 = vpack.c.b16 %v2159, %v2151
    %v3040 = vpack.c.b16 %v2160, %v2152
    %v3041 = vpack.c.b16 %v2161, %v2153
    %v3042 = vpack.c.b16 %v2162, %v2154
    %v3043 = vpack.c.b16 %v2163, %v2155
    %v3044 = vpack.c.b16 %v2172, %v2164
    %v3045 = vpack.c.b16 %v2173, %v2165
    %v3046 = vpack.c.b16 %v2174, %v2166
    %v3047 = vpack.c.b16 %v2175, %v2167
    %v3048 = vpack.c.b16 %v2176, %v2168
    %v3049 = vpack.c.b16 %v2177, %v2169
    %v3050 = vpack.c.b16 %v2178, %v2170
    %v3051 = vpack.c.b16 %v2179, %v2171
    %v3052 = vpack.c.b16 %v2188, %v2180
    %v3053 = vpack.c.b16 %v2189, %v2181
    %v3054 = vpack.c.b16 %v2190, %v2182
    %v3055 = vpack.c.b16 %v2191, %v2183
    %v3056 = vpack.c.b16 %v2192, %v2184
    %v3057 = vpack.c.b16 %v2193, %v2185
    %v3058 = vpack.c.b16 %v2194, %v2186
    %v3059 = vpack.c.b16 %v2195, %v2187
    %v3060 = vpack.c.b16 %v2204, %v2196
    %v3061 = vpack.c.b16 %v2205, %v2197
    %v3062 = vpack.c.b16 %v2206, %v2198
    %v3063 = vpack.c.b16 %v2207, %v2199
    %v3064 = vpack.c.b16 %v2208, %v2200
    %v3065 = vpack.c.b16 %v2209, %v2201
    %v3066 = vpack.c.b16 %v2210, %v2202
    %v3067 = vpack.c.b16 %v2211, %v2203
    %v3068 = vpack.c.b16 %v2220, %v2212
    %v3069 = vpack.c.b16 %v2221, %v2213
    %v3070 = vpack.c.b16 %v2222, %v2214
    %v3071 = vpack.c.b16 %v2223, %v2215
    %v3072 = vpack.c.b16 %v2224, %v2216
    %v3073 = vpack.c.b16 %v2225, %v2217
    %v3074 = vpack.c.b16 %v2226, %v2218
    %v3075 = vpack.c.b16 %v2227, %v2219
    %v3076 = vpack.c.b16 %v2236, %v2228
    %v3077 = vpack.c.b16 %v2237, %v2229
    %v3078 = vpack.c.b16 %v2238, %v2230
    %v3079 = vpack.c.b16 %v2239, %v2231
    %v3080 = vpack.c.b16 %v2240, %v2232
    %v3081 = vpack.c.b16 %v2241, %v2233
    %v3082 = vpack.c.b16 %v2242, %v2234
    %v3083 = vpack.c.b16 %v2243, %v2235
    %v3084 = vpack.c.b16 %v2252, %v2244
    %v3085 = vpack.c.b16 %v2253, %v2245
    %v3086 = vpack.c.b16 %v2254, %v2246
    %v3087 = vpack.c.b16 %v2255, %v2247
    %v3088 = vpack.c.b16 %v2256, %v2248
    %v3089 = vpack.c.b16 %v2257, %v2249
    %v3090 = vpack.c.b16 %v2258, %v2250
    %v3091 = vpack.c.b16 %v2259, %v2251
    %v3092 = vpack.c.b16 %v2268, %v2260
    %v3093 = vpack.c.b16 %v2269, %v2261
    %v3094 = vpack.c.b16 %v2270, %v2262
    %v3095 = vpack.c.b16 %v2271, %v2263
    %v3096 = vpack.c.b16 %v2272, %v2264
    %v3097 = vpack.c.b16 %v2273, %v2265
    %v3098 = vpack.c.b16 %v2274, %v2266
    %v3099 = vpack.c.b16 %v2275, %v2267
    %v3100 = vpack.c.b16 %v2284, %v2276
    %v3101 = vpack.c.b16 %v2285, %v2277
    %v3102 = vpack.c.b16 %v2286, %v2278
    %v3103 = vpack.c.b16 %v2287, %v2279
    %v3104 = vpack.c.b16 %v2288, %v2280
    %v3105 = vpack.c.b16 %v2289, %v2281
    %v3106 = vpack.c.b16 %v2290, %v2282
    %v3107 = vpack.c.b16 %v2291, %v2283
    %v3108 = vpack.c.b16 %v2300, %v2292
    %v3109 = vpack.c.b16 %v2301, %v2293
    %v3110 = vpack.c.b16 %v2302, %v2294
    %v3111 = vpack.c.b16 %v2303, %v2295
    %v3112 = vpack.c.b16 %v2304, %v2296
    %v3113 = vpack.c.b16 %v2305, %v2297
    %v3114 = vpack.c.b16 %v2306, %v2298
    %v3115 = vpack.c.b16 %v2307, %v2299
    %v3116 = vpack.c.b16 %v2316, %v2308
    %v3117 = vpack.c.b16 %v2317, %v2309
    %v3118 = vpack.c.b16 %v2318, %v2310
    %v3119 = vpack.c.b16 %v2319, %v2311
    %v3120 = vpack.c.b16 %v2320, %v2312
    %v3121 = vpack.c.b16 %v2321, %v2313
    %v3122 = vpack.c.b16 %v2322, %v2314
    %v3123 = vpack.c.b16 %v2323, %v2315
    %v3124 = vpack.c.b16 %v2332, %v2324
    %v3125 = vpack.c.b16 %v2333, %v2325
    %v3126 = vpack.c.b16 %v2334, %v2326
    %v3127 = vpack.c.b16 %v2335, %v2327
    %v3128 = vpack.c.b16 %v2336, %v2328
    %v3129 = vpack.c.b16 %v2337, %v2329
    %v3130 = vpack.c.b16 %v2338, %v2330
    %v3131 = vpack.c.b16 %v2339, %v2331
    %v3132 = vpack.c.b16 %v2348, %v2340
    %v3133 = vpack.c.b16 %v2349, %v2341
    %v3134 = vpack.c.b16 %v2350, %v2342
    %v3135 = vpack.c.b16 %v2351, %v2343
    %v3136 = vpack.c.b16 %v2352, %v2344
    %v3137 = vpack.c.b16 %v2353, %v2345
    %v3138 = vpack.c.b16 %v2354, %v2346
    %v3139 = vpack.c.b16 %v2355, %v2347
    %v3140 = vpack.c.b16 %v2364, %v2356
    %v3141 = vpack.c.b16 %v2365, %v2357
    %v3142 = vpack.c.b16 %v2366, %v2358
    %v3143 = vpack.c.b16 %v2367, %v2359
    %v3144 = vpack.c.b16 %v2368, %v2360
    %v3145 = vpack.c.b16 %v2369, %v2361
    %v3146 = vpack.c.b16 %v2370, %v2362
    %v3147 = vpack.c.b16 %v2371, %v2363
    %v3148 = vpack.c.b16 %v2380, %v2372
    %v3149 = vpack.c.b16 %v2381, %v2373
    %v3150 = vpack.c.b16 %v2382, %v2374
    %v3151 = vpack.c.b16 %v2383, %v2375
    %v3152 = vpack.c.b16 %v2384, %v2376
    %v3153 = vpack.c.b16 %v2385, %v2377
    %v3154 = vpack.c.b16 %v2386, %v2378
    %v3155 = vpack.c.b16 %v2387, %v2379
    %v3156 = vpack.c.b16 %v2396, %v2388
    %v3157 = vpack.c.b16 %v2397, %v2389
    %v3158 = vpack.c.b16 %v2398, %v2390
    %v3159 = vpack.c.b16 %v2399, %v2391
    %v3160 = vpack.c.b16 %v2400, %v2392
    %v3161 = vpack.c.b16 %v2401, %v2393
    %v3162 = vpack.c.b16 %v2402, %v2394
    %v3163 = vpack.c.b16 %v2403, %v2395
    %v3164 = vpack.c.b16 %v2412, %v2404
    %v3165 = vpack.c.b16 %v2413, %v2405
    %v3166 = vpack.c.b16 %v2414, %v2406
    %v3167 = vpack.c.b16 %v2415, %v2407
    %v3168 = vpack.c.b16 %v2416, %v2408
    %v3169 = vpack.c.b16 %v2417, %v2409
    %v3170 = vpack.c.b16 %v2418, %v2410
    %v3171 = vpack.c.b16 %v2419, %v2411
    %v3172 = vpack.c.b16 %v2428, %v2420
    %v3173 = vpack.c.b16 %v2429, %v2421
    %v3174 = vpack.c.b16 %v2430, %v2422
    %v3175 = vpack.c.b16 %v2431, %v2423
    %v3176 = vpack.c.b16 %v2432, %v2424
    %v3177 = vpack.c.b16 %v2433, %v2425
    %v3178 = vpack.c.b16 %v2434, %v2426
    %v3179 = vpack.c.b16 %v2435, %v2427
    %v3180 = vpack.c.b16 %v2444, %v2436
    %v3181 = vpack.c.b16 %v2445, %v2437
    %v3182 = vpack.c.b16 %v2446, %v2438
    %v3183 = vpack.c.b16 %v2447, %v2439
    %v3184 = vpack.c.b16 %v2448, %v2440
    %v3185 = vpack.c.b16 %v2449, %v2441
    %v3186 = vpack.c.b16 %v2450, %v2442
    %v3187 = vpack.c.b16 %v2451, %v2443
    %v3188 = vpack.c.b16 %v2460, %v2452
    %v3189 = vpack.c.b16 %v2461, %v2453
    %v3190 = vpack.c.b16 %v2462, %v2454
    %v3191 = vpack.c.b16 %v2463, %v2455
    %v3192 = vpack.c.b16 %v2464, %v2456
    %v3193 = vpack.c.b16 %v2465, %v2457
    %v3194 = vpack.c.b16 %v2466, %v2458
    %v3195 = vpack.c.b16 %v2467, %v2459
    %v3196 = vpack.c.b16 %v2476, %v2468
    %v3197 = vpack.c.b16 %v2477, %v2469
    %v3198 = vpack.c.b16 %v2478, %v2470
    %v3199 = vpack.c.b16 %v2479, %v2471
    %v3200 = vpack.c.b16 %v2480, %v2472
    %v3201 = vpack.c.b16 %v2481, %v2473
    %v3202 = vpack.c.b16 %v2482, %v2474
    %v3203 = vpack.c.b16 %v2483, %v2475
    %v3204 = vpack.c.b16 %v2492, %v2484
    %v3205 = vpack.c.b16 %v2493, %v2485
    %v3206 = vpack.c.b16 %v2494, %v2486
    %v3207 = vpack.c.b16 %v2495, %v2487
    %v3208 = vpack.c.b16 %v2496, %v2488
    %v3209 = vpack.c.b16 %v2497, %v2489
    %v3210 = vpack.c.b16 %v2498, %v2490
    %v3211 = vpack.c.b16 %v2499, %v2491
    %v3212 = vpack.c.b16 %v2508, %v2500
    %v3213 = vpack.c.b16 %v2509, %v2501
    %v3214 = vpack.c.b16 %v2510, %v2502
    %v3215 = vpack.c.b16 %v2511, %v2503
    %v3216 = vpack.c.b16 %v2512, %v2504
    %v3217 = vpack.c.b16 %v2513, %v2505
    %v3218 = vpack.c.b16 %v2514, %v2506
    %v3219 = vpack.c.b16 %v2515, %v2507
    %v3220 = vpack.c.b16 %v2524, %v2516
    %v3221 = vpack.c.b16 %v2525, %v2517
    %v3222 = vpack.c.b16 %v2526, %v2518
    %v3223 = vpack.c.b16 %v2527, %v2519
    %v3224 = vpack.c.b16 %v2528, %v2520
    %v3225 = vpack.c.b16 %v2529, %v2521
    %v3226 = vpack.c.b16 %v2530, %v2522
    %v3227 = vpack.c.b16 %v2531, %v2523
    %v3228 = vpack.c.b16 %v2540, %v2532
    %v3229 = vpack.c.b16 %v2541, %v2533
    %v3230 = vpack.c.b16 %v2542, %v2534
    %v3231 = vpack.c.b16 %v2543, %v2535
    %v3232 = vpack.c.b16 %v2544, %v2536
    %v3233 = vpack.c.b16 %v2545, %v2537
    %v3234 = vpack.c.b16 %v2546, %v2538
    %v3235 = vpack.c.b16 %v2547, %v2539
    %v3236 = vpack.c.b16 %v2556, %v2548
    %v3237 = vpack.c.b16 %v2557, %v2549
    %v3238 = vpack.c.b16 %v2558, %v2550
    %v3239 = vpack.c.b16 %v2559, %v2551
    %v3240 = vpack.c.b16 %v2560, %v2552
    %v3241 = vpack.c.b16 %v2561, %v2553
    %v3242 = vpack.c.b16 %v2562, %v2554
    %v3243 = vpack.c.b16 %v2563, %v2555
    %v3244 = vpack.c.b16 %v2572, %v2564
    %v3245 = vpack.c.b16 %v2573, %v2565
    %v3246 = vpack.c.b16 %v2574, %v2566
    %v3247 = vpack.c.b16 %v2575, %v2567
    %v3248 = vpack.c.b16 %v2576, %v2568
    %v3249 = vpack.c.b16 %v2577, %v2569
    %v3250 = vpack.c.b16 %v2578, %v2570
    %v3251 = vpack.c.b16 %v2579, %v2571
    %v3252 = vpack.c.b16 %v2588, %v2580
    %v3253 = vpack.c.b16 %v2589, %v2581
    %v3254 = vpack.c.b16 %v2590, %v2582
    %v3255 = vpack.c.b16 %v2591, %v2583
    %v3256 = vpack.c.b16 %v2592, %v2584
    %v3257 = vpack.c.b16 %v2593, %v2585
    %v3258 = vpack.c.b16 %v2594, %v2586
    %v3259 = vpack.c.b16 %v2595, %v2587
    %v3260 = vpack.c.b16 %v2604, %v2596
    %v3261 = vpack.c.b16 %v2605, %v2597
    %v3262 = vpack.c.b16 %v2606, %v2598
    %v3263 = vpack.c.b16 %v2607, %v2599
    %v3264 = vpack.c.b16 %v2608, %v2600
    %v3265 = vpack.c.b16 %v2609, %v2601
    %v3266 = vpack.c.b16 %v2610, %v2602
    %v3267 = vpack.c.b16 %v2611, %v2603
    %v3268 = vpack.c.b16 %v2620, %v2612
    %v3269 = vpack.c.b16 %v2621, %v2613
    %v3270 = vpack.c.b16 %v2622, %v2614
    %v3271 = vpack.c.b16 %v2623, %v2615
    %v3272 = vpack.c.b16 %v2624, %v2616
    %v3273 = vpack.c.b16 %v2625, %v2617
    %v3274 = vpack.c.b16 %v2626, %v2618
    %v3275 = vpack.c.b16 %v2627, %v2619
    %v3276 = vpack.c.b16 %v2636, %v2628
    %v3277 = vpack.c.b16 %v2637, %v2629
    %v3278 = vpack.c.b16 %v2638, %v2630
    %v3279 = vpack.c.b16 %v2639, %v2631
    %v3280 = vpack.c.b16 %v2640, %v2632
    %v3281 = vpack.c.b16 %v2641, %v2633
    %v3282 = vpack.c.b16 %v2642, %v2634
    %v3283 = vpack.c.b16 %v2643, %v2635
    %v3284 = vpack.c.b16 %v2652, %v2644
    %v3285 = vpack.c.b16 %v2653, %v2645
    %v3286 = vpack.c.b16 %v2654, %v2646
    %v3287 = vpack.c.b16 %v2655, %v2647
    %v3288 = vpack.c.b16 %v2656, %v2648
    %v3289 = vpack.c.b16 %v2657, %v2649
    %v3290 = vpack.c.b16 %v2658, %v2650
    %v3291 = vpack.c.b16 %v2659, %v2651
    %v3292 = vpack.c.b16 %v2668, %v2660
    %v3293 = vpack.c.b16 %v2669, %v2661
    %v3294 = vpack.c.b16 %v2670, %v2662
    %v3295 = vpack.c.b16 %v2671, %v2663
    %v3296 = vpack.c.b16 %v2672, %v2664
    %v3297 = vpack.c.b16 %v2673, %v2665
    %v3298 = vpack.c.b16 %v2674, %v2666
    %v3299 = vpack.c.b16 %v2675, %v2667
    %v3300 = vpack.c.b16 %v2684, %v2676
    %v3301 = vpack.c.b16 %v2685, %v2677
    %v3302 = vpack.c.b16 %v2686, %v2678
    %v3303 = vpack.c.b16 %v2687, %v2679
    %v3304 = vpack.c.b16 %v2688, %v2680
    %v3305 = vpack.c.b16 %v2689, %v2681
    %v3306 = vpack.c.b16 %v2690, %v2682
    %v3307 = vpack.c.b16 %v2691, %v2683
    %v3308 = vpack.c.b16 %v2700, %v2692
    %v3309 = vpack.c.b16 %v2701, %v2693
    %v3310 = vpack.c.b16 %v2702, %v2694
    %v3311 = vpack.c.b16 %v2703, %v2695
    %v3312 = vpack.c.b16 %v2704, %v2696
    %v3313 = vpack.c.b16 %v2705, %v2697
    %v3314 = vpack.c.b16 %v2706, %v2698
    %v3315 = vpack.c.b16 %v2707, %v2699
    %v3316 = vpack.c.b16 %v2716, %v2708
    %v3317 = vpack.c.b16 %v2717, %v2709
    %v3318 = vpack.c.b16 %v2718, %v2710
    %v3319 = vpack.c.b16 %v2719, %v2711
    %v3320 = vpack.c.b16 %v2720, %v2712
    %v3321 = vpack.c.b16 %v2721, %v2713
    %v3322 = vpack.c.b16 %v2722, %v2714
    %v3323 = vpack.c.b16 %v2723, %v2715
    %v3324 = vpack.c.b16 %v2732, %v2724
    %v3325 = vpack.c.b16 %v2733, %v2725
    %v3326 = vpack.c.b16 %v2734, %v2726
    %v3327 = vpack.c.b16 %v2735, %v2727
    %v3328 = vpack.c.b16 %v2736, %v2728
    %v3329 = vpack.c.b16 %v2737, %v2729
    %v3330 = vpack.c.b16 %v2738, %v2730
    %v3331 = vpack.c.b16 %v2739, %v2731
    %v3332 = vpack.c.b16 %v2748, %v2740
    %v3333 = vpack.c.b16 %v2749, %v2741
    %v3334 = vpack.c.b16 %v2750, %v2742
    %v3335 = vpack.c.b16 %v2751, %v2743
    %v3336 = vpack.c.b16 %v2752, %v2744
    %v3337 = vpack.c.b16 %v2753, %v2745
    %v3338 = vpack.c.b16 %v2754, %v2746
    %v3339 = vpack.c.b16 %v2755, %v2747
    %v3340 = vpack.c.b16 %v2764, %v2756
    %v3341 = vpack.c.b16 %v2765, %v2757
    %v3342 = vpack.c.b16 %v2766, %v2758
    %v3343 = vpack.c.b16 %v2767, %v2759
    %v3344 = vpack.c.b16 %v2768, %v2760
    %v3345 = vpack.c.b16 %v2769, %v2761
    %v3346 = vpack.c.b16 %v2770, %v2762
    %v3347 = vpack.c.b16 %v2771, %v2763
    %v3348 = vpack.c.b16 %v2780, %v2772
    %v3349 = vpack.c.b16 %v2781, %v2773
    %v3350 = vpack.c.b16 %v2782, %v2774
    %v3351 = vpack.c.b16 %v2783, %v2775
    %v3352 = vpack.c.b16 %v2784, %v2776
    %v3353 = vpack.c.b16 %v2785, %v2777
    %v3354 = vpack.c.b16 %v2786, %v2778
    %v3355 = vpack.c.b16 %v2787, %v2779
    %v3356 = vpack.c.b16 %v2796, %v2788
    %v3357 = vpack.c.b16 %v2797, %v2789
    %v3358 = vpack.c.b16 %v2798, %v2790
    %v3359 = vpack.c.b16 %v2799, %v2791
    %v3360 = vpack.c.b16 %v2800, %v2792
    %v3361 = vpack.c.b16 %v2801, %v2793
    %v3362 = vpack.c.b16 %v2802, %v2794
    %v3363 = vpack.c.b16 %v2803, %v2795
    %v3364 = vpack.c.b16 %v2812, %v2804
    %v3365 = vpack.c.b16 %v2813, %v2805
    %v3366 = vpack.c.b16 %v2814, %v2806
    %v3367 = vpack.c.b16 %v2815, %v2807
    %v3368 = vpack.c.b16 %v2816, %v2808
    %v3369 = vpack.c.b16 %v2817, %v2809
    %v3370 = vpack.c.b16 %v2818, %v2810
    %v3371 = vpack.c.b16 %v2819, %v2811
    %v3372 = vpack.c.b16 %v2828, %v2820
    %v3373 = vpack.c.b16 %v2829, %v2821
    %v3374 = vpack.c.b16 %v2830, %v2822
    %v3375 = vpack.c.b16 %v2831, %v2823
    %v3376 = vpack.c.b16 %v2832, %v2824
    %v3377 = vpack.c.b16 %v2833, %v2825
    %v3378 = vpack.c.b16 %v2834, %v2826
    %v3379 = vpack.c.b16 %v2835, %v2827
    %v3380 = vpack.c.b16 %v2844, %v2836
    %v3381 = vpack.c.b16 %v2845, %v2837
    %v3382 = vpack.c.b16 %v2846, %v2838
    %v3383 = vpack.c.b16 %v2847, %v2839
    %v3384 = vpack.c.b16 %v2848, %v2840
    %v3385 = vpack.c.b16 %v2849, %v2841
    %v3386 = vpack.c.b16 %v2850, %v2842
    %v3387 = vpack.c.b16 %v2851, %v2843
    %v3388 = vpack.c.b16 %v2860, %v2852
    %v3389 = vpack.c.b16 %v2861, %v2853
    %v3390 = vpack.c.b16 %v2862, %v2854
    %v3391 = vpack.c.b16 %v2863, %v2855
    %v3392 = vpack.c.b16 %v2864, %v2856
    %v3393 = vpack.c.b16 %v2865, %v2857
    %v3394 = vpack.c.b16 %v2866, %v2858
    %v3395 = vpack.c.b16 %v2867, %v2859
    %v3396 = vpack.c.b16 %v2876, %v2868
    %v3397 = vpack.c.b16 %v2877, %v2869
    %v3398 = vpack.c.b16 %v2878, %v2870
    %v3399 = vpack.c.b16 %v2879, %v2871
    %v3400 = vpack.c.b16 %v2880, %v2872
    %v3401 = vpack.c.b16 %v2881, %v2873
    %v3402 = vpack.c.b16 %v2882, %v2874
    %v3403 = vpack.c.b16 %v2883, %v2875
    %v3404 = vpack.c.b16 %v2892, %v2884
    %v3405 = vpack.c.b16 %v2893, %v2885
    %v3406 = vpack.c.b16 %v2894, %v2886
    %v3407 = vpack.c.b16 %v2895, %v2887
    %v3408 = vpack.c.b16 %v2896, %v2888
    %v3409 = vpack.c.b16 %v2897, %v2889
    %v3410 = vpack.c.b16 %v2898, %v2890
    %v3411 = vpack.c.b16 %v2899, %v2891
    %3924 = vmatprep.subr.bf16.mxu0 %v2901
    %3925 = vmatpush1.bf16.msra.mxu0 %v2900
    %3926 = vmatprep.subr.bf16.mxu0 %v2909
    %3927 = vmatpush1.bf16.msra.mxu0 %v2908
    %3928 = vmatprep.subr.bf16.mxu0 %v2917
    %3929 = vmatpush1.bf16.msra.mxu0 %v2916
    %3930 = vmatprep.subr.bf16.mxu0 %v2925
    %3931 = vmatpush1.bf16.msra.mxu0 %v2924
    %3932 = vmatprep.subr.bf16.mxu0 %v2933
    %3933 = vmatpush1.bf16.msra.mxu0 %v2932
    %3934 = vmatprep.subr.bf16.mxu0 %v2941
    %3935 = vmatpush1.bf16.msra.mxu0 %v2940
    %3936 = vmatprep.subr.bf16.mxu0 %v2949
    %3937 = vmatpush1.bf16.msra.mxu0 %v2948
    %3938 = vmatprep.subr.bf16.mxu0 %v2957
    %3939 = vmatpush1.bf16.msra.mxu0 %v2956
    %3940 = vmatprep.subr.bf16.mxu0 %v2965
    %3941 = vmatpush1.bf16.msra.mxu0 %v2964
    %3942 = vmatprep.subr.bf16.mxu0 %v2973
    %3943 = vmatpush1.bf16.msra.mxu0 %v2972
    %3944 = vmatprep.subr.bf16.mxu0 %v2981
    %3945 = vmatpush1.bf16.msra.mxu0 %v2980
    %3946 = vmatprep.subr.bf16.mxu0 %v2989
    %3947 = vmatpush1.bf16.msra.mxu0 %v2988
    %3948 = vmatprep.subr.bf16.mxu0 %v2997
    %3949 = vmatpush1.bf16.msra.mxu0 %v2996
    %3950 = vmatprep.subr.bf16.mxu0 %v3005
    %3951 = vmatpush1.bf16.msra.mxu0 %v3004
    %3952 = vmatprep.subr.bf16.mxu0 %v3013
    %3953 = vmatpush1.bf16.msra.mxu0 %v3012
    %3954 = vmatprep.subr.bf16.mxu0 %v3021
    %3955 = vmatpush1.bf16.msra.mxu0 %v3020
    %3956 = vmatprep.mubr.bf16.mxu0 %v803
    %3957 = vmatmul.mubr.bf16.gmra.mrb[0].mxu0 %v802
    %v3958 = vpop.f32.mrb[0].mxu0
    %v3959 = vadd.f32 %v1327, %v3958
    %v3960 = vpop.f32.mrb[0].mxu0
    %v3961 = vadd.f32 %v1331, %v3960
    %v3962 = vpop.f32.mrb[0].mxu0
    %v3963 = vadd.f32 %v1327, %v3962
    %v3964 = vpop.f32.mrb[0].mxu0
    %v3965 = vadd.f32 %v1331, %v3964
    %3966 = vdwg.mxu0
    %3967 = vmatprep.subr.bf16.mxu0 %v3029
    %3968 = vmatpush1.bf16.msra.mxu0 %v3028
    %3969 = vmatprep.subr.bf16.mxu0 %v3037
    %3970 = vmatpush1.bf16.msra.mxu0 %v3036
    %3971 = vmatprep.subr.bf16.mxu0 %v3045
    %3972 = vmatpush1.bf16.msra.mxu0 %v3044
    %3973 = vmatprep.subr.bf16.mxu0 %v3053
    %3974 = vmatpush1.bf16.msra.mxu0 %v3052
    %3975 = vmatprep.subr.bf16.mxu0 %v3061
    %3976 = vmatpush1.bf16.msra.mxu0 %v3060
    %3977 = vmatprep.subr.bf16.mxu0 %v3069
    %3978 = vmatpush1.bf16.msra.mxu0 %v3068
    %3979 = vmatprep.subr.bf16.mxu0 %v3077
    %3980 = vmatpush1.bf16.msra.mxu0 %v3076
    %3981 = vmatprep.subr.bf16.mxu0 %v3085
    %3982 = vmatpush1.bf16.msra.mxu0 %v3084
    %3983 = vmatprep.subr.bf16.mxu0 %v3093
    %3984 = vmatpush1.bf16.msra.mxu0 %v3092
    %3985 = vmatprep.subr.bf16.mxu0 %v3101
    %3986 = vmatpush1.bf16.msra.mxu0 %v3100
    %3987 = vmatprep.subr.bf16.mxu0 %v3109
    %3988 = vmatpush1.bf16.msra.mxu0 %v3108
    %3989 = vmatprep.subr.bf16.mxu0 %v3117
    %3990 = vmatpush1.bf16.msra.mxu0 %v3116
    %3991 = vmatprep.subr.bf16.mxu0 %v3125
    %3992 = vmatpush1.bf16.msra.mxu0 %v3124
    %3993 = vmatprep.subr.bf16.mxu0 %v3133
    %3994 = vmatpush1.bf16.msra.mxu0 %v3132
    %3995 = vmatprep.subr.bf16.mxu0 %v3141
    %3996 = vmatpush1.bf16.msra.mxu0 %v3140
    %3997 = vmatprep.subr.bf16.mxu0 %v3149
    %3998 = vmatpush1.bf16.msra.mxu0 %v3148
    %3999 = vmatprep.mubr.bf16.mxu0 %v805
    %4000 = vmatmul.mubr.bf16.gmra.mrb[0].mxu0 %v804
    %v4001 = vpop.f32.mrb[0].mxu0
    %v4002 = vadd.f32 %v3959, %v4001
    %v4003 = vpop.f32.mrb[0].mxu0
    %v4004 = vadd.f32 %v3961, %v4003
    %v4005 = vpop.f32.mrb[0].mxu0
    %v4006 = vadd.f32 %v3963, %v4005
    %v4007 = vpop.f32.mrb[0].mxu0
    %v4008 = vadd.f32 %v3965, %v4007
    %4009 = vdwg.mxu0
    %4010 = vmatprep.subr.bf16.mxu0 %v3157
    %4011 = vmatpush1.bf16.msra.mxu0 %v3156
    %4012 = vmatprep.subr.bf16.mxu0 %v3165
    %4013 = vmatpush1.bf16.msra.mxu0 %v3164
    %4014 = vmatprep.subr.bf16.mxu0 %v3173
    %4015 = vmatpush1.bf16.msra.mxu0 %v3172
    %4016 = vmatprep.subr.bf16.mxu0 %v3181
    %4017 = vmatpush1.bf16.msra.mxu0 %v3180
    %4018 = vmatprep.subr.bf16.mxu0 %v3189
    %4019 = vmatpush1.bf16.msra.mxu0 %v3188
    %4020 = vmatprep.subr.bf16.mxu0 %v3197
    %4021 = vmatpush1.bf16.msra.mxu0 %v3196
    %4022 = vmatprep.subr.bf16.mxu0 %v3205
    %4023 = vmatpush1.bf16.msra.mxu0 %v3204
    %4024 = vmatprep.subr.bf16.mxu0 %v3213
    %4025 = vmatpush1.bf16.msra.mxu0 %v3212
    %4026 = vmatprep.subr.bf16.mxu0 %v3221
    %4027 = vmatpush1.bf16.msra.mxu0 %v3220
    %4028 = vmatprep.subr.bf16.mxu0 %v3229
    %4029 = vmatpush1.bf16.msra.mxu0 %v3228
    %4030 = vmatprep.subr.bf16.mxu0 %v3237
    %4031 = vmatpush1.bf16.msra.mxu0 %v3236
    %4032 = vmatprep.subr.bf16.mxu0 %v3245
    %4033 = vmatpush1.bf16.msra.mxu0 %v3244
    %4034 = vmatprep.subr.bf16.mxu0 %v3253
    %4035 = vmatpush1.bf16.msra.mxu0 %v3252
    %4036 = vmatprep.subr.bf16.mxu0 %v3261
    %4037 = vmatpush1.bf16.msra.mxu0 %v3260
    %4038 = vmatprep.subr.bf16.mxu0 %v3269
    %4039 = vmatpush1.bf16.msra.mxu0 %v3268
    %4040 = vmatprep.subr.bf16.mxu0 %v3277
    %4041 = vmatpush1.bf16.msra.mxu0 %v3276
    %4042 = vmatprep.mubr.bf16.mxu0 %v807
    %4043 = vmatmul.mubr.bf16.gmra.mrb[0].mxu0 %v806
    %v4044 = vpop.f32.mrb[0].mxu0
    %v4045 = vadd.f32 %v4002, %v4044
    %v4046 = vpop.f32.mrb[0].mxu0
    %v4047 = vadd.f32 %v4004, %v4046
    %v4048 = vpop.f32.mrb[0].mxu0
    %v4049 = vadd.f32 %v4006, %v4048
    %v4050 = vpop.f32.mrb[0].mxu0
    %v4051 = vadd.f32 %v4008, %v4050
    %4052 = vdwg.mxu0
    %4053 = vmatprep.subr.bf16.mxu0 %v3285
    %4054 = vmatpush1.bf16.msra.mxu0 %v3284
    %4055 = vmatprep.subr.bf16.mxu0 %v3293
    %4056 = vmatpush1.bf16.msra.mxu0 %v3292
    %4057 = vmatprep.subr.bf16.mxu0 %v3301
    %4058 = vmatpush1.bf16.msra.mxu0 %v3300
    %4059 = vmatprep.subr.bf16.mxu0 %v3309
    %4060 = vmatpush1.bf16.msra.mxu0 %v3308
    %4061 = vmatprep.subr.bf16.mxu0 %v3317
    %4062 = vmatpush1.bf16.msra.mxu0 %v3316
    %4063 = vmatprep.subr.bf16.mxu0 %v3325
    %4064 = vmatpush1.bf16.msra.mxu0 %v3324
    %4065 = vmatprep.subr.bf16.mxu0 %v3333
    %4066 = vmatpush1.bf16.msra.mxu0 %v3332
    %4067 = vmatprep.subr.bf16.mxu0 %v3341
    %4068 = vmatpush1.bf16.msra.mxu0 %v3340
    %4069 = vmatprep.subr.bf16.mxu0 %v3349
    %4070 = vmatpush1.bf16.msra.mxu0 %v3348
    %4071 = vmatprep.subr.bf16.mxu0 %v3357
    %4072 = vmatpush1.bf16.msra.mxu0 %v3356
    %4073 = vmatprep.subr.bf16.mxu0 %v3365
    %4074 = vmatpush1.bf16.msra.mxu0 %v3364
    %4075 = vmatprep.subr.bf16.mxu0 %v3373
    %4076 = vmatpush1.bf16.msra.mxu0 %v3372
    %4077 = vmatprep.subr.bf16.mxu0 %v3381
    %4078 = vmatpush1.bf16.msra.mxu0 %v3380
    %4079 = vmatprep.subr.bf16.mxu0 %v3389
    %4080 = vmatpush1.bf16.msra.mxu0 %v3388
    %4081 = vmatprep.subr.bf16.mxu0 %v3397
    %4082 = vmatpush1.bf16.msra.mxu0 %v3396
    %4083 = vmatprep.subr.bf16.mxu0 %v3405
    %4084 = vmatpush1.bf16.msra.mxu0 %v3404
    %4085 = vmatprep.mubr.bf16.mxu0 %v809
    %4086 = vmatmul.mubr.bf16.gmra.mrb[0].mxu0 %v808
    %v4087 = vpop.f32.mrb[0].mxu0
    %v4088 = vadd.f32 %v4045, %v4087
    %v4089 = vpop.f32.mrb[0].mxu0
    %v4090 = vadd.f32 %v4047, %v4089
    %v4091 = vpop.f32.mrb[0].mxu0
    %v4092 = vadd.f32 %v4049, %v4091
    %v4093 = vpop.f32.mrb[0].mxu0
    %v4094 = vadd.f32 %v4051, %v4093
    %4095 = vdwg.mxu0
    %4096 = vmatprep.subr.bf16.mxu0 %v2903
    %4097 = vmatpush1.bf16.msra.mxu0 %v2902
    %4098 = vmatprep.subr.bf16.mxu0 %v2911
    %4099 = vmatpush1.bf16.msra.mxu0 %v2910
    %4100 = vmatprep.subr.bf16.mxu0 %v2919
    %4101 = vmatpush1.bf16.msra.mxu0 %v2918
    %4102 = vmatprep.subr.bf16.mxu0 %v2927
    %4103 = vmatpush1.bf16.msra.mxu0 %v2926
    %4104 = vmatprep.subr.bf16.mxu0 %v2935
    %4105 = vmatpush1.bf16.msra.mxu0 %v2934
    %4106 = vmatprep.subr.bf16.mxu0 %v2943
    %4107 = vmatpush1.bf16.msra.mxu0 %v2942
    %4108 = vmatprep.subr.bf16.mxu0 %v2951
    %4109 = vmatpush1.bf16.msra.mxu0 %v2950
    %4110 = vmatprep.subr.bf16.mxu0 %v2959
    %4111 = vmatpush1.bf16.msra.mxu0 %v2958
    %4112 = vmatprep.subr.bf16.mxu0 %v2967
    %4113 = vmatpush1.bf16.msra.mxu0 %v2966
    %4114 = vmatprep.subr.bf16.mxu0 %v2975
    %4115 = vmatpush1.bf16.msra.mxu0 %v2974
    %4116 = vmatprep.subr.bf16.mxu0 %v2983
    %4117 = vmatpush1.bf16.msra.mxu0 %v2982
    %4118 = vmatprep.subr.bf16.mxu0 %v2991
    %4119 = vmatpush1.bf16.msra.mxu0 %v2990
    %4120 = vmatprep.subr.bf16.mxu0 %v2999
    %4121 = vmatpush1.bf16.msra.mxu0 %v2998
    %4122 = vmatprep.subr.bf16.mxu0 %v3007
    %4123 = vmatpush1.bf16.msra.mxu0 %v3006
    %4124 = vmatprep.subr.bf16.mxu0 %v3015
    %4125 = vmatpush1.bf16.msra.mxu0 %v3014
    %4126 = vmatprep.subr.bf16.mxu0 %v3023
    %4127 = vmatpush1.bf16.msra.mxu0 %v3022
    %4128 = vmatprep.mubr.bf16.mxu0 %v803
    %4129 = vmatmul.mubr.bf16.gmra.mrb[0].mxu0 %v802
    %v4130 = vpop.f32.mrb[0].mxu0
    %v4131 = vadd.f32 %v1335, %v4130
    %v4132 = vpop.f32.mrb[0].mxu0
    %v4133 = vadd.f32 %v1339, %v4132
    %v4134 = vpop.f32.mrb[0].mxu0
    %v4135 = vadd.f32 %v1335, %v4134
    %v4136 = vpop.f32.mrb[0].mxu0
    %v4137 = vadd.f32 %v1339, %v4136
    %4138 = vdwg.mxu0
    %4139 = vmatprep.subr.bf16.mxu0 %v3031
    %4140 = vmatpush1.bf16.msra.mxu0 %v3030
    %4141 = vmatprep.subr.bf16.mxu0 %v3039
    %4142 = vmatpush1.bf16.msra.mxu0 %v3038
    %4143 = vmatprep.subr.bf16.mxu0 %v3047
    %4144 = vmatpush1.bf16.msra.mxu0 %v3046
    %4145 = vmatprep.subr.bf16.mxu0 %v3055
    %4146 = vmatpush1.bf16.msra.mxu0 %v3054
    %4147 = vmatprep.subr.bf16.mxu0 %v3063
    %4148 = vmatpush1.bf16.msra.mxu0 %v3062
    %4149 = vmatprep.subr.bf16.mxu0 %v3071
    %4150 = vmatpush1.bf16.msra.mxu0 %v3070
    %4151 = vmatprep.subr.bf16.mxu0 %v3079
    %4152 = vmatpush1.bf16.msra.mxu0 %v3078
    %4153 = vmatprep.subr.bf16.mxu0 %v3087
    %4154 = vmatpush1.bf16.msra.mxu0 %v3086
    %4155 = vmatprep.subr.bf16.mxu0 %v3095
    %4156 = vmatpush1.bf16.msra.mxu0 %v3094
    %4157 = vmatprep.subr.bf16.mxu0 %v3103
    %4158 = vmatpush1.bf16.msra.mxu0 %v3102
    %4159 = vmatprep.subr.bf16.mxu0 %v3111
    %4160 = vmatpush1.bf16.msra.mxu0 %v3110
    %4161 = vmatprep.subr.bf16.mxu0 %v3119
    %4162 = vmatpush1.bf16.msra.mxu0 %v3118
    %4163 = vmatprep.subr.bf16.mxu0 %v3127
    %4164 = vmatpush1.bf16.msra.mxu0 %v3126
    %4165 = vmatprep.subr.bf16.mxu0 %v3135
    %4166 = vmatpush1.bf16.msra.mxu0 %v3134
    %4167 = vmatprep.subr.bf16.mxu0 %v3143
    %4168 = vmatpush1.bf16.msra.mxu0 %v3142
    %4169 = vmatprep.subr.bf16.mxu0 %v3151
    %4170 = vmatpush1.bf16.msra.mxu0 %v3150
    %4171 = vmatprep.mubr.bf16.mxu0 %v805
    %4172 = vmatmul.mubr.bf16.gmra.mrb[0].mxu0 %v804
    %v4173 = vpop.f32.mrb[0].mxu0
    %v4174 = vadd.f32 %v4131, %v4173
    %v4175 = vpop.f32.mrb[0].mxu0
    %v4176 = vadd.f32 %v4133, %v4175
    %v4177 = vpop.f32.mrb[0].mxu0
    %v4178 = vadd.f32 %v4135, %v4177
    %v4179 = vpop.f32.mrb[0].mxu0
    %v4180 = vadd.f32 %v4137, %v4179
    %4181 = vdwg.mxu0
    %4182 = vmatprep.subr.bf16.mxu0 %v3159
    %4183 = vmatpush1.bf16.msra.mxu0 %v3158
    %4184 = vmatprep.subr.bf16.mxu0 %v3167
    %4185 = vmatpush1.bf16.msra.mxu0 %v3166
    %4186 = vmatprep.subr.bf16.mxu0 %v3175
    %4187 = vmatpush1.bf16.msra.mxu0 %v3174
    %4188 = vmatprep.subr.bf16.mxu0 %v3183
    %4189 = vmatpush1.bf16.msra.mxu0 %v3182
    %4190 = vmatprep.subr.bf16.mxu0 %v3191
    %4191 = vmatpush1.bf16.msra.mxu0 %v3190
    %4192 = vmatprep.subr.bf16.mxu0 %v3199
    %4193 = vmatpush1.bf16.msra.mxu0 %v3198
    %4194 = vmatprep.subr.bf16.mxu0 %v3207
    %4195 = vmatpush1.bf16.msra.mxu0 %v3206
    %4196 = vmatprep.subr.bf16.mxu0 %v3215
    %4197 = vmatpush1.bf16.msra.mxu0 %v3214
    %4198 = vmatprep.subr.bf16.mxu0 %v3223
    %4199 = vmatpush1.bf16.msra.mxu0 %v3222
    %4200 = vmatprep.subr.bf16.mxu0 %v3231
    %4201 = vmatpush1.bf16.msra.mxu0 %v3230
    %4202 = vmatprep.subr.bf16.mxu0 %v3239
    %4203 = vmatpush1.bf16.msra.mxu0 %v3238
    %4204 = vmatprep.subr.bf16.mxu0 %v3247
    %4205 = vmatpush1.bf16.msra.mxu0 %v3246
    %4206 = vmatprep.subr.bf16.mxu0 %v3255
    %4207 = vmatpush1.bf16.msra.mxu0 %v3254
    %4208 = vmatprep.subr.bf16.mxu0 %v3263
    %4209 = vmatpush1.bf16.msra.mxu0 %v3262
    %4210 = vmatprep.subr.bf16.mxu0 %v3271
    %4211 = vmatpush1.bf16.msra.mxu0 %v3270
    %4212 = vmatprep.subr.bf16.mxu0 %v3279
    %4213 = vmatpush1.bf16.msra.mxu0 %v3278
    %4214 = vmatprep.mubr.bf16.mxu0 %v807
    %4215 = vmatmul.mubr.bf16.gmra.mrb[0].mxu0 %v806
    %v4216 = vpop.f32.mrb[0].mxu0
    %v4217 = vadd.f32 %v4174, %v4216
    %v4218 = vpop.f32.mrb[0].mxu0
    %v4219 = vadd.f32 %v4176, %v4218
    %v4220 = vpop.f32.mrb[0].mxu0
    %v4221 = vadd.f32 %v4178, %v4220
    %v4222 = vpop.f32.mrb[0].mxu0
    %v4223 = vadd.f32 %v4180, %v4222
    %4224 = vdwg.mxu0
    %4225 = vmatprep.subr.bf16.mxu0 %v3287
    %4226 = vmatpush1.bf16.msra.mxu0 %v3286
    %4227 = vmatprep.subr.bf16.mxu0 %v3295
    %4228 = vmatpush1.bf16.msra.mxu0 %v3294
    %4229 = vmatprep.subr.bf16.mxu0 %v3303
    %4230 = vmatpush1.bf16.msra.mxu0 %v3302
    %4231 = vmatprep.subr.bf16.mxu0 %v3311
    %4232 = vmatpush1.bf16.msra.mxu0 %v3310
    %4233 = vmatprep.subr.bf16.mxu0 %v3319
    %4234 = vmatpush1.bf16.msra.mxu0 %v3318
    %4235 = vmatprep.subr.bf16.mxu0 %v3327
    %4236 = vmatpush1.bf16.msra.mxu0 %v3326
    %4237 = vmatprep.subr.bf16.mxu0 %v3335
    %4238 = vmatpush1.bf16.msra.mxu0 %v3334
    %4239 = vmatprep.subr.bf16.mxu0 %v3343
    %4240 = vmatpush1.bf16.msra.mxu0 %v3342
    %4241 = vmatprep.subr.bf16.mxu0 %v3351
    %4242 = vmatpush1.bf16.msra.mxu0 %v3350
    %4243 = vmatprep.subr.bf16.mxu0 %v3359
    %4244 = vmatpush1.bf16.msra.mxu0 %v3358
    %4245 = vmatprep.subr.bf16.mxu0 %v3367
    %4246 = vmatpush1.bf16.msra.mxu0 %v3366
    %4247 = vmatprep.subr.bf16.mxu0 %v3375
    %4248 = vmatpush1.bf16.msra.mxu0 %v3374
    %4249 = vmatprep.subr.bf16.mxu0 %v3383
    %4250 = vmatpush1.bf16.msra.mxu0 %v3382
    %4251 = vmatprep.subr.bf16.mxu0 %v3391
    %4252 = vmatpush1.bf16.msra.mxu0 %v3390
    %4253 = vmatprep.subr.bf16.mxu0 %v3399
    %4254 = vmatpush1.bf16.msra.mxu0 %v3398
    %4255 = vmatprep.subr.bf16.mxu0 %v3407
    %4256 = vmatpush1.bf16.msra.mxu0 %v3406
    %4257 = vmatprep.mubr.bf16.mxu0 %v809
    %4258 = vmatmul.mubr.bf16.gmra.mrb[0].mxu0 %v808
    %v4259 = vpop.f32.mrb[0].mxu0
    %v4260 = vadd.f32 %v4217, %v4259
    %v4261 = vpop.f32.mrb[0].mxu0
    %v4262 = vadd.f32 %v4219, %v4261
    %v4263 = vpop.f32.mrb[0].mxu0
    %v4264 = vadd.f32 %v4221, %v4263
    %v4265 = vpop.f32.mrb[0].mxu0
    %v4266 = vadd.f32 %v4223, %v4265
    %4267 = vdwg.mxu0
    %4268 = vmatprep.subr.bf16.mxu0 %v2905
    %4269 = vmatpush1.bf16.msra.mxu0 %v2904
    %4270 = vmatprep.subr.bf16.mxu0 %v2913
    %4271 = vmatpush1.bf16.msra.mxu0 %v2912
    %4272 = vmatprep.subr.bf16.mxu0 %v2921
    %4273 = vmatpush1.bf16.msra.mxu0 %v2920
    %4274 = vmatprep.subr.bf16.mxu0 %v2929
    %4275 = vmatpush1.bf16.msra.mxu0 %v2928
    %4276 = vmatprep.subr.bf16.mxu0 %v2937
    %4277 = vmatpush1.bf16.msra.mxu0 %v2936
    %4278 = vmatprep.subr.bf16.mxu0 %v2945
    %4279 = vmatpush1.bf16.msra.mxu0 %v2944
    %4280 = vmatprep.subr.bf16.mxu0 %v2953
    %4281 = vmatpush1.bf16.msra.mxu0 %v2952
    %4282 = vmatprep.subr.bf16.mxu0 %v2961
    %4283 = vmatpush1.bf16.msra.mxu0 %v2960
    %4284 = vmatprep.subr.bf16.mxu0 %v2969
    %4285 = vmatpush1.bf16.msra.mxu0 %v2968
    %4286 = vmatprep.subr.bf16.mxu0 %v2977
    %4287 = vmatpush1.bf16.msra.mxu0 %v2976
    %4288 = vmatprep.subr.bf16.mxu0 %v2985
    %4289 = vmatpush1.bf16.msra.mxu0 %v2984
    %4290 = vmatprep.subr.bf16.mxu0 %v2993
    %4291 = vmatpush1.bf16.msra.mxu0 %v2992
    %4292 = vmatprep.subr.bf16.mxu0 %v3001
    %4293 = vmatpush1.bf16.msra.mxu0 %v3000
    %4294 = vmatprep.subr.bf16.mxu0 %v3009
    %4295 = vmatpush1.bf16.msra.mxu0 %v3008
    %4296 = vmatprep.subr.bf16.mxu0 %v3017
    %4297 = vmatpush1.bf16.msra.mxu0 %v3016
    %4298 = vmatprep.subr.bf16.mxu0 %v3025
    %4299 = vmatpush1.bf16.msra.mxu0 %v3024
    %4300 = vmatprep.mubr.bf16.mxu0 %v803
    %4301 = vmatmul.mubr.bf16.gmra.mrb[0].mxu0 %v802
    %v4302 = vpop.f32.mrb[0].mxu0
    %v4303 = vadd.f32 %v1343, %v4302
    %v4304 = vpop.f32.mrb[0].mxu0
    %v4305 = vadd.f32 %v1347, %v4304
    %v4306 = vpop.f32.mrb[0].mxu0
    %v4307 = vadd.f32 %v1343, %v4306
    %v4308 = vpop.f32.mrb[0].mxu0
    %v4309 = vadd.f32 %v1347, %v4308
    %4310 = vdwg.mxu0
    %4311 = vmatprep.subr.bf16.mxu0 %v3033
    %4312 = vmatpush1.bf16.msra.mxu0 %v3032
    %4313 = vmatprep.subr.bf16.mxu0 %v3041
    %4314 = vmatpush1.bf16.msra.mxu0 %v3040
    %4315 = vmatprep.subr.bf16.mxu0 %v3049
    %4316 = vmatpush1.bf16.msra.mxu0 %v3048
    %4317 = vmatprep.subr.bf16.mxu0 %v3057
    %4318 = vmatpush1.bf16.msra.mxu0 %v3056
    %4319 = vmatprep.subr.bf16.mxu0 %v3065
    %4320 = vmatpush1.bf16.msra.mxu0 %v3064
    %4321 = vmatprep.subr.bf16.mxu0 %v3073
    %4322 = vmatpush1.bf16.msra.mxu0 %v3072
    %4323 = vmatprep.subr.bf16.mxu0 %v3081
    %4324 = vmatpush1.bf16.msra.mxu0 %v3080
    %4325 = vmatprep.subr.bf16.mxu0 %v3089
    %4326 = vmatpush1.bf16.msra.mxu0 %v3088
    %4327 = vmatprep.subr.bf16.mxu0 %v3097
    %4328 = vmatpush1.bf16.msra.mxu0 %v3096
    %4329 = vmatprep.subr.bf16.mxu0 %v3105
    %4330 = vmatpush1.bf16.msra.mxu0 %v3104
    %4331 = vmatprep.subr.bf16.mxu0 %v3113
    %4332 = vmatpush1.bf16.msra.mxu0 %v3112
    %4333 = vmatprep.subr.bf16.mxu0 %v3121
    %4334 = vmatpush1.bf16.msra.mxu0 %v3120
    %4335 = vmatprep.subr.bf16.mxu0 %v3129
    %4336 = vmatpush1.bf16.msra.mxu0 %v3128
    %4337 = vmatprep.subr.bf16.mxu0 %v3137
    %4338 = vmatpush1.bf16.msra.mxu0 %v3136
    %4339 = vmatprep.subr.bf16.mxu0 %v3145
    %4340 = vmatpush1.bf16.msra.mxu0 %v3144
    %4341 = vmatprep.subr.bf16.mxu0 %v3153
    %4342 = vmatpush1.bf16.msra.mxu0 %v3152
    %4343 = vmatprep.mubr.bf16.mxu0 %v805
    %4344 = vmatmul.mubr.bf16.gmra.mrb[0].mxu0 %v804
    %v4345 = vpop.f32.mrb[0].mxu0
    %v4346 = vadd.f32 %v4303, %v4345
    %v4347 = vpop.f32.mrb[0].mxu0
    %v4348 = vadd.f32 %v4305, %v4347
    %v4349 = vpop.f32.mrb[0].mxu0
    %v4350 = vadd.f32 %v4307, %v4349
    %v4351 = vpop.f32.mrb[0].mxu0
    %v4352 = vadd.f32 %v4309, %v4351
    %4353 = vdwg.mxu0
    %4354 = vmatprep.subr.bf16.mxu0 %v3161
    %4355 = vmatpush1.bf16.msra.mxu0 %v3160
    %4356 = vmatprep.subr.bf16.mxu0 %v3169
    %4357 = vmatpush1.bf16.msra.mxu0 %v3168
    %4358 = vmatprep.subr.bf16.mxu0 %v3177
    %4359 = vmatpush1.bf16.msra.mxu0 %v3176
    %4360 = vmatprep.subr.bf16.mxu0 %v3185
    %4361 = vmatpush1.bf16.msra.mxu0 %v3184
    %4362 = vmatprep.subr.bf16.mxu0 %v3193
    %4363 = vmatpush1.bf16.msra.mxu0 %v3192
    %4364 = vmatprep.subr.bf16.mxu0 %v3201
    %4365 = vmatpush1.bf16.msra.mxu0 %v3200
    %4366 = vmatprep.subr.bf16.mxu0 %v3209
    %4367 = vmatpush1.bf16.msra.mxu0 %v3208
    %4368 = vmatprep.subr.bf16.mxu0 %v3217
    %4369 = vmatpush1.bf16.msra.mxu0 %v3216
    %4370 = vmatprep.subr.bf16.mxu0 %v3225
    %4371 = vmatpush1.bf16.msra.mxu0 %v3224
    %4372 = vmatprep.subr.bf16.mxu0 %v3233
    %4373 = vmatpush1.bf16.msra.mxu0 %v3232
    %4374 = vmatprep.subr.bf16.mxu0 %v3241
    %4375 = vmatpush1.bf16.msra.mxu0 %v3240
    %4376 = vmatprep.subr.bf16.mxu0 %v3249
    %4377 = vmatpush1.bf16.msra.mxu0 %v3248
    %4378 = vmatprep.subr.bf16.mxu0 %v3257
    %4379 = vmatpush1.bf16.msra.mxu0 %v3256
    %4380 = vmatprep.subr.bf16.mxu0 %v3265
    %4381 = vmatpush1.bf16.msra.mxu0 %v3264
    %4382 = vmatprep.subr.bf16.mxu0 %v3273
    %4383 = vmatpush1.bf16.msra.mxu0 %v3272
    %4384 = vmatprep.subr.bf16.mxu0 %v3281
    %4385 = vmatpush1.bf16.msra.mxu0 %v3280
    %4386 = vmatprep.mubr.bf16.mxu0 %v807
    %4387 = vmatmul.mubr.bf16.gmra.mrb[0].mxu0 %v806
    %v4388 = vpop.f32.mrb[0].mxu0
    %v4389 = vadd.f32 %v4346, %v4388
    %v4390 = vpop.f32.mrb[0].mxu0
    %v4391 = vadd.f32 %v4348, %v4390
    %v4392 = vpop.f32.mrb[0].mxu0
    %v4393 = vadd.f32 %v4350, %v4392
    %v4394 = vpop.f32.mrb[0].mxu0
    %v4395 = vadd.f32 %v4352, %v4394
    %4396 = vdwg.mxu0
    %4397 = vmatprep.subr.bf16.mxu0 %v3289
    %4398 = vmatpush1.bf16.msra.mxu0 %v3288
    %4399 = vmatprep.subr.bf16.mxu0 %v3297
    %4400 = vmatpush1.bf16.msra.mxu0 %v3296
    %4401 = vmatprep.subr.bf16.mxu0 %v3305
    %4402 = vmatpush1.bf16.msra.mxu0 %v3304
    %4403 = vmatprep.subr.bf16.mxu0 %v3313
    %4404 = vmatpush1.bf16.msra.mxu0 %v3312
    %4405 = vmatprep.subr.bf16.mxu0 %v3321
    %4406 = vmatpush1.bf16.msra.mxu0 %v3320
    %4407 = vmatprep.subr.bf16.mxu0 %v3329
    %4408 = vmatpush1.bf16.msra.mxu0 %v3328
    %4409 = vmatprep.subr.bf16.mxu0 %v3337
    %4410 = vmatpush1.bf16.msra.mxu0 %v3336
    %4411 = vmatprep.subr.bf16.mxu0 %v3345
    %4412 = vmatpush1.bf16.msra.mxu0 %v3344
    %4413 = vmatprep.subr.bf16.mxu0 %v3353
    %4414 = vmatpush1.bf16.msra.mxu0 %v3352
    %4415 = vmatprep.subr.bf16.mxu0 %v3361
    %4416 = vmatpush1.bf16.msra.mxu0 %v3360
    %4417 = vmatprep.subr.bf16.mxu0 %v3369
    %4418 = vmatpush1.bf16.msra.mxu0 %v3368
    %4419 = vmatprep.subr.bf16.mxu0 %v3377
    %4420 = vmatpush1.bf16.msra.mxu0 %v3376
    %4421 = vmatprep.subr.bf16.mxu0 %v3385
    %4422 = vmatpush1.bf16.msra.mxu0 %v3384
    %4423 = vmatprep.subr.bf16.mxu0 %v3393
    %4424 = vmatpush1.bf16.msra.mxu0 %v3392
    %4425 = vmatprep.subr.bf16.mxu0 %v3401
    %4426 = vmatpush1.bf16.msra.mxu0 %v3400
    %4427 = vmatprep.subr.bf16.mxu0 %v3409
    %4428 = vmatpush1.bf16.msra.mxu0 %v3408
    %4429 = vmatprep.mubr.bf16.mxu0 %v809
    %4430 = vmatmul.mubr.bf16.gmra.mrb[0].mxu0 %v808
    %v4431 = vpop.f32.mrb[0].mxu0
    %v4432 = vadd.f32 %v4389, %v4431
    %v4433 = vpop.f32.mrb[0].mxu0
    %v4434 = vadd.f32 %v4391, %v4433
    %v4435 = vpop.f32.mrb[0].mxu0
    %v4436 = vadd.f32 %v4393, %v4435
    %v4437 = vpop.f32.mrb[0].mxu0
    %v4438 = vadd.f32 %v4395, %v4437
    %4439 = vdwg.mxu0
    %4440 = vmatprep.subr.bf16.mxu0 %v2907
    %4441 = vmatpush1.bf16.msra.mxu0 %v2906
    %4442 = vmatprep.subr.bf16.mxu0 %v2915
    %4443 = vmatpush1.bf16.msra.mxu0 %v2914
    %4444 = vmatprep.subr.bf16.mxu0 %v2923
    %4445 = vmatpush1.bf16.msra.mxu0 %v2922
    %4446 = vmatprep.subr.bf16.mxu0 %v2931
    %4447 = vmatpush1.bf16.msra.mxu0 %v2930
    %4448 = vmatprep.subr.bf16.mxu0 %v2939
    %4449 = vmatpush1.bf16.msra.mxu0 %v2938
    %4450 = vmatprep.subr.bf16.mxu0 %v2947
    %4451 = vmatpush1.bf16.msra.mxu0 %v2946
    %4452 = vmatprep.subr.bf16.mxu0 %v2955
    %4453 = vmatpush1.bf16.msra.mxu0 %v2954
    %4454 = vmatprep.subr.bf16.mxu0 %v2963
    %4455 = vmatpush1.bf16.msra.mxu0 %v2962
    %4456 = vmatprep.subr.bf16.mxu0 %v2971
    %4457 = vmatpush1.bf16.msra.mxu0 %v2970
    %4458 = vmatprep.subr.bf16.mxu0 %v2979
    %4459 = vmatpush1.bf16.msra.mxu0 %v2978
    %4460 = vmatprep.subr.bf16.mxu0 %v2987
    %4461 = vmatpush1.bf16.msra.mxu0 %v2986
    %4462 = vmatprep.subr.bf16.mxu0 %v2995
    %4463 = vmatpush1.bf16.msra.mxu0 %v2994
    %4464 = vmatprep.subr.bf16.mxu0 %v3003
    %4465 = vmatpush1.bf16.msra.mxu0 %v3002
    %4466 = vmatprep.subr.bf16.mxu0 %v3011
    %4467 = vmatpush1.bf16.msra.mxu0 %v3010
    %4468 = vmatprep.subr.bf16.mxu0 %v3019
    %4469 = vmatpush1.bf16.msra.mxu0 %v3018
    %4470 = vmatprep.subr.bf16.mxu0 %v3027
    %4471 = vmatpush1.bf16.msra.mxu0 %v3026
    %4472 = vmatprep.mubr.bf16.mxu0 %v803
    %4473 = vmatmul.mubr.bf16.gmra.mrb[0].mxu0 %v802
    %v4474 = vpop.f32.mrb[0].mxu0
    %v4475 = vadd.f32 %v1351, %v4474
    %v4476 = vpop.f32.mrb[0].mxu0
    %v4477 = vadd.f32 %v1355, %v4476
    %v4478 = vpop.f32.mrb[0].mxu0
    %v4479 = vadd.f32 %v1351, %v4478
    %v4480 = vpop.f32.mrb[0].mxu0
    %v4481 = vadd.f32 %v1355, %v4480
    %4482 = vdwg.mxu0
    %4483 = vmatprep.subr.bf16.mxu0 %v3035
    %4484 = vmatpush1.bf16.msra.mxu0 %v3034
    %4485 = vmatprep.subr.bf16.mxu0 %v3043
    %4486 = vmatpush1.bf16.msra.mxu0 %v3042
    %4487 = vmatprep.subr.bf16.mxu0 %v3051
    %4488 = vmatpush1.bf16.msra.mxu0 %v3050
    %4489 = vmatprep.subr.bf16.mxu0 %v3059
    %4490 = vmatpush1.bf16.msra.mxu0 %v3058
    %4491 = vmatprep.subr.bf16.mxu0 %v3067
    %4492 = vmatpush1.bf16.msra.mxu0 %v3066
    %4493 = vmatprep.subr.bf16.mxu0 %v3075
    %4494 = vmatpush1.bf16.msra.mxu0 %v3074
    %4495 = vmatprep.subr.bf16.mxu0 %v3083
    %4496 = vmatpush1.bf16.msra.mxu0 %v3082
    %4497 = vmatprep.subr.bf16.mxu0 %v3091
    %4498 = vmatpush1.bf16.msra.mxu0 %v3090
    %4499 = vmatprep.subr.bf16.mxu0 %v3099
    %4500 = vmatpush1.bf16.msra.mxu0 %v3098
    %4501 = vmatprep.subr.bf16.mxu0 %v3107
    %4502 = vmatpush1.bf16.msra.mxu0 %v3106
    %4503 = vmatprep.subr.bf16.mxu0 %v3115
    %4504 = vmatpush1.bf16.msra.mxu0 %v3114
    %4505 = vmatprep.subr.bf16.mxu0 %v3123
    %4506 = vmatpush1.bf16.msra.mxu0 %v3122
    %4507 = vmatprep.subr.bf16.mxu0 %v3131
    %4508 = vmatpush1.bf16.msra.mxu0 %v3130
    %4509 = vmatprep.subr.bf16.mxu0 %v3139
    %4510 = vmatpush1.bf16.msra.mxu0 %v3138
    %4511 = vmatprep.subr.bf16.mxu0 %v3147
    %4512 = vmatpush1.bf16.msra.mxu0 %v3146
    %4513 = vmatprep.subr.bf16.mxu0 %v3155
    %4514 = vmatpush1.bf16.msra.mxu0 %v3154
    %4515 = vmatprep.mubr.bf16.mxu0 %v805
    %4516 = vmatmul.mubr.bf16.gmra.mrb[0].mxu0 %v804
    %v4517 = vpop.f32.mrb[0].mxu0
    %v4518 = vadd.f32 %v4475, %v4517
    %v4519 = vpop.f32.mrb[0].mxu0
    %v4520 = vadd.f32 %v4477, %v4519
    %v4521 = vpop.f32.mrb[0].mxu0
    %v4522 = vadd.f32 %v4479, %v4521
    %v4523 = vpop.f32.mrb[0].mxu0
    %v4524 = vadd.f32 %v4481, %v4523
    %4525 = vdwg.mxu0
    %4526 = vmatprep.subr.bf16.mxu0 %v3163
    %4527 = vmatpush1.bf16.msra.mxu0 %v3162
    %4528 = vmatprep.subr.bf16.mxu0 %v3171
    %4529 = vmatpush1.bf16.msra.mxu0 %v3170
    %4530 = vmatprep.subr.bf16.mxu0 %v3179
    %4531 = vmatpush1.bf16.msra.mxu0 %v3178
    %4532 = vmatprep.subr.bf16.mxu0 %v3187
    %4533 = vmatpush1.bf16.msra.mxu0 %v3186
    %4534 = vmatprep.subr.bf16.mxu0 %v3195
    %4535 = vmatpush1.bf16.msra.mxu0 %v3194
    %4536 = vmatprep.subr.bf16.mxu0 %v3203
    %4537 = vmatpush1.bf16.msra.mxu0 %v3202
    %4538 = vmatprep.subr.bf16.mxu0 %v3211
    %4539 = vmatpush1.bf16.msra.mxu0 %v3210
    %4540 = vmatprep.subr.bf16.mxu0 %v3219
    %4541 = vmatpush1.bf16.msra.mxu0 %v3218
    %4542 = vmatprep.subr.bf16.mxu0 %v3227
    %4543 = vmatpush1.bf16.msra.mxu0 %v3226
    %4544 = vmatprep.subr.bf16.mxu0 %v3235
    %4545 = vmatpush1.bf16.msra.mxu0 %v3234
    %4546 = vmatprep.subr.bf16.mxu0 %v3243
    %4547 = vmatpush1.bf16.msra.mxu0 %v3242
    %4548 = vmatprep.subr.bf16.mxu0 %v3251
    %4549 = vmatpush1.bf16.msra.mxu0 %v3250
    %4550 = vmatprep.subr.bf16.mxu0 %v3259
    %4551 = vmatpush1.bf16.msra.mxu0 %v3258
    %4552 = vmatprep.subr.bf16.mxu0 %v3267
    %4553 = vmatpush1.bf16.msra.mxu0 %v3266
    %4554 = vmatprep.subr.bf16.mxu0 %v3275
    %4555 = vmatpush1.bf16.msra.mxu0 %v3274
    %4556 = vmatprep.subr.bf16.mxu0 %v3283
    %4557 = vmatpush1.bf16.msra.mxu0 %v3282
    %4558 = vmatprep.mubr.bf16.mxu0 %v807
    %4559 = vmatmul.mubr.bf16.gmra.mrb[0].mxu0 %v806
    %v4560 = vpop.f32.mrb[0].mxu0
    %v4561 = vadd.f32 %v4518, %v4560
    %v4562 = vpop.f32.mrb[0].mxu0
    %v4563 = vadd.f32 %v4520, %v4562
    %v4564 = vpop.f32.mrb[0].mxu0
    %v4565 = vadd.f32 %v4522, %v4564
    %v4566 = vpop.f32.mrb[0].mxu0
    %v4567 = vadd.f32 %v4524, %v4566
    %4568 = vdwg.mxu0
    %4569 = vmatprep.subr.bf16.mxu0 %v3291
    %4570 = vmatpush1.bf16.msra.mxu0 %v3290
    %4571 = vmatprep.subr.bf16.mxu0 %v3299
    %4572 = vmatpush1.bf16.msra.mxu0 %v3298
    %4573 = vmatprep.subr.bf16.mxu0 %v3307
    %4574 = vmatpush1.bf16.msra.mxu0 %v3306
    %4575 = vmatprep.subr.bf16.mxu0 %v3315
    %4576 = vmatpush1.bf16.msra.mxu0 %v3314
    %4577 = vmatprep.subr.bf16.mxu0 %v3323
    %4578 = vmatpush1.bf16.msra.mxu0 %v3322
    %4579 = vmatprep.subr.bf16.mxu0 %v3331
    %4580 = vmatpush1.bf16.msra.mxu0 %v3330
    %4581 = vmatprep.subr.bf16.mxu0 %v3339
    %4582 = vmatpush1.bf16.msra.mxu0 %v3338
    %4583 = vmatprep.subr.bf16.mxu0 %v3347
    %4584 = vmatpush1.bf16.msra.mxu0 %v3346
    %4585 = vmatprep.subr.bf16.mxu0 %v3355
    %4586 = vmatpush1.bf16.msra.mxu0 %v3354
    %4587 = vmatprep.subr.bf16.mxu0 %v3363
    %4588 = vmatpush1.bf16.msra.mxu0 %v3362
    %4589 = vmatprep.subr.bf16.mxu0 %v3371
    %4590 = vmatpush1.bf16.msra.mxu0 %v3370
    %4591 = vmatprep.subr.bf16.mxu0 %v3379
    %4592 = vmatpush1.bf16.msra.mxu0 %v3378
    %4593 = vmatprep.subr.bf16.mxu0 %v3387
    %4594 = vmatpush1.bf16.msra.mxu0 %v3386
    %4595 = vmatprep.subr.bf16.mxu0 %v3395
    %4596 = vmatpush1.bf16.msra.mxu0 %v3394
    %4597 = vmatprep.subr.bf16.mxu0 %v3403
    %4598 = vmatpush1.bf16.msra.mxu0 %v3402
    %4599 = vmatprep.subr.bf16.mxu0 %v3411
    %4600 = vmatpush1.bf16.msra.mxu0 %v3410
    %4601 = vmatprep.mubr.bf16.mxu0 %v809
    %4602 = vmatmul.mubr.bf16.gmra.mrb[0].mxu0 %v808
    %v4603 = vpop.f32.mrb[0].mxu0
    %v4604 = vadd.f32 %v4561, %v4603
    %v4605 = vpop.f32.mrb[0].mxu0
    %v4606 = vadd.f32 %v4563, %v4605
    %v4607 = vpop.f32.mrb[0].mxu0
    %v4608 = vadd.f32 %v4565, %v4607
    %v4609 = vpop.f32.mrb[0].mxu0
    %v4610 = vadd.f32 %v4567, %v4609
    %4611 = vdwg.mxu0
    %vm4612 = vcmp.gt.f32.partialorder %v4088, 0.0
    %vm4613 = vcmp.gt.f32.partialorder %v4090, 0.0
    %vm4614 = vcmp.gt.f32.partialorder %v4260, 0.0
    %vm4615 = vcmp.gt.f32.partialorder %v4262, 0.0
    %vm4616 = vcmp.gt.f32.partialorder %v4432, 0.0
    %vm4617 = vcmp.gt.f32.partialorder %v4434, 0.0
    %vm4618 = vcmp.gt.f32.partialorder %v4604, 0.0
    %vm4619 = vcmp.gt.f32.partialorder %v4606, 0.0
    %vm4620 = vcmp.gt.f32.partialorder %v4092, 0.0
    %vm4621 = vcmp.gt.f32.partialorder %v4094, 0.0
    %vm4622 = vcmp.gt.f32.partialorder %v4264, 0.0
    %vm4623 = vcmp.gt.f32.partialorder %v4266, 0.0
    %vm4624 = vcmp.gt.f32.partialorder %v4436, 0.0
    %vm4625 = vcmp.gt.f32.partialorder %v4438, 0.0
    %vm4626 = vcmp.gt.f32.partialorder %v4608, 0.0
    %vm4627 = vcmp.gt.f32.partialorder %v4610, 0.0
    %v4628 = vmul.f32 %v4088, 0.01
    %v4629 = vmul.f32 %v4090, 0.01
    %v4630 = vmul.f32 %v4260, 0.01
    %v4631 = vmul.f32 %v4262, 0.01
    %v4632 = vmul.f32 %v4432, 0.01
    %v4633 = vmul.f32 %v4434, 0.01
    %v4634 = vmul.f32 %v4604, 0.01
    %v4635 = vmul.f32 %v4606, 0.01
    %v4636 = vmul.f32 %v4092, 0.01
    %v4637 = vmul.f32 %v4094, 0.01
    %v4638 = vmul.f32 %v4264, 0.01
    %v4639 = vmul.f32 %v4266, 0.01
    %v4640 = vmul.f32 %v4436, 0.01
    %v4641 = vmul.f32 %v4438, 0.01
    %v4642 = vmul.f32 %v4608, 0.01
    %v4643 = vmul.f32 %v4610, 0.01
    %v4644 = vsel %vm4612, %v4088, %v4628
    %v4645 = vsel %vm4613, %v4090, %v4629
    %v4646 = vsel %vm4614, %v4260, %v4630
    %v4647 = vsel %vm4615, %v4262, %v4631
    %v4648 = vsel %vm4616, %v4432, %v4632
    %v4649 = vsel %vm4617, %v4434, %v4633
    %v4650 = vsel %vm4618, %v4604, %v4634
    %v4651 = vsel %vm4619, %v4606, %v4635
    %v4652 = vsel %vm4620, %v4092, %v4636
    %v4653 = vsel %vm4621, %v4094, %v4637
    %v4654 = vsel %vm4622, %v4264, %v4638
    %v4655 = vsel %vm4623, %v4266, %v4639
    %v4656 = vsel %vm4624, %v4436, %v4640
    %v4657 = vsel %vm4625, %v4438, %v4641
    %v4658 = vsel %vm4626, %v4608, %v4642
    %v4659 = vsel %vm4627, %v4610, %v4643
    %v4660 = vpack.c.bf16 %v4652, %v4644
    %v4661 = vpack.c.bf16 %v4653, %v4645
    %v4662 = vpack.c.bf16 %v4654, %v4646
    %v4663 = vpack.c.bf16 %v4655, %v4647
    %v4664 = vpack.c.bf16 %v4656, %v4648
    %v4665 = vpack.c.bf16 %v4657, %v4649
    %v4666 = vpack.c.bf16 %v4658, %v4650
    %v4667 = vpack.c.bf16 %v4659, %v4651
    %v4668 = vld [vmem:[#allocation11] sm:$0xff]
    %v4669 = vld [vmem:[#allocation11 + $0x8] sm:$0xff]
    %v4670 = vld [vmem:[#allocation11 + $0x10] sm:$0xff]
    %v4671 = vld [vmem:[#allocation11 + $0x18] sm:$0xff]
    %v4672 = vld [vmem:[#allocation11 + $0x20] sm:$0xff]
    %v4673 = vld [vmem:[#allocation11 + $0x28] sm:$0xff]
    %v4674 = vld [vmem:[#allocation11 + $0x30] sm:$0xff]
    %v4675 = vld [vmem:[#allocation11 + $0x38] sm:$0xff]
    %v4676 = vld [vmem:[#allocation11 + $0x40] sm:$0xff]
    %v4677 = vld [vmem:[#allocation11 + $0x48] sm:$0xff]
    %v4678 = vld [vmem:[#allocation11 + $0x50] sm:$0xff]
    %v4679 = vld [vmem:[#allocation11 + $0x58] sm:$0xff]
    %v4680 = vld [vmem:[#allocation11 + $0x60] sm:$0xff]
    %v4681 = vld [vmem:[#allocation11 + $0x68] sm:$0xff]
    %v4682 = vld [vmem:[#allocation11 + $0x70] sm:$0xff]
    %v4683 = vld [vmem:[#allocation11 + $0x78] sm:$0xff]
    %v4684 = vld [vmem:[#allocation11 + $0x80] sm:$0xff]
    %v4685 = vld [vmem:[#allocation11 + $0x88] sm:$0xff]
    %v4686 = vld [vmem:[#allocation11 + $0x90] sm:$0xff]
    %v4687 = vld [vmem:[#allocation11 + $0x98] sm:$0xff]
    %v4688 = vld [vmem:[#allocation11 + $0xa0] sm:$0xff]
    %v4689 = vld [vmem:[#allocation11 + $0xa8] sm:$0xff]
    %v4690 = vld [vmem:[#allocation11 + $0xb0] sm:$0xff]
    %v4691 = vld [vmem:[#allocation11 + $0xb8] sm:$0xff]
    %v4692 = vld [vmem:[#allocation11 + $0xc0] sm:$0xff]
    %v4693 = vld [vmem:[#allocation11 + $0xc8] sm:$0xff]
    %v4694 = vld [vmem:[#allocation11 + $0xd0] sm:$0xff]
    %v4695 = vld [vmem:[#allocation11 + $0xd8] sm:$0xff]
    %v4696 = vld [vmem:[#allocation11 + $0xe0] sm:$0xff]
    %v4697 = vld [vmem:[#allocation11 + $0xe8] sm:$0xff]
    %v4698 = vld [vmem:[#allocation11 + $0xf0] sm:$0xff]
    %v4699 = vld [vmem:[#allocation11 + $0xf8] sm:$0xff]
    %v4700 = vld [vmem:[#allocation11 + $0x100] sm:$0xff]
    %v4701 = vld [vmem:[#allocation11 + $0x108] sm:$0xff]
    %v4702 = vld [vmem:[#allocation11 + $0x110] sm:$0xff]
    %v4703 = vld [vmem:[#allocation11 + $0x118] sm:$0xff]
    %v4704 = vld [vmem:[#allocation11 + $0x120] sm:$0xff]
    %v4705 = vld [vmem:[#allocation11 + $0x128] sm:$0xff]
    %v4706 = vld [vmem:[#allocation11 + $0x130] sm:$0xff]
    %v4707 = vld [vmem:[#allocation11 + $0x138] sm:$0xff]
    %v4708 = vld [vmem:[#allocation11 + $0x140] sm:$0xff]
    %v4709 = vld [vmem:[#allocation11 + $0x148] sm:$0xff]
    %v4710 = vld [vmem:[#allocation11 + $0x150] sm:$0xff]
    %v4711 = vld [vmem:[#allocation11 + $0x158] sm:$0xff]
    %v4712 = vld [vmem:[#allocation11 + $0x160] sm:$0xff]
    %v4713 = vld [vmem:[#allocation11 + $0x168] sm:$0xff]
    %v4714 = vld [vmem:[#allocation11 + $0x170] sm:$0xff]
    %v4715 = vld [vmem:[#allocation11 + $0x178] sm:$0xff]
    %v4716 = vld [vmem:[#allocation11 + $0x180] sm:$0xff]
    %v4717 = vld [vmem:[#allocation11 + $0x188] sm:$0xff]
    %v4718 = vld [vmem:[#allocation11 + $0x190] sm:$0xff]
    %v4719 = vld [vmem:[#allocation11 + $0x198] sm:$0xff]
    %v4720 = vld [vmem:[#allocation11 + $0x1a0] sm:$0xff]
    %v4721 = vld [vmem:[#allocation11 + $0x1a8] sm:$0xff]
    %v4722 = vld [vmem:[#allocation11 + $0x1b0] sm:$0xff]
    %v4723 = vld [vmem:[#allocation11 + $0x1b8] sm:$0xff]
    %v4724 = vld [vmem:[#allocation11 + $0x1c0] sm:$0xff]
    %v4725 = vld [vmem:[#allocation11 + $0x1c8] sm:$0xff]
    %v4726 = vld [vmem:[#allocation11 + $0x1d0] sm:$0xff]
    %v4727 = vld [vmem:[#allocation11 + $0x1d8] sm:$0xff]
    %v4728 = vld [vmem:[#allocation11 + $0x1e0] sm:$0xff]
    %v4729 = vld [vmem:[#allocation11 + $0x1e8] sm:$0xff]
    %v4730 = vld [vmem:[#allocation11 + $0x1f0] sm:$0xff]
    %v4731 = vld [vmem:[#allocation11 + $0x1f8] sm:$0xff]
    %v4732 = vld [vmem:[#allocation11 + $0x200] sm:$0xff]
    %v4733 = vld [vmem:[#allocation11 + $0x208] sm:$0xff]
    %v4734 = vld [vmem:[#allocation11 + $0x210] sm:$0xff]
    %v4735 = vld [vmem:[#allocation11 + $0x218] sm:$0xff]
    %v4736 = vld [vmem:[#allocation11 + $0x220] sm:$0xff]
    %v4737 = vld [vmem:[#allocation11 + $0x228] sm:$0xff]
    %v4738 = vld [vmem:[#allocation11 + $0x230] sm:$0xff]
    %v4739 = vld [vmem:[#allocation11 + $0x238] sm:$0xff]
    %v4740 = vld [vmem:[#allocation11 + $0x240] sm:$0xff]
    %v4741 = vld [vmem:[#allocation11 + $0x248] sm:$0xff]
    %v4742 = vld [vmem:[#allocation11 + $0x250] sm:$0xff]
    %v4743 = vld [vmem:[#allocation11 + $0x258] sm:$0xff]
    %v4744 = vld [vmem:[#allocation11 + $0x260] sm:$0xff]
    %v4745 = vld [vmem:[#allocation11 + $0x268] sm:$0xff]
    %v4746 = vld [vmem:[#allocation11 + $0x270] sm:$0xff]
    %v4747 = vld [vmem:[#allocation11 + $0x278] sm:$0xff]
    %v4748 = vld [vmem:[#allocation11 + $0x280] sm:$0xff]
    %v4749 = vld [vmem:[#allocation11 + $0x288] sm:$0xff]
    %v4750 = vld [vmem:[#allocation11 + $0x290] sm:$0xff]
    %v4751 = vld [vmem:[#allocation11 + $0x298] sm:$0xff]
    %v4752 = vld [vmem:[#allocation11 + $0x2a0] sm:$0xff]
    %v4753 = vld [vmem:[#allocation11 + $0x2a8] sm:$0xff]
    %v4754 = vld [vmem:[#allocation11 + $0x2b0] sm:$0xff]
    %v4755 = vld [vmem:[#allocation11 + $0x2b8] sm:$0xff]
    %v4756 = vld [vmem:[#allocation11 + $0x2c0] sm:$0xff]
    %v4757 = vld [vmem:[#allocation11 + $0x2c8] sm:$0xff]
    %v4758 = vld [vmem:[#allocation11 + $0x2d0] sm:$0xff]
    %v4759 = vld [vmem:[#allocation11 + $0x2d8] sm:$0xff]
    %v4760 = vld [vmem:[#allocation11 + $0x2e0] sm:$0xff]
    %v4761 = vld [vmem:[#allocation11 + $0x2e8] sm:$0xff]
    %v4762 = vld [vmem:[#allocation11 + $0x2f0] sm:$0xff]
    %v4763 = vld [vmem:[#allocation11 + $0x2f8] sm:$0xff]
    %v4764 = vld [vmem:[#allocation11 + $0x300] sm:$0xff]
    %v4765 = vld [vmem:[#allocation11 + $0x308] sm:$0xff]
    %v4766 = vld [vmem:[#allocation11 + $0x310] sm:$0xff]
    %v4767 = vld [vmem:[#allocation11 + $0x318] sm:$0xff]
    %v4768 = vld [vmem:[#allocation11 + $0x320] sm:$0xff]
    %v4769 = vld [vmem:[#allocation11 + $0x328] sm:$0xff]
    %v4770 = vld [vmem:[#allocation11 + $0x330] sm:$0xff]
    %v4771 = vld [vmem:[#allocation11 + $0x338] sm:$0xff]
    %v4772 = vld [vmem:[#allocation11 + $0x340] sm:$0xff]
    %v4773 = vld [vmem:[#allocation11 + $0x348] sm:$0xff]
    %v4774 = vld [vmem:[#allocation11 + $0x350] sm:$0xff]
    %v4775 = vld [vmem:[#allocation11 + $0x358] sm:$0xff]
    %v4776 = vld [vmem:[#allocation11 + $0x360] sm:$0xff]
    %v4777 = vld [vmem:[#allocation11 + $0x368] sm:$0xff]
    %v4778 = vld [vmem:[#allocation11 + $0x370] sm:$0xff]
    %v4779 = vld [vmem:[#allocation11 + $0x378] sm:$0xff]
    %v4780 = vld [vmem:[#allocation11 + $0x380] sm:$0xff]
    %v4781 = vld [vmem:[#allocation11 + $0x388] sm:$0xff]
    %v4782 = vld [vmem:[#allocation11 + $0x390] sm:$0xff]
    %v4783 = vld [vmem:[#allocation11 + $0x398] sm:$0xff]
    %v4784 = vld [vmem:[#allocation11 + $0x3a0] sm:$0xff]
    %v4785 = vld [vmem:[#allocation11 + $0x3a8] sm:$0xff]
    %v4786 = vld [vmem:[#allocation11 + $0x3b0] sm:$0xff]
    %v4787 = vld [vmem:[#allocation11 + $0x3b8] sm:$0xff]
    %v4788 = vld [vmem:[#allocation11 + $0x3c0] sm:$0xff]
    %v4789 = vld [vmem:[#allocation11 + $0x3c8] sm:$0xff]
    %v4790 = vld [vmem:[#allocation11 + $0x3d0] sm:$0xff]
    %v4791 = vld [vmem:[#allocation11 + $0x3d8] sm:$0xff]
    %v4792 = vld [vmem:[#allocation11 + $0x3e0] sm:$0xff]
    %v4793 = vld [vmem:[#allocation11 + $0x3e8] sm:$0xff]
    %v4794 = vld [vmem:[#allocation11 + $0x3f0] sm:$0xff]
    %v4795 = vld [vmem:[#allocation11 + $0x3f8] sm:$0xff]
    %v4796 = vld [vmem:[#allocation11 + $0x400] sm:$0xff]
    %v4797 = vld [vmem:[#allocation11 + $0x408] sm:$0xff]
    %v4798 = vld [vmem:[#allocation11 + $0x410] sm:$0xff]
    %v4799 = vld [vmem:[#allocation11 + $0x418] sm:$0xff]
    %v4800 = vld [vmem:[#allocation11 + $0x420] sm:$0xff]
    %v4801 = vld [vmem:[#allocation11 + $0x428] sm:$0xff]
    %v4802 = vld [vmem:[#allocation11 + $0x430] sm:$0xff]
    %v4803 = vld [vmem:[#allocation11 + $0x438] sm:$0xff]
    %v4804 = vld [vmem:[#allocation11 + $0x440] sm:$0xff]
    %v4805 = vld [vmem:[#allocation11 + $0x448] sm:$0xff]
    %v4806 = vld [vmem:[#allocation11 + $0x450] sm:$0xff]
    %v4807 = vld [vmem:[#allocation11 + $0x458] sm:$0xff]
    %v4808 = vld [vmem:[#allocation11 + $0x460] sm:$0xff]
    %v4809 = vld [vmem:[#allocation11 + $0x468] sm:$0xff]
    %v4810 = vld [vmem:[#allocation11 + $0x470] sm:$0xff]
    %v4811 = vld [vmem:[#allocation11 + $0x478] sm:$0xff]
    %v4812 = vld [vmem:[#allocation11 + $0x480] sm:$0xff]
    %v4813 = vld [vmem:[#allocation11 + $0x488] sm:$0xff]
    %v4814 = vld [vmem:[#allocation11 + $0x490] sm:$0xff]
    %v4815 = vld [vmem:[#allocation11 + $0x498] sm:$0xff]
    %v4816 = vld [vmem:[#allocation11 + $0x4a0] sm:$0xff]
    %v4817 = vld [vmem:[#allocation11 + $0x4a8] sm:$0xff]
    %v4818 = vld [vmem:[#allocation11 + $0x4b0] sm:$0xff]
    %v4819 = vld [vmem:[#allocation11 + $0x4b8] sm:$0xff]
    %v4820 = vld [vmem:[#allocation11 + $0x4c0] sm:$0xff]
    %v4821 = vld [vmem:[#allocation11 + $0x4c8] sm:$0xff]
    %v4822 = vld [vmem:[#allocation11 + $0x4d0] sm:$0xff]
    %v4823 = vld [vmem:[#allocation11 + $0x4d8] sm:$0xff]
    %v4824 = vld [vmem:[#allocation11 + $0x4e0] sm:$0xff]
    %v4825 = vld [vmem:[#allocation11 + $0x4e8] sm:$0xff]
    %v4826 = vld [vmem:[#allocation11 + $0x4f0] sm:$0xff]
    %v4827 = vld [vmem:[#allocation11 + $0x4f8] sm:$0xff]
    %v4828 = vld [vmem:[#allocation11 + $0x500] sm:$0xff]
    %v4829 = vld [vmem:[#allocation11 + $0x508] sm:$0xff]
    %v4830 = vld [vmem:[#allocation11 + $0x510] sm:$0xff]
    %v4831 = vld [vmem:[#allocation11 + $0x518] sm:$0xff]
    %v4832 = vld [vmem:[#allocation11 + $0x520] sm:$0xff]
    %v4833 = vld [vmem:[#allocation11 + $0x528] sm:$0xff]
    %v4834 = vld [vmem:[#allocation11 + $0x530] sm:$0xff]
    %v4835 = vld [vmem:[#allocation11 + $0x538] sm:$0xff]
    %v4836 = vld [vmem:[#allocation11 + $0x540] sm:$0xff]
    %v4837 = vld [vmem:[#allocation11 + $0x548] sm:$0xff]
    %v4838 = vld [vmem:[#allocation11 + $0x550] sm:$0xff]
    %v4839 = vld [vmem:[#allocation11 + $0x558] sm:$0xff]
    %v4840 = vld [vmem:[#allocation11 + $0x560] sm:$0xff]
    %v4841 = vld [vmem:[#allocation11 + $0x568] sm:$0xff]
    %v4842 = vld [vmem:[#allocation11 + $0x570] sm:$0xff]
    %v4843 = vld [vmem:[#allocation11 + $0x578] sm:$0xff]
    %v4844 = vld [vmem:[#allocation11 + $0x580] sm:$0xff]
    %v4845 = vld [vmem:[#allocation11 + $0x588] sm:$0xff]
    %v4846 = vld [vmem:[#allocation11 + $0x590] sm:$0xff]
    %v4847 = vld [vmem:[#allocation11 + $0x598] sm:$0xff]
    %v4848 = vld [vmem:[#allocation11 + $0x5a0] sm:$0xff]
    %v4849 = vld [vmem:[#allocation11 + $0x5a8] sm:$0xff]
    %v4850 = vld [vmem:[#allocation11 + $0x5b0] sm:$0xff]
    %v4851 = vld [vmem:[#allocation11 + $0x5b8] sm:$0xff]
    %v4852 = vld [vmem:[#allocation11 + $0x5c0] sm:$0xff]
    %v4853 = vld [vmem:[#allocation11 + $0x5c8] sm:$0xff]
    %v4854 = vld [vmem:[#allocation11 + $0x5d0] sm:$0xff]
    %v4855 = vld [vmem:[#allocation11 + $0x5d8] sm:$0xff]
    %v4856 = vld [vmem:[#allocation11 + $0x5e0] sm:$0xff]
    %v4857 = vld [vmem:[#allocation11 + $0x5e8] sm:$0xff]
    %v4858 = vld [vmem:[#allocation11 + $0x5f0] sm:$0xff]
    %v4859 = vld [vmem:[#allocation11 + $0x5f8] sm:$0xff]
    %v4860 = vld [vmem:[#allocation11 + $0x600] sm:$0xff]
    %v4861 = vld [vmem:[#allocation11 + $0x608] sm:$0xff]
    %v4862 = vld [vmem:[#allocation11 + $0x610] sm:$0xff]
    %v4863 = vld [vmem:[#allocation11 + $0x618] sm:$0xff]
    %v4864 = vld [vmem:[#allocation11 + $0x620] sm:$0xff]
    %v4865 = vld [vmem:[#allocation11 + $0x628] sm:$0xff]
    %v4866 = vld [vmem:[#allocation11 + $0x630] sm:$0xff]
    %v4867 = vld [vmem:[#allocation11 + $0x638] sm:$0xff]
    %v4868 = vld [vmem:[#allocation11 + $0x640] sm:$0xff]
    %v4869 = vld [vmem:[#allocation11 + $0x648] sm:$0xff]
    %v4870 = vld [vmem:[#allocation11 + $0x650] sm:$0xff]
    %v4871 = vld [vmem:[#allocation11 + $0x658] sm:$0xff]
    %v4872 = vld [vmem:[#allocation11 + $0x660] sm:$0xff]
    %v4873 = vld [vmem:[#allocation11 + $0x668] sm:$0xff]
    %v4874 = vld [vmem:[#allocation11 + $0x670] sm:$0xff]
    %v4875 = vld [vmem:[#allocation11 + $0x678] sm:$0xff]
    %v4876 = vld [vmem:[#allocation11 + $0x680] sm:$0xff]
    %v4877 = vld [vmem:[#allocation11 + $0x688] sm:$0xff]
    %v4878 = vld [vmem:[#allocation11 + $0x690] sm:$0xff]
    %v4879 = vld [vmem:[#allocation11 + $0x698] sm:$0xff]
    %v4880 = vld [vmem:[#allocation11 + $0x6a0] sm:$0xff]
    %v4881 = vld [vmem:[#allocation11 + $0x6a8] sm:$0xff]
    %v4882 = vld [vmem:[#allocation11 + $0x6b0] sm:$0xff]
    %v4883 = vld [vmem:[#allocation11 + $0x6b8] sm:$0xff]
    %v4884 = vld [vmem:[#allocation11 + $0x6c0] sm:$0xff]
    %v4885 = vld [vmem:[#allocation11 + $0x6c8] sm:$0xff]
    %v4886 = vld [vmem:[#allocation11 + $0x6d0] sm:$0xff]
    %v4887 = vld [vmem:[#allocation11 + $0x6d8] sm:$0xff]
    %v4888 = vld [vmem:[#allocation11 + $0x6e0] sm:$0xff]
    %v4889 = vld [vmem:[#allocation11 + $0x6e8] sm:$0xff]
    %v4890 = vld [vmem:[#allocation11 + $0x6f0] sm:$0xff]
    %v4891 = vld [vmem:[#allocation11 + $0x6f8] sm:$0xff]
    %v4892 = vld [vmem:[#allocation11 + $0x700] sm:$0xff]
    %v4893 = vld [vmem:[#allocation11 + $0x708] sm:$0xff]
    %v4894 = vld [vmem:[#allocation11 + $0x710] sm:$0xff]
    %v4895 = vld [vmem:[#allocation11 + $0x718] sm:$0xff]
    %v4896 = vld [vmem:[#allocation11 + $0x720] sm:$0xff]
    %v4897 = vld [vmem:[#allocation11 + $0x728] sm:$0xff]
    %v4898 = vld [vmem:[#allocation11 + $0x730] sm:$0xff]
    %v4899 = vld [vmem:[#allocation11 + $0x738] sm:$0xff]
    %v4900 = vld [vmem:[#allocation11 + $0x740] sm:$0xff]
    %v4901 = vld [vmem:[#allocation11 + $0x748] sm:$0xff]
    %v4902 = vld [vmem:[#allocation11 + $0x750] sm:$0xff]
    %v4903 = vld [vmem:[#allocation11 + $0x758] sm:$0xff]
    %v4904 = vld [vmem:[#allocation11 + $0x760] sm:$0xff]
    %v4905 = vld [vmem:[#allocation11 + $0x768] sm:$0xff]
    %v4906 = vld [vmem:[#allocation11 + $0x770] sm:$0xff]
    %v4907 = vld [vmem:[#allocation11 + $0x778] sm:$0xff]
    %v4908 = vld [vmem:[#allocation11 + $0x780] sm:$0xff]
    %v4909 = vld [vmem:[#allocation11 + $0x788] sm:$0xff]
    %v4910 = vld [vmem:[#allocation11 + $0x790] sm:$0xff]
    %v4911 = vld [vmem:[#allocation11 + $0x798] sm:$0xff]
    %v4912 = vld [vmem:[#allocation11 + $0x7a0] sm:$0xff]
    %v4913 = vld [vmem:[#allocation11 + $0x7a8] sm:$0xff]
    %v4914 = vld [vmem:[#allocation11 + $0x7b0] sm:$0xff]
    %v4915 = vld [vmem:[#allocation11 + $0x7b8] sm:$0xff]
    %v4916 = vld [vmem:[#allocation11 + $0x7c0] sm:$0xff]
    %v4917 = vld [vmem:[#allocation11 + $0x7c8] sm:$0xff]
    %v4918 = vld [vmem:[#allocation11 + $0x7d0] sm:$0xff]
    %v4919 = vld [vmem:[#allocation11 + $0x7d8] sm:$0xff]
    %v4920 = vld [vmem:[#allocation11 + $0x7e0] sm:$0xff]
    %v4921 = vld [vmem:[#allocation11 + $0x7e8] sm:$0xff]
    %v4922 = vld [vmem:[#allocation11 + $0x7f0] sm:$0xff]
    %v4923 = vld [vmem:[#allocation11 + $0x7f8] sm:$0xff]
    %v4924 = vld [vmem:[#allocation11 + $0x800] sm:$0xff]
    %v4925 = vld [vmem:[#allocation11 + $0x808] sm:$0xff]
    %v4926 = vld [vmem:[#allocation11 + $0x810] sm:$0xff]
    %v4927 = vld [vmem:[#allocation11 + $0x818] sm:$0xff]
    %v4928 = vld [vmem:[#allocation11 + $0x820] sm:$0xff]
    %v4929 = vld [vmem:[#allocation11 + $0x828] sm:$0xff]
    %v4930 = vld [vmem:[#allocation11 + $0x830] sm:$0xff]
    %v4931 = vld [vmem:[#allocation11 + $0x838] sm:$0xff]
    %v4932 = vld [vmem:[#allocation11 + $0x840] sm:$0xff]
    %v4933 = vld [vmem:[#allocation11 + $0x848] sm:$0xff]
    %v4934 = vld [vmem:[#allocation11 + $0x850] sm:$0xff]
    %v4935 = vld [vmem:[#allocation11 + $0x858] sm:$0xff]
    %v4936 = vld [vmem:[#allocation11 + $0x860] sm:$0xff]
    %v4937 = vld [vmem:[#allocation11 + $0x868] sm:$0xff]
    %v4938 = vld [vmem:[#allocation11 + $0x870] sm:$0xff]
    %v4939 = vld [vmem:[#allocation11 + $0x878] sm:$0xff]
    %v4940 = vld [vmem:[#allocation11 + $0x880] sm:$0xff]
    %v4941 = vld [vmem:[#allocation11 + $0x888] sm:$0xff]
    %v4942 = vld [vmem:[#allocation11 + $0x890] sm:$0xff]
    %v4943 = vld [vmem:[#allocation11 + $0x898] sm:$0xff]
    %v4944 = vld [vmem:[#allocation11 + $0x8a0] sm:$0xff]
    %v4945 = vld [vmem:[#allocation11 + $0x8a8] sm:$0xff]
    %v4946 = vld [vmem:[#allocation11 + $0x8b0] sm:$0xff]
    %v4947 = vld [vmem:[#allocation11 + $0x8b8] sm:$0xff]
    %v4948 = vld [vmem:[#allocation11 + $0x8c0] sm:$0xff]
    %v4949 = vld [vmem:[#allocation11 + $0x8c8] sm:$0xff]
    %v4950 = vld [vmem:[#allocation11 + $0x8d0] sm:$0xff]
    %v4951 = vld [vmem:[#allocation11 + $0x8d8] sm:$0xff]
    %v4952 = vld [vmem:[#allocation11 + $0x8e0] sm:$0xff]
    %v4953 = vld [vmem:[#allocation11 + $0x8e8] sm:$0xff]
    %v4954 = vld [vmem:[#allocation11 + $0x8f0] sm:$0xff]
    %v4955 = vld [vmem:[#allocation11 + $0x8f8] sm:$0xff]
    %v4956 = vld [vmem:[#allocation11 + $0x900] sm:$0xff]
    %v4957 = vld [vmem:[#allocation11 + $0x908] sm:$0xff]
    %v4958 = vld [vmem:[#allocation11 + $0x910] sm:$0xff]
    %v4959 = vld [vmem:[#allocation11 + $0x918] sm:$0xff]
    %v4960 = vld [vmem:[#allocation11 + $0x920] sm:$0xff]
    %v4961 = vld [vmem:[#allocation11 + $0x928] sm:$0xff]
    %v4962 = vld [vmem:[#allocation11 + $0x930] sm:$0xff]
    %v4963 = vld [vmem:[#allocation11 + $0x938] sm:$0xff]
    %v4964 = vld [vmem:[#allocation11 + $0x940] sm:$0xff]
    %v4965 = vld [vmem:[#allocation11 + $0x948] sm:$0xff]
    %v4966 = vld [vmem:[#allocation11 + $0x950] sm:$0xff]
    %v4967 = vld [vmem:[#allocation11 + $0x958] sm:$0xff]
    %v4968 = vld [vmem:[#allocation11 + $0x960] sm:$0xff]
    %v4969 = vld [vmem:[#allocation11 + $0x968] sm:$0xff]
    %v4970 = vld [vmem:[#allocation11 + $0x970] sm:$0xff]
    %v4971 = vld [vmem:[#allocation11 + $0x978] sm:$0xff]
    %v4972 = vld [vmem:[#allocation11 + $0x980] sm:$0xff]
    %v4973 = vld [vmem:[#allocation11 + $0x988] sm:$0xff]
    %v4974 = vld [vmem:[#allocation11 + $0x990] sm:$0xff]
    %v4975 = vld [vmem:[#allocation11 + $0x998] sm:$0xff]
    %v4976 = vld [vmem:[#allocation11 + $0x9a0] sm:$0xff]
    %v4977 = vld [vmem:[#allocation11 + $0x9a8] sm:$0xff]
    %v4978 = vld [vmem:[#allocation11 + $0x9b0] sm:$0xff]
    %v4979 = vld [vmem:[#allocation11 + $0x9b8] sm:$0xff]
    %v4980 = vld [vmem:[#allocation11 + $0x9c0] sm:$0xff]
    %v4981 = vld [vmem:[#allocation11 + $0x9c8] sm:$0xff]
    %v4982 = vld [vmem:[#allocation11 + $0x9d0] sm:$0xff]
    %v4983 = vld [vmem:[#allocation11 + $0x9d8] sm:$0xff]
    %v4984 = vld [vmem:[#allocation11 + $0x9e0] sm:$0xff]
    %v4985 = vld [vmem:[#allocation11 + $0x9e8] sm:$0xff]
    %v4986 = vld [vmem:[#allocation11 + $0x9f0] sm:$0xff]
    %v4987 = vld [vmem:[#allocation11 + $0x9f8] sm:$0xff]
    %v4988 = vld [vmem:[#allocation11 + $0xa00] sm:$0xff]
    %v4989 = vld [vmem:[#allocation11 + $0xa08] sm:$0xff]
    %v4990 = vld [vmem:[#allocation11 + $0xa10] sm:$0xff]
    %v4991 = vld [vmem:[#allocation11 + $0xa18] sm:$0xff]
    %v4992 = vld [vmem:[#allocation11 + $0xa20] sm:$0xff]
    %v4993 = vld [vmem:[#allocation11 + $0xa28] sm:$0xff]
    %v4994 = vld [vmem:[#allocation11 + $0xa30] sm:$0xff]
    %v4995 = vld [vmem:[#allocation11 + $0xa38] sm:$0xff]
    %v4996 = vld [vmem:[#allocation11 + $0xa40] sm:$0xff]
    %v4997 = vld [vmem:[#allocation11 + $0xa48] sm:$0xff]
    %v4998 = vld [vmem:[#allocation11 + $0xa50] sm:$0xff]
    %v4999 = vld [vmem:[#allocation11 + $0xa58] sm:$0xff]
    %v5000 = vld [vmem:[#allocation11 + $0xa60] sm:$0xff]
    %v5001 = vld [vmem:[#allocation11 + $0xa68] sm:$0xff]
    %v5002 = vld [vmem:[#allocation11 + $0xa70] sm:$0xff]
    %v5003 = vld [vmem:[#allocation11 + $0xa78] sm:$0xff]
    %v5004 = vld [vmem:[#allocation11 + $0xa80] sm:$0xff]
    %v5005 = vld [vmem:[#allocation11 + $0xa88] sm:$0xff]
    %v5006 = vld [vmem:[#allocation11 + $0xa90] sm:$0xff]
    %v5007 = vld [vmem:[#allocation11 + $0xa98] sm:$0xff]
    %v5008 = vld [vmem:[#allocation11 + $0xaa0] sm:$0xff]
    %v5009 = vld [vmem:[#allocation11 + $0xaa8] sm:$0xff]
    %v5010 = vld [vmem:[#allocation11 + $0xab0] sm:$0xff]
    %v5011 = vld [vmem:[#allocation11 + $0xab8] sm:$0xff]
    %v5012 = vld [vmem:[#allocation11 + $0xac0] sm:$0xff]
    %v5013 = vld [vmem:[#allocation11 + $0xac8] sm:$0xff]
    %v5014 = vld [vmem:[#allocation11 + $0xad0] sm:$0xff]
    %v5015 = vld [vmem:[#allocation11 + $0xad8] sm:$0xff]
    %v5016 = vld [vmem:[#allocation11 + $0xae0] sm:$0xff]
    %v5017 = vld [vmem:[#allocation11 + $0xae8] sm:$0xff]
    %v5018 = vld [vmem:[#allocation11 + $0xaf0] sm:$0xff]
    %v5019 = vld [vmem:[#allocation11 + $0xaf8] sm:$0xff]
    %v5020 = vld [vmem:[#allocation11 + $0xb00] sm:$0xff]
    %v5021 = vld [vmem:[#allocation11 + $0xb08] sm:$0xff]
    %v5022 = vld [vmem:[#allocation11 + $0xb10] sm:$0xff]
    %v5023 = vld [vmem:[#allocation11 + $0xb18] sm:$0xff]
    %v5024 = vld [vmem:[#allocation11 + $0xb20] sm:$0xff]
    %v5025 = vld [vmem:[#allocation11 + $0xb28] sm:$0xff]
    %v5026 = vld [vmem:[#allocation11 + $0xb30] sm:$0xff]
    %v5027 = vld [vmem:[#allocation11 + $0xb38] sm:$0xff]
    %v5028 = vld [vmem:[#allocation11 + $0xb40] sm:$0xff]
    %v5029 = vld [vmem:[#allocation11 + $0xb48] sm:$0xff]
    %v5030 = vld [vmem:[#allocation11 + $0xb50] sm:$0xff]
    %v5031 = vld [vmem:[#allocation11 + $0xb58] sm:$0xff]
    %v5032 = vld [vmem:[#allocation11 + $0xb60] sm:$0xff]
    %v5033 = vld [vmem:[#allocation11 + $0xb68] sm:$0xff]
    %v5034 = vld [vmem:[#allocation11 + $0xb70] sm:$0xff]
    %v5035 = vld [vmem:[#allocation11 + $0xb78] sm:$0xff]
    %v5036 = vld [vmem:[#allocation11 + $0xb80] sm:$0xff]
    %v5037 = vld [vmem:[#allocation11 + $0xb88] sm:$0xff]
    %v5038 = vld [vmem:[#allocation11 + $0xb90] sm:$0xff]
    %v5039 = vld [vmem:[#allocation11 + $0xb98] sm:$0xff]
    %v5040 = vld [vmem:[#allocation11 + $0xba0] sm:$0xff]
    %v5041 = vld [vmem:[#allocation11 + $0xba8] sm:$0xff]
    %v5042 = vld [vmem:[#allocation11 + $0xbb0] sm:$0xff]
    %v5043 = vld [vmem:[#allocation11 + $0xbb8] sm:$0xff]
    %v5044 = vld [vmem:[#allocation11 + $0xbc0] sm:$0xff]
    %v5045 = vld [vmem:[#allocation11 + $0xbc8] sm:$0xff]
    %v5046 = vld [vmem:[#allocation11 + $0xbd0] sm:$0xff]
    %v5047 = vld [vmem:[#allocation11 + $0xbd8] sm:$0xff]
    %v5048 = vld [vmem:[#allocation11 + $0xbe0] sm:$0xff]
    %v5049 = vld [vmem:[#allocation11 + $0xbe8] sm:$0xff]
    %v5050 = vld [vmem:[#allocation11 + $0xbf0] sm:$0xff]
    %v5051 = vld [vmem:[#allocation11 + $0xbf8] sm:$0xff]
    %v5052 = vld [vmem:[#allocation11 + $0xc00] sm:$0xff]
    %v5053 = vld [vmem:[#allocation11 + $0xc08] sm:$0xff]
    %v5054 = vld [vmem:[#allocation11 + $0xc10] sm:$0xff]
    %v5055 = vld [vmem:[#allocation11 + $0xc18] sm:$0xff]
    %v5056 = vld [vmem:[#allocation11 + $0xc20] sm:$0xff]
    %v5057 = vld [vmem:[#allocation11 + $0xc28] sm:$0xff]
    %v5058 = vld [vmem:[#allocation11 + $0xc30] sm:$0xff]
    %v5059 = vld [vmem:[#allocation11 + $0xc38] sm:$0xff]
    %v5060 = vld [vmem:[#allocation11 + $0xc40] sm:$0xff]
    %v5061 = vld [vmem:[#allocation11 + $0xc48] sm:$0xff]
    %v5062 = vld [vmem:[#allocation11 + $0xc50] sm:$0xff]
    %v5063 = vld [vmem:[#allocation11 + $0xc58] sm:$0xff]
    %v5064 = vld [vmem:[#allocation11 + $0xc60] sm:$0xff]
    %v5065 = vld [vmem:[#allocation11 + $0xc68] sm:$0xff]
    %v5066 = vld [vmem:[#allocation11 + $0xc70] sm:$0xff]
    %v5067 = vld [vmem:[#allocation11 + $0xc78] sm:$0xff]
    %v5068 = vld [vmem:[#allocation11 + $0xc80] sm:$0xff]
    %v5069 = vld [vmem:[#allocation11 + $0xc88] sm:$0xff]
    %v5070 = vld [vmem:[#allocation11 + $0xc90] sm:$0xff]
    %v5071 = vld [vmem:[#allocation11 + $0xc98] sm:$0xff]
    %v5072 = vld [vmem:[#allocation11 + $0xca0] sm:$0xff]
    %v5073 = vld [vmem:[#allocation11 + $0xca8] sm:$0xff]
    %v5074 = vld [vmem:[#allocation11 + $0xcb0] sm:$0xff]
    %v5075 = vld [vmem:[#allocation11 + $0xcb8] sm:$0xff]
    %v5076 = vld [vmem:[#allocation11 + $0xcc0] sm:$0xff]
    %v5077 = vld [vmem:[#allocation11 + $0xcc8] sm:$0xff]
    %v5078 = vld [vmem:[#allocation11 + $0xcd0] sm:$0xff]
    %v5079 = vld [vmem:[#allocation11 + $0xcd8] sm:$0xff]
    %v5080 = vld [vmem:[#allocation11 + $0xce0] sm:$0xff]
    %v5081 = vld [vmem:[#allocation11 + $0xce8] sm:$0xff]
    %v5082 = vld [vmem:[#allocation11 + $0xcf0] sm:$0xff]
    %v5083 = vld [vmem:[#allocation11 + $0xcf8] sm:$0xff]
    %v5084 = vld [vmem:[#allocation11 + $0xd00] sm:$0xff]
    %v5085 = vld [vmem:[#allocation11 + $0xd08] sm:$0xff]
    %v5086 = vld [vmem:[#allocation11 + $0xd10] sm:$0xff]
    %v5087 = vld [vmem:[#allocation11 + $0xd18] sm:$0xff]
    %v5088 = vld [vmem:[#allocation11 + $0xd20] sm:$0xff]
    %v5089 = vld [vmem:[#allocation11 + $0xd28] sm:$0xff]
    %v5090 = vld [vmem:[#allocation11 + $0xd30] sm:$0xff]
    %v5091 = vld [vmem:[#allocation11 + $0xd38] sm:$0xff]
    %v5092 = vld [vmem:[#allocation11 + $0xd40] sm:$0xff]
    %v5093 = vld [vmem:[#allocation11 + $0xd48] sm:$0xff]
    %v5094 = vld [vmem:[#allocation11 + $0xd50] sm:$0xff]
    %v5095 = vld [vmem:[#allocation11 + $0xd58] sm:$0xff]
    %v5096 = vld [vmem:[#allocation11 + $0xd60] sm:$0xff]
    %v5097 = vld [vmem:[#allocation11 + $0xd68] sm:$0xff]
    %v5098 = vld [vmem:[#allocation11 + $0xd70] sm:$0xff]
    %v5099 = vld [vmem:[#allocation11 + $0xd78] sm:$0xff]
    %v5100 = vld [vmem:[#allocation11 + $0xd80] sm:$0xff]
    %v5101 = vld [vmem:[#allocation11 + $0xd88] sm:$0xff]
    %v5102 = vld [vmem:[#allocation11 + $0xd90] sm:$0xff]
    %v5103 = vld [vmem:[#allocation11 + $0xd98] sm:$0xff]
    %v5104 = vld [vmem:[#allocation11 + $0xda0] sm:$0xff]
    %v5105 = vld [vmem:[#allocation11 + $0xda8] sm:$0xff]
    %v5106 = vld [vmem:[#allocation11 + $0xdb0] sm:$0xff]
    %v5107 = vld [vmem:[#allocation11 + $0xdb8] sm:$0xff]
    %v5108 = vld [vmem:[#allocation11 + $0xdc0] sm:$0xff]
    %v5109 = vld [vmem:[#allocation11 + $0xdc8] sm:$0xff]
    %v5110 = vld [vmem:[#allocation11 + $0xdd0] sm:$0xff]
    %v5111 = vld [vmem:[#allocation11 + $0xdd8] sm:$0xff]
    %v5112 = vld [vmem:[#allocation11 + $0xde0] sm:$0xff]
    %v5113 = vld [vmem:[#allocation11 + $0xde8] sm:$0xff]
    %v5114 = vld [vmem:[#allocation11 + $0xdf0] sm:$0xff]
    %v5115 = vld [vmem:[#allocation11 + $0xdf8] sm:$0xff]
    %v5116 = vld [vmem:[#allocation11 + $0xe00] sm:$0xff]
    %v5117 = vld [vmem:[#allocation11 + $0xe08] sm:$0xff]
    %v5118 = vld [vmem:[#allocation11 + $0xe10] sm:$0xff]
    %v5119 = vld [vmem:[#allocation11 + $0xe18] sm:$0xff]
    %v5120 = vld [vmem:[#allocation11 + $0xe20] sm:$0xff]
    %v5121 = vld [vmem:[#allocation11 + $0xe28] sm:$0xff]
    %v5122 = vld [vmem:[#allocation11 + $0xe30] sm:$0xff]
    %v5123 = vld [vmem:[#allocation11 + $0xe38] sm:$0xff]
    %v5124 = vld [vmem:[#allocation11 + $0xe40] sm:$0xff]
    %v5125 = vld [vmem:[#allocation11 + $0xe48] sm:$0xff]
    %v5126 = vld [vmem:[#allocation11 + $0xe50] sm:$0xff]
    %v5127 = vld [vmem:[#allocation11 + $0xe58] sm:$0xff]
    %v5128 = vld [vmem:[#allocation11 + $0xe60] sm:$0xff]
    %v5129 = vld [vmem:[#allocation11 + $0xe68] sm:$0xff]
    %v5130 = vld [vmem:[#allocation11 + $0xe70] sm:$0xff]
    %v5131 = vld [vmem:[#allocation11 + $0xe78] sm:$0xff]
    %v5132 = vld [vmem:[#allocation11 + $0xe80] sm:$0xff]
    %v5133 = vld [vmem:[#allocation11 + $0xe88] sm:$0xff]
    %v5134 = vld [vmem:[#allocation11 + $0xe90] sm:$0xff]
    %v5135 = vld [vmem:[#allocation11 + $0xe98] sm:$0xff]
    %v5136 = vld [vmem:[#allocation11 + $0xea0] sm:$0xff]
    %v5137 = vld [vmem:[#allocation11 + $0xea8] sm:$0xff]
    %v5138 = vld [vmem:[#allocation11 + $0xeb0] sm:$0xff]
    %v5139 = vld [vmem:[#allocation11 + $0xeb8] sm:$0xff]
    %v5140 = vld [vmem:[#allocation11 + $0xec0] sm:$0xff]
    %v5141 = vld [vmem:[#allocation11 + $0xec8] sm:$0xff]
    %v5142 = vld [vmem:[#allocation11 + $0xed0] sm:$0xff]
    %v5143 = vld [vmem:[#allocation11 + $0xed8] sm:$0xff]
    %v5144 = vld [vmem:[#allocation11 + $0xee0] sm:$0xff]
    %v5145 = vld [vmem:[#allocation11 + $0xee8] sm:$0xff]
    %v5146 = vld [vmem:[#allocation11 + $0xef0] sm:$0xff]
    %v5147 = vld [vmem:[#allocation11 + $0xef8] sm:$0xff]
    %v5148 = vld [vmem:[#allocation11 + $0xf00] sm:$0xff]
    %v5149 = vld [vmem:[#allocation11 + $0xf08] sm:$0xff]
    %v5150 = vld [vmem:[#allocation11 + $0xf10] sm:$0xff]
    %v5151 = vld [vmem:[#allocation11 + $0xf18] sm:$0xff]
    %v5152 = vld [vmem:[#allocation11 + $0xf20] sm:$0xff]
    %v5153 = vld [vmem:[#allocation11 + $0xf28] sm:$0xff]
    %v5154 = vld [vmem:[#allocation11 + $0xf30] sm:$0xff]
    %v5155 = vld [vmem:[#allocation11 + $0xf38] sm:$0xff]
    %v5156 = vld [vmem:[#allocation11 + $0xf40] sm:$0xff]
    %v5157 = vld [vmem:[#allocation11 + $0xf48] sm:$0xff]
    %v5158 = vld [vmem:[#allocation11 + $0xf50] sm:$0xff]
    %v5159 = vld [vmem:[#allocation11 + $0xf58] sm:$0xff]
    %v5160 = vld [vmem:[#allocation11 + $0xf60] sm:$0xff]
    %v5161 = vld [vmem:[#allocation11 + $0xf68] sm:$0xff]
    %v5162 = vld [vmem:[#allocation11 + $0xf70] sm:$0xff]
    %v5163 = vld [vmem:[#allocation11 + $0xf78] sm:$0xff]
    %v5164 = vld [vmem:[#allocation11 + $0xf80] sm:$0xff]
    %v5165 = vld [vmem:[#allocation11 + $0xf88] sm:$0xff]
    %v5166 = vld [vmem:[#allocation11 + $0xf90] sm:$0xff]
    %v5167 = vld [vmem:[#allocation11 + $0xf98] sm:$0xff]
    %v5168 = vld [vmem:[#allocation11 + $0xfa0] sm:$0xff]
    %v5169 = vld [vmem:[#allocation11 + $0xfa8] sm:$0xff]
    %v5170 = vld [vmem:[#allocation11 + $0xfb0] sm:$0xff]
    %v5171 = vld [vmem:[#allocation11 + $0xfb8] sm:$0xff]
    %v5172 = vld [vmem:[#allocation11 + $0xfc0] sm:$0xff]
    %v5173 = vld [vmem:[#allocation11 + $0xfc8] sm:$0xff]
    %v5174 = vld [vmem:[#allocation11 + $0xfd0] sm:$0xff]
    %v5175 = vld [vmem:[#allocation11 + $0xfd8] sm:$0xff]
    %v5176 = vld [vmem:[#allocation11 + $0xfe0] sm:$0xff]
    %v5177 = vld [vmem:[#allocation11 + $0xfe8] sm:$0xff]
    %v5178 = vld [vmem:[#allocation11 + $0xff0] sm:$0xff]
    %v5179 = vld [vmem:[#allocation11 + $0xff8] sm:$0xff]
    %v5180 = vld [vmem:[#allocation13] sm:$0xff]
    %v5182 = vlaneseq
    %v5183 = vshrl.u32 %v5182, 7
    %v5184 = vsub.s32 0, %v5183
    %v5185 = vrot.slane %v5180, %v5184
    %v5186 = vlaneseq
    %v5187 = vshrl.u32 %v5186, 7
    %v5188 = vsub.s32 1, %v5187
    %v5189 = vrot.slane %v5180, %v5188
    %v5190 = vlaneseq
    %v5191 = vshrl.u32 %v5190, 7
    %v5192 = vsub.s32 2, %v5191
    %v5193 = vrot.slane %v5180, %v5192
    %v5194 = vlaneseq
    %v5195 = vshrl.u32 %v5194, 7
    %v5196 = vsub.s32 3, %v5195
    %v5197 = vrot.slane %v5180, %v5196
    %v5198 = vlaneseq
    %v5199 = vshrl.u32 %v5198, 7
    %v5200 = vsub.s32 4, %v5199
    %v5201 = vrot.slane %v5180, %v5200
    %v5202 = vlaneseq
    %v5203 = vshrl.u32 %v5202, 7
    %v5204 = vsub.s32 5, %v5203
    %v5205 = vrot.slane %v5180, %v5204
    %v5206 = vlaneseq
    %v5207 = vshrl.u32 %v5206, 7
    %v5208 = vsub.s32 6, %v5207
    %v5209 = vrot.slane %v5180, %v5208
    %v5210 = vlaneseq
    %v5211 = vshrl.u32 %v5210, 7
    %v5212 = vsub.s32 7, %v5211
    %v5213 = vrot.slane %v5180, %v5212
    %v5734 = vunpack.c.l.b16 %v4668
    %v5735 = vunpack.c.h.b16 %v4668
    %v5736 = vunpack.c.l.b16 %v4669
    %v5737 = vunpack.c.h.b16 %v4669
    %v5738 = vunpack.c.l.b16 %v4670
    %v5739 = vunpack.c.h.b16 %v4670
    %v5740 = vunpack.c.l.b16 %v4671
    %v5741 = vunpack.c.h.b16 %v4671
    %v5742 = vunpack.c.l.b16 %v4672
    %v5743 = vunpack.c.h.b16 %v4672
    %v5744 = vunpack.c.l.b16 %v4673
    %v5745 = vunpack.c.h.b16 %v4673
    %v5746 = vunpack.c.l.b16 %v4674
    %v5747 = vunpack.c.h.b16 %v4674
    %v5748 = vunpack.c.l.b16 %v4675
    %v5749 = vunpack.c.h.b16 %v4675
    %v5750 = vunpack.c.l.b16 %v4676
    %v5751 = vunpack.c.h.b16 %v4676
    %v5752 = vunpack.c.l.b16 %v4677
    %v5753 = vunpack.c.h.b16 %v4677
    %v5754 = vunpack.c.l.b16 %v4678
    %v5755 = vunpack.c.h.b16 %v4678
    %v5756 = vunpack.c.l.b16 %v4679
    %v5757 = vunpack.c.h.b16 %v4679
    %v5758 = vunpack.c.l.b16 %v4680
    %v5759 = vunpack.c.h.b16 %v4680
    %v5760 = vunpack.c.l.b16 %v4681
    %v5761 = vunpack.c.h.b16 %v4681
    %v5762 = vunpack.c.l.b16 %v4682
    %v5763 = vunpack.c.h.b16 %v4682
    %v5764 = vunpack.c.l.b16 %v4683
    %v5765 = vunpack.c.h.b16 %v4683
    %v5766 = vunpack.c.l.b16 %v4684
    %v5767 = vunpack.c.h.b16 %v4684
    %v5768 = vunpack.c.l.b16 %v4685
    %v5769 = vunpack.c.h.b16 %v4685
    %v5770 = vunpack.c.l.b16 %v4686
    %v5771 = vunpack.c.h.b16 %v4686
    %v5772 = vunpack.c.l.b16 %v4687
    %v5773 = vunpack.c.h.b16 %v4687
    %v5774 = vunpack.c.l.b16 %v4688
    %v5775 = vunpack.c.h.b16 %v4688
    %v5776 = vunpack.c.l.b16 %v4689
    %v5777 = vunpack.c.h.b16 %v4689
    %v5778 = vunpack.c.l.b16 %v4690
    %v5779 = vunpack.c.h.b16 %v4690
    %v5780 = vunpack.c.l.b16 %v4691
    %v5781 = vunpack.c.h.b16 %v4691
    %v5782 = vunpack.c.l.b16 %v4692
    %v5783 = vunpack.c.h.b16 %v4692
    %v5784 = vunpack.c.l.b16 %v4693
    %v5785 = vunpack.c.h.b16 %v4693
    %v5786 = vunpack.c.l.b16 %v4694
    %v5787 = vunpack.c.h.b16 %v4694
    %v5788 = vunpack.c.l.b16 %v4695
    %v5789 = vunpack.c.h.b16 %v4695
    %v5790 = vunpack.c.l.b16 %v4696
    %v5791 = vunpack.c.h.b16 %v4696
    %v5792 = vunpack.c.l.b16 %v4697
    %v5793 = vunpack.c.h.b16 %v4697
    %v5794 = vunpack.c.l.b16 %v4698
    %v5795 = vunpack.c.h.b16 %v4698
    %v5796 = vunpack.c.l.b16 %v4699
    %v5797 = vunpack.c.h.b16 %v4699
    %v5798 = vunpack.c.l.b16 %v4700
    %v5799 = vunpack.c.h.b16 %v4700
    %v5800 = vunpack.c.l.b16 %v4701
    %v5801 = vunpack.c.h.b16 %v4701
    %v5802 = vunpack.c.l.b16 %v4702
    %v5803 = vunpack.c.h.b16 %v4702
    %v5804 = vunpack.c.l.b16 %v4703
    %v5805 = vunpack.c.h.b16 %v4703
    %v5806 = vunpack.c.l.b16 %v4704
    %v5807 = vunpack.c.h.b16 %v4704
    %v5808 = vunpack.c.l.b16 %v4705
    %v5809 = vunpack.c.h.b16 %v4705
    %v5810 = vunpack.c.l.b16 %v4706
    %v5811 = vunpack.c.h.b16 %v4706
    %v5812 = vunpack.c.l.b16 %v4707
    %v5813 = vunpack.c.h.b16 %v4707
    %v5814 = vunpack.c.l.b16 %v4708
    %v5815 = vunpack.c.h.b16 %v4708
    %v5816 = vunpack.c.l.b16 %v4709
    %v5817 = vunpack.c.h.b16 %v4709
    %v5818 = vunpack.c.l.b16 %v4710
    %v5819 = vunpack.c.h.b16 %v4710
    %v5820 = vunpack.c.l.b16 %v4711
    %v5821 = vunpack.c.h.b16 %v4711
    %v5822 = vunpack.c.l.b16 %v4712
    %v5823 = vunpack.c.h.b16 %v4712
    %v5824 = vunpack.c.l.b16 %v4713
    %v5825 = vunpack.c.h.b16 %v4713
    %v5826 = vunpack.c.l.b16 %v4714
    %v5827 = vunpack.c.h.b16 %v4714
    %v5828 = vunpack.c.l.b16 %v4715
    %v5829 = vunpack.c.h.b16 %v4715
    %v5830 = vunpack.c.l.b16 %v4716
    %v5831 = vunpack.c.h.b16 %v4716
    %v5832 = vunpack.c.l.b16 %v4717
    %v5833 = vunpack.c.h.b16 %v4717
    %v5834 = vunpack.c.l.b16 %v4718
    %v5835 = vunpack.c.h.b16 %v4718
    %v5836 = vunpack.c.l.b16 %v4719
    %v5837 = vunpack.c.h.b16 %v4719
    %v5838 = vunpack.c.l.b16 %v4720
    %v5839 = vunpack.c.h.b16 %v4720
    %v5840 = vunpack.c.l.b16 %v4721
    %v5841 = vunpack.c.h.b16 %v4721
    %v5842 = vunpack.c.l.b16 %v4722
    %v5843 = vunpack.c.h.b16 %v4722
    %v5844 = vunpack.c.l.b16 %v4723
    %v5845 = vunpack.c.h.b16 %v4723
    %v5846 = vunpack.c.l.b16 %v4724
    %v5847 = vunpack.c.h.b16 %v4724
    %v5848 = vunpack.c.l.b16 %v4725
    %v5849 = vunpack.c.h.b16 %v4725
    %v5850 = vunpack.c.l.b16 %v4726
    %v5851 = vunpack.c.h.b16 %v4726
    %v5852 = vunpack.c.l.b16 %v4727
    %v5853 = vunpack.c.h.b16 %v4727
    %v5854 = vunpack.c.l.b16 %v4728
    %v5855 = vunpack.c.h.b16 %v4728
    %v5856 = vunpack.c.l.b16 %v4729
    %v5857 = vunpack.c.h.b16 %v4729
    %v5858 = vunpack.c.l.b16 %v4730
    %v5859 = vunpack.c.h.b16 %v4730
    %v5860 = vunpack.c.l.b16 %v4731
    %v5861 = vunpack.c.h.b16 %v4731
    %v5862 = vunpack.c.l.b16 %v4732
    %v5863 = vunpack.c.h.b16 %v4732
    %v5864 = vunpack.c.l.b16 %v4733
    %v5865 = vunpack.c.h.b16 %v4733
    %v5866 = vunpack.c.l.b16 %v4734
    %v5867 = vunpack.c.h.b16 %v4734
    %v5868 = vunpack.c.l.b16 %v4735
    %v5869 = vunpack.c.h.b16 %v4735
    %v5870 = vunpack.c.l.b16 %v4736
    %v5871 = vunpack.c.h.b16 %v4736
    %v5872 = vunpack.c.l.b16 %v4737
    %v5873 = vunpack.c.h.b16 %v4737
    %v5874 = vunpack.c.l.b16 %v4738
    %v5875 = vunpack.c.h.b16 %v4738
    %v5876 = vunpack.c.l.b16 %v4739
    %v5877 = vunpack.c.h.b16 %v4739
    %v5878 = vunpack.c.l.b16 %v4740
    %v5879 = vunpack.c.h.b16 %v4740
    %v5880 = vunpack.c.l.b16 %v4741
    %v5881 = vunpack.c.h.b16 %v4741
    %v5882 = vunpack.c.l.b16 %v4742
    %v5883 = vunpack.c.h.b16 %v4742
    %v5884 = vunpack.c.l.b16 %v4743
    %v5885 = vunpack.c.h.b16 %v4743
    %v5886 = vunpack.c.l.b16 %v4744
    %v5887 = vunpack.c.h.b16 %v4744
    %v5888 = vunpack.c.l.b16 %v4745
    %v5889 = vunpack.c.h.b16 %v4745
    %v5890 = vunpack.c.l.b16 %v4746
    %v5891 = vunpack.c.h.b16 %v4746
    %v5892 = vunpack.c.l.b16 %v4747
    %v5893 = vunpack.c.h.b16 %v4747
    %v5894 = vunpack.c.l.b16 %v4748
    %v5895 = vunpack.c.h.b16 %v4748
    %v5896 = vunpack.c.l.b16 %v4749
    %v5897 = vunpack.c.h.b16 %v4749
    %v5898 = vunpack.c.l.b16 %v4750
    %v5899 = vunpack.c.h.b16 %v4750
    %v5900 = vunpack.c.l.b16 %v4751
    %v5901 = vunpack.c.h.b16 %v4751
    %v5902 = vunpack.c.l.b16 %v4752
    %v5903 = vunpack.c.h.b16 %v4752
    %v5904 = vunpack.c.l.b16 %v4753
    %v5905 = vunpack.c.h.b16 %v4753
    %v5906 = vunpack.c.l.b16 %v4754
    %v5907 = vunpack.c.h.b16 %v4754
    %v5908 = vunpack.c.l.b16 %v4755
    %v5909 = vunpack.c.h.b16 %v4755
    %v5910 = vunpack.c.l.b16 %v4756
    %v5911 = vunpack.c.h.b16 %v4756
    %v5912 = vunpack.c.l.b16 %v4757
    %v5913 = vunpack.c.h.b16 %v4757
    %v5914 = vunpack.c.l.b16 %v4758
    %v5915 = vunpack.c.h.b16 %v4758
    %v5916 = vunpack.c.l.b16 %v4759
    %v5917 = vunpack.c.h.b16 %v4759
    %v5918 = vunpack.c.l.b16 %v4760
    %v5919 = vunpack.c.h.b16 %v4760
    %v5920 = vunpack.c.l.b16 %v4761
    %v5921 = vunpack.c.h.b16 %v4761
    %v5922 = vunpack.c.l.b16 %v4762
    %v5923 = vunpack.c.h.b16 %v4762
    %v5924 = vunpack.c.l.b16 %v4763
    %v5925 = vunpack.c.h.b16 %v4763
    %v5926 = vunpack.c.l.b16 %v4764
    %v5927 = vunpack.c.h.b16 %v4764
    %v5928 = vunpack.c.l.b16 %v4765
    %v5929 = vunpack.c.h.b16 %v4765
    %v5930 = vunpack.c.l.b16 %v4766
    %v5931 = vunpack.c.h.b16 %v4766
    %v5932 = vunpack.c.l.b16 %v4767
    %v5933 = vunpack.c.h.b16 %v4767
    %v5934 = vunpack.c.l.b16 %v4768
    %v5935 = vunpack.c.h.b16 %v4768
    %v5936 = vunpack.c.l.b16 %v4769
    %v5937 = vunpack.c.h.b16 %v4769
    %v5938 = vunpack.c.l.b16 %v4770
    %v5939 = vunpack.c.h.b16 %v4770
    %v5940 = vunpack.c.l.b16 %v4771
    %v5941 = vunpack.c.h.b16 %v4771
    %v5942 = vunpack.c.l.b16 %v4772
    %v5943 = vunpack.c.h.b16 %v4772
    %v5944 = vunpack.c.l.b16 %v4773
    %v5945 = vunpack.c.h.b16 %v4773
    %v5946 = vunpack.c.l.b16 %v4774
    %v5947 = vunpack.c.h.b16 %v4774
    %v5948 = vunpack.c.l.b16 %v4775
    %v5949 = vunpack.c.h.b16 %v4775
    %v5950 = vunpack.c.l.b16 %v4776
    %v5951 = vunpack.c.h.b16 %v4776
    %v5952 = vunpack.c.l.b16 %v4777
    %v5953 = vunpack.c.h.b16 %v4777
    %v5954 = vunpack.c.l.b16 %v4778
    %v5955 = vunpack.c.h.b16 %v4778
    %v5956 = vunpack.c.l.b16 %v4779
    %v5957 = vunpack.c.h.b16 %v4779
    %v5958 = vunpack.c.l.b16 %v4780
    %v5959 = vunpack.c.h.b16 %v4780
    %v5960 = vunpack.c.l.b16 %v4781
    %v5961 = vunpack.c.h.b16 %v4781
    %v5962 = vunpack.c.l.b16 %v4782
    %v5963 = vunpack.c.h.b16 %v4782
    %v5964 = vunpack.c.l.b16 %v4783
    %v5965 = vunpack.c.h.b16 %v4783
    %v5966 = vunpack.c.l.b16 %v4784
    %v5967 = vunpack.c.h.b16 %v4784
    %v5968 = vunpack.c.l.b16 %v4785
    %v5969 = vunpack.c.h.b16 %v4785
    %v5970 = vunpack.c.l.b16 %v4786
    %v5971 = vunpack.c.h.b16 %v4786
    %v5972 = vunpack.c.l.b16 %v4787
    %v5973 = vunpack.c.h.b16 %v4787
    %v5974 = vunpack.c.l.b16 %v4788
    %v5975 = vunpack.c.h.b16 %v4788
    %v5976 = vunpack.c.l.b16 %v4789
    %v5977 = vunpack.c.h.b16 %v4789
    %v5978 = vunpack.c.l.b16 %v4790
    %v5979 = vunpack.c.h.b16 %v4790
    %v5980 = vunpack.c.l.b16 %v4791
    %v5981 = vunpack.c.h.b16 %v4791
    %v5982 = vunpack.c.l.b16 %v4792
    %v5983 = vunpack.c.h.b16 %v4792
    %v5984 = vunpack.c.l.b16 %v4793
    %v5985 = vunpack.c.h.b16 %v4793
    %v5986 = vunpack.c.l.b16 %v4794
    %v5987 = vunpack.c.h.b16 %v4794
    %v5988 = vunpack.c.l.b16 %v4795
    %v5989 = vunpack.c.h.b16 %v4795
    %v5990 = vunpack.c.l.b16 %v4796
    %v5991 = vunpack.c.h.b16 %v4796
    %v5992 = vunpack.c.l.b16 %v4797
    %v5993 = vunpack.c.h.b16 %v4797
    %v5994 = vunpack.c.l.b16 %v4798
    %v5995 = vunpack.c.h.b16 %v4798
    %v5996 = vunpack.c.l.b16 %v4799
    %v5997 = vunpack.c.h.b16 %v4799
    %v5998 = vunpack.c.l.b16 %v4800
    %v5999 = vunpack.c.h.b16 %v4800
    %v6000 = vunpack.c.l.b16 %v4801
    %v6001 = vunpack.c.h.b16 %v4801
    %v6002 = vunpack.c.l.b16 %v4802
    %v6003 = vunpack.c.h.b16 %v4802
    %v6004 = vunpack.c.l.b16 %v4803
    %v6005 = vunpack.c.h.b16 %v4803
    %v6006 = vunpack.c.l.b16 %v4804
    %v6007 = vunpack.c.h.b16 %v4804
    %v6008 = vunpack.c.l.b16 %v4805
    %v6009 = vunpack.c.h.b16 %v4805
    %v6010 = vunpack.c.l.b16 %v4806
    %v6011 = vunpack.c.h.b16 %v4806
    %v6012 = vunpack.c.l.b16 %v4807
    %v6013 = vunpack.c.h.b16 %v4807
    %v6014 = vunpack.c.l.b16 %v4808
    %v6015 = vunpack.c.h.b16 %v4808
    %v6016 = vunpack.c.l.b16 %v4809
    %v6017 = vunpack.c.h.b16 %v4809
    %v6018 = vunpack.c.l.b16 %v4810
    %v6019 = vunpack.c.h.b16 %v4810
    %v6020 = vunpack.c.l.b16 %v4811
    %v6021 = vunpack.c.h.b16 %v4811
    %v6022 = vunpack.c.l.b16 %v4812
    %v6023 = vunpack.c.h.b16 %v4812
    %v6024 = vunpack.c.l.b16 %v4813
    %v6025 = vunpack.c.h.b16 %v4813
    %v6026 = vunpack.c.l.b16 %v4814
    %v6027 = vunpack.c.h.b16 %v4814
    %v6028 = vunpack.c.l.b16 %v4815
    %v6029 = vunpack.c.h.b16 %v4815
    %v6030 = vunpack.c.l.b16 %v4816
    %v6031 = vunpack.c.h.b16 %v4816
    %v6032 = vunpack.c.l.b16 %v4817
    %v6033 = vunpack.c.h.b16 %v4817
    %v6034 = vunpack.c.l.b16 %v4818
    %v6035 = vunpack.c.h.b16 %v4818
    %v6036 = vunpack.c.l.b16 %v4819
    %v6037 = vunpack.c.h.b16 %v4819
    %v6038 = vunpack.c.l.b16 %v4820
    %v6039 = vunpack.c.h.b16 %v4820
    %v6040 = vunpack.c.l.b16 %v4821
    %v6041 = vunpack.c.h.b16 %v4821
    %v6042 = vunpack.c.l.b16 %v4822
    %v6043 = vunpack.c.h.b16 %v4822
    %v6044 = vunpack.c.l.b16 %v4823
    %v6045 = vunpack.c.h.b16 %v4823
    %v6046 = vunpack.c.l.b16 %v4824
    %v6047 = vunpack.c.h.b16 %v4824
    %v6048 = vunpack.c.l.b16 %v4825
    %v6049 = vunpack.c.h.b16 %v4825
    %v6050 = vunpack.c.l.b16 %v4826
    %v6051 = vunpack.c.h.b16 %v4826
    %v6052 = vunpack.c.l.b16 %v4827
    %v6053 = vunpack.c.h.b16 %v4827
    %v6054 = vunpack.c.l.b16 %v4828
    %v6055 = vunpack.c.h.b16 %v4828
    %v6056 = vunpack.c.l.b16 %v4829
    %v6057 = vunpack.c.h.b16 %v4829
    %v6058 = vunpack.c.l.b16 %v4830
    %v6059 = vunpack.c.h.b16 %v4830
    %v6060 = vunpack.c.l.b16 %v4831
    %v6061 = vunpack.c.h.b16 %v4831
    %v6062 = vunpack.c.l.b16 %v4832
    %v6063 = vunpack.c.h.b16 %v4832
    %v6064 = vunpack.c.l.b16 %v4833
    %v6065 = vunpack.c.h.b16 %v4833
    %v6066 = vunpack.c.l.b16 %v4834
    %v6067 = vunpack.c.h.b16 %v4834
    %v6068 = vunpack.c.l.b16 %v4835
    %v6069 = vunpack.c.h.b16 %v4835
    %v6070 = vunpack.c.l.b16 %v4836
    %v6071 = vunpack.c.h.b16 %v4836
    %v6072 = vunpack.c.l.b16 %v4837
    %v6073 = vunpack.c.h.b16 %v4837
    %v6074 = vunpack.c.l.b16 %v4838
    %v6075 = vunpack.c.h.b16 %v4838
    %v6076 = vunpack.c.l.b16 %v4839
    %v6077 = vunpack.c.h.b16 %v4839
    %v6078 = vunpack.c.l.b16 %v4840
    %v6079 = vunpack.c.h.b16 %v4840
    %v6080 = vunpack.c.l.b16 %v4841
    %v6081 = vunpack.c.h.b16 %v4841
    %v6082 = vunpack.c.l.b16 %v4842
    %v6083 = vunpack.c.h.b16 %v4842
    %v6084 = vunpack.c.l.b16 %v4843
    %v6085 = vunpack.c.h.b16 %v4843
    %v6086 = vunpack.c.l.b16 %v4844
    %v6087 = vunpack.c.h.b16 %v4844
    %v6088 = vunpack.c.l.b16 %v4845
    %v6089 = vunpack.c.h.b16 %v4845
    %v6090 = vunpack.c.l.b16 %v4846
    %v6091 = vunpack.c.h.b16 %v4846
    %v6092 = vunpack.c.l.b16 %v4847
    %v6093 = vunpack.c.h.b16 %v4847
    %v6094 = vunpack.c.l.b16 %v4848
    %v6095 = vunpack.c.h.b16 %v4848
    %v6096 = vunpack.c.l.b16 %v4849
    %v6097 = vunpack.c.h.b16 %v4849
    %v6098 = vunpack.c.l.b16 %v4850
    %v6099 = vunpack.c.h.b16 %v4850
    %v6100 = vunpack.c.l.b16 %v4851
    %v6101 = vunpack.c.h.b16 %v4851
    %v6102 = vunpack.c.l.b16 %v4852
    %v6103 = vunpack.c.h.b16 %v4852
    %v6104 = vunpack.c.l.b16 %v4853
    %v6105 = vunpack.c.h.b16 %v4853
    %v6106 = vunpack.c.l.b16 %v4854
    %v6107 = vunpack.c.h.b16 %v4854
    %v6108 = vunpack.c.l.b16 %v4855
    %v6109 = vunpack.c.h.b16 %v4855
    %v6110 = vunpack.c.l.b16 %v4856
    %v6111 = vunpack.c.h.b16 %v4856
    %v6112 = vunpack.c.l.b16 %v4857
    %v6113 = vunpack.c.h.b16 %v4857
    %v6114 = vunpack.c.l.b16 %v4858
    %v6115 = vunpack.c.h.b16 %v4858
    %v6116 = vunpack.c.l.b16 %v4859
    %v6117 = vunpack.c.h.b16 %v4859
    %v6118 = vunpack.c.l.b16 %v4860
    %v6119 = vunpack.c.h.b16 %v4860
    %v6120 = vunpack.c.l.b16 %v4861
    %v6121 = vunpack.c.h.b16 %v4861
    %v6122 = vunpack.c.l.b16 %v4862
    %v6123 = vunpack.c.h.b16 %v4862
    %v6124 = vunpack.c.l.b16 %v4863
    %v6125 = vunpack.c.h.b16 %v4863
    %v6126 = vunpack.c.l.b16 %v4864
    %v6127 = vunpack.c.h.b16 %v4864
    %v6128 = vunpack.c.l.b16 %v4865
    %v6129 = vunpack.c.h.b16 %v4865
    %v6130 = vunpack.c.l.b16 %v4866
    %v6131 = vunpack.c.h.b16 %v4866
    %v6132 = vunpack.c.l.b16 %v4867
    %v6133 = vunpack.c.h.b16 %v4867
    %v6134 = vunpack.c.l.b16 %v4868
    %v6135 = vunpack.c.h.b16 %v4868
    %v6136 = vunpack.c.l.b16 %v4869
    %v6137 = vunpack.c.h.b16 %v4869
    %v6138 = vunpack.c.l.b16 %v4870
    %v6139 = vunpack.c.h.b16 %v4870
    %v6140 = vunpack.c.l.b16 %v4871
    %v6141 = vunpack.c.h.b16 %v4871
    %v6142 = vunpack.c.l.b16 %v4872
    %v6143 = vunpack.c.h.b16 %v4872
    %v6144 = vunpack.c.l.b16 %v4873
    %v6145 = vunpack.c.h.b16 %v4873
    %v6146 = vunpack.c.l.b16 %v4874
    %v6147 = vunpack.c.h.b16 %v4874
    %v6148 = vunpack.c.l.b16 %v4875
    %v6149 = vunpack.c.h.b16 %v4875
    %v6150 = vunpack.c.l.b16 %v4876
    %v6151 = vunpack.c.h.b16 %v4876
    %v6152 = vunpack.c.l.b16 %v4877
    %v6153 = vunpack.c.h.b16 %v4877
    %v6154 = vunpack.c.l.b16 %v4878
    %v6155 = vunpack.c.h.b16 %v4878
    %v6156 = vunpack.c.l.b16 %v4879
    %v6157 = vunpack.c.h.b16 %v4879
    %v6158 = vunpack.c.l.b16 %v4880
    %v6159 = vunpack.c.h.b16 %v4880
    %v6160 = vunpack.c.l.b16 %v4881
    %v6161 = vunpack.c.h.b16 %v4881
    %v6162 = vunpack.c.l.b16 %v4882
    %v6163 = vunpack.c.h.b16 %v4882
    %v6164 = vunpack.c.l.b16 %v4883
    %v6165 = vunpack.c.h.b16 %v4883
    %v6166 = vunpack.c.l.b16 %v4884
    %v6167 = vunpack.c.h.b16 %v4884
    %v6168 = vunpack.c.l.b16 %v4885
    %v6169 = vunpack.c.h.b16 %v4885
    %v6170 = vunpack.c.l.b16 %v4886
    %v6171 = vunpack.c.h.b16 %v4886
    %v6172 = vunpack.c.l.b16 %v4887
    %v6173 = vunpack.c.h.b16 %v4887
    %v6174 = vunpack.c.l.b16 %v4888
    %v6175 = vunpack.c.h.b16 %v4888
    %v6176 = vunpack.c.l.b16 %v4889
    %v6177 = vunpack.c.h.b16 %v4889
    %v6178 = vunpack.c.l.b16 %v4890
    %v6179 = vunpack.c.h.b16 %v4890
    %v6180 = vunpack.c.l.b16 %v4891
    %v6181 = vunpack.c.h.b16 %v4891
    %v6182 = vunpack.c.l.b16 %v4892
    %v6183 = vunpack.c.h.b16 %v4892
    %v6184 = vunpack.c.l.b16 %v4893
    %v6185 = vunpack.c.h.b16 %v4893
    %v6186 = vunpack.c.l.b16 %v4894
    %v6187 = vunpack.c.h.b16 %v4894
    %v6188 = vunpack.c.l.b16 %v4895
    %v6189 = vunpack.c.h.b16 %v4895
    %v6190 = vunpack.c.l.b16 %v4896
    %v6191 = vunpack.c.h.b16 %v4896
    %v6192 = vunpack.c.l.b16 %v4897
    %v6193 = vunpack.c.h.b16 %v4897
    %v6194 = vunpack.c.l.b16 %v4898
    %v6195 = vunpack.c.h.b16 %v4898
    %v6196 = vunpack.c.l.b16 %v4899
    %v6197 = vunpack.c.h.b16 %v4899
    %v6198 = vunpack.c.l.b16 %v4900
    %v6199 = vunpack.c.h.b16 %v4900
    %v6200 = vunpack.c.l.b16 %v4901
    %v6201 = vunpack.c.h.b16 %v4901
    %v6202 = vunpack.c.l.b16 %v4902
    %v6203 = vunpack.c.h.b16 %v4902
    %v6204 = vunpack.c.l.b16 %v4903
    %v6205 = vunpack.c.h.b16 %v4903
    %v6206 = vunpack.c.l.b16 %v4904
    %v6207 = vunpack.c.h.b16 %v4904
    %v6208 = vunpack.c.l.b16 %v4905
    %v6209 = vunpack.c.h.b16 %v4905
    %v6210 = vunpack.c.l.b16 %v4906
    %v6211 = vunpack.c.h.b16 %v4906
    %v6212 = vunpack.c.l.b16 %v4907
    %v6213 = vunpack.c.h.b16 %v4907
    %v6214 = vunpack.c.l.b16 %v4908
    %v6215 = vunpack.c.h.b16 %v4908
    %v6216 = vunpack.c.l.b16 %v4909
    %v6217 = vunpack.c.h.b16 %v4909
    %v6218 = vunpack.c.l.b16 %v4910
    %v6219 = vunpack.c.h.b16 %v4910
    %v6220 = vunpack.c.l.b16 %v4911
    %v6221 = vunpack.c.h.b16 %v4911
    %v6222 = vunpack.c.l.b16 %v4912
    %v6223 = vunpack.c.h.b16 %v4912
    %v6224 = vunpack.c.l.b16 %v4913
    %v6225 = vunpack.c.h.b16 %v4913
    %v6226 = vunpack.c.l.b16 %v4914
    %v6227 = vunpack.c.h.b16 %v4914
    %v6228 = vunpack.c.l.b16 %v4915
    %v6229 = vunpack.c.h.b16 %v4915
    %v6230 = vunpack.c.l.b16 %v4916
    %v6231 = vunpack.c.h.b16 %v4916
    %v6232 = vunpack.c.l.b16 %v4917
    %v6233 = vunpack.c.h.b16 %v4917
    %v6234 = vunpack.c.l.b16 %v4918
    %v6235 = vunpack.c.h.b16 %v4918
    %v6236 = vunpack.c.l.b16 %v4919
    %v6237 = vunpack.c.h.b16 %v4919
    %v6238 = vunpack.c.l.b16 %v4920
    %v6239 = vunpack.c.h.b16 %v4920
    %v6240 = vunpack.c.l.b16 %v4921
    %v6241 = vunpack.c.h.b16 %v4921
    %v6242 = vunpack.c.l.b16 %v4922
    %v6243 = vunpack.c.h.b16 %v4922
    %v6244 = vunpack.c.l.b16 %v4923
    %v6245 = vunpack.c.h.b16 %v4923
    %v6246 = vunpack.c.l.b16 %v4924
    %v6247 = vunpack.c.h.b16 %v4924
    %v6248 = vunpack.c.l.b16 %v4925
    %v6249 = vunpack.c.h.b16 %v4925
    %v6250 = vunpack.c.l.b16 %v4926
    %v6251 = vunpack.c.h.b16 %v4926
    %v6252 = vunpack.c.l.b16 %v4927
    %v6253 = vunpack.c.h.b16 %v4927
    %v6254 = vunpack.c.l.b16 %v4928
    %v6255 = vunpack.c.h.b16 %v4928
    %v6256 = vunpack.c.l.b16 %v4929
    %v6257 = vunpack.c.h.b16 %v4929
    %v6258 = vunpack.c.l.b16 %v4930
    %v6259 = vunpack.c.h.b16 %v4930
    %v6260 = vunpack.c.l.b16 %v4931
    %v6261 = vunpack.c.h.b16 %v4931
    %v6262 = vunpack.c.l.b16 %v4932
    %v6263 = vunpack.c.h.b16 %v4932
    %v6264 = vunpack.c.l.b16 %v4933
    %v6265 = vunpack.c.h.b16 %v4933
    %v6266 = vunpack.c.l.b16 %v4934
    %v6267 = vunpack.c.h.b16 %v4934
    %v6268 = vunpack.c.l.b16 %v4935
    %v6269 = vunpack.c.h.b16 %v4935
    %v6270 = vunpack.c.l.b16 %v4936
    %v6271 = vunpack.c.h.b16 %v4936
    %v6272 = vunpack.c.l.b16 %v4937
    %v6273 = vunpack.c.h.b16 %v4937
    %v6274 = vunpack.c.l.b16 %v4938
    %v6275 = vunpack.c.h.b16 %v4938
    %v6276 = vunpack.c.l.b16 %v4939
    %v6277 = vunpack.c.h.b16 %v4939
    %v6278 = vunpack.c.l.b16 %v4940
    %v6279 = vunpack.c.h.b16 %v4940
    %v6280 = vunpack.c.l.b16 %v4941
    %v6281 = vunpack.c.h.b16 %v4941
    %v6282 = vunpack.c.l.b16 %v4942
    %v6283 = vunpack.c.h.b16 %v4942
    %v6284 = vunpack.c.l.b16 %v4943
    %v6285 = vunpack.c.h.b16 %v4943
    %v6286 = vunpack.c.l.b16 %v4944
    %v6287 = vunpack.c.h.b16 %v4944
    %v6288 = vunpack.c.l.b16 %v4945
    %v6289 = vunpack.c.h.b16 %v4945
    %v6290 = vunpack.c.l.b16 %v4946
    %v6291 = vunpack.c.h.b16 %v4946
    %v6292 = vunpack.c.l.b16 %v4947
    %v6293 = vunpack.c.h.b16 %v4947
    %v6294 = vunpack.c.l.b16 %v4948
    %v6295 = vunpack.c.h.b16 %v4948
    %v6296 = vunpack.c.l.b16 %v4949
    %v6297 = vunpack.c.h.b16 %v4949
    %v6298 = vunpack.c.l.b16 %v4950
    %v6299 = vunpack.c.h.b16 %v4950
    %v6300 = vunpack.c.l.b16 %v4951
    %v6301 = vunpack.c.h.b16 %v4951
    %v6302 = vunpack.c.l.b16 %v4952
    %v6303 = vunpack.c.h.b16 %v4952
    %v6304 = vunpack.c.l.b16 %v4953
    %v6305 = vunpack.c.h.b16 %v4953
    %v6306 = vunpack.c.l.b16 %v4954
    %v6307 = vunpack.c.h.b16 %v4954
    %v6308 = vunpack.c.l.b16 %v4955
    %v6309 = vunpack.c.h.b16 %v4955
    %v6310 = vunpack.c.l.b16 %v4956
    %v6311 = vunpack.c.h.b16 %v4956
    %v6312 = vunpack.c.l.b16 %v4957
    %v6313 = vunpack.c.h.b16 %v4957
    %v6314 = vunpack.c.l.b16 %v4958
    %v6315 = vunpack.c.h.b16 %v4958
    %v6316 = vunpack.c.l.b16 %v4959
    %v6317 = vunpack.c.h.b16 %v4959
    %v6318 = vunpack.c.l.b16 %v4960
    %v6319 = vunpack.c.h.b16 %v4960
    %v6320 = vunpack.c.l.b16 %v4961
    %v6321 = vunpack.c.h.b16 %v4961
    %v6322 = vunpack.c.l.b16 %v4962
    %v6323 = vunpack.c.h.b16 %v4962
    %v6324 = vunpack.c.l.b16 %v4963
    %v6325 = vunpack.c.h.b16 %v4963
    %v6326 = vunpack.c.l.b16 %v4964
    %v6327 = vunpack.c.h.b16 %v4964
    %v6328 = vunpack.c.l.b16 %v4965
    %v6329 = vunpack.c.h.b16 %v4965
    %v6330 = vunpack.c.l.b16 %v4966
    %v6331 = vunpack.c.h.b16 %v4966
    %v6332 = vunpack.c.l.b16 %v4967
    %v6333 = vunpack.c.h.b16 %v4967
    %v6334 = vunpack.c.l.b16 %v4968
    %v6335 = vunpack.c.h.b16 %v4968
    %v6336 = vunpack.c.l.b16 %v4969
    %v6337 = vunpack.c.h.b16 %v4969
    %v6338 = vunpack.c.l.b16 %v4970
    %v6339 = vunpack.c.h.b16 %v4970
    %v6340 = vunpack.c.l.b16 %v4971
    %v6341 = vunpack.c.h.b16 %v4971
    %v6342 = vunpack.c.l.b16 %v4972
    %v6343 = vunpack.c.h.b16 %v4972
    %v6344 = vunpack.c.l.b16 %v4973
    %v6345 = vunpack.c.h.b16 %v4973
    %v6346 = vunpack.c.l.b16 %v4974
    %v6347 = vunpack.c.h.b16 %v4974
    %v6348 = vunpack.c.l.b16 %v4975
    %v6349 = vunpack.c.h.b16 %v4975
    %v6350 = vunpack.c.l.b16 %v4976
    %v6351 = vunpack.c.h.b16 %v4976
    %v6352 = vunpack.c.l.b16 %v4977
    %v6353 = vunpack.c.h.b16 %v4977
    %v6354 = vunpack.c.l.b16 %v4978
    %v6355 = vunpack.c.h.b16 %v4978
    %v6356 = vunpack.c.l.b16 %v4979
    %v6357 = vunpack.c.h.b16 %v4979
    %v6358 = vunpack.c.l.b16 %v4980
    %v6359 = vunpack.c.h.b16 %v4980
    %v6360 = vunpack.c.l.b16 %v4981
    %v6361 = vunpack.c.h.b16 %v4981
    %v6362 = vunpack.c.l.b16 %v4982
    %v6363 = vunpack.c.h.b16 %v4982
    %v6364 = vunpack.c.l.b16 %v4983
    %v6365 = vunpack.c.h.b16 %v4983
    %v6366 = vunpack.c.l.b16 %v4984
    %v6367 = vunpack.c.h.b16 %v4984
    %v6368 = vunpack.c.l.b16 %v4985
    %v6369 = vunpack.c.h.b16 %v4985
    %v6370 = vunpack.c.l.b16 %v4986
    %v6371 = vunpack.c.h.b16 %v4986
    %v6372 = vunpack.c.l.b16 %v4987
    %v6373 = vunpack.c.h.b16 %v4987
    %v6374 = vunpack.c.l.b16 %v4988
    %v6375 = vunpack.c.h.b16 %v4988
    %v6376 = vunpack.c.l.b16 %v4989
    %v6377 = vunpack.c.h.b16 %v4989
    %v6378 = vunpack.c.l.b16 %v4990
    %v6379 = vunpack.c.h.b16 %v4990
    %v6380 = vunpack.c.l.b16 %v4991
    %v6381 = vunpack.c.h.b16 %v4991
    %v6382 = vunpack.c.l.b16 %v4992
    %v6383 = vunpack.c.h.b16 %v4992
    %v6384 = vunpack.c.l.b16 %v4993
    %v6385 = vunpack.c.h.b16 %v4993
    %v6386 = vunpack.c.l.b16 %v4994
    %v6387 = vunpack.c.h.b16 %v4994
    %v6388 = vunpack.c.l.b16 %v4995
    %v6389 = vunpack.c.h.b16 %v4995
    %v6390 = vunpack.c.l.b16 %v4996
    %v6391 = vunpack.c.h.b16 %v4996
    %v6392 = vunpack.c.l.b16 %v4997
    %v6393 = vunpack.c.h.b16 %v4997
    %v6394 = vunpack.c.l.b16 %v4998
    %v6395 = vunpack.c.h.b16 %v4998
    %v6396 = vunpack.c.l.b16 %v4999
    %v6397 = vunpack.c.h.b16 %v4999
    %v6398 = vunpack.c.l.b16 %v5000
    %v6399 = vunpack.c.h.b16 %v5000
    %v6400 = vunpack.c.l.b16 %v5001
    %v6401 = vunpack.c.h.b16 %v5001
    %v6402 = vunpack.c.l.b16 %v5002
    %v6403 = vunpack.c.h.b16 %v5002
    %v6404 = vunpack.c.l.b16 %v5003
    %v6405 = vunpack.c.h.b16 %v5003
    %v6406 = vunpack.c.l.b16 %v5004
    %v6407 = vunpack.c.h.b16 %v5004
    %v6408 = vunpack.c.l.b16 %v5005
    %v6409 = vunpack.c.h.b16 %v5005
    %v6410 = vunpack.c.l.b16 %v5006
    %v6411 = vunpack.c.h.b16 %v5006
    %v6412 = vunpack.c.l.b16 %v5007
    %v6413 = vunpack.c.h.b16 %v5007
    %v6414 = vunpack.c.l.b16 %v5008
    %v6415 = vunpack.c.h.b16 %v5008
    %v6416 = vunpack.c.l.b16 %v5009
    %v6417 = vunpack.c.h.b16 %v5009
    %v6418 = vunpack.c.l.b16 %v5010
    %v6419 = vunpack.c.h.b16 %v5010
    %v6420 = vunpack.c.l.b16 %v5011
    %v6421 = vunpack.c.h.b16 %v5011
    %v6422 = vunpack.c.l.b16 %v5012
    %v6423 = vunpack.c.h.b16 %v5012
    %v6424 = vunpack.c.l.b16 %v5013
    %v6425 = vunpack.c.h.b16 %v5013
    %v6426 = vunpack.c.l.b16 %v5014
    %v6427 = vunpack.c.h.b16 %v5014
    %v6428 = vunpack.c.l.b16 %v5015
    %v6429 = vunpack.c.h.b16 %v5015
    %v6430 = vunpack.c.l.b16 %v5016
    %v6431 = vunpack.c.h.b16 %v5016
    %v6432 = vunpack.c.l.b16 %v5017
    %v6433 = vunpack.c.h.b16 %v5017
    %v6434 = vunpack.c.l.b16 %v5018
    %v6435 = vunpack.c.h.b16 %v5018
    %v6436 = vunpack.c.l.b16 %v5019
    %v6437 = vunpack.c.h.b16 %v5019
    %v6438 = vunpack.c.l.b16 %v5020
    %v6439 = vunpack.c.h.b16 %v5020
    %v6440 = vunpack.c.l.b16 %v5021
    %v6441 = vunpack.c.h.b16 %v5021
    %v6442 = vunpack.c.l.b16 %v5022
    %v6443 = vunpack.c.h.b16 %v5022
    %v6444 = vunpack.c.l.b16 %v5023
    %v6445 = vunpack.c.h.b16 %v5023
    %v6446 = vunpack.c.l.b16 %v5024
    %v6447 = vunpack.c.h.b16 %v5024
    %v6448 = vunpack.c.l.b16 %v5025
    %v6449 = vunpack.c.h.b16 %v5025
    %v6450 = vunpack.c.l.b16 %v5026
    %v6451 = vunpack.c.h.b16 %v5026
    %v6452 = vunpack.c.l.b16 %v5027
    %v6453 = vunpack.c.h.b16 %v5027
    %v6454 = vunpack.c.l.b16 %v5028
    %v6455 = vunpack.c.h.b16 %v5028
    %v6456 = vunpack.c.l.b16 %v5029
    %v6457 = vunpack.c.h.b16 %v5029
    %v6458 = vunpack.c.l.b16 %v5030
    %v6459 = vunpack.c.h.b16 %v5030
    %v6460 = vunpack.c.l.b16 %v5031
    %v6461 = vunpack.c.h.b16 %v5031
    %v6462 = vunpack.c.l.b16 %v5032
    %v6463 = vunpack.c.h.b16 %v5032
    %v6464 = vunpack.c.l.b16 %v5033
    %v6465 = vunpack.c.h.b16 %v5033
    %v6466 = vunpack.c.l.b16 %v5034
    %v6467 = vunpack.c.h.b16 %v5034
    %v6468 = vunpack.c.l.b16 %v5035
    %v6469 = vunpack.c.h.b16 %v5035
    %v6470 = vunpack.c.l.b16 %v5036
    %v6471 = vunpack.c.h.b16 %v5036
    %v6472 = vunpack.c.l.b16 %v5037
    %v6473 = vunpack.c.h.b16 %v5037
    %v6474 = vunpack.c.l.b16 %v5038
    %v6475 = vunpack.c.h.b16 %v5038
    %v6476 = vunpack.c.l.b16 %v5039
    %v6477 = vunpack.c.h.b16 %v5039
    %v6478 = vunpack.c.l.b16 %v5040
    %v6479 = vunpack.c.h.b16 %v5040
    %v6480 = vunpack.c.l.b16 %v5041
    %v6481 = vunpack.c.h.b16 %v5041
    %v6482 = vunpack.c.l.b16 %v5042
    %v6483 = vunpack.c.h.b16 %v5042
    %v6484 = vunpack.c.l.b16 %v5043
    %v6485 = vunpack.c.h.b16 %v5043
    %v6486 = vunpack.c.l.b16 %v5044
    %v6487 = vunpack.c.h.b16 %v5044
    %v6488 = vunpack.c.l.b16 %v5045
    %v6489 = vunpack.c.h.b16 %v5045
    %v6490 = vunpack.c.l.b16 %v5046
    %v6491 = vunpack.c.h.b16 %v5046
    %v6492 = vunpack.c.l.b16 %v5047
    %v6493 = vunpack.c.h.b16 %v5047
    %v6494 = vunpack.c.l.b16 %v5048
    %v6495 = vunpack.c.h.b16 %v5048
    %v6496 = vunpack.c.l.b16 %v5049
    %v6497 = vunpack.c.h.b16 %v5049
    %v6498 = vunpack.c.l.b16 %v5050
    %v6499 = vunpack.c.h.b16 %v5050
    %v6500 = vunpack.c.l.b16 %v5051
    %v6501 = vunpack.c.h.b16 %v5051
    %v6502 = vunpack.c.l.b16 %v5052
    %v6503 = vunpack.c.h.b16 %v5052
    %v6504 = vunpack.c.l.b16 %v5053
    %v6505 = vunpack.c.h.b16 %v5053
    %v6506 = vunpack.c.l.b16 %v5054
    %v6507 = vunpack.c.h.b16 %v5054
    %v6508 = vunpack.c.l.b16 %v5055
    %v6509 = vunpack.c.h.b16 %v5055
    %v6510 = vunpack.c.l.b16 %v5056
    %v6511 = vunpack.c.h.b16 %v5056
    %v6512 = vunpack.c.l.b16 %v5057
    %v6513 = vunpack.c.h.b16 %v5057
    %v6514 = vunpack.c.l.b16 %v5058
    %v6515 = vunpack.c.h.b16 %v5058
    %v6516 = vunpack.c.l.b16 %v5059
    %v6517 = vunpack.c.h.b16 %v5059
    %v6518 = vunpack.c.l.b16 %v5060
    %v6519 = vunpack.c.h.b16 %v5060
    %v6520 = vunpack.c.l.b16 %v5061
    %v6521 = vunpack.c.h.b16 %v5061
    %v6522 = vunpack.c.l.b16 %v5062
    %v6523 = vunpack.c.h.b16 %v5062
    %v6524 = vunpack.c.l.b16 %v5063
    %v6525 = vunpack.c.h.b16 %v5063
    %v6526 = vunpack.c.l.b16 %v5064
    %v6527 = vunpack.c.h.b16 %v5064
    %v6528 = vunpack.c.l.b16 %v5065
    %v6529 = vunpack.c.h.b16 %v5065
    %v6530 = vunpack.c.l.b16 %v5066
    %v6531 = vunpack.c.h.b16 %v5066
    %v6532 = vunpack.c.l.b16 %v5067
    %v6533 = vunpack.c.h.b16 %v5067
    %v6534 = vunpack.c.l.b16 %v5068
    %v6535 = vunpack.c.h.b16 %v5068
    %v6536 = vunpack.c.l.b16 %v5069
    %v6537 = vunpack.c.h.b16 %v5069
    %v6538 = vunpack.c.l.b16 %v5070
    %v6539 = vunpack.c.h.b16 %v5070
    %v6540 = vunpack.c.l.b16 %v5071
    %v6541 = vunpack.c.h.b16 %v5071
    %v6542 = vunpack.c.l.b16 %v5072
    %v6543 = vunpack.c.h.b16 %v5072
    %v6544 = vunpack.c.l.b16 %v5073
    %v6545 = vunpack.c.h.b16 %v5073
    %v6546 = vunpack.c.l.b16 %v5074
    %v6547 = vunpack.c.h.b16 %v5074
    %v6548 = vunpack.c.l.b16 %v5075
    %v6549 = vunpack.c.h.b16 %v5075
    %v6550 = vunpack.c.l.b16 %v5076
    %v6551 = vunpack.c.h.b16 %v5076
    %v6552 = vunpack.c.l.b16 %v5077
    %v6553 = vunpack.c.h.b16 %v5077
    %v6554 = vunpack.c.l.b16 %v5078
    %v6555 = vunpack.c.h.b16 %v5078
    %v6556 = vunpack.c.l.b16 %v5079
    %v6557 = vunpack.c.h.b16 %v5079
    %v6558 = vunpack.c.l.b16 %v5080
    %v6559 = vunpack.c.h.b16 %v5080
    %v6560 = vunpack.c.l.b16 %v5081
    %v6561 = vunpack.c.h.b16 %v5081
    %v6562 = vunpack.c.l.b16 %v5082
    %v6563 = vunpack.c.h.b16 %v5082
    %v6564 = vunpack.c.l.b16 %v5083
    %v6565 = vunpack.c.h.b16 %v5083
    %v6566 = vunpack.c.l.b16 %v5084
    %v6567 = vunpack.c.h.b16 %v5084
    %v6568 = vunpack.c.l.b16 %v5085
    %v6569 = vunpack.c.h.b16 %v5085
    %v6570 = vunpack.c.l.b16 %v5086
    %v6571 = vunpack.c.h.b16 %v5086
    %v6572 = vunpack.c.l.b16 %v5087
    %v6573 = vunpack.c.h.b16 %v5087
    %v6574 = vunpack.c.l.b16 %v5088
    %v6575 = vunpack.c.h.b16 %v5088
    %v6576 = vunpack.c.l.b16 %v5089
    %v6577 = vunpack.c.h.b16 %v5089
    %v6578 = vunpack.c.l.b16 %v5090
    %v6579 = vunpack.c.h.b16 %v5090
    %v6580 = vunpack.c.l.b16 %v5091
    %v6581 = vunpack.c.h.b16 %v5091
    %v6582 = vunpack.c.l.b16 %v5092
    %v6583 = vunpack.c.h.b16 %v5092
    %v6584 = vunpack.c.l.b16 %v5093
    %v6585 = vunpack.c.h.b16 %v5093
    %v6586 = vunpack.c.l.b16 %v5094
    %v6587 = vunpack.c.h.b16 %v5094
    %v6588 = vunpack.c.l.b16 %v5095
    %v6589 = vunpack.c.h.b16 %v5095
    %v6590 = vunpack.c.l.b16 %v5096
    %v6591 = vunpack.c.h.b16 %v5096
    %v6592 = vunpack.c.l.b16 %v5097
    %v6593 = vunpack.c.h.b16 %v5097
    %v6594 = vunpack.c.l.b16 %v5098
    %v6595 = vunpack.c.h.b16 %v5098
    %v6596 = vunpack.c.l.b16 %v5099
    %v6597 = vunpack.c.h.b16 %v5099
    %v6598 = vunpack.c.l.b16 %v5100
    %v6599 = vunpack.c.h.b16 %v5100
    %v6600 = vunpack.c.l.b16 %v5101
    %v6601 = vunpack.c.h.b16 %v5101
    %v6602 = vunpack.c.l.b16 %v5102
    %v6603 = vunpack.c.h.b16 %v5102
    %v6604 = vunpack.c.l.b16 %v5103
    %v6605 = vunpack.c.h.b16 %v5103
    %v6606 = vunpack.c.l.b16 %v5104
    %v6607 = vunpack.c.h.b16 %v5104
    %v6608 = vunpack.c.l.b16 %v5105
    %v6609 = vunpack.c.h.b16 %v5105
    %v6610 = vunpack.c.l.b16 %v5106
    %v6611 = vunpack.c.h.b16 %v5106
    %v6612 = vunpack.c.l.b16 %v5107
    %v6613 = vunpack.c.h.b16 %v5107
    %v6614 = vunpack.c.l.b16 %v5108
    %v6615 = vunpack.c.h.b16 %v5108
    %v6616 = vunpack.c.l.b16 %v5109
    %v6617 = vunpack.c.h.b16 %v5109
    %v6618 = vunpack.c.l.b16 %v5110
    %v6619 = vunpack.c.h.b16 %v5110
    %v6620 = vunpack.c.l.b16 %v5111
    %v6621 = vunpack.c.h.b16 %v5111
    %v6622 = vunpack.c.l.b16 %v5112
    %v6623 = vunpack.c.h.b16 %v5112
    %v6624 = vunpack.c.l.b16 %v5113
    %v6625 = vunpack.c.h.b16 %v5113
    %v6626 = vunpack.c.l.b16 %v5114
    %v6627 = vunpack.c.h.b16 %v5114
    %v6628 = vunpack.c.l.b16 %v5115
    %v6629 = vunpack.c.h.b16 %v5115
    %v6630 = vunpack.c.l.b16 %v5116
    %v6631 = vunpack.c.h.b16 %v5116
    %v6632 = vunpack.c.l.b16 %v5117
    %v6633 = vunpack.c.h.b16 %v5117
    %v6634 = vunpack.c.l.b16 %v5118
    %v6635 = vunpack.c.h.b16 %v5118
    %v6636 = vunpack.c.l.b16 %v5119
    %v6637 = vunpack.c.h.b16 %v5119
    %v6638 = vunpack.c.l.b16 %v5120
    %v6639 = vunpack.c.h.b16 %v5120
    %v6640 = vunpack.c.l.b16 %v5121
    %v6641 = vunpack.c.h.b16 %v5121
    %v6642 = vunpack.c.l.b16 %v5122
    %v6643 = vunpack.c.h.b16 %v5122
    %v6644 = vunpack.c.l.b16 %v5123
    %v6645 = vunpack.c.h.b16 %v5123
    %v6646 = vunpack.c.l.b16 %v5124
    %v6647 = vunpack.c.h.b16 %v5124
    %v6648 = vunpack.c.l.b16 %v5125
    %v6649 = vunpack.c.h.b16 %v5125
    %v6650 = vunpack.c.l.b16 %v5126
    %v6651 = vunpack.c.h.b16 %v5126
    %v6652 = vunpack.c.l.b16 %v5127
    %v6653 = vunpack.c.h.b16 %v5127
    %v6654 = vunpack.c.l.b16 %v5128
    %v6655 = vunpack.c.h.b16 %v5128
    %v6656 = vunpack.c.l.b16 %v5129
    %v6657 = vunpack.c.h.b16 %v5129
    %v6658 = vunpack.c.l.b16 %v5130
    %v6659 = vunpack.c.h.b16 %v5130
    %v6660 = vunpack.c.l.b16 %v5131
    %v6661 = vunpack.c.h.b16 %v5131
    %v6662 = vunpack.c.l.b16 %v5132
    %v6663 = vunpack.c.h.b16 %v5132
    %v6664 = vunpack.c.l.b16 %v5133
    %v6665 = vunpack.c.h.b16 %v5133
    %v6666 = vunpack.c.l.b16 %v5134
    %v6667 = vunpack.c.h.b16 %v5134
    %v6668 = vunpack.c.l.b16 %v5135
    %v6669 = vunpack.c.h.b16 %v5135
    %v6670 = vunpack.c.l.b16 %v5136
    %v6671 = vunpack.c.h.b16 %v5136
    %v6672 = vunpack.c.l.b16 %v5137
    %v6673 = vunpack.c.h.b16 %v5137
    %v6674 = vunpack.c.l.b16 %v5138
    %v6675 = vunpack.c.h.b16 %v5138
    %v6676 = vunpack.c.l.b16 %v5139
    %v6677 = vunpack.c.h.b16 %v5139
    %v6678 = vunpack.c.l.b16 %v5140
    %v6679 = vunpack.c.h.b16 %v5140
    %v6680 = vunpack.c.l.b16 %v5141
    %v6681 = vunpack.c.h.b16 %v5141
    %v6682 = vunpack.c.l.b16 %v5142
    %v6683 = vunpack.c.h.b16 %v5142
    %v6684 = vunpack.c.l.b16 %v5143
    %v6685 = vunpack.c.h.b16 %v5143
    %v6686 = vunpack.c.l.b16 %v5144
    %v6687 = vunpack.c.h.b16 %v5144
    %v6688 = vunpack.c.l.b16 %v5145
    %v6689 = vunpack.c.h.b16 %v5145
    %v6690 = vunpack.c.l.b16 %v5146
    %v6691 = vunpack.c.h.b16 %v5146
    %v6692 = vunpack.c.l.b16 %v5147
    %v6693 = vunpack.c.h.b16 %v5147
    %v6694 = vunpack.c.l.b16 %v5148
    %v6695 = vunpack.c.h.b16 %v5148
    %v6696 = vunpack.c.l.b16 %v5149
    %v6697 = vunpack.c.h.b16 %v5149
    %v6698 = vunpack.c.l.b16 %v5150
    %v6699 = vunpack.c.h.b16 %v5150
    %v6700 = vunpack.c.l.b16 %v5151
    %v6701 = vunpack.c.h.b16 %v5151
    %v6702 = vunpack.c.l.b16 %v5152
    %v6703 = vunpack.c.h.b16 %v5152
    %v6704 = vunpack.c.l.b16 %v5153
    %v6705 = vunpack.c.h.b16 %v5153
    %v6706 = vunpack.c.l.b16 %v5154
    %v6707 = vunpack.c.h.b16 %v5154
    %v6708 = vunpack.c.l.b16 %v5155
    %v6709 = vunpack.c.h.b16 %v5155
    %v6710 = vunpack.c.l.b16 %v5156
    %v6711 = vunpack.c.h.b16 %v5156
    %v6712 = vunpack.c.l.b16 %v5157
    %v6713 = vunpack.c.h.b16 %v5157
    %v6714 = vunpack.c.l.b16 %v5158
    %v6715 = vunpack.c.h.b16 %v5158
    %v6716 = vunpack.c.l.b16 %v5159
    %v6717 = vunpack.c.h.b16 %v5159
    %v6718 = vunpack.c.l.b16 %v5160
    %v6719 = vunpack.c.h.b16 %v5160
    %v6720 = vunpack.c.l.b16 %v5161
    %v6721 = vunpack.c.h.b16 %v5161
    %v6722 = vunpack.c.l.b16 %v5162
    %v6723 = vunpack.c.h.b16 %v5162
    %v6724 = vunpack.c.l.b16 %v5163
    %v6725 = vunpack.c.h.b16 %v5163
    %v6726 = vunpack.c.l.b16 %v5164
    %v6727 = vunpack.c.h.b16 %v5164
    %v6728 = vunpack.c.l.b16 %v5165
    %v6729 = vunpack.c.h.b16 %v5165
    %v6730 = vunpack.c.l.b16 %v5166
    %v6731 = vunpack.c.h.b16 %v5166
    %v6732 = vunpack.c.l.b16 %v5167
    %v6733 = vunpack.c.h.b16 %v5167
    %v6734 = vunpack.c.l.b16 %v5168
    %v6735 = vunpack.c.h.b16 %v5168
    %v6736 = vunpack.c.l.b16 %v5169
    %v6737 = vunpack.c.h.b16 %v5169
    %v6738 = vunpack.c.l.b16 %v5170
    %v6739 = vunpack.c.h.b16 %v5170
    %v6740 = vunpack.c.l.b16 %v5171
    %v6741 = vunpack.c.h.b16 %v5171
    %v6742 = vunpack.c.l.b16 %v5172
    %v6743 = vunpack.c.h.b16 %v5172
    %v6744 = vunpack.c.l.b16 %v5173
    %v6745 = vunpack.c.h.b16 %v5173
    %v6746 = vunpack.c.l.b16 %v5174
    %v6747 = vunpack.c.h.b16 %v5174
    %v6748 = vunpack.c.l.b16 %v5175
    %v6749 = vunpack.c.h.b16 %v5175
    %v6750 = vunpack.c.l.b16 %v5176
    %v6751 = vunpack.c.h.b16 %v5176
    %v6752 = vunpack.c.l.b16 %v5177
    %v6753 = vunpack.c.h.b16 %v5177
    %v6754 = vunpack.c.l.b16 %v5178
    %v6755 = vunpack.c.h.b16 %v5178
    %v6756 = vunpack.c.l.b16 %v5179
    %v6757 = vunpack.c.h.b16 %v5179
    %v6758 = vpack.c.b16 %v5742, %v5734
    %v6759 = vpack.c.b16 %v5743, %v5735
    %v6760 = vpack.c.b16 %v5744, %v5736
    %v6761 = vpack.c.b16 %v5745, %v5737
    %v6762 = vpack.c.b16 %v5746, %v5738
    %v6763 = vpack.c.b16 %v5747, %v5739
    %v6764 = vpack.c.b16 %v5748, %v5740
    %v6765 = vpack.c.b16 %v5749, %v5741
    %v6766 = vpack.c.b16 %v5758, %v5750
    %v6767 = vpack.c.b16 %v5759, %v5751
    %v6768 = vpack.c.b16 %v5760, %v5752
    %v6769 = vpack.c.b16 %v5761, %v5753
    %v6770 = vpack.c.b16 %v5762, %v5754
    %v6771 = vpack.c.b16 %v5763, %v5755
    %v6772 = vpack.c.b16 %v5764, %v5756
    %v6773 = vpack.c.b16 %v5765, %v5757
    %v6774 = vpack.c.b16 %v5774, %v5766
    %v6775 = vpack.c.b16 %v5775, %v5767
    %v6776 = vpack.c.b16 %v5776, %v5768
    %v6777 = vpack.c.b16 %v5777, %v5769
    %v6778 = vpack.c.b16 %v5778, %v5770
    %v6779 = vpack.c.b16 %v5779, %v5771
    %v6780 = vpack.c.b16 %v5780, %v5772
    %v6781 = vpack.c.b16 %v5781, %v5773
    %v6782 = vpack.c.b16 %v5790, %v5782
    %v6783 = vpack.c.b16 %v5791, %v5783
    %v6784 = vpack.c.b16 %v5792, %v5784
    %v6785 = vpack.c.b16 %v5793, %v5785
    %v6786 = vpack.c.b16 %v5794, %v5786
    %v6787 = vpack.c.b16 %v5795, %v5787
    %v6788 = vpack.c.b16 %v5796, %v5788
    %v6789 = vpack.c.b16 %v5797, %v5789
    %v6790 = vpack.c.b16 %v5806, %v5798
    %v6791 = vpack.c.b16 %v5807, %v5799
    %v6792 = vpack.c.b16 %v5808, %v5800
    %v6793 = vpack.c.b16 %v5809, %v5801
    %v6794 = vpack.c.b16 %v5810, %v5802
    %v6795 = vpack.c.b16 %v5811, %v5803
    %v6796 = vpack.c.b16 %v5812, %v5804
    %v6797 = vpack.c.b16 %v5813, %v5805
    %v6798 = vpack.c.b16 %v5822, %v5814
    %v6799 = vpack.c.b16 %v5823, %v5815
    %v6800 = vpack.c.b16 %v5824, %v5816
    %v6801 = vpack.c.b16 %v5825, %v5817
    %v6802 = vpack.c.b16 %v5826, %v5818
    %v6803 = vpack.c.b16 %v5827, %v5819
    %v6804 = vpack.c.b16 %v5828, %v5820
    %v6805 = vpack.c.b16 %v5829, %v5821
    %v6806 = vpack.c.b16 %v5838, %v5830
    %v6807 = vpack.c.b16 %v5839, %v5831
    %v6808 = vpack.c.b16 %v5840, %v5832
    %v6809 = vpack.c.b16 %v5841, %v5833
    %v6810 = vpack.c.b16 %v5842, %v5834
    %v6811 = vpack.c.b16 %v5843, %v5835
    %v6812 = vpack.c.b16 %v5844, %v5836
    %v6813 = vpack.c.b16 %v5845, %v5837
    %v6814 = vpack.c.b16 %v5854, %v5846
    %v6815 = vpack.c.b16 %v5855, %v5847
    %v6816 = vpack.c.b16 %v5856, %v5848
    %v6817 = vpack.c.b16 %v5857, %v5849
    %v6818 = vpack.c.b16 %v5858, %v5850
    %v6819 = vpack.c.b16 %v5859, %v5851
    %v6820 = vpack.c.b16 %v5860, %v5852
    %v6821 = vpack.c.b16 %v5861, %v5853
    %v6822 = vpack.c.b16 %v5870, %v5862
    %v6823 = vpack.c.b16 %v5871, %v5863
    %v6824 = vpack.c.b16 %v5872, %v5864
    %v6825 = vpack.c.b16 %v5873, %v5865
    %v6826 = vpack.c.b16 %v5874, %v5866
    %v6827 = vpack.c.b16 %v5875, %v5867
    %v6828 = vpack.c.b16 %v5876, %v5868
    %v6829 = vpack.c.b16 %v5877, %v5869
    %v6830 = vpack.c.b16 %v5886, %v5878
    %v6831 = vpack.c.b16 %v5887, %v5879
    %v6832 = vpack.c.b16 %v5888, %v5880
    %v6833 = vpack.c.b16 %v5889, %v5881
    %v6834 = vpack.c.b16 %v5890, %v5882
    %v6835 = vpack.c.b16 %v5891, %v5883
    %v6836 = vpack.c.b16 %v5892, %v5884
    %v6837 = vpack.c.b16 %v5893, %v5885
    %v6838 = vpack.c.b16 %v5902, %v5894
    %v6839 = vpack.c.b16 %v5903, %v5895
    %v6840 = vpack.c.b16 %v5904, %v5896
    %v6841 = vpack.c.b16 %v5905, %v5897
    %v6842 = vpack.c.b16 %v5906, %v5898
    %v6843 = vpack.c.b16 %v5907, %v5899
    %v6844 = vpack.c.b16 %v5908, %v5900
    %v6845 = vpack.c.b16 %v5909, %v5901
    %v6846 = vpack.c.b16 %v5918, %v5910
    %v6847 = vpack.c.b16 %v5919, %v5911
    %v6848 = vpack.c.b16 %v5920, %v5912
    %v6849 = vpack.c.b16 %v5921, %v5913
    %v6850 = vpack.c.b16 %v5922, %v5914
    %v6851 = vpack.c.b16 %v5923, %v5915
    %v6852 = vpack.c.b16 %v5924, %v5916
    %v6853 = vpack.c.b16 %v5925, %v5917
    %v6854 = vpack.c.b16 %v5934, %v5926
    %v6855 = vpack.c.b16 %v5935, %v5927
    %v6856 = vpack.c.b16 %v5936, %v5928
    %v6857 = vpack.c.b16 %v5937, %v5929
    %v6858 = vpack.c.b16 %v5938, %v5930
    %v6859 = vpack.c.b16 %v5939, %v5931
    %v6860 = vpack.c.b16 %v5940, %v5932
    %v6861 = vpack.c.b16 %v5941, %v5933
    %v6862 = vpack.c.b16 %v5950, %v5942
    %v6863 = vpack.c.b16 %v5951, %v5943
    %v6864 = vpack.c.b16 %v5952, %v5944
    %v6865 = vpack.c.b16 %v5953, %v5945
    %v6866 = vpack.c.b16 %v5954, %v5946
    %v6867 = vpack.c.b16 %v5955, %v5947
    %v6868 = vpack.c.b16 %v5956, %v5948
    %v6869 = vpack.c.b16 %v5957, %v5949
    %v6870 = vpack.c.b16 %v5966, %v5958
    %v6871 = vpack.c.b16 %v5967, %v5959
    %v6872 = vpack.c.b16 %v5968, %v5960
    %v6873 = vpack.c.b16 %v5969, %v5961
    %v6874 = vpack.c.b16 %v5970, %v5962
    %v6875 = vpack.c.b16 %v5971, %v5963
    %v6876 = vpack.c.b16 %v5972, %v5964
    %v6877 = vpack.c.b16 %v5973, %v5965
    %v6878 = vpack.c.b16 %v5982, %v5974
    %v6879 = vpack.c.b16 %v5983, %v5975
    %v6880 = vpack.c.b16 %v5984, %v5976
    %v6881 = vpack.c.b16 %v5985, %v5977
    %v6882 = vpack.c.b16 %v5986, %v5978
    %v6883 = vpack.c.b16 %v5987, %v5979
    %v6884 = vpack.c.b16 %v5988, %v5980
    %v6885 = vpack.c.b16 %v5989, %v5981
    %v6886 = vpack.c.b16 %v5998, %v5990
    %v6887 = vpack.c.b16 %v5999, %v5991
    %v6888 = vpack.c.b16 %v6000, %v5992
    %v6889 = vpack.c.b16 %v6001, %v5993
    %v6890 = vpack.c.b16 %v6002, %v5994
    %v6891 = vpack.c.b16 %v6003, %v5995
    %v6892 = vpack.c.b16 %v6004, %v5996
    %v6893 = vpack.c.b16 %v6005, %v5997
    %v6894 = vpack.c.b16 %v6014, %v6006
    %v6895 = vpack.c.b16 %v6015, %v6007
    %v6896 = vpack.c.b16 %v6016, %v6008
    %v6897 = vpack.c.b16 %v6017, %v6009
    %v6898 = vpack.c.b16 %v6018, %v6010
    %v6899 = vpack.c.b16 %v6019, %v6011
    %v6900 = vpack.c.b16 %v6020, %v6012
    %v6901 = vpack.c.b16 %v6021, %v6013
    %v6902 = vpack.c.b16 %v6030, %v6022
    %v6903 = vpack.c.b16 %v6031, %v6023
    %v6904 = vpack.c.b16 %v6032, %v6024
    %v6905 = vpack.c.b16 %v6033, %v6025
    %v6906 = vpack.c.b16 %v6034, %v6026
    %v6907 = vpack.c.b16 %v6035, %v6027
    %v6908 = vpack.c.b16 %v6036, %v6028
    %v6909 = vpack.c.b16 %v6037, %v6029
    %v6910 = vpack.c.b16 %v6046, %v6038
    %v6911 = vpack.c.b16 %v6047, %v6039
    %v6912 = vpack.c.b16 %v6048, %v6040
    %v6913 = vpack.c.b16 %v6049, %v6041
    %v6914 = vpack.c.b16 %v6050, %v6042
    %v6915 = vpack.c.b16 %v6051, %v6043
    %v6916 = vpack.c.b16 %v6052, %v6044
    %v6917 = vpack.c.b16 %v6053, %v6045
    %v6918 = vpack.c.b16 %v6062, %v6054
    %v6919 = vpack.c.b16 %v6063, %v6055
    %v6920 = vpack.c.b16 %v6064, %v6056
    %v6921 = vpack.c.b16 %v6065, %v6057
    %v6922 = vpack.c.b16 %v6066, %v6058
    %v6923 = vpack.c.b16 %v6067, %v6059
    %v6924 = vpack.c.b16 %v6068, %v6060
    %v6925 = vpack.c.b16 %v6069, %v6061
    %v6926 = vpack.c.b16 %v6078, %v6070
    %v6927 = vpack.c.b16 %v6079, %v6071
    %v6928 = vpack.c.b16 %v6080, %v6072
    %v6929 = vpack.c.b16 %v6081, %v6073
    %v6930 = vpack.c.b16 %v6082, %v6074
    %v6931 = vpack.c.b16 %v6083, %v6075
    %v6932 = vpack.c.b16 %v6084, %v6076
    %v6933 = vpack.c.b16 %v6085, %v6077
    %v6934 = vpack.c.b16 %v6094, %v6086
    %v6935 = vpack.c.b16 %v6095, %v6087
    %v6936 = vpack.c.b16 %v6096, %v6088
    %v6937 = vpack.c.b16 %v6097, %v6089
    %v6938 = vpack.c.b16 %v6098, %v6090
    %v6939 = vpack.c.b16 %v6099, %v6091
    %v6940 = vpack.c.b16 %v6100, %v6092
    %v6941 = vpack.c.b16 %v6101, %v6093
    %v6942 = vpack.c.b16 %v6110, %v6102
    %v6943 = vpack.c.b16 %v6111, %v6103
    %v6944 = vpack.c.b16 %v6112, %v6104
    %v6945 = vpack.c.b16 %v6113, %v6105
    %v6946 = vpack.c.b16 %v6114, %v6106
    %v6947 = vpack.c.b16 %v6115, %v6107
    %v6948 = vpack.c.b16 %v6116, %v6108
    %v6949 = vpack.c.b16 %v6117, %v6109
    %v6950 = vpack.c.b16 %v6126, %v6118
    %v6951 = vpack.c.b16 %v6127, %v6119
    %v6952 = vpack.c.b16 %v6128, %v6120
    %v6953 = vpack.c.b16 %v6129, %v6121
    %v6954 = vpack.c.b16 %v6130, %v6122
    %v6955 = vpack.c.b16 %v6131, %v6123
    %v6956 = vpack.c.b16 %v6132, %v6124
    %v6957 = vpack.c.b16 %v6133, %v6125
    %v6958 = vpack.c.b16 %v6142, %v6134
    %v6959 = vpack.c.b16 %v6143, %v6135
    %v6960 = vpack.c.b16 %v6144, %v6136
    %v6961 = vpack.c.b16 %v6145, %v6137
    %v6962 = vpack.c.b16 %v6146, %v6138
    %v6963 = vpack.c.b16 %v6147, %v6139
    %v6964 = vpack.c.b16 %v6148, %v6140
    %v6965 = vpack.c.b16 %v6149, %v6141
    %v6966 = vpack.c.b16 %v6158, %v6150
    %v6967 = vpack.c.b16 %v6159, %v6151
    %v6968 = vpack.c.b16 %v6160, %v6152
    %v6969 = vpack.c.b16 %v6161, %v6153
    %v6970 = vpack.c.b16 %v6162, %v6154
    %v6971 = vpack.c.b16 %v6163, %v6155
    %v6972 = vpack.c.b16 %v6164, %v6156
    %v6973 = vpack.c.b16 %v6165, %v6157
    %v6974 = vpack.c.b16 %v6174, %v6166
    %v6975 = vpack.c.b16 %v6175, %v6167
    %v6976 = vpack.c.b16 %v6176, %v6168
    %v6977 = vpack.c.b16 %v6177, %v6169
    %v6978 = vpack.c.b16 %v6178, %v6170
    %v6979 = vpack.c.b16 %v6179, %v6171
    %v6980 = vpack.c.b16 %v6180, %v6172
    %v6981 = vpack.c.b16 %v6181, %v6173
    %v6982 = vpack.c.b16 %v6190, %v6182
    %v6983 = vpack.c.b16 %v6191, %v6183
    %v6984 = vpack.c.b16 %v6192, %v6184
    %v6985 = vpack.c.b16 %v6193, %v6185
    %v6986 = vpack.c.b16 %v6194, %v6186
    %v6987 = vpack.c.b16 %v6195, %v6187
    %v6988 = vpack.c.b16 %v6196, %v6188
    %v6989 = vpack.c.b16 %v6197, %v6189
    %v6990 = vpack.c.b16 %v6206, %v6198
    %v6991 = vpack.c.b16 %v6207, %v6199
    %v6992 = vpack.c.b16 %v6208, %v6200
    %v6993 = vpack.c.b16 %v6209, %v6201
    %v6994 = vpack.c.b16 %v6210, %v6202
    %v6995 = vpack.c.b16 %v6211, %v6203
    %v6996 = vpack.c.b16 %v6212, %v6204
    %v6997 = vpack.c.b16 %v6213, %v6205
    %v6998 = vpack.c.b16 %v6222, %v6214
    %v6999 = vpack.c.b16 %v6223, %v6215
    %v7000 = vpack.c.b16 %v6224, %v6216
    %v7001 = vpack.c.b16 %v6225, %v6217
    %v7002 = vpack.c.b16 %v6226, %v6218
    %v7003 = vpack.c.b16 %v6227, %v6219
    %v7004 = vpack.c.b16 %v6228, %v6220
    %v7005 = vpack.c.b16 %v6229, %v6221
    %v7006 = vpack.c.b16 %v6238, %v6230
    %v7007 = vpack.c.b16 %v6239, %v6231
    %v7008 = vpack.c.b16 %v6240, %v6232
    %v7009 = vpack.c.b16 %v6241, %v6233
    %v7010 = vpack.c.b16 %v6242, %v6234
    %v7011 = vpack.c.b16 %v6243, %v6235
    %v7012 = vpack.c.b16 %v6244, %v6236
    %v7013 = vpack.c.b16 %v6245, %v6237
    %v7014 = vpack.c.b16 %v6254, %v6246
    %v7015 = vpack.c.b16 %v6255, %v6247
    %v7016 = vpack.c.b16 %v6256, %v6248
    %v7017 = vpack.c.b16 %v6257, %v6249
    %v7018 = vpack.c.b16 %v6258, %v6250
    %v7019 = vpack.c.b16 %v6259, %v6251
    %v7020 = vpack.c.b16 %v6260, %v6252
    %v7021 = vpack.c.b16 %v6261, %v6253
    %v7022 = vpack.c.b16 %v6270, %v6262
    %v7023 = vpack.c.b16 %v6271, %v6263
    %v7024 = vpack.c.b16 %v6272, %v6264
    %v7025 = vpack.c.b16 %v6273, %v6265
    %v7026 = vpack.c.b16 %v6274, %v6266
    %v7027 = vpack.c.b16 %v6275, %v6267
    %v7028 = vpack.c.b16 %v6276, %v6268
    %v7029 = vpack.c.b16 %v6277, %v6269
    %v7030 = vpack.c.b16 %v6286, %v6278
    %v7031 = vpack.c.b16 %v6287, %v6279
    %v7032 = vpack.c.b16 %v6288, %v6280
    %v7033 = vpack.c.b16 %v6289, %v6281
    %v7034 = vpack.c.b16 %v6290, %v6282
    %v7035 = vpack.c.b16 %v6291, %v6283
    %v7036 = vpack.c.b16 %v6292, %v6284
    %v7037 = vpack.c.b16 %v6293, %v6285
    %v7038 = vpack.c.b16 %v6302, %v6294
    %v7039 = vpack.c.b16 %v6303, %v6295
    %v7040 = vpack.c.b16 %v6304, %v6296
    %v7041 = vpack.c.b16 %v6305, %v6297
    %v7042 = vpack.c.b16 %v6306, %v6298
    %v7043 = vpack.c.b16 %v6307, %v6299
    %v7044 = vpack.c.b16 %v6308, %v6300
    %v7045 = vpack.c.b16 %v6309, %v6301
    %v7046 = vpack.c.b16 %v6318, %v6310
    %v7047 = vpack.c.b16 %v6319, %v6311
    %v7048 = vpack.c.b16 %v6320, %v6312
    %v7049 = vpack.c.b16 %v6321, %v6313
    %v7050 = vpack.c.b16 %v6322, %v6314
    %v7051 = vpack.c.b16 %v6323, %v6315
    %v7052 = vpack.c.b16 %v6324, %v6316
    %v7053 = vpack.c.b16 %v6325, %v6317
    %v7054 = vpack.c.b16 %v6334, %v6326
    %v7055 = vpack.c.b16 %v6335, %v6327
    %v7056 = vpack.c.b16 %v6336, %v6328
    %v7057 = vpack.c.b16 %v6337, %v6329
    %v7058 = vpack.c.b16 %v6338, %v6330
    %v7059 = vpack.c.b16 %v6339, %v6331
    %v7060 = vpack.c.b16 %v6340, %v6332
    %v7061 = vpack.c.b16 %v6341, %v6333
    %v7062 = vpack.c.b16 %v6350, %v6342
    %v7063 = vpack.c.b16 %v6351, %v6343
    %v7064 = vpack.c.b16 %v6352, %v6344
    %v7065 = vpack.c.b16 %v6353, %v6345
    %v7066 = vpack.c.b16 %v6354, %v6346
    %v7067 = vpack.c.b16 %v6355, %v6347
    %v7068 = vpack.c.b16 %v6356, %v6348
    %v7069 = vpack.c.b16 %v6357, %v6349
    %v7070 = vpack.c.b16 %v6366, %v6358
    %v7071 = vpack.c.b16 %v6367, %v6359
    %v7072 = vpack.c.b16 %v6368, %v6360
    %v7073 = vpack.c.b16 %v6369, %v6361
    %v7074 = vpack.c.b16 %v6370, %v6362
    %v7075 = vpack.c.b16 %v6371, %v6363
    %v7076 = vpack.c.b16 %v6372, %v6364
    %v7077 = vpack.c.b16 %v6373, %v6365
    %v7078 = vpack.c.b16 %v6382, %v6374
    %v7079 = vpack.c.b16 %v6383, %v6375
    %v7080 = vpack.c.b16 %v6384, %v6376
    %v7081 = vpack.c.b16 %v6385, %v6377
    %v7082 = vpack.c.b16 %v6386, %v6378
    %v7083 = vpack.c.b16 %v6387, %v6379
    %v7084 = vpack.c.b16 %v6388, %v6380
    %v7085 = vpack.c.b16 %v6389, %v6381
    %v7086 = vpack.c.b16 %v6398, %v6390
    %v7087 = vpack.c.b16 %v6399, %v6391
    %v7088 = vpack.c.b16 %v6400, %v6392
    %v7089 = vpack.c.b16 %v6401, %v6393
    %v7090 = vpack.c.b16 %v6402, %v6394
    %v7091 = vpack.c.b16 %v6403, %v6395
    %v7092 = vpack.c.b16 %v6404, %v6396
    %v7093 = vpack.c.b16 %v6405, %v6397
    %v7094 = vpack.c.b16 %v6414, %v6406
    %v7095 = vpack.c.b16 %v6415, %v6407
    %v7096 = vpack.c.b16 %v6416, %v6408
    %v7097 = vpack.c.b16 %v6417, %v6409
    %v7098 = vpack.c.b16 %v6418, %v6410
    %v7099 = vpack.c.b16 %v6419, %v6411
    %v7100 = vpack.c.b16 %v6420, %v6412
    %v7101 = vpack.c.b16 %v6421, %v6413
    %v7102 = vpack.c.b16 %v6430, %v6422
    %v7103 = vpack.c.b16 %v6431, %v6423
    %v7104 = vpack.c.b16 %v6432, %v6424
    %v7105 = vpack.c.b16 %v6433, %v6425
    %v7106 = vpack.c.b16 %v6434, %v6426
    %v7107 = vpack.c.b16 %v6435, %v6427
    %v7108 = vpack.c.b16 %v6436, %v6428
    %v7109 = vpack.c.b16 %v6437, %v6429
    %v7110 = vpack.c.b16 %v6446, %v6438
    %v7111 = vpack.c.b16 %v6447, %v6439
    %v7112 = vpack.c.b16 %v6448, %v6440
    %v7113 = vpack.c.b16 %v6449, %v6441
    %v7114 = vpack.c.b16 %v6450, %v6442
    %v7115 = vpack.c.b16 %v6451, %v6443
    %v7116 = vpack.c.b16 %v6452, %v6444
    %v7117 = vpack.c.b16 %v6453, %v6445
    %v7118 = vpack.c.b16 %v6462, %v6454
    %v7119 = vpack.c.b16 %v6463, %v6455
    %v7120 = vpack.c.b16 %v6464, %v6456
    %v7121 = vpack.c.b16 %v6465, %v6457
    %v7122 = vpack.c.b16 %v6466, %v6458
    %v7123 = vpack.c.b16 %v6467, %v6459
    %v7124 = vpack.c.b16 %v6468, %v6460
    %v7125 = vpack.c.b16 %v6469, %v6461
    %v7126 = vpack.c.b16 %v6478, %v6470
    %v7127 = vpack.c.b16 %v6479, %v6471
    %v7128 = vpack.c.b16 %v6480, %v6472
    %v7129 = vpack.c.b16 %v6481, %v6473
    %v7130 = vpack.c.b16 %v6482, %v6474
    %v7131 = vpack.c.b16 %v6483, %v6475
    %v7132 = vpack.c.b16 %v6484, %v6476
    %v7133 = vpack.c.b16 %v6485, %v6477
    %v7134 = vpack.c.b16 %v6494, %v6486
    %v7135 = vpack.c.b16 %v6495, %v6487
    %v7136 = vpack.c.b16 %v6496, %v6488
    %v7137 = vpack.c.b16 %v6497, %v6489
    %v7138 = vpack.c.b16 %v6498, %v6490
    %v7139 = vpack.c.b16 %v6499, %v6491
    %v7140 = vpack.c.b16 %v6500, %v6492
    %v7141 = vpack.c.b16 %v6501, %v6493
    %v7142 = vpack.c.b16 %v6510, %v6502
    %v7143 = vpack.c.b16 %v6511, %v6503
    %v7144 = vpack.c.b16 %v6512, %v6504
    %v7145 = vpack.c.b16 %v6513, %v6505
    %v7146 = vpack.c.b16 %v6514, %v6506
    %v7147 = vpack.c.b16 %v6515, %v6507
    %v7148 = vpack.c.b16 %v6516, %v6508
    %v7149 = vpack.c.b16 %v6517, %v6509
    %v7150 = vpack.c.b16 %v6526, %v6518
    %v7151 = vpack.c.b16 %v6527, %v6519
    %v7152 = vpack.c.b16 %v6528, %v6520
    %v7153 = vpack.c.b16 %v6529, %v6521
    %v7154 = vpack.c.b16 %v6530, %v6522
    %v7155 = vpack.c.b16 %v6531, %v6523
    %v7156 = vpack.c.b16 %v6532, %v6524
    %v7157 = vpack.c.b16 %v6533, %v6525
    %v7158 = vpack.c.b16 %v6542, %v6534
    %v7159 = vpack.c.b16 %v6543, %v6535
    %v7160 = vpack.c.b16 %v6544, %v6536
    %v7161 = vpack.c.b16 %v6545, %v6537
    %v7162 = vpack.c.b16 %v6546, %v6538
    %v7163 = vpack.c.b16 %v6547, %v6539
    %v7164 = vpack.c.b16 %v6548, %v6540
    %v7165 = vpack.c.b16 %v6549, %v6541
    %v7166 = vpack.c.b16 %v6558, %v6550
    %v7167 = vpack.c.b16 %v6559, %v6551
    %v7168 = vpack.c.b16 %v6560, %v6552
    %v7169 = vpack.c.b16 %v6561, %v6553
    %v7170 = vpack.c.b16 %v6562, %v6554
    %v7171 = vpack.c.b16 %v6563, %v6555
    %v7172 = vpack.c.b16 %v6564, %v6556
    %v7173 = vpack.c.b16 %v6565, %v6557
    %v7174 = vpack.c.b16 %v6574, %v6566
    %v7175 = vpack.c.b16 %v6575, %v6567
    %v7176 = vpack.c.b16 %v6576, %v6568
    %v7177 = vpack.c.b16 %v6577, %v6569
    %v7178 = vpack.c.b16 %v6578, %v6570
    %v7179 = vpack.c.b16 %v6579, %v6571
    %v7180 = vpack.c.b16 %v6580, %v6572
    %v7181 = vpack.c.b16 %v6581, %v6573
    %v7182 = vpack.c.b16 %v6590, %v6582
    %v7183 = vpack.c.b16 %v6591, %v6583
    %v7184 = vpack.c.b16 %v6592, %v6584
    %v7185 = vpack.c.b16 %v6593, %v6585
    %v7186 = vpack.c.b16 %v6594, %v6586
    %v7187 = vpack.c.b16 %v6595, %v6587
    %v7188 = vpack.c.b16 %v6596, %v6588
    %v7189 = vpack.c.b16 %v6597, %v6589
    %v7190 = vpack.c.b16 %v6606, %v6598
    %v7191 = vpack.c.b16 %v6607, %v6599
    %v7192 = vpack.c.b16 %v6608, %v6600
    %v7193 = vpack.c.b16 %v6609, %v6601
    %v7194 = vpack.c.b16 %v6610, %v6602
    %v7195 = vpack.c.b16 %v6611, %v6603
    %v7196 = vpack.c.b16 %v6612, %v6604
    %v7197 = vpack.c.b16 %v6613, %v6605
    %v7198 = vpack.c.b16 %v6622, %v6614
    %v7199 = vpack.c.b16 %v6623, %v6615
    %v7200 = vpack.c.b16 %v6624, %v6616
    %v7201 = vpack.c.b16 %v6625, %v6617
    %v7202 = vpack.c.b16 %v6626, %v6618
    %v7203 = vpack.c.b16 %v6627, %v6619
    %v7204 = vpack.c.b16 %v6628, %v6620
    %v7205 = vpack.c.b16 %v6629, %v6621
    %v7206 = vpack.c.b16 %v6638, %v6630
    %v7207 = vpack.c.b16 %v6639, %v6631
    %v7208 = vpack.c.b16 %v6640, %v6632
    %v7209 = vpack.c.b16 %v6641, %v6633
    %v7210 = vpack.c.b16 %v6642, %v6634
    %v7211 = vpack.c.b16 %v6643, %v6635
    %v7212 = vpack.c.b16 %v6644, %v6636
    %v7213 = vpack.c.b16 %v6645, %v6637
    %v7214 = vpack.c.b16 %v6654, %v6646
    %v7215 = vpack.c.b16 %v6655, %v6647
    %v7216 = vpack.c.b16 %v6656, %v6648
    %v7217 = vpack.c.b16 %v6657, %v6649
    %v7218 = vpack.c.b16 %v6658, %v6650
    %v7219 = vpack.c.b16 %v6659, %v6651
    %v7220 = vpack.c.b16 %v6660, %v6652
    %v7221 = vpack.c.b16 %v6661, %v6653
    %v7222 = vpack.c.b16 %v6670, %v6662
    %v7223 = vpack.c.b16 %v6671, %v6663
    %v7224 = vpack.c.b16 %v6672, %v6664
    %v7225 = vpack.c.b16 %v6673, %v6665
    %v7226 = vpack.c.b16 %v6674, %v6666
    %v7227 = vpack.c.b16 %v6675, %v6667
    %v7228 = vpack.c.b16 %v6676, %v6668
    %v7229 = vpack.c.b16 %v6677, %v6669
    %v7230 = vpack.c.b16 %v6686, %v6678
    %v7231 = vpack.c.b16 %v6687, %v6679
    %v7232 = vpack.c.b16 %v6688, %v6680
    %v7233 = vpack.c.b16 %v6689, %v6681
    %v7234 = vpack.c.b16 %v6690, %v6682
    %v7235 = vpack.c.b16 %v6691, %v6683
    %v7236 = vpack.c.b16 %v6692, %v6684
    %v7237 = vpack.c.b16 %v6693, %v6685
    %v7238 = vpack.c.b16 %v6702, %v6694
    %v7239 = vpack.c.b16 %v6703, %v6695
    %v7240 = vpack.c.b16 %v6704, %v6696
    %v7241 = vpack.c.b16 %v6705, %v6697
    %v7242 = vpack.c.b16 %v6706, %v6698
    %v7243 = vpack.c.b16 %v6707, %v6699
    %v7244 = vpack.c.b16 %v6708, %v6700
    %v7245 = vpack.c.b16 %v6709, %v6701
    %v7246 = vpack.c.b16 %v6718, %v6710
    %v7247 = vpack.c.b16 %v6719, %v6711
    %v7248 = vpack.c.b16 %v6720, %v6712
    %v7249 = vpack.c.b16 %v6721, %v6713
    %v7250 = vpack.c.b16 %v6722, %v6714
    %v7251 = vpack.c.b16 %v6723, %v6715
    %v7252 = vpack.c.b16 %v6724, %v6716
    %v7253 = vpack.c.b16 %v6725, %v6717
    %v7254 = vpack.c.b16 %v6734, %v6726
    %v7255 = vpack.c.b16 %v6735, %v6727
    %v7256 = vpack.c.b16 %v6736, %v6728
    %v7257 = vpack.c.b16 %v6737, %v6729
    %v7258 = vpack.c.b16 %v6738, %v6730
    %v7259 = vpack.c.b16 %v6739, %v6731
    %v7260 = vpack.c.b16 %v6740, %v6732
    %v7261 = vpack.c.b16 %v6741, %v6733
    %v7262 = vpack.c.b16 %v6750, %v6742
    %v7263 = vpack.c.b16 %v6751, %v6743
    %v7264 = vpack.c.b16 %v6752, %v6744
    %v7265 = vpack.c.b16 %v6753, %v6745
    %v7266 = vpack.c.b16 %v6754, %v6746
    %v7267 = vpack.c.b16 %v6755, %v6747
    %v7268 = vpack.c.b16 %v6756, %v6748
    %v7269 = vpack.c.b16 %v6757, %v6749
    %7782 = vmatprep.subr.bf16.mxu0 %v6759
    %7783 = vmatpush1.bf16.msra.mxu0 %v6758
    %7784 = vmatprep.subr.bf16.mxu0 %v6767
    %7785 = vmatpush1.bf16.msra.mxu0 %v6766
    %7786 = vmatprep.subr.bf16.mxu0 %v6775
    %7787 = vmatpush1.bf16.msra.mxu0 %v6774
    %7788 = vmatprep.subr.bf16.mxu0 %v6783
    %7789 = vmatpush1.bf16.msra.mxu0 %v6782
    %7790 = vmatprep.subr.bf16.mxu0 %v6791
    %7791 = vmatpush1.bf16.msra.mxu0 %v6790
    %7792 = vmatprep.subr.bf16.mxu0 %v6799
    %7793 = vmatpush1.bf16.msra.mxu0 %v6798
    %7794 = vmatprep.subr.bf16.mxu0 %v6807
    %7795 = vmatpush1.bf16.msra.mxu0 %v6806
    %7796 = vmatprep.subr.bf16.mxu0 %v6815
    %7797 = vmatpush1.bf16.msra.mxu0 %v6814
    %7798 = vmatprep.subr.bf16.mxu0 %v6823
    %7799 = vmatpush1.bf16.msra.mxu0 %v6822
    %7800 = vmatprep.subr.bf16.mxu0 %v6831
    %7801 = vmatpush1.bf16.msra.mxu0 %v6830
    %7802 = vmatprep.subr.bf16.mxu0 %v6839
    %7803 = vmatpush1.bf16.msra.mxu0 %v6838
    %7804 = vmatprep.subr.bf16.mxu0 %v6847
    %7805 = vmatpush1.bf16.msra.mxu0 %v6846
    %7806 = vmatprep.subr.bf16.mxu0 %v6855
    %7807 = vmatpush1.bf16.msra.mxu0 %v6854
    %7808 = vmatprep.subr.bf16.mxu0 %v6863
    %7809 = vmatpush1.bf16.msra.mxu0 %v6862
    %7810 = vmatprep.subr.bf16.mxu0 %v6871
    %7811 = vmatpush1.bf16.msra.mxu0 %v6870
    %7812 = vmatprep.subr.bf16.mxu0 %v6879
    %7813 = vmatpush1.bf16.msra.mxu0 %v6878
    %7814 = vmatprep.mubr.bf16.mxu0 %v4661
    %7815 = vmatmul.mubr.bf16.gmra.mrb[0].mxu0 %v4660
    %v7816 = vpop.f32.mrb[0].mxu0
    %v7817 = vadd.f32 %v5185, %v7816
    %v7818 = vpop.f32.mrb[0].mxu0
    %v7819 = vadd.f32 %v5189, %v7818
    %v7820 = vpop.f32.mrb[0].mxu0
    %v7821 = vadd.f32 %v5185, %v7820
    %v7822 = vpop.f32.mrb[0].mxu0
    %v7823 = vadd.f32 %v5189, %v7822
    %7824 = vdwg.mxu0
    %7825 = vmatprep.subr.bf16.mxu0 %v6887
    %7826 = vmatpush1.bf16.msra.mxu0 %v6886
    %7827 = vmatprep.subr.bf16.mxu0 %v6895
    %7828 = vmatpush1.bf16.msra.mxu0 %v6894
    %7829 = vmatprep.subr.bf16.mxu0 %v6903
    %7830 = vmatpush1.bf16.msra.mxu0 %v6902
    %7831 = vmatprep.subr.bf16.mxu0 %v6911
    %7832 = vmatpush1.bf16.msra.mxu0 %v6910
    %7833 = vmatprep.subr.bf16.mxu0 %v6919
    %7834 = vmatpush1.bf16.msra.mxu0 %v6918
    %7835 = vmatprep.subr.bf16.mxu0 %v6927
    %7836 = vmatpush1.bf16.msra.mxu0 %v6926
    %7837 = vmatprep.subr.bf16.mxu0 %v6935
    %7838 = vmatpush1.bf16.msra.mxu0 %v6934
    %7839 = vmatprep.subr.bf16.mxu0 %v6943
    %7840 = vmatpush1.bf16.msra.mxu0 %v6942
    %7841 = vmatprep.subr.bf16.mxu0 %v6951
    %7842 = vmatpush1.bf16.msra.mxu0 %v6950
    %7843 = vmatprep.subr.bf16.mxu0 %v6959
    %7844 = vmatpush1.bf16.msra.mxu0 %v6958
    %7845 = vmatprep.subr.bf16.mxu0 %v6967
    %7846 = vmatpush1.bf16.msra.mxu0 %v6966
    %7847 = vmatprep.subr.bf16.mxu0 %v6975
    %7848 = vmatpush1.bf16.msra.mxu0 %v6974
    %7849 = vmatprep.subr.bf16.mxu0 %v6983
    %7850 = vmatpush1.bf16.msra.mxu0 %v6982
    %7851 = vmatprep.subr.bf16.mxu0 %v6991
    %7852 = vmatpush1.bf16.msra.mxu0 %v6990
    %7853 = vmatprep.subr.bf16.mxu0 %v6999
    %7854 = vmatpush1.bf16.msra.mxu0 %v6998
    %7855 = vmatprep.subr.bf16.mxu0 %v7007
    %7856 = vmatpush1.bf16.msra.mxu0 %v7006
    %7857 = vmatprep.mubr.bf16.mxu0 %v4663
    %7858 = vmatmul.mubr.bf16.gmra.mrb[0].mxu0 %v4662
    %v7859 = vpop.f32.mrb[0].mxu0
    %v7860 = vadd.f32 %v7817, %v7859
    %v7861 = vpop.f32.mrb[0].mxu0
    %v7862 = vadd.f32 %v7819, %v7861
    %v7863 = vpop.f32.mrb[0].mxu0
    %v7864 = vadd.f32 %v7821, %v7863
    %v7865 = vpop.f32.mrb[0].mxu0
    %v7866 = vadd.f32 %v7823, %v7865
    %7867 = vdwg.mxu0
    %7868 = vmatprep.subr.bf16.mxu0 %v7015
    %7869 = vmatpush1.bf16.msra.mxu0 %v7014
    %7870 = vmatprep.subr.bf16.mxu0 %v7023
    %7871 = vmatpush1.bf16.msra.mxu0 %v7022
    %7872 = vmatprep.subr.bf16.mxu0 %v7031
    %7873 = vmatpush1.bf16.msra.mxu0 %v7030
    %7874 = vmatprep.subr.bf16.mxu0 %v7039
    %7875 = vmatpush1.bf16.msra.mxu0 %v7038
    %7876 = vmatprep.subr.bf16.mxu0 %v7047
    %7877 = vmatpush1.bf16.msra.mxu0 %v7046
    %7878 = vmatprep.subr.bf16.mxu0 %v7055
    %7879 = vmatpush1.bf16.msra.mxu0 %v7054
    %7880 = vmatprep.subr.bf16.mxu0 %v7063
    %7881 = vmatpush1.bf16.msra.mxu0 %v7062
    %7882 = vmatprep.subr.bf16.mxu0 %v7071
    %7883 = vmatpush1.bf16.msra.mxu0 %v7070
    %7884 = vmatprep.subr.bf16.mxu0 %v7079
    %7885 = vmatpush1.bf16.msra.mxu0 %v7078
    %7886 = vmatprep.subr.bf16.mxu0 %v7087
    %7887 = vmatpush1.bf16.msra.mxu0 %v7086
    %7888 = vmatprep.subr.bf16.mxu0 %v7095
    %7889 = vmatpush1.bf16.msra.mxu0 %v7094
    %7890 = vmatprep.subr.bf16.mxu0 %v7103
    %7891 = vmatpush1.bf16.msra.mxu0 %v7102
    %7892 = vmatprep.subr.bf16.mxu0 %v7111
    %7893 = vmatpush1.bf16.msra.mxu0 %v7110
    %7894 = vmatprep.subr.bf16.mxu0 %v7119
    %7895 = vmatpush1.bf16.msra.mxu0 %v7118
    %7896 = vmatprep.subr.bf16.mxu0 %v7127
    %7897 = vmatpush1.bf16.msra.mxu0 %v7126
    %7898 = vmatprep.subr.bf16.mxu0 %v7135
    %7899 = vmatpush1.bf16.msra.mxu0 %v7134
    %7900 = vmatprep.mubr.bf16.mxu0 %v4665
    %7901 = vmatmul.mubr.bf16.gmra.mrb[0].mxu0 %v4664
    %v7902 = vpop.f32.mrb[0].mxu0
    %v7903 = vadd.f32 %v7860, %v7902
    %v7904 = vpop.f32.mrb[0].mxu0
    %v7905 = vadd.f32 %v7862, %v7904
    %v7906 = vpop.f32.mrb[0].mxu0
    %v7907 = vadd.f32 %v7864, %v7906
    %v7908 = vpop.f32.mrb[0].mxu0
    %v7909 = vadd.f32 %v7866, %v7908
    %7910 = vdwg.mxu0
    %7911 = vmatprep.subr.bf16.mxu0 %v7143
    %7912 = vmatpush1.bf16.msra.mxu0 %v7142
    %7913 = vmatprep.subr.bf16.mxu0 %v7151
    %7914 = vmatpush1.bf16.msra.mxu0 %v7150
    %7915 = vmatprep.subr.bf16.mxu0 %v7159
    %7916 = vmatpush1.bf16.msra.mxu0 %v7158
    %7917 = vmatprep.subr.bf16.mxu0 %v7167
    %7918 = vmatpush1.bf16.msra.mxu0 %v7166
    %7919 = vmatprep.subr.bf16.mxu0 %v7175
    %7920 = vmatpush1.bf16.msra.mxu0 %v7174
    %7921 = vmatprep.subr.bf16.mxu0 %v7183
    %7922 = vmatpush1.bf16.msra.mxu0 %v7182
    %7923 = vmatprep.subr.bf16.mxu0 %v7191
    %7924 = vmatpush1.bf16.msra.mxu0 %v7190
    %7925 = vmatprep.subr.bf16.mxu0 %v7199
    %7926 = vmatpush1.bf16.msra.mxu0 %v7198
    %7927 = vmatprep.subr.bf16.mxu0 %v7207
    %7928 = vmatpush1.bf16.msra.mxu0 %v7206
    %7929 = vmatprep.subr.bf16.mxu0 %v7215
    %7930 = vmatpush1.bf16.msra.mxu0 %v7214
    %7931 = vmatprep.subr.bf16.mxu0 %v7223
    %7932 = vmatpush1.bf16.msra.mxu0 %v7222
    %7933 = vmatprep.subr.bf16.mxu0 %v7231
    %7934 = vmatpush1.bf16.msra.mxu0 %v7230
    %7935 = vmatprep.subr.bf16.mxu0 %v7239
    %7936 = vmatpush1.bf16.msra.mxu0 %v7238
    %7937 = vmatprep.subr.bf16.mxu0 %v7247
    %7938 = vmatpush1.bf16.msra.mxu0 %v7246
    %7939 = vmatprep.subr.bf16.mxu0 %v7255
    %7940 = vmatpush1.bf16.msra.mxu0 %v7254
    %7941 = vmatprep.subr.bf16.mxu0 %v7263
    %7942 = vmatpush1.bf16.msra.mxu0 %v7262
    %7943 = vmatprep.mubr.bf16.mxu0 %v4667
    %7944 = vmatmul.mubr.bf16.gmra.mrb[0].mxu0 %v4666
    %v7945 = vpop.f32.mrb[0].mxu0
    %v7946 = vadd.f32 %v7903, %v7945
    %v7947 = vpop.f32.mrb[0].mxu0
    %v7948 = vadd.f32 %v7905, %v7947
    %v7949 = vpop.f32.mrb[0].mxu0
    %v7950 = vadd.f32 %v7907, %v7949
    %v7951 = vpop.f32.mrb[0].mxu0
    %v7952 = vadd.f32 %v7909, %v7951
    %7953 = vdwg.mxu0
    %7954 = vmatprep.subr.bf16.mxu0 %v6761
    %7955 = vmatpush1.bf16.msra.mxu0 %v6760
    %7956 = vmatprep.subr.bf16.mxu0 %v6769
    %7957 = vmatpush1.bf16.msra.mxu0 %v6768
    %7958 = vmatprep.subr.bf16.mxu0 %v6777
    %7959 = vmatpush1.bf16.msra.mxu0 %v6776
    %7960 = vmatprep.subr.bf16.mxu0 %v6785
    %7961 = vmatpush1.bf16.msra.mxu0 %v6784
    %7962 = vmatprep.subr.bf16.mxu0 %v6793
    %7963 = vmatpush1.bf16.msra.mxu0 %v6792
    %7964 = vmatprep.subr.bf16.mxu0 %v6801
    %7965 = vmatpush1.bf16.msra.mxu0 %v6800
    %7966 = vmatprep.subr.bf16.mxu0 %v6809
    %7967 = vmatpush1.bf16.msra.mxu0 %v6808
    %7968 = vmatprep.subr.bf16.mxu0 %v6817
    %7969 = vmatpush1.bf16.msra.mxu0 %v6816
    %7970 = vmatprep.subr.bf16.mxu0 %v6825
    %7971 = vmatpush1.bf16.msra.mxu0 %v6824
    %7972 = vmatprep.subr.bf16.mxu0 %v6833
    %7973 = vmatpush1.bf16.msra.mxu0 %v6832
    %7974 = vmatprep.subr.bf16.mxu0 %v6841
    %7975 = vmatpush1.bf16.msra.mxu0 %v6840
    %7976 = vmatprep.subr.bf16.mxu0 %v6849
    %7977 = vmatpush1.bf16.msra.mxu0 %v6848
    %7978 = vmatprep.subr.bf16.mxu0 %v6857
    %7979 = vmatpush1.bf16.msra.mxu0 %v6856
    %7980 = vmatprep.subr.bf16.mxu0 %v6865
    %7981 = vmatpush1.bf16.msra.mxu0 %v6864
    %7982 = vmatprep.subr.bf16.mxu0 %v6873
    %7983 = vmatpush1.bf16.msra.mxu0 %v6872
    %7984 = vmatprep.subr.bf16.mxu0 %v6881
    %7985 = vmatpush1.bf16.msra.mxu0 %v6880
    %7986 = vmatprep.mubr.bf16.mxu0 %v4661
    %7987 = vmatmul.mubr.bf16.gmra.mrb[0].mxu0 %v4660
    %v7988 = vpop.f32.mrb[0].mxu0
    %v7989 = vadd.f32 %v5193, %v7988
    %v7990 = vpop.f32.mrb[0].mxu0
    %v7991 = vadd.f32 %v5197, %v7990
    %v7992 = vpop.f32.mrb[0].mxu0
    %v7993 = vadd.f32 %v5193, %v7992
    %v7994 = vpop.f32.mrb[0].mxu0
    %v7995 = vadd.f32 %v5197, %v7994
    %7996 = vdwg.mxu0
    %7997 = vmatprep.subr.bf16.mxu0 %v6889
    %7998 = vmatpush1.bf16.msra.mxu0 %v6888
    %7999 = vmatprep.subr.bf16.mxu0 %v6897
    %8000 = vmatpush1.bf16.msra.mxu0 %v6896
    %8001 = vmatprep.subr.bf16.mxu0 %v6905
    %8002 = vmatpush1.bf16.msra.mxu0 %v6904
    %8003 = vmatprep.subr.bf16.mxu0 %v6913
    %8004 = vmatpush1.bf16.msra.mxu0 %v6912
    %8005 = vmatprep.subr.bf16.mxu0 %v6921
    %8006 = vmatpush1.bf16.msra.mxu0 %v6920
    %8007 = vmatprep.subr.bf16.mxu0 %v6929
    %8008 = vmatpush1.bf16.msra.mxu0 %v6928
    %8009 = vmatprep.subr.bf16.mxu0 %v6937
    %8010 = vmatpush1.bf16.msra.mxu0 %v6936
    %8011 = vmatprep.subr.bf16.mxu0 %v6945
    %8012 = vmatpush1.bf16.msra.mxu0 %v6944
    %8013 = vmatprep.subr.bf16.mxu0 %v6953
    %8014 = vmatpush1.bf16.msra.mxu0 %v6952
    %8015 = vmatprep.subr.bf16.mxu0 %v6961
    %8016 = vmatpush1.bf16.msra.mxu0 %v6960
    %8017 = vmatprep.subr.bf16.mxu0 %v6969
    %8018 = vmatpush1.bf16.msra.mxu0 %v6968
    %8019 = vmatprep.subr.bf16.mxu0 %v6977
    %8020 = vmatpush1.bf16.msra.mxu0 %v6976
    %8021 = vmatprep.subr.bf16.mxu0 %v6985
    %8022 = vmatpush1.bf16.msra.mxu0 %v6984
    %8023 = vmatprep.subr.bf16.mxu0 %v6993
    %8024 = vmatpush1.bf16.msra.mxu0 %v6992
    %8025 = vmatprep.subr.bf16.mxu0 %v7001
    %8026 = vmatpush1.bf16.msra.mxu0 %v7000
    %8027 = vmatprep.subr.bf16.mxu0 %v7009
    %8028 = vmatpush1.bf16.msra.mxu0 %v7008
    %8029 = vmatprep.mubr.bf16.mxu0 %v4663
    %8030 = vmatmul.mubr.bf16.gmra.mrb[0].mxu0 %v4662
    %v8031 = vpop.f32.mrb[0].mxu0
    %v8032 = vadd.f32 %v7989, %v8031
    %v8033 = vpop.f32.mrb[0].mxu0
    %v8034 = vadd.f32 %v7991, %v8033
    %v8035 = vpop.f32.mrb[0].mxu0
    %v8036 = vadd.f32 %v7993, %v8035
    %v8037 = vpop.f32.mrb[0].mxu0
    %v8038 = vadd.f32 %v7995, %v8037
    %8039 = vdwg.mxu0
    %8040 = vmatprep.subr.bf16.mxu0 %v7017
    %8041 = vmatpush1.bf16.msra.mxu0 %v7016
    %8042 = vmatprep.subr.bf16.mxu0 %v7025
    %8043 = vmatpush1.bf16.msra.mxu0 %v7024
    %8044 = vmatprep.subr.bf16.mxu0 %v7033
    %8045 = vmatpush1.bf16.msra.mxu0 %v7032
    %8046 = vmatprep.subr.bf16.mxu0 %v7041
    %8047 = vmatpush1.bf16.msra.mxu0 %v7040
    %8048 = vmatprep.subr.bf16.mxu0 %v7049
    %8049 = vmatpush1.bf16.msra.mxu0 %v7048
    %8050 = vmatprep.subr.bf16.mxu0 %v7057
    %8051 = vmatpush1.bf16.msra.mxu0 %v7056
    %8052 = vmatprep.subr.bf16.mxu0 %v7065
    %8053 = vmatpush1.bf16.msra.mxu0 %v7064
    %8054 = vmatprep.subr.bf16.mxu0 %v7073
    %8055 = vmatpush1.bf16.msra.mxu0 %v7072
    %8056 = vmatprep.subr.bf16.mxu0 %v7081
    %8057 = vmatpush1.bf16.msra.mxu0 %v7080
    %8058 = vmatprep.subr.bf16.mxu0 %v7089
    %8059 = vmatpush1.bf16.msra.mxu0 %v7088
    %8060 = vmatprep.subr.bf16.mxu0 %v7097
    %8061 = vmatpush1.bf16.msra.mxu0 %v7096
    %8062 = vmatprep.subr.bf16.mxu0 %v7105
    %8063 = vmatpush1.bf16.msra.mxu0 %v7104
    %8064 = vmatprep.subr.bf16.mxu0 %v7113
    %8065 = vmatpush1.bf16.msra.mxu0 %v7112
    %8066 = vmatprep.subr.bf16.mxu0 %v7121
    %8067 = vmatpush1.bf16.msra.mxu0 %v7120
    %8068 = vmatprep.subr.bf16.mxu0 %v7129
    %8069 = vmatpush1.bf16.msra.mxu0 %v7128
    %8070 = vmatprep.subr.bf16.mxu0 %v7137
    %8071 = vmatpush1.bf16.msra.mxu0 %v7136
    %8072 = vmatprep.mubr.bf16.mxu0 %v4665
    %8073 = vmatmul.mubr.bf16.gmra.mrb[0].mxu0 %v4664
    %v8074 = vpop.f32.mrb[0].mxu0
    %v8075 = vadd.f32 %v8032, %v8074
    %v8076 = vpop.f32.mrb[0].mxu0
    %v8077 = vadd.f32 %v8034, %v8076
    %v8078 = vpop.f32.mrb[0].mxu0
    %v8079 = vadd.f32 %v8036, %v8078
    %v8080 = vpop.f32.mrb[0].mxu0
    %v8081 = vadd.f32 %v8038, %v8080
    %8082 = vdwg.mxu0
    %8083 = vmatprep.subr.bf16.mxu0 %v7145
    %8084 = vmatpush1.bf16.msra.mxu0 %v7144
    %8085 = vmatprep.subr.bf16.mxu0 %v7153
    %8086 = vmatpush1.bf16.msra.mxu0 %v7152
    %8087 = vmatprep.subr.bf16.mxu0 %v7161
    %8088 = vmatpush1.bf16.msra.mxu0 %v7160
    %8089 = vmatprep.subr.bf16.mxu0 %v7169
    %8090 = vmatpush1.bf16.msra.mxu0 %v7168
    %8091 = vmatprep.subr.bf16.mxu0 %v7177
    %8092 = vmatpush1.bf16.msra.mxu0 %v7176
    %8093 = vmatprep.subr.bf16.mxu0 %v7185
    %8094 = vmatpush1.bf16.msra.mxu0 %v7184
    %8095 = vmatprep.subr.bf16.mxu0 %v7193
    %8096 = vmatpush1.bf16.msra.mxu0 %v7192
    %8097 = vmatprep.subr.bf16.mxu0 %v7201
    %8098 = vmatpush1.bf16.msra.mxu0 %v7200
    %8099 = vmatprep.subr.bf16.mxu0 %v7209
    %8100 = vmatpush1.bf16.msra.mxu0 %v7208
    %8101 = vmatprep.subr.bf16.mxu0 %v7217
    %8102 = vmatpush1.bf16.msra.mxu0 %v7216
    %8103 = vmatprep.subr.bf16.mxu0 %v7225
    %8104 = vmatpush1.bf16.msra.mxu0 %v7224
    %8105 = vmatprep.subr.bf16.mxu0 %v7233
    %8106 = vmatpush1.bf16.msra.mxu0 %v7232
    %8107 = vmatprep.subr.bf16.mxu0 %v7241
    %8108 = vmatpush1.bf16.msra.mxu0 %v7240
    %8109 = vmatprep.subr.bf16.mxu0 %v7249
    %8110 = vmatpush1.bf16.msra.mxu0 %v7248
    %8111 = vmatprep.subr.bf16.mxu0 %v7257
    %8112 = vmatpush1.bf16.msra.mxu0 %v7256
    %8113 = vmatprep.subr.bf16.mxu0 %v7265
    %8114 = vmatpush1.bf16.msra.mxu0 %v7264
    %8115 = vmatprep.mubr.bf16.mxu0 %v4667
    %8116 = vmatmul.mubr.bf16.gmra.mrb[0].mxu0 %v4666
    %v8117 = vpop.f32.mrb[0].mxu0
    %v8118 = vadd.f32 %v8075, %v8117
    %v8119 = vpop.f32.mrb[0].mxu0
    %v8120 = vadd.f32 %v8077, %v8119
    %v8121 = vpop.f32.mrb[0].mxu0
    %v8122 = vadd.f32 %v8079, %v8121
    %v8123 = vpop.f32.mrb[0].mxu0
    %v8124 = vadd.f32 %v8081, %v8123
    %8125 = vdwg.mxu0
    %8126 = vmatprep.subr.bf16.mxu0 %v6763
    %8127 = vmatpush1.bf16.msra.mxu0 %v6762
    %8128 = vmatprep.subr.bf16.mxu0 %v6771
    %8129 = vmatpush1.bf16.msra.mxu0 %v6770
    %8130 = vmatprep.subr.bf16.mxu0 %v6779
    %8131 = vmatpush1.bf16.msra.mxu0 %v6778
    %8132 = vmatprep.subr.bf16.mxu0 %v6787
    %8133 = vmatpush1.bf16.msra.mxu0 %v6786
    %8134 = vmatprep.subr.bf16.mxu0 %v6795
    %8135 = vmatpush1.bf16.msra.mxu0 %v6794
    %8136 = vmatprep.subr.bf16.mxu0 %v6803
    %8137 = vmatpush1.bf16.msra.mxu0 %v6802
    %8138 = vmatprep.subr.bf16.mxu0 %v6811
    %8139 = vmatpush1.bf16.msra.mxu0 %v6810
    %8140 = vmatprep.subr.bf16.mxu0 %v6819
    %8141 = vmatpush1.bf16.msra.mxu0 %v6818
    %8142 = vmatprep.subr.bf16.mxu0 %v6827
    %8143 = vmatpush1.bf16.msra.mxu0 %v6826
    %8144 = vmatprep.subr.bf16.mxu0 %v6835
    %8145 = vmatpush1.bf16.msra.mxu0 %v6834
    %8146 = vmatprep.subr.bf16.mxu0 %v6843
    %8147 = vmatpush1.bf16.msra.mxu0 %v6842
    %8148 = vmatprep.subr.bf16.mxu0 %v6851
    %8149 = vmatpush1.bf16.msra.mxu0 %v6850
    %8150 = vmatprep.subr.bf16.mxu0 %v6859
    %8151 = vmatpush1.bf16.msra.mxu0 %v6858
    %8152 = vmatprep.subr.bf16.mxu0 %v6867
    %8153 = vmatpush1.bf16.msra.mxu0 %v6866
    %8154 = vmatprep.subr.bf16.mxu0 %v6875
    %8155 = vmatpush1.bf16.msra.mxu0 %v6874
    %8156 = vmatprep.subr.bf16.mxu0 %v6883
    %8157 = vmatpush1.bf16.msra.mxu0 %v6882
    %8158 = vmatprep.mubr.bf16.mxu0 %v4661
    %8159 = vmatmul.mubr.bf16.gmra.mrb[0].mxu0 %v4660
    %v8160 = vpop.f32.mrb[0].mxu0
    %v8161 = vadd.f32 %v5201, %v8160
    %v8162 = vpop.f32.mrb[0].mxu0
    %v8163 = vadd.f32 %v5205, %v8162
    %v8164 = vpop.f32.mrb[0].mxu0
    %v8165 = vadd.f32 %v5201, %v8164
    %v8166 = vpop.f32.mrb[0].mxu0
    %v8167 = vadd.f32 %v5205, %v8166
    %8168 = vdwg.mxu0
    %8169 = vmatprep.subr.bf16.mxu0 %v6891
    %8170 = vmatpush1.bf16.msra.mxu0 %v6890
    %8171 = vmatprep.subr.bf16.mxu0 %v6899
    %8172 = vmatpush1.bf16.msra.mxu0 %v6898
    %8173 = vmatprep.subr.bf16.mxu0 %v6907
    %8174 = vmatpush1.bf16.msra.mxu0 %v6906
    %8175 = vmatprep.subr.bf16.mxu0 %v6915
    %8176 = vmatpush1.bf16.msra.mxu0 %v6914
    %8177 = vmatprep.subr.bf16.mxu0 %v6923
    %8178 = vmatpush1.bf16.msra.mxu0 %v6922
    %8179 = vmatprep.subr.bf16.mxu0 %v6931
    %8180 = vmatpush1.bf16.msra.mxu0 %v6930
    %8181 = vmatprep.subr.bf16.mxu0 %v6939
    %8182 = vmatpush1.bf16.msra.mxu0 %v6938
    %8183 = vmatprep.subr.bf16.mxu0 %v6947
    %8184 = vmatpush1.bf16.msra.mxu0 %v6946
    %8185 = vmatprep.subr.bf16.mxu0 %v6955
    %8186 = vmatpush1.bf16.msra.mxu0 %v6954
    %8187 = vmatprep.subr.bf16.mxu0 %v6963
    %8188 = vmatpush1.bf16.msra.mxu0 %v6962
    %8189 = vmatprep.subr.bf16.mxu0 %v6971
    %8190 = vmatpush1.bf16.msra.mxu0 %v6970
    %8191 = vmatprep.subr.bf16.mxu0 %v6979
    %8192 = vmatpush1.bf16.msra.mxu0 %v6978
    %8193 = vmatprep.subr.bf16.mxu0 %v6987
    %8194 = vmatpush1.bf16.msra.mxu0 %v6986
    %8195 = vmatprep.subr.bf16.mxu0 %v6995
    %8196 = vmatpush1.bf16.msra.mxu0 %v6994
    %8197 = vmatprep.subr.bf16.mxu0 %v7003
    %8198 = vmatpush1.bf16.msra.mxu0 %v7002
    %8199 = vmatprep.subr.bf16.mxu0 %v7011
    %8200 = vmatpush1.bf16.msra.mxu0 %v7010
    %8201 = vmatprep.mubr.bf16.mxu0 %v4663
    %8202 = vmatmul.mubr.bf16.gmra.mrb[0].mxu0 %v4662
    %v8203 = vpop.f32.mrb[0].mxu0
    %v8204 = vadd.f32 %v8161, %v8203
    %v8205 = vpop.f32.mrb[0].mxu0
    %v8206 = vadd.f32 %v8163, %v8205
    %v8207 = vpop.f32.mrb[0].mxu0
    %v8208 = vadd.f32 %v8165, %v8207
    %v8209 = vpop.f32.mrb[0].mxu0
    %v8210 = vadd.f32 %v8167, %v8209
    %8211 = vdwg.mxu0
    %8212 = vmatprep.subr.bf16.mxu0 %v7019
    %8213 = vmatpush1.bf16.msra.mxu0 %v7018
    %8214 = vmatprep.subr.bf16.mxu0 %v7027
    %8215 = vmatpush1.bf16.msra.mxu0 %v7026
    %8216 = vmatprep.subr.bf16.mxu0 %v7035
    %8217 = vmatpush1.bf16.msra.mxu0 %v7034
    %8218 = vmatprep.subr.bf16.mxu0 %v7043
    %8219 = vmatpush1.bf16.msra.mxu0 %v7042
    %8220 = vmatprep.subr.bf16.mxu0 %v7051
    %8221 = vmatpush1.bf16.msra.mxu0 %v7050
    %8222 = vmatprep.subr.bf16.mxu0 %v7059
    %8223 = vmatpush1.bf16.msra.mxu0 %v7058
    %8224 = vmatprep.subr.bf16.mxu0 %v7067
    %8225 = vmatpush1.bf16.msra.mxu0 %v7066
    %8226 = vmatprep.subr.bf16.mxu0 %v7075
    %8227 = vmatpush1.bf16.msra.mxu0 %v7074
    %8228 = vmatprep.subr.bf16.mxu0 %v7083
    %8229 = vmatpush1.bf16.msra.mxu0 %v7082
    %8230 = vmatprep.subr.bf16.mxu0 %v7091
    %8231 = vmatpush1.bf16.msra.mxu0 %v7090
    %8232 = vmatprep.subr.bf16.mxu0 %v7099
    %8233 = vmatpush1.bf16.msra.mxu0 %v7098
    %8234 = vmatprep.subr.bf16.mxu0 %v7107
    %8235 = vmatpush1.bf16.msra.mxu0 %v7106
    %8236 = vmatprep.subr.bf16.mxu0 %v7115
    %8237 = vmatpush1.bf16.msra.mxu0 %v7114
    %8238 = vmatprep.subr.bf16.mxu0 %v7123
    %8239 = vmatpush1.bf16.msra.mxu0 %v7122
    %8240 = vmatprep.subr.bf16.mxu0 %v7131
    %8241 = vmatpush1.bf16.msra.mxu0 %v7130
    %8242 = vmatprep.subr.bf16.mxu0 %v7139
    %8243 = vmatpush1.bf16.msra.mxu0 %v7138
    %8244 = vmatprep.mubr.bf16.mxu0 %v4665
    %8245 = vmatmul.mubr.bf16.gmra.mrb[0].mxu0 %v4664
    %v8246 = vpop.f32.mrb[0].mxu0
    %v8247 = vadd.f32 %v8204, %v8246
    %v8248 = vpop.f32.mrb[0].mxu0
    %v8249 = vadd.f32 %v8206, %v8248
    %v8250 = vpop.f32.mrb[0].mxu0
    %v8251 = vadd.f32 %v8208, %v8250
    %v8252 = vpop.f32.mrb[0].mxu0
    %v8253 = vadd.f32 %v8210, %v8252
    %8254 = vdwg.mxu0
    %8255 = vmatprep.subr.bf16.mxu0 %v7147
    %8256 = vmatpush1.bf16.msra.mxu0 %v7146
    %8257 = vmatprep.subr.bf16.mxu0 %v7155
    %8258 = vmatpush1.bf16.msra.mxu0 %v7154
    %8259 = vmatprep.subr.bf16.mxu0 %v7163
    %8260 = vmatpush1.bf16.msra.mxu0 %v7162
    %8261 = vmatprep.subr.bf16.mxu0 %v7171
    %8262 = vmatpush1.bf16.msra.mxu0 %v7170
    %8263 = vmatprep.subr.bf16.mxu0 %v7179
    %8264 = vmatpush1.bf16.msra.mxu0 %v7178
    %8265 = vmatprep.subr.bf16.mxu0 %v7187
    %8266 = vmatpush1.bf16.msra.mxu0 %v7186
    %8267 = vmatprep.subr.bf16.mxu0 %v7195
    %8268 = vmatpush1.bf16.msra.mxu0 %v7194
    %8269 = vmatprep.subr.bf16.mxu0 %v7203
    %8270 = vmatpush1.bf16.msra.mxu0 %v7202
    %8271 = vmatprep.subr.bf16.mxu0 %v7211
    %8272 = vmatpush1.bf16.msra.mxu0 %v7210
    %8273 = vmatprep.subr.bf16.mxu0 %v7219
    %8274 = vmatpush1.bf16.msra.mxu0 %v7218
    %8275 = vmatprep.subr.bf16.mxu0 %v7227
    %8276 = vmatpush1.bf16.msra.mxu0 %v7226
    %8277 = vmatprep.subr.bf16.mxu0 %v7235
    %8278 = vmatpush1.bf16.msra.mxu0 %v7234
    %8279 = vmatprep.subr.bf16.mxu0 %v7243
    %8280 = vmatpush1.bf16.msra.mxu0 %v7242
    %8281 = vmatprep.subr.bf16.mxu0 %v7251
    %8282 = vmatpush1.bf16.msra.mxu0 %v7250
    %8283 = vmatprep.subr.bf16.mxu0 %v7259
    %8284 = vmatpush1.bf16.msra.mxu0 %v7258
    %8285 = vmatprep.subr.bf16.mxu0 %v7267
    %8286 = vmatpush1.bf16.msra.mxu0 %v7266
    %8287 = vmatprep.mubr.bf16.mxu0 %v4667
    %8288 = vmatmul.mubr.bf16.gmra.mrb[0].mxu0 %v4666
    %v8289 = vpop.f32.mrb[0].mxu0
    %v8290 = vadd.f32 %v8247, %v8289
    %v8291 = vpop.f32.mrb[0].mxu0
    %v8292 = vadd.f32 %v8249, %v8291
    %v8293 = vpop.f32.mrb[0].mxu0
    %v8294 = vadd.f32 %v8251, %v8293
    %v8295 = vpop.f32.mrb[0].mxu0
    %v8296 = vadd.f32 %v8253, %v8295
    %8297 = vdwg.mxu0
    %8298 = vmatprep.subr.bf16.mxu0 %v6765
    %8299 = vmatpush1.bf16.msra.mxu0 %v6764
    %8300 = vmatprep.subr.bf16.mxu0 %v6773
    %8301 = vmatpush1.bf16.msra.mxu0 %v6772
    %8302 = vmatprep.subr.bf16.mxu0 %v6781
    %8303 = vmatpush1.bf16.msra.mxu0 %v6780
    %8304 = vmatprep.subr.bf16.mxu0 %v6789
    %8305 = vmatpush1.bf16.msra.mxu0 %v6788
    %8306 = vmatprep.subr.bf16.mxu0 %v6797
    %8307 = vmatpush1.bf16.msra.mxu0 %v6796
    %8308 = vmatprep.subr.bf16.mxu0 %v6805
    %8309 = vmatpush1.bf16.msra.mxu0 %v6804
    %8310 = vmatprep.subr.bf16.mxu0 %v6813
    %8311 = vmatpush1.bf16.msra.mxu0 %v6812
    %8312 = vmatprep.subr.bf16.mxu0 %v6821
    %8313 = vmatpush1.bf16.msra.mxu0 %v6820
    %8314 = vmatprep.subr.bf16.mxu0 %v6829
    %8315 = vmatpush1.bf16.msra.mxu0 %v6828
    %8316 = vmatprep.subr.bf16.mxu0 %v6837
    %8317 = vmatpush1.bf16.msra.mxu0 %v6836
    %8318 = vmatprep.subr.bf16.mxu0 %v6845
    %8319 = vmatpush1.bf16.msra.mxu0 %v6844
    %8320 = vmatprep.subr.bf16.mxu0 %v6853
    %8321 = vmatpush1.bf16.msra.mxu0 %v6852
    %8322 = vmatprep.subr.bf16.mxu0 %v6861
    %8323 = vmatpush1.bf16.msra.mxu0 %v6860
    %8324 = vmatprep.subr.bf16.mxu0 %v6869
    %8325 = vmatpush1.bf16.msra.mxu0 %v6868
    %8326 = vmatprep.subr.bf16.mxu0 %v6877
    %8327 = vmatpush1.bf16.msra.mxu0 %v6876
    %8328 = vmatprep.subr.bf16.mxu0 %v6885
    %8329 = vmatpush1.bf16.msra.mxu0 %v6884
    %8330 = vmatprep.mubr.bf16.mxu0 %v4661
    %8331 = vmatmul.mubr.bf16.gmra.mrb[0].mxu0 %v4660
    %v8332 = vpop.f32.mrb[0].mxu0
    %v8333 = vadd.f32 %v5209, %v8332
    %v8334 = vpop.f32.mrb[0].mxu0
    %v8335 = vadd.f32 %v5213, %v8334
    %v8336 = vpop.f32.mrb[0].mxu0
    %v8337 = vadd.f32 %v5209, %v8336
    %v8338 = vpop.f32.mrb[0].mxu0
    %v8339 = vadd.f32 %v5213, %v8338
    %8340 = vdwg.mxu0
    %8341 = vmatprep.subr.bf16.mxu0 %v6893
    %8342 = vmatpush1.bf16.msra.mxu0 %v6892
    %8343 = vmatprep.subr.bf16.mxu0 %v6901
    %8344 = vmatpush1.bf16.msra.mxu0 %v6900
    %8345 = vmatprep.subr.bf16.mxu0 %v6909
    %8346 = vmatpush1.bf16.msra.mxu0 %v6908
    %8347 = vmatprep.subr.bf16.mxu0 %v6917
    %8348 = vmatpush1.bf16.msra.mxu0 %v6916
    %8349 = vmatprep.subr.bf16.mxu0 %v6925
    %8350 = vmatpush1.bf16.msra.mxu0 %v6924
    %8351 = vmatprep.subr.bf16.mxu0 %v6933
    %8352 = vmatpush1.bf16.msra.mxu0 %v6932
    %8353 = vmatprep.subr.bf16.mxu0 %v6941
    %8354 = vmatpush1.bf16.msra.mxu0 %v6940
    %8355 = vmatprep.subr.bf16.mxu0 %v6949
    %8356 = vmatpush1.bf16.msra.mxu0 %v6948
    %8357 = vmatprep.subr.bf16.mxu0 %v6957
    %8358 = vmatpush1.bf16.msra.mxu0 %v6956
    %8359 = vmatprep.subr.bf16.mxu0 %v6965
    %8360 = vmatpush1.bf16.msra.mxu0 %v6964
    %8361 = vmatprep.subr.bf16.mxu0 %v6973
    %8362 = vmatpush1.bf16.msra.mxu0 %v6972
    %8363 = vmatprep.subr.bf16.mxu0 %v6981
    %8364 = vmatpush1.bf16.msra.mxu0 %v6980
    %8365 = vmatprep.subr.bf16.mxu0 %v6989
    %8366 = vmatpush1.bf16.msra.mxu0 %v6988
    %8367 = vmatprep.subr.bf16.mxu0 %v6997
    %8368 = vmatpush1.bf16.msra.mxu0 %v6996
    %8369 = vmatprep.subr.bf16.mxu0 %v7005
    %8370 = vmatpush1.bf16.msra.mxu0 %v7004
    %8371 = vmatprep.subr.bf16.mxu0 %v7013
    %8372 = vmatpush1.bf16.msra.mxu0 %v7012
    %8373 = vmatprep.mubr.bf16.mxu0 %v4663
    %8374 = vmatmul.mubr.bf16.gmra.mrb[0].mxu0 %v4662
    %v8375 = vpop.f32.mrb[0].mxu0
    %v8376 = vadd.f32 %v8333, %v8375
    %v8377 = vpop.f32.mrb[0].mxu0
    %v8378 = vadd.f32 %v8335, %v8377
    %v8379 = vpop.f32.mrb[0].mxu0
    %v8380 = vadd.f32 %v8337, %v8379
    %v8381 = vpop.f32.mrb[0].mxu0
    %v8382 = vadd.f32 %v8339, %v8381
    %8383 = vdwg.mxu0
    %8384 = vmatprep.subr.bf16.mxu0 %v7021
    %8385 = vmatpush1.bf16.msra.mxu0 %v7020
    %8386 = vmatprep.subr.bf16.mxu0 %v7029
    %8387 = vmatpush1.bf16.msra.mxu0 %v7028
    %8388 = vmatprep.subr.bf16.mxu0 %v7037
    %8389 = vmatpush1.bf16.msra.mxu0 %v7036
    %8390 = vmatprep.subr.bf16.mxu0 %v7045
    %8391 = vmatpush1.bf16.msra.mxu0 %v7044
    %8392 = vmatprep.subr.bf16.mxu0 %v7053
    %8393 = vmatpush1.bf16.msra.mxu0 %v7052
    %8394 = vmatprep.subr.bf16.mxu0 %v7061
    %8395 = vmatpush1.bf16.msra.mxu0 %v7060
    %8396 = vmatprep.subr.bf16.mxu0 %v7069
    %8397 = vmatpush1.bf16.msra.mxu0 %v7068
    %8398 = vmatprep.subr.bf16.mxu0 %v7077
    %8399 = vmatpush1.bf16.msra.mxu0 %v7076
    %8400 = vmatprep.subr.bf16.mxu0 %v7085
    %8401 = vmatpush1.bf16.msra.mxu0 %v7084
    %8402 = vmatprep.subr.bf16.mxu0 %v7093
    %8403 = vmatpush1.bf16.msra.mxu0 %v7092
    %8404 = vmatprep.subr.bf16.mxu0 %v7101
    %8405 = vmatpush1.bf16.msra.mxu0 %v7100
    %8406 = vmatprep.subr.bf16.mxu0 %v7109
    %8407 = vmatpush1.bf16.msra.mxu0 %v7108
    %8408 = vmatprep.subr.bf16.mxu0 %v7117
    %8409 = vmatpush1.bf16.msra.mxu0 %v7116
    %8410 = vmatprep.subr.bf16.mxu0 %v7125
    %8411 = vmatpush1.bf16.msra.mxu0 %v7124
    %8412 = vmatprep.subr.bf16.mxu0 %v7133
    %8413 = vmatpush1.bf16.msra.mxu0 %v7132
    %8414 = vmatprep.subr.bf16.mxu0 %v7141
    %8415 = vmatpush1.bf16.msra.mxu0 %v7140
    %8416 = vmatprep.mubr.bf16.mxu0 %v4665
    %8417 = vmatmul.mubr.bf16.gmra.mrb[0].mxu0 %v4664
    %v8418 = vpop.f32.mrb[0].mxu0
    %v8419 = vadd.f32 %v8376, %v8418
    %v8420 = vpop.f32.mrb[0].mxu0
    %v8421 = vadd.f32 %v8378, %v8420
    %v8422 = vpop.f32.mrb[0].mxu0
    %v8423 = vadd.f32 %v8380, %v8422
    %v8424 = vpop.f32.mrb[0].mxu0
    %v8425 = vadd.f32 %v8382, %v8424
    %8426 = vdwg.mxu0
    %8427 = vmatprep.subr.bf16.mxu0 %v7149
    %8428 = vmatpush1.bf16.msra.mxu0 %v7148
    %8429 = vmatprep.subr.bf16.mxu0 %v7157
    %8430 = vmatpush1.bf16.msra.mxu0 %v7156
    %8431 = vmatprep.subr.bf16.mxu0 %v7165
    %8432 = vmatpush1.bf16.msra.mxu0 %v7164
    %8433 = vmatprep.subr.bf16.mxu0 %v7173
    %8434 = vmatpush1.bf16.msra.mxu0 %v7172
    %8435 = vmatprep.subr.bf16.mxu0 %v7181
    %8436 = vmatpush1.bf16.msra.mxu0 %v7180
    %8437 = vmatprep.subr.bf16.mxu0 %v7189
    %8438 = vmatpush1.bf16.msra.mxu0 %v7188
    %8439 = vmatprep.subr.bf16.mxu0 %v7197
    %8440 = vmatpush1.bf16.msra.mxu0 %v7196
    %8441 = vmatprep.subr.bf16.mxu0 %v7205
    %8442 = vmatpush1.bf16.msra.mxu0 %v7204
    %8443 = vmatprep.subr.bf16.mxu0 %v7213
    %8444 = vmatpush1.bf16.msra.mxu0 %v7212
    %8445 = vmatprep.subr.bf16.mxu0 %v7221
    %8446 = vmatpush1.bf16.msra.mxu0 %v7220
    %8447 = vmatprep.subr.bf16.mxu0 %v7229
    %8448 = vmatpush1.bf16.msra.mxu0 %v7228
    %8449 = vmatprep.subr.bf16.mxu0 %v7237
    %8450 = vmatpush1.bf16.msra.mxu0 %v7236
    %8451 = vmatprep.subr.bf16.mxu0 %v7245
    %8452 = vmatpush1.bf16.msra.mxu0 %v7244
    %8453 = vmatprep.subr.bf16.mxu0 %v7253
    %8454 = vmatpush1.bf16.msra.mxu0 %v7252
    %8455 = vmatprep.subr.bf16.mxu0 %v7261
    %8456 = vmatpush1.bf16.msra.mxu0 %v7260
    %8457 = vmatprep.subr.bf16.mxu0 %v7269
    %8458 = vmatpush1.bf16.msra.mxu0 %v7268
    %8459 = vmatprep.mubr.bf16.mxu0 %v4667
    %8460 = vmatmul.mubr.bf16.gmra.mrb[0].mxu0 %v4666
    %v8461 = vpop.f32.mrb[0].mxu0
    %v8462 = vadd.f32 %v8419, %v8461
    %v8463 = vpop.f32.mrb[0].mxu0
    %v8464 = vadd.f32 %v8421, %v8463
    %v8465 = vpop.f32.mrb[0].mxu0
    %v8466 = vadd.f32 %v8423, %v8465
    %v8467 = vpop.f32.mrb[0].mxu0
    %v8468 = vadd.f32 %v8425, %v8467
    %8469 = vdwg.mxu0
    %vm8470 = vcmp.gt.f32.partialorder %v7946, 0.0
    %vm8471 = vcmp.gt.f32.partialorder %v7948, 0.0
    %vm8472 = vcmp.gt.f32.partialorder %v8118, 0.0
    %vm8473 = vcmp.gt.f32.partialorder %v8120, 0.0
    %vm8474 = vcmp.gt.f32.partialorder %v8290, 0.0
    %vm8475 = vcmp.gt.f32.partialorder %v8292, 0.0
    %vm8476 = vcmp.gt.f32.partialorder %v8462, 0.0
    %vm8477 = vcmp.gt.f32.partialorder %v8464, 0.0
    %vm8478 = vcmp.gt.f32.partialorder %v7950, 0.0
    %vm8479 = vcmp.gt.f32.partialorder %v7952, 0.0
    %vm8480 = vcmp.gt.f32.partialorder %v8122, 0.0
    %vm8481 = vcmp.gt.f32.partialorder %v8124, 0.0
    %vm8482 = vcmp.gt.f32.partialorder %v8294, 0.0
    %vm8483 = vcmp.gt.f32.partialorder %v8296, 0.0
    %vm8484 = vcmp.gt.f32.partialorder %v8466, 0.0
    %vm8485 = vcmp.gt.f32.partialorder %v8468, 0.0
    %v8486 = vmul.f32 %v7946, 0.01
    %v8487 = vmul.f32 %v7948, 0.01
    %v8488 = vmul.f32 %v8118, 0.01
    %v8489 = vmul.f32 %v8120, 0.01
    %v8490 = vmul.f32 %v8290, 0.01
    %v8491 = vmul.f32 %v8292, 0.01
    %v8492 = vmul.f32 %v8462, 0.01
    %v8493 = vmul.f32 %v8464, 0.01
    %v8494 = vmul.f32 %v7950, 0.01
    %v8495 = vmul.f32 %v7952, 0.01
    %v8496 = vmul.f32 %v8122, 0.01
    %v8497 = vmul.f32 %v8124, 0.01
    %v8498 = vmul.f32 %v8294, 0.01
    %v8499 = vmul.f32 %v8296, 0.01
    %v8500 = vmul.f32 %v8466, 0.01
    %v8501 = vmul.f32 %v8468, 0.01
    %v8502 = vsel %vm8470, %v7946, %v8486
    %v8503 = vsel %vm8471, %v7948, %v8487
    %v8504 = vsel %vm8472, %v8118, %v8488
    %v8505 = vsel %vm8473, %v8120, %v8489
    %v8506 = vsel %vm8474, %v8290, %v8490
    %v8507 = vsel %vm8475, %v8292, %v8491
    %v8508 = vsel %vm8476, %v8462, %v8492
    %v8509 = vsel %vm8477, %v8464, %v8493
    %v8510 = vsel %vm8478, %v7950, %v8494
    %v8511 = vsel %vm8479, %v7952, %v8495
    %v8512 = vsel %vm8480, %v8122, %v8496
    %v8513 = vsel %vm8481, %v8124, %v8497
    %v8514 = vsel %vm8482, %v8294, %v8498
    %v8515 = vsel %vm8483, %v8296, %v8499
    %v8516 = vsel %vm8484, %v8466, %v8500
    %v8517 = vsel %vm8485, %v8468, %v8501
    %v8518 = vpack.c.bf16 %v8510, %v8502
    %v8519 = vpack.c.bf16 %v8511, %v8503
    %v8520 = vpack.c.bf16 %v8512, %v8504
    %v8521 = vpack.c.bf16 %v8513, %v8505
    %v8522 = vpack.c.bf16 %v8514, %v8506
    %v8523 = vpack.c.bf16 %v8515, %v8507
    %v8524 = vpack.c.bf16 %v8516, %v8508
    %v8525 = vpack.c.bf16 %v8517, %v8509
    %v8526 = vld [vmem:[#allocation14] sm:$0xf]
    %v8527 = vld [vmem:[#allocation14 + $0x4] sm:$0xf]
    %v8528 = vld [vmem:[#allocation14 + $0x8] sm:$0xf]
    %v8529 = vld [vmem:[#allocation14 + $0xc] sm:$0xf]
    %v8530 = vld [vmem:[#allocation14 + $0x10] sm:$0xf]
    %v8531 = vld [vmem:[#allocation14 + $0x14] sm:$0xf]
    %v8532 = vld [vmem:[#allocation14 + $0x18] sm:$0xf]
    %v8533 = vld [vmem:[#allocation14 + $0x1c] sm:$0xf]
    %v8534 = vld [vmem:[#allocation14 + $0x20] sm:$0xf]
    %v8535 = vld [vmem:[#allocation14 + $0x24] sm:$0xf]
    %v8536 = vld [vmem:[#allocation14 + $0x28] sm:$0xf]
    %v8537 = vld [vmem:[#allocation14 + $0x2c] sm:$0xf]
    %v8538 = vld [vmem:[#allocation14 + $0x30] sm:$0xf]
    %v8539 = vld [vmem:[#allocation14 + $0x34] sm:$0xf]
    %v8540 = vld [vmem:[#allocation14 + $0x38] sm:$0xf]
    %v8541 = vld [vmem:[#allocation14 + $0x3c] sm:$0xf]
    %v8542 = vld [vmem:[#allocation14 + $0x40] sm:$0xf]
    %v8543 = vld [vmem:[#allocation14 + $0x44] sm:$0xf]
    %v8544 = vld [vmem:[#allocation14 + $0x48] sm:$0xf]
    %v8545 = vld [vmem:[#allocation14 + $0x4c] sm:$0xf]
    %v8546 = vld [vmem:[#allocation14 + $0x50] sm:$0xf]
    %v8547 = vld [vmem:[#allocation14 + $0x54] sm:$0xf]
    %v8548 = vld [vmem:[#allocation14 + $0x58] sm:$0xf]
    %v8549 = vld [vmem:[#allocation14 + $0x5c] sm:$0xf]
    %v8550 = vld [vmem:[#allocation14 + $0x60] sm:$0xf]
    %v8551 = vld [vmem:[#allocation14 + $0x64] sm:$0xf]
    %v8552 = vld [vmem:[#allocation14 + $0x68] sm:$0xf]
    %v8553 = vld [vmem:[#allocation14 + $0x6c] sm:$0xf]
    %v8554 = vld [vmem:[#allocation14 + $0x70] sm:$0xf]
    %v8555 = vld [vmem:[#allocation14 + $0x74] sm:$0xf]
    %v8556 = vld [vmem:[#allocation14 + $0x78] sm:$0xf]
    %v8557 = vld [vmem:[#allocation14 + $0x7c] sm:$0xf]
    %v8558 = vld [vmem:[#allocation14 + $0x80] sm:$0xf]
    %v8559 = vld [vmem:[#allocation14 + $0x84] sm:$0xf]
    %v8560 = vld [vmem:[#allocation14 + $0x88] sm:$0xf]
    %v8561 = vld [vmem:[#allocation14 + $0x8c] sm:$0xf]
    %v8562 = vld [vmem:[#allocation14 + $0x90] sm:$0xf]
    %v8563 = vld [vmem:[#allocation14 + $0x94] sm:$0xf]
    %v8564 = vld [vmem:[#allocation14 + $0x98] sm:$0xf]
    %v8565 = vld [vmem:[#allocation14 + $0x9c] sm:$0xf]
    %v8566 = vld [vmem:[#allocation14 + $0xa0] sm:$0xf]
    %v8567 = vld [vmem:[#allocation14 + $0xa4] sm:$0xf]
    %v8568 = vld [vmem:[#allocation14 + $0xa8] sm:$0xf]
    %v8569 = vld [vmem:[#allocation14 + $0xac] sm:$0xf]
    %v8570 = vld [vmem:[#allocation14 + $0xb0] sm:$0xf]
    %v8571 = vld [vmem:[#allocation14 + $0xb4] sm:$0xf]
    %v8572 = vld [vmem:[#allocation14 + $0xb8] sm:$0xf]
    %v8573 = vld [vmem:[#allocation14 + $0xbc] sm:$0xf]
    %v8574 = vld [vmem:[#allocation14 + $0xc0] sm:$0xf]
    %v8575 = vld [vmem:[#allocation14 + $0xc4] sm:$0xf]
    %v8576 = vld [vmem:[#allocation14 + $0xc8] sm:$0xf]
    %v8577 = vld [vmem:[#allocation14 + $0xcc] sm:$0xf]
    %v8578 = vld [vmem:[#allocation14 + $0xd0] sm:$0xf]
    %v8579 = vld [vmem:[#allocation14 + $0xd4] sm:$0xf]
    %v8580 = vld [vmem:[#allocation14 + $0xd8] sm:$0xf]
    %v8581 = vld [vmem:[#allocation14 + $0xdc] sm:$0xf]
    %v8582 = vld [vmem:[#allocation14 + $0xe0] sm:$0xf]
    %v8583 = vld [vmem:[#allocation14 + $0xe4] sm:$0xf]
    %v8584 = vld [vmem:[#allocation14 + $0xe8] sm:$0xf]
    %v8585 = vld [vmem:[#allocation14 + $0xec] sm:$0xf]
    %v8586 = vld [vmem:[#allocation14 + $0xf0] sm:$0xf]
    %v8587 = vld [vmem:[#allocation14 + $0xf4] sm:$0xf]
    %v8588 = vld [vmem:[#allocation14 + $0xf8] sm:$0xf]
    %v8589 = vld [vmem:[#allocation14 + $0xfc] sm:$0xf]
    %v8590 = vld [vmem:[#allocation14 + $0x100] sm:$0xf]
    %v8591 = vld [vmem:[#allocation14 + $0x104] sm:$0xf]
    %v8592 = vld [vmem:[#allocation14 + $0x108] sm:$0xf]
    %v8593 = vld [vmem:[#allocation14 + $0x10c] sm:$0xf]
    %v8594 = vld [vmem:[#allocation14 + $0x110] sm:$0xf]
    %v8595 = vld [vmem:[#allocation14 + $0x114] sm:$0xf]
    %v8596 = vld [vmem:[#allocation14 + $0x118] sm:$0xf]
    %v8597 = vld [vmem:[#allocation14 + $0x11c] sm:$0xf]
    %v8598 = vld [vmem:[#allocation14 + $0x120] sm:$0xf]
    %v8599 = vld [vmem:[#allocation14 + $0x124] sm:$0xf]
    %v8600 = vld [vmem:[#allocation14 + $0x128] sm:$0xf]
    %v8601 = vld [vmem:[#allocation14 + $0x12c] sm:$0xf]
    %v8602 = vld [vmem:[#allocation14 + $0x130] sm:$0xf]
    %v8603 = vld [vmem:[#allocation14 + $0x134] sm:$0xf]
    %v8604 = vld [vmem:[#allocation14 + $0x138] sm:$0xf]
    %v8605 = vld [vmem:[#allocation14 + $0x13c] sm:$0xf]
    %v8606 = vld [vmem:[#allocation14 + $0x140] sm:$0xf]
    %v8607 = vld [vmem:[#allocation14 + $0x144] sm:$0xf]
    %v8608 = vld [vmem:[#allocation14 + $0x148] sm:$0xf]
    %v8609 = vld [vmem:[#allocation14 + $0x14c] sm:$0xf]
    %v8610 = vld [vmem:[#allocation14 + $0x150] sm:$0xf]
    %v8611 = vld [vmem:[#allocation14 + $0x154] sm:$0xf]
    %v8612 = vld [vmem:[#allocation14 + $0x158] sm:$0xf]
    %v8613 = vld [vmem:[#allocation14 + $0x15c] sm:$0xf]
    %v8614 = vld [vmem:[#allocation14 + $0x160] sm:$0xf]
    %v8615 = vld [vmem:[#allocation14 + $0x164] sm:$0xf]
    %v8616 = vld [vmem:[#allocation14 + $0x168] sm:$0xf]
    %v8617 = vld [vmem:[#allocation14 + $0x16c] sm:$0xf]
    %v8618 = vld [vmem:[#allocation14 + $0x170] sm:$0xf]
    %v8619 = vld [vmem:[#allocation14 + $0x174] sm:$0xf]
    %v8620 = vld [vmem:[#allocation14 + $0x178] sm:$0xf]
    %v8621 = vld [vmem:[#allocation14 + $0x17c] sm:$0xf]
    %v8622 = vld [vmem:[#allocation14 + $0x180] sm:$0xf]
    %v8623 = vld [vmem:[#allocation14 + $0x184] sm:$0xf]
    %v8624 = vld [vmem:[#allocation14 + $0x188] sm:$0xf]
    %v8625 = vld [vmem:[#allocation14 + $0x18c] sm:$0xf]
    %v8626 = vld [vmem:[#allocation14 + $0x190] sm:$0xf]
    %v8627 = vld [vmem:[#allocation14 + $0x194] sm:$0xf]
    %v8628 = vld [vmem:[#allocation14 + $0x198] sm:$0xf]
    %v8629 = vld [vmem:[#allocation14 + $0x19c] sm:$0xf]
    %v8630 = vld [vmem:[#allocation14 + $0x1a0] sm:$0xf]
    %v8631 = vld [vmem:[#allocation14 + $0x1a4] sm:$0xf]
    %v8632 = vld [vmem:[#allocation14 + $0x1a8] sm:$0xf]
    %v8633 = vld [vmem:[#allocation14 + $0x1ac] sm:$0xf]
    %v8634 = vld [vmem:[#allocation14 + $0x1b0] sm:$0xf]
    %v8635 = vld [vmem:[#allocation14 + $0x1b4] sm:$0xf]
    %v8636 = vld [vmem:[#allocation14 + $0x1b8] sm:$0xf]
    %v8637 = vld [vmem:[#allocation14 + $0x1bc] sm:$0xf]
    %v8638 = vld [vmem:[#allocation14 + $0x1c0] sm:$0xf]
    %v8639 = vld [vmem:[#allocation14 + $0x1c4] sm:$0xf]
    %v8640 = vld [vmem:[#allocation14 + $0x1c8] sm:$0xf]
    %v8641 = vld [vmem:[#allocation14 + $0x1cc] sm:$0xf]
    %v8642 = vld [vmem:[#allocation14 + $0x1d0] sm:$0xf]
    %v8643 = vld [vmem:[#allocation14 + $0x1d4] sm:$0xf]
    %v8644 = vld [vmem:[#allocation14 + $0x1d8] sm:$0xf]
    %v8645 = vld [vmem:[#allocation14 + $0x1dc] sm:$0xf]
    %v8646 = vld [vmem:[#allocation14 + $0x1e0] sm:$0xf]
    %v8647 = vld [vmem:[#allocation14 + $0x1e4] sm:$0xf]
    %v8648 = vld [vmem:[#allocation14 + $0x1e8] sm:$0xf]
    %v8649 = vld [vmem:[#allocation14 + $0x1ec] sm:$0xf]
    %v8650 = vld [vmem:[#allocation14 + $0x1f0] sm:$0xf]
    %v8651 = vld [vmem:[#allocation14 + $0x1f4] sm:$0xf]
    %v8652 = vld [vmem:[#allocation14 + $0x1f8] sm:$0xf]
    %v8653 = vld [vmem:[#allocation14 + $0x1fc] sm:$0xf]
    %v8654 = vld [vmem:[#allocation16] sm:$0x1]
    %v8656 = vlaneseq
    %v8657 = vshrl.u32 %v8656, 7
    %v8658 = vsub.s32 0, %v8657
    %v8659 = vrot.slane %v8654, %v8658
    %v8789 = vunpack.c.l.b16 %v8526
    %v8790 = vunpack.c.l.b16 %v8527
    %v8791 = vunpack.c.l.b16 %v8528
    %v8792 = vunpack.c.l.b16 %v8529
    %v8793 = vunpack.c.l.b16 %v8530
    %v8794 = vunpack.c.l.b16 %v8531
    %v8795 = vunpack.c.l.b16 %v8532
    %v8796 = vunpack.c.l.b16 %v8533
    %v8797 = vunpack.c.l.b16 %v8534
    %v8798 = vunpack.c.l.b16 %v8535
    %v8799 = vunpack.c.l.b16 %v8536
    %v8800 = vunpack.c.l.b16 %v8537
    %v8801 = vunpack.c.l.b16 %v8538
    %v8802 = vunpack.c.l.b16 %v8539
    %v8803 = vunpack.c.l.b16 %v8540
    %v8804 = vunpack.c.l.b16 %v8541
    %v8805 = vunpack.c.l.b16 %v8542
    %v8806 = vunpack.c.l.b16 %v8543
    %v8807 = vunpack.c.l.b16 %v8544
    %v8808 = vunpack.c.l.b16 %v8545
    %v8809 = vunpack.c.l.b16 %v8546
    %v8810 = vunpack.c.l.b16 %v8547
    %v8811 = vunpack.c.l.b16 %v8548
    %v8812 = vunpack.c.l.b16 %v8549
    %v8813 = vunpack.c.l.b16 %v8550
    %v8814 = vunpack.c.l.b16 %v8551
    %v8815 = vunpack.c.l.b16 %v8552
    %v8816 = vunpack.c.l.b16 %v8553
    %v8817 = vunpack.c.l.b16 %v8554
    %v8818 = vunpack.c.l.b16 %v8555
    %v8819 = vunpack.c.l.b16 %v8556
    %v8820 = vunpack.c.l.b16 %v8557
    %v8821 = vunpack.c.l.b16 %v8558
    %v8822 = vunpack.c.l.b16 %v8559
    %v8823 = vunpack.c.l.b16 %v8560
    %v8824 = vunpack.c.l.b16 %v8561
    %v8825 = vunpack.c.l.b16 %v8562
    %v8826 = vunpack.c.l.b16 %v8563
    %v8827 = vunpack.c.l.b16 %v8564
    %v8828 = vunpack.c.l.b16 %v8565
    %v8829 = vunpack.c.l.b16 %v8566
    %v8830 = vunpack.c.l.b16 %v8567
    %v8831 = vunpack.c.l.b16 %v8568
    %v8832 = vunpack.c.l.b16 %v8569
    %v8833 = vunpack.c.l.b16 %v8570
    %v8834 = vunpack.c.l.b16 %v8571
    %v8835 = vunpack.c.l.b16 %v8572
    %v8836 = vunpack.c.l.b16 %v8573
    %v8837 = vunpack.c.l.b16 %v8574
    %v8838 = vunpack.c.l.b16 %v8575
    %v8839 = vunpack.c.l.b16 %v8576
    %v8840 = vunpack.c.l.b16 %v8577
    %v8841 = vunpack.c.l.b16 %v8578
    %v8842 = vunpack.c.l.b16 %v8579
    %v8843 = vunpack.c.l.b16 %v8580
    %v8844 = vunpack.c.l.b16 %v8581
    %v8845 = vunpack.c.l.b16 %v8582
    %v8846 = vunpack.c.l.b16 %v8583
    %v8847 = vunpack.c.l.b16 %v8584
    %v8848 = vunpack.c.l.b16 %v8585
    %v8849 = vunpack.c.l.b16 %v8586
    %v8850 = vunpack.c.l.b16 %v8587
    %v8851 = vunpack.c.l.b16 %v8588
    %v8852 = vunpack.c.l.b16 %v8589
    %v8853 = vunpack.c.l.b16 %v8590
    %v8854 = vunpack.c.l.b16 %v8591
    %v8855 = vunpack.c.l.b16 %v8592
    %v8856 = vunpack.c.l.b16 %v8593
    %v8857 = vunpack.c.l.b16 %v8594
    %v8858 = vunpack.c.l.b16 %v8595
    %v8859 = vunpack.c.l.b16 %v8596
    %v8860 = vunpack.c.l.b16 %v8597
    %v8861 = vunpack.c.l.b16 %v8598
    %v8862 = vunpack.c.l.b16 %v8599
    %v8863 = vunpack.c.l.b16 %v8600
    %v8864 = vunpack.c.l.b16 %v8601
    %v8865 = vunpack.c.l.b16 %v8602
    %v8866 = vunpack.c.l.b16 %v8603
    %v8867 = vunpack.c.l.b16 %v8604
    %v8868 = vunpack.c.l.b16 %v8605
    %v8869 = vunpack.c.l.b16 %v8606
    %v8870 = vunpack.c.l.b16 %v8607
    %v8871 = vunpack.c.l.b16 %v8608
    %v8872 = vunpack.c.l.b16 %v8609
    %v8873 = vunpack.c.l.b16 %v8610
    %v8874 = vunpack.c.l.b16 %v8611
    %v8875 = vunpack.c.l.b16 %v8612
    %v8876 = vunpack.c.l.b16 %v8613
    %v8877 = vunpack.c.l.b16 %v8614
    %v8878 = vunpack.c.l.b16 %v8615
    %v8879 = vunpack.c.l.b16 %v8616
    %v8880 = vunpack.c.l.b16 %v8617
    %v8881 = vunpack.c.l.b16 %v8618
    %v8882 = vunpack.c.l.b16 %v8619
    %v8883 = vunpack.c.l.b16 %v8620
    %v8884 = vunpack.c.l.b16 %v8621
    %v8885 = vunpack.c.l.b16 %v8622
    %v8886 = vunpack.c.l.b16 %v8623
    %v8887 = vunpack.c.l.b16 %v8624
    %v8888 = vunpack.c.l.b16 %v8625
    %v8889 = vunpack.c.l.b16 %v8626
    %v8890 = vunpack.c.l.b16 %v8627
    %v8891 = vunpack.c.l.b16 %v8628
    %v8892 = vunpack.c.l.b16 %v8629
    %v8893 = vunpack.c.l.b16 %v8630
    %v8894 = vunpack.c.l.b16 %v8631
    %v8895 = vunpack.c.l.b16 %v8632
    %v8896 = vunpack.c.l.b16 %v8633
    %v8897 = vunpack.c.l.b16 %v8634
    %v8898 = vunpack.c.l.b16 %v8635
    %v8899 = vunpack.c.l.b16 %v8636
    %v8900 = vunpack.c.l.b16 %v8637
    %v8901 = vunpack.c.l.b16 %v8638
    %v8902 = vunpack.c.l.b16 %v8639
    %v8903 = vunpack.c.l.b16 %v8640
    %v8904 = vunpack.c.l.b16 %v8641
    %v8905 = vunpack.c.l.b16 %v8642
    %v8906 = vunpack.c.l.b16 %v8643
    %v8907 = vunpack.c.l.b16 %v8644
    %v8908 = vunpack.c.l.b16 %v8645
    %v8909 = vunpack.c.l.b16 %v8646
    %v8910 = vunpack.c.l.b16 %v8647
    %v8911 = vunpack.c.l.b16 %v8648
    %v8912 = vunpack.c.l.b16 %v8649
    %v8913 = vunpack.c.l.b16 %v8650
    %v8914 = vunpack.c.l.b16 %v8651
    %v8915 = vunpack.c.l.b16 %v8652
    %v8916 = vunpack.c.l.b16 %v8653
    %v8917 = vpack.c.b16 %v8790, %v8789
    %v8918 = vpack.c.b16 %v8792, %v8791
    %v8919 = vpack.c.b16 %v8794, %v8793
    %v8920 = vpack.c.b16 %v8796, %v8795
    %v8921 = vpack.c.b16 %v8798, %v8797
    %v8922 = vpack.c.b16 %v8800, %v8799
    %v8923 = vpack.c.b16 %v8802, %v8801
    %v8924 = vpack.c.b16 %v8804, %v8803
    %v8925 = vpack.c.b16 %v8806, %v8805
    %v8926 = vpack.c.b16 %v8808, %v8807
    %v8927 = vpack.c.b16 %v8810, %v8809
    %v8928 = vpack.c.b16 %v8812, %v8811
    %v8929 = vpack.c.b16 %v8814, %v8813
    %v8930 = vpack.c.b16 %v8816, %v8815
    %v8931 = vpack.c.b16 %v8818, %v8817
    %v8932 = vpack.c.b16 %v8820, %v8819
    %v8933 = vpack.c.b16 %v8822, %v8821
    %v8934 = vpack.c.b16 %v8824, %v8823
    %v8935 = vpack.c.b16 %v8826, %v8825
    %v8936 = vpack.c.b16 %v8828, %v8827
    %v8937 = vpack.c.b16 %v8830, %v8829
    %v8938 = vpack.c.b16 %v8832, %v8831
    %v8939 = vpack.c.b16 %v8834, %v8833
    %v8940 = vpack.c.b16 %v8836, %v8835
    %v8941 = vpack.c.b16 %v8838, %v8837
    %v8942 = vpack.c.b16 %v8840, %v8839
    %v8943 = vpack.c.b16 %v8842, %v8841
    %v8944 = vpack.c.b16 %v8844, %v8843
    %v8945 = vpack.c.b16 %v8846, %v8845
    %v8946 = vpack.c.b16 %v8848, %v8847
    %v8947 = vpack.c.b16 %v8850, %v8849
    %v8948 = vpack.c.b16 %v8852, %v8851
    %v8949 = vpack.c.b16 %v8854, %v8853
    %v8950 = vpack.c.b16 %v8856, %v8855
    %v8951 = vpack.c.b16 %v8858, %v8857
    %v8952 = vpack.c.b16 %v8860, %v8859
    %v8953 = vpack.c.b16 %v8862, %v8861
    %v8954 = vpack.c.b16 %v8864, %v8863
    %v8955 = vpack.c.b16 %v8866, %v8865
    %v8956 = vpack.c.b16 %v8868, %v8867
    %v8957 = vpack.c.b16 %v8870, %v8869
    %v8958 = vpack.c.b16 %v8872, %v8871
    %v8959 = vpack.c.b16 %v8874, %v8873
    %v8960 = vpack.c.b16 %v8876, %v8875
    %v8961 = vpack.c.b16 %v8878, %v8877
    %v8962 = vpack.c.b16 %v8880, %v8879
    %v8963 = vpack.c.b16 %v8882, %v8881
    %v8964 = vpack.c.b16 %v8884, %v8883
    %v8965 = vpack.c.b16 %v8886, %v8885
    %v8966 = vpack.c.b16 %v8888, %v8887
    %v8967 = vpack.c.b16 %v8890, %v8889
    %v8968 = vpack.c.b16 %v8892, %v8891
    %v8969 = vpack.c.b16 %v8894, %v8893
    %v8970 = vpack.c.b16 %v8896, %v8895
    %v8971 = vpack.c.b16 %v8898, %v8897
    %v8972 = vpack.c.b16 %v8900, %v8899
    %v8973 = vpack.c.b16 %v8902, %v8901
    %v8974 = vpack.c.b16 %v8904, %v8903
    %v8975 = vpack.c.b16 %v8906, %v8905
    %v8976 = vpack.c.b16 %v8908, %v8907
    %v8977 = vpack.c.b16 %v8910, %v8909
    %v8978 = vpack.c.b16 %v8912, %v8911
    %v8979 = vpack.c.b16 %v8914, %v8913
    %v8980 = vpack.c.b16 %v8916, %v8915
    %9045 = vmatprep.subr.bf16.mxu0 0
    %9046 = vmatpush1.bf16.msra.mxu0 %v8917
    %9047 = vmatprep.subr.bf16.mxu0 0
    %9048 = vmatpush1.bf16.msra.mxu0 %v8918
    %9049 = vmatprep.subr.bf16.mxu0 0
    %9050 = vmatpush1.bf16.msra.mxu0 %v8919
    %9051 = vmatprep.subr.bf16.mxu0 0
    %9052 = vmatpush1.bf16.msra.mxu0 %v8920
    %9053 = vmatprep.subr.bf16.mxu0 0
    %9054 = vmatpush1.bf16.msra.mxu0 %v8921
    %9055 = vmatprep.subr.bf16.mxu0 0
    %9056 = vmatpush1.bf16.msra.mxu0 %v8922
    %9057 = vmatprep.subr.bf16.mxu0 0
    %9058 = vmatpush1.bf16.msra.mxu0 %v8923
    %9059 = vmatprep.subr.bf16.mxu0 0
    %9060 = vmatpush1.bf16.msra.mxu0 %v8924
    %9061 = vmatprep.subr.bf16.mxu0 0
    %9062 = vmatpush1.bf16.msra.mxu0 %v8925
    %9063 = vmatprep.subr.bf16.mxu0 0
    %9064 = vmatpush1.bf16.msra.mxu0 %v8926
    %9065 = vmatprep.subr.bf16.mxu0 0
    %9066 = vmatpush1.bf16.msra.mxu0 %v8927
    %9067 = vmatprep.subr.bf16.mxu0 0
    %9068 = vmatpush1.bf16.msra.mxu0 %v8928
    %9069 = vmatprep.subr.bf16.mxu0 0
    %9070 = vmatpush1.bf16.msra.mxu0 %v8929
    %9071 = vmatprep.subr.bf16.mxu0 0
    %9072 = vmatpush1.bf16.msra.mxu0 %v8930
    %9073 = vmatprep.subr.bf16.mxu0 0
    %9074 = vmatpush1.bf16.msra.mxu0 %v8931
    %9075 = vmatprep.subr.bf16.mxu0 0
    %9076 = vmatpush1.bf16.msra.mxu0 %v8932
    %9077 = vmatprep.mubr.bf16.mxu0 %v8519
    %9078 = vmatmul.mubr.bf16.gmra.mrb[0].mxu0 %v8518
    %v9079 = vpop.f32.mrb[0].mxu0
    %v9080 = vadd.f32 %v8659, %v9079
    %v9081 = vpop.f32.mrb[0].mxu0
    %v9082 = vpop.f32.mrb[0].mxu0
    %v9083 = vadd.f32 %v8659, %v9082
    %v9084 = vpop.f32.mrb[0].mxu0
    %9085 = vdwg.mxu0
    %9086 = vmatprep.subr.bf16.mxu0 0
    %9087 = vmatpush1.bf16.msra.mxu0 %v8933
    %9088 = vmatprep.subr.bf16.mxu0 0
    %9089 = vmatpush1.bf16.msra.mxu0 %v8934
    %9090 = vmatprep.subr.bf16.mxu0 0
    %9091 = vmatpush1.bf16.msra.mxu0 %v8935
    %9092 = vmatprep.subr.bf16.mxu0 0
    %9093 = vmatpush1.bf16.msra.mxu0 %v8936
    %9094 = vmatprep.subr.bf16.mxu0 0
    %9095 = vmatpush1.bf16.msra.mxu0 %v8937
    %9096 = vmatprep.subr.bf16.mxu0 0
    %9097 = vmatpush1.bf16.msra.mxu0 %v8938
    %9098 = vmatprep.subr.bf16.mxu0 0
    %9099 = vmatpush1.bf16.msra.mxu0 %v8939
    %9100 = vmatprep.subr.bf16.mxu0 0
    %9101 = vmatpush1.bf16.msra.mxu0 %v8940
    %9102 = vmatprep.subr.bf16.mxu0 0
    %9103 = vmatpush1.bf16.msra.mxu0 %v8941
    %9104 = vmatprep.subr.bf16.mxu0 0
    %9105 = vmatpush1.bf16.msra.mxu0 %v8942
    %9106 = vmatprep.subr.bf16.mxu0 0
    %9107 = vmatpush1.bf16.msra.mxu0 %v8943
    %9108 = vmatprep.subr.bf16.mxu0 0
    %9109 = vmatpush1.bf16.msra.mxu0 %v8944
    %9110 = vmatprep.subr.bf16.mxu0 0
    %9111 = vmatpush1.bf16.msra.mxu0 %v8945
    %9112 = vmatprep.subr.bf16.mxu0 0
    %9113 = vmatpush1.bf16.msra.mxu0 %v8946
    %9114 = vmatprep.subr.bf16.mxu0 0
    %9115 = vmatpush1.bf16.msra.mxu0 %v8947
    %9116 = vmatprep.subr.bf16.mxu0 0
    %9117 = vmatpush1.bf16.msra.mxu0 %v8948
    %9118 = vmatprep.mubr.bf16.mxu0 %v8521
    %9119 = vmatmul.mubr.bf16.gmra.mrb[0].mxu0 %v8520
    %v9120 = vpop.f32.mrb[0].mxu0
    %v9121 = vadd.f32 %v9080, %v9120
    %v9122 = vpop.f32.mrb[0].mxu0
    %v9123 = vpop.f32.mrb[0].mxu0
    %v9124 = vadd.f32 %v9083, %v9123
    %v9125 = vpop.f32.mrb[0].mxu0
    %9126 = vdwg.mxu0
    %9127 = vmatprep.subr.bf16.mxu0 0
    %9128 = vmatpush1.bf16.msra.mxu0 %v8949
    %9129 = vmatprep.subr.bf16.mxu0 0
    %9130 = vmatpush1.bf16.msra.mxu0 %v8950
    %9131 = vmatprep.subr.bf16.mxu0 0
    %9132 = vmatpush1.bf16.msra.mxu0 %v8951
    %9133 = vmatprep.subr.bf16.mxu0 0
    %9134 = vmatpush1.bf16.msra.mxu0 %v8952
    %9135 = vmatprep.subr.bf16.mxu0 0
    %9136 = vmatpush1.bf16.msra.mxu0 %v8953
    %9137 = vmatprep.subr.bf16.mxu0 0
    %9138 = vmatpush1.bf16.msra.mxu0 %v8954
    %9139 = vmatprep.subr.bf16.mxu0 0
    %9140 = vmatpush1.bf16.msra.mxu0 %v8955
    %9141 = vmatprep.subr.bf16.mxu0 0
    %9142 = vmatpush1.bf16.msra.mxu0 %v8956
    %9143 = vmatprep.subr.bf16.mxu0 0
    %9144 = vmatpush1.bf16.msra.mxu0 %v8957
    %9145 = vmatprep.subr.bf16.mxu0 0
    %9146 = vmatpush1.bf16.msra.mxu0 %v8958
    %9147 = vmatprep.subr.bf16.mxu0 0
    %9148 = vmatpush1.bf16.msra.mxu0 %v8959
    %9149 = vmatprep.subr.bf16.mxu0 0
    %9150 = vmatpush1.bf16.msra.mxu0 %v8960
    %9151 = vmatprep.subr.bf16.mxu0 0
    %9152 = vmatpush1.bf16.msra.mxu0 %v8961
    %9153 = vmatprep.subr.bf16.mxu0 0
    %9154 = vmatpush1.bf16.msra.mxu0 %v8962
    %9155 = vmatprep.subr.bf16.mxu0 0
    %9156 = vmatpush1.bf16.msra.mxu0 %v8963
    %9157 = vmatprep.subr.bf16.mxu0 0
    %9158 = vmatpush1.bf16.msra.mxu0 %v8964
    %9159 = vmatprep.mubr.bf16.mxu0 %v8523
    %9160 = vmatmul.mubr.bf16.gmra.mrb[0].mxu0 %v8522
    %v9161 = vpop.f32.mrb[0].mxu0
    %v9162 = vadd.f32 %v9121, %v9161
    %v9163 = vpop.f32.mrb[0].mxu0
    %v9164 = vpop.f32.mrb[0].mxu0
    %v9165 = vadd.f32 %v9124, %v9164
    %v9166 = vpop.f32.mrb[0].mxu0
    %9167 = vdwg.mxu0
    %9168 = vmatprep.subr.bf16.mxu0 0
    %9169 = vmatpush1.bf16.msra.mxu0 %v8965
    %9170 = vmatprep.subr.bf16.mxu0 0
    %9171 = vmatpush1.bf16.msra.mxu0 %v8966
    %9172 = vmatprep.subr.bf16.mxu0 0
    %9173 = vmatpush1.bf16.msra.mxu0 %v8967
    %9174 = vmatprep.subr.bf16.mxu0 0
    %9175 = vmatpush1.bf16.msra.mxu0 %v8968
    %9176 = vmatprep.subr.bf16.mxu0 0
    %9177 = vmatpush1.bf16.msra.mxu0 %v8969
    %9178 = vmatprep.subr.bf16.mxu0 0
    %9179 = vmatpush1.bf16.msra.mxu0 %v8970
    %9180 = vmatprep.subr.bf16.mxu0 0
    %9181 = vmatpush1.bf16.msra.mxu0 %v8971
    %9182 = vmatprep.subr.bf16.mxu0 0
    %9183 = vmatpush1.bf16.msra.mxu0 %v8972
    %9184 = vmatprep.subr.bf16.mxu0 0
    %9185 = vmatpush1.bf16.msra.mxu0 %v8973
    %9186 = vmatprep.subr.bf16.mxu0 0
    %9187 = vmatpush1.bf16.msra.mxu0 %v8974
    %9188 = vmatprep.subr.bf16.mxu0 0
    %9189 = vmatpush1.bf16.msra.mxu0 %v8975
    %9190 = vmatprep.subr.bf16.mxu0 0
    %9191 = vmatpush1.bf16.msra.mxu0 %v8976
    %9192 = vmatprep.subr.bf16.mxu0 0
    %9193 = vmatpush1.bf16.msra.mxu0 %v8977
    %9194 = vmatprep.subr.bf16.mxu0 0
    %9195 = vmatpush1.bf16.msra.mxu0 %v8978
    %9196 = vmatprep.subr.bf16.mxu0 0
    %9197 = vmatpush1.bf16.msra.mxu0 %v8979
    %9198 = vmatprep.subr.bf16.mxu0 0
    %9199 = vmatpush1.bf16.msra.mxu0 %v8980
    %9200 = vmatprep.mubr.bf16.mxu0 %v8525
    %9201 = vmatmul.mubr.bf16.gmra.mrb[0].mxu0 %v8524
    %v9202 = vpop.f32.mrb[0].mxu0
    %v9203 = vadd.f32 %v9162, %v9202
    %v9204 = vpop.f32.mrb[0].mxu0
    %v9205 = vpop.f32.mrb[0].mxu0
    %v9206 = vadd.f32 %v9165, %v9205
    %v9207 = vpop.f32.mrb[0].mxu0
    %9208 = vdwg.mxu0
    %v9209 = vlaneseq
    %v9210 = vand.u32 %v9209, 127
    %vm9211 = vcmp.lt.s32.totalorder %v9210, 37
    %v9212 = vsel %vm9211, %v9203, -1e+30
    %v9213 = vsel %vm9211, %v9206, -1e+30
    %9214 = vmax.xlane.f32.xlu0 %v9212
    %v9215 = vpop.xlane.xlu0 %9214
    %9216 = vmax.xlane.f32.xlu0 %v9213
    %v9217 = vpop.xlane.xlu0 %9216
    %v9218 = vsub.f32 %v9212, %v9215
    %v9219 = vsub.f32 %v9213, %v9217
    %v9220 = vmul.f32 %v9218, 1.442695
    %v9221 = vpow.pop %v9220
    %v9222 = vmul.f32 %v9219, 1.442695
    %v9223 = vpow.pop %v9222
    %v9224 = vsel %vm9211, %v9221, 0.0
    %v9225 = vsel %vm9211, %v9223, 0.0
    %9226 = vadd.xlane.f32.xlu0 %v9224
    %v9227 = vpop.xlane.xlu0 %9226
    %9228 = vadd.xlane.f32.xlu0 %v9225
    %v9229 = vpop.xlane.xlu0 %9228
    %v9230 = vlog2.pop %v9227
    %v9231 = vmul.f32 %v9230, 0.6931472
    %v9232 = vlog2.pop %v9229
    %v9233 = vmul.f32 %v9232, 0.6931472
    %v9234 = vsub.f32 %v9218, %v9231
    %v9235 = vsub.f32 %v9219, %v9233
    %v9236 = vtanh.pop %v9203
    %v9237 = vtanh.pop %v9206
    %v9238 = vsel %vm9211, %v9234, %v9236
    %v9239 = vsel %vm9211, %v9235, %v9237
    %9240 = vst [vmem:[#allocation17] sm:$0xff] %v9238
    %9241 = vst [vmem:[#allocation17 + $0x8] sm:$0xff] %v9239
    // Predicated region
    $region74: #{tpu_custom_call.1} parent=1 // pred_check
      _
    $region75: #{tpu_custom_call.1} parent=1 // pred_check_branch
      %9243 = sbr.rel (0) target = $region77
    $region76: #{tpu_custom_call.1} parent=1 // pred_region
      %s9245 = ssub.s32 256, 256
      %9246 = vsyncadd [#allocation4], %s9245
      %s9247 = sshll.u32 [#allocation17], 4
      %s9248 = int_to_ptr.vmem [resolvable:$true] %s9247
      %9253 = dma.vmem_to_hbm [thread:$0]  %s9248, 256, %s9, [#allocation4], 128, 128, 8
    $region77: #{tpu_custom_call.1} parent=1 // pred_fallthru
      _
    // Predicated region
    $region78: #{tpu_custom_call.1} parent=1 // pred_check
      _
    $region79: #{tpu_custom_call.1} parent=1 // pred_check_branch
      %9255 = sbr.rel (0) target = $region81
    $region80: #{tpu_custom_call.1} parent=1 // pred_region
      %9256 = dma.done [#allocation4], 256
    $region81: #{tpu_custom_call.1} parent=1 // pred_fallthru
      _
    %9257 = vsyncpa [#allocation3], 1
    %9258 = vsyncpa [#allocation6], 1
    %9259 = vsyncpa [#allocation9], 1
    %9260 = vsyncpa [#allocation12], 1
    %9261 = vsyncpa [#allocation15], 1
    %9262 = vsyncpa [#allocation4], 1

</llo_original>
